<compile_context>
chip_gen: v7x
topology: tpu7x:2x2x1
jax: 0.10.0
libtpu: 0.0.40
codegen_flags: <defaults>
</compile_context>

<pallas_src>
import numpy as np
import jax
import jax.numpy as jnp
from jax.experimental import pallas as pl
from jax.experimental.pallas import tpu as pltpu

EPS = 1e-5


# ------------------------------ small helpers ---------------------------------- #

_VMEM_LIMIT_CACHE = None


def _vmem_limit_bytes():
    """~96 MiB on v5e/v6e (128 MiB VMEM), ~48 MiB on v7x (64 MiB VMEM)."""
    global _VMEM_LIMIT_CACHE
    if _VMEM_LIMIT_CACHE is None:
        try:
            cap = int(pltpu.get_tpu_info().vmem_capacity_bytes)
        except Exception:
            cap = 64 * 1024 * 1024
        _VMEM_LIMIT_CACHE = int(min(cap * 3 // 4, 100 * 1024 * 1024))
    return _VMEM_LIMIT_CACHE


def _default_compute_dtype():
    """bf16 matmul operands on v6e/v7x (native bf16 MXU); f32 on older chips."""
    try:
        kind = jax.devices()[0].device_kind.lower()
    except Exception:
        return jnp.float32
    if any(t in kind for t in ("v2", "v3", "v4", "v5")):
        return jnp.float32
    return jnp.bfloat16


def _pick_tile(n, target):
    """Largest divisor of n that is <= target (>= 1)."""
    t = max(1, min(n, int(target)))
    while n % t:
        t -= 1
    return t


def _cparams(semantics, vmem_limit):
    return pltpu.CompilerParams(dimension_semantics=semantics,
                                vmem_limit_bytes=int(vmem_limit))


def _adaptive_rows(n_rows, bytes_per_row, vmem_limit, cap=1024, override=None):
    if override is not None:
        return _pick_tile(n_rows, override)
    budget = vmem_limit // 8
    tgt = max(8, min(cap, budget // max(1, bytes_per_row)))
    return _pick_tile(n_rows, tgt)


def _conv_row_tile(Hq, Wq, Cin, Cout, itemsize, vmem_limit, override=None):
    if override is not None:
        return _pick_tile(Hq, override)
    budget = vmem_limit // 8
    bytes_per_row = Wq * (6 * Cin * 4 + 3 * Cout * 4 + (Cin + Cout) * 2 * itemsize)
    tgt = max(4, min(32, budget // max(1, bytes_per_row)))
    return _pick_tile(Hq, tgt)


# ------------------ kernel 1: ConvTranspose2d(2, s=2) + stats ------------------ #

def _deconv_stats_kernel(x_ref, wk_ref, up_ref, st_ref):
    # x_ref : (tr, W, Cin)       rows of the flattened (B*H, W, Cin) input
    # wk_ref: (Cin, 4*Cout)      column index = a*2*Cout + c*Cout + co  (W_up[ci,co,a,c])
    # up_ref: (tr, 2, W, 2*Cout) up[r, a, w, c*Cout+co] -> output pixel (2h+a, 2w+c, co)
    # st_ref: (1, 2, 4*Cout)     per-tile [sum ; sum_sq], per (a, c, co) group
    tr, W, cin = x_ref.shape
    cout4 = wk_ref.shape[1]
    cout2 = cout4 // 2
    x2 = x_ref[...].reshape(tr * W, cin)
    y = jnp.dot(x2, wk_ref[...], preferred_element_type=jnp.float32)   # (tr*W, 4*Cout)
    # stats on the values the consumer will actually read (post output-dtype rounding)
    yq = y.astype(up_ref.dtype).astype(jnp.float32)
    up_ref[:, 0:1, :, :] = yq[:, :cout2].reshape(tr, 1, W, cout2).astype(up_ref.dtype)
    up_ref[:, 1:2, :, :] = yq[:, cout2:].reshape(tr, 1, W, cout2).astype(up_ref.dtype)
    st_ref[:, 0:1, :] = yq.sum(axis=0, keepdims=True).reshape(1, 1, cout4)
    st_ref[:, 1:2, :] = (yq * yq).sum(axis=0, keepdims=True).reshape(1, 1, cout4)


def deconv2x2_stats(x_rows, wk, row_tile, vmem_limit):
    BH, W, Cin = x_rows.shape
    cout4 = wk.shape[1]
    tr = row_tile
    n = BH // tr
    return pl.pallas_call(
        _deconv_stats_kernel,
        out_shape=(jax.ShapeDtypeStruct((BH, 2, W, cout4 // 2), x_rows.dtype),
                   jax.ShapeDtypeStruct((n, 2, cout4), jnp.float32)),
        grid=(n,),
        in_specs=[pl.BlockSpec((tr, W, Cin), lambda i: (i, 0, 0)),
                  pl.BlockSpec((Cin, cout4), lambda i: (0, 0))],
        out_specs=(pl.BlockSpec((tr, 2, W, cout4 // 2), lambda i: (i, 0, 0, 0)),
                   pl.BlockSpec((1, 2, cout4), lambda i: (i, 0, 0))),
        compiler_params=_cparams(("parallel",), vmem_limit),
    )(x_rows, wk)


# --------------- kernels 2/3: fused BN+ReLU -> 3x3 conv -> stats ---------------- #

def _shift_lr(act):
    # act: (rows, Wq, C) f32 — zero-padded column shifts (dx=0 / dx=2 taps).
    rows, wq, c = act.shape
    zcol = jnp.zeros((rows, 1, c), act.dtype)
    a_dx0 = jnp.concatenate([zcol, act[:, :wq - 1, :]], axis=1)
    a_dx2 = jnp.concatenate([act[:, 1:, :], zcol], axis=1)
    return a_dx0, a_dx2


def _conv3x3_body(act_pad, w_ref, out_ref, st_ref, col_ref):
    # act_pad: (tr+2, Wq, Cin) f32 value — 1-row halo included, zeroed at borders.
    # w_ref  : (3, 3*Cin, Cout)  per-dy weight, column block order [dx=0 | dx=1 | dx=2].
    # col_ref: (tr+2, Wq, 3*Cin) scratch (matmul operand dtype).
    trp, wq, cin = act_pad.shape
    tr = trp - 2
    cout = w_ref.shape[-1]
    a0, a2 = _shift_lr(act_pad)
    col_ref[...] = jnp.concatenate([a0, act_pad, a2], axis=-1).astype(col_ref.dtype)
    acc = jnp.dot(col_ref[0:tr].reshape(tr * wq, 3 * cin), w_ref[0],
                  preferred_element_type=jnp.float32)
    acc = acc + jnp.dot(col_ref[1:tr + 1].reshape(tr * wq, 3 * cin), w_ref[1],
                        preferred_element_type=jnp.float32)
    acc = acc + jnp.dot(col_ref[2:tr + 2].reshape(tr * wq, 3 * cin), w_ref[2],
                        preferred_element_type=jnp.float32)
    accq = acc.astype(out_ref.dtype).astype(jnp.float32)
    out_ref[...] = accq.reshape(1, tr, wq, cout).astype(out_ref.dtype)
    st_ref[:, :, 0:1, :] = accq.sum(axis=0).reshape(1, 1, 1, cout)
    st_ref[:, :, 1:2, :] = (accq * accq).sum(axis=0).reshape(1, 1, 1, cout)


def _halo_mask(tr, i):
    # keep[s] == False where window row s lies outside the image (conv zero-pad rows)
    abs_row = i * tr - 1 + jax.lax.broadcasted_iota(jnp.int32, (tr + 2, 1, 1), 0)
    hq = pl.num_programs(1) * tr
    return jnp.logical_and(abs_row >= 0, abs_row < hq)


def _conv1_kernel(up_ref, up_t_ref, up_b_ref, br_ref, br_t_ref, br_b_ref,
                  ssu_ref, w_ref, out_ref, st_ref, col_ref):
    # Fused: BN(up)+ReLU, channel-concat with cropped bridge, 3x3 conv, BN-stats.
    i = pl.program_id(1)
    _, tr, wq, cu = up_ref.shape
    cb = br_ref.shape[-1]
    up_rows = jnp.concatenate([up_t_ref[...], up_ref[...], up_b_ref[...]], axis=1)
    br_rows = jnp.concatenate([br_t_ref[...], br_ref[...], br_b_ref[...]], axis=1)
    up_rows = up_rows.reshape(tr + 2, wq, cu).astype(jnp.float32)
    br_rows = br_rows.reshape(tr + 2, wq, cb).astype(jnp.float32)
    scale = ssu_ref[0:1, :].reshape(1, 1, cu)
    shift = ssu_ref[1:2, :].reshape(1, 1, cu)
    up_act = jnp.maximum(up_rows * scale + shift, 0.0)
    act = jnp.concatenate([up_act, br_rows], axis=-1)        # PyTorch cat([up, crop], 1)
    act = jnp.where(_halo_mask(tr, i), act, 0.0)              # zero-pad at image borders
    _conv3x3_body(act, w_ref, out_ref, st_ref, col_ref)


def _conv2_kernel(x_ref, x_t_ref, x_b_ref, ss_ref, w_ref, out_ref, st_ref, col_ref):
    # Fused: BN(conv1)+ReLU, 3x3 conv, BN-stats.
    i = pl.program_id(1)
    _, tr, wq, cin = x_ref.shape
    rows = jnp.concatenate([x_t_ref[...], x_ref[...], x_b_ref[...]], axis=1)
    rows = rows.reshape(tr + 2, wq, cin).astype(jnp.float32)
    scale = ss_ref[0:1, :].reshape(1, 1, cin)
    shift = ss_ref[1:2, :].reshape(1, 1, cin)
    act = jnp.maximum(rows * scale + shift, 0.0)
    act = jnp.where(_halo_mask(tr, i), act, 0.0)
    _conv3x3_body(act, w_ref, out_ref, st_ref, col_ref)


def conv3x3_cat_stats(up, crop, ss_up, w1, row_tile, vmem_limit):
    B, Hq, Wq, Cu = up.shape
    Cb = crop.shape[-1]
    Cin = Cu + Cb
    Cout = w1.shape[-1]
    isz = jnp.dtype(up.dtype).itemsize
    tr = _conv_row_tile(Hq, Wq, Cin, Cout, isz, vmem_limit, row_tile)
    nh = Hq // tr
    cur = lambda b, i: (b, i, 0, 0)
    top = lambda b, i: (b, jnp.maximum(i * tr - 1, 0), 0, 0)       # element idx (block=1)
    bot = lambda b, i: (b, jnp.minimum(i * tr + tr, Hq - 1), 0, 0)
    # TODO(synk): add a Cout-tile grid axis / channel padding to 128 for deep, wide
    # UNet levels so weight residency and masked stores stop being the limiter.
    return pl.pallas_call(
        _conv1_kernel,
        out_shape=(jax.ShapeDtypeStruct((B, Hq, Wq, Cout), up.dtype),
                   jax.ShapeDtypeStruct((B, nh, 2, Cout), jnp.float32)),
        grid=(B, nh),
        in_specs=[pl.BlockSpec((1, tr, Wq, Cu), cur),
                  pl.BlockSpec((1, 1, Wq, Cu), top),
                  pl.BlockSpec((1, 1, Wq, Cu), bot),
                  pl.BlockSpec((1, tr, Wq, Cb), cur),
                  pl.BlockSpec((1, 1, Wq, Cb), top),
                  pl.BlockSpec((1, 1, Wq, Cb), bot),
                  pl.BlockSpec((2, Cu), lambda b, i: (0, 0)),
                  pl.BlockSpec((3, 3 * Cin, Cout), lambda b, i: (0, 0, 0))],
        out_specs=(pl.BlockSpec((1, tr, Wq, Cout), cur),
                   pl.BlockSpec((1, 1, 2, Cout), lambda b, i: (b, i, 0, 0))),
        scratch_shapes=[pltpu.VMEM((tr + 2, Wq, 3 * Cin), up.dtype)],
        compiler_params=_cparams(("parallel", "parallel"), vmem_limit),
    )(up, up, up, crop, crop, crop, ss_up, w1)


def conv3x3_stats(x, ss, w, row_tile, vmem_limit):
    B, Hq, Wq, Cin = x.shape
    Cout = w.shape[-1]
    isz = jnp.dtype(x.dtype).itemsize
    tr = _conv_row_tile(Hq, Wq, Cin, Cout, isz, vmem_limit, row_tile)
    nh = Hq // tr
    cur = lambda b, i: (b, i, 0, 0)
    top = lambda b, i: (b, jnp.maximum(i * tr - 1, 0), 0, 0)
    bot = lambda b, i: (b, jnp.minimum(i * tr + tr, Hq - 1), 0, 0)
    return pl.pallas_call(
        _conv2_kernel,
        out_shape=(jax.ShapeDtypeStruct((B, Hq, Wq, Cout), x.dtype),
                   jax.ShapeDtypeStruct((B, nh, 2, Cout), jnp.float32)),
        grid=(B, nh),
        in_specs=[pl.BlockSpec((1, tr, Wq, Cin), cur),
                  pl.BlockSpec((1, 1, Wq, Cin), top),
                  pl.BlockSpec((1, 1, Wq, Cin), bot),
                  pl.BlockSpec((2, Cin), lambda b, i: (0, 0)),
                  pl.BlockSpec((3, 3 * Cin, Cout), lambda b, i: (0, 0, 0))],
        out_specs=(pl.BlockSpec((1, tr, Wq, Cout), cur),
                   pl.BlockSpec((1, 1, 2, Cout), lambda b, i: (b, i, 0, 0))),
        scratch_shapes=[pltpu.VMEM((tr + 2, Wq, 3 * Cin), x.dtype)],
        compiler_params=_cparams(("parallel", "parallel"), vmem_limit),
    )(x, x, x, ss, w)


# ------------------------ kernel 4: final BN2 + ReLU --------------------------- #

def _bn_relu_kernel(x_ref, ss_ref, o_ref):
    c = x_ref.shape[-1]
    scale = ss_ref[0:1, :].reshape(1, 1, c)
    shift = ss_ref[1:2, :].reshape(1, 1, c)
    o_ref[...] = jnp.maximum(x_ref[...].astype(jnp.float32) * scale + shift,
                             0.0).astype(o_ref.dtype)


def bn_relu_final(x_rows, ss, row_tile, vmem_limit):
    R, Wq, C = x_rows.shape
    tr = row_tile
    return pl.pallas_call(
        _bn_relu_kernel,
        out_shape=jax.ShapeDtypeStruct((R, Wq, C), jnp.float32),
        grid=(R // tr,),
        in_specs=[pl.BlockSpec((tr, Wq, C), lambda i: (i, 0, 0)),
                  pl.BlockSpec((2, C), lambda i: (0, 0))],
        out_specs=pl.BlockSpec((tr, Wq, C), lambda i: (i, 0, 0)),
        compiler_params=_cparams(("parallel",), vmem_limit),
    )(x_rows, ss)


# ------------------------------- module forward -------------------------------- #

def _fold_bn(sum_c, sumsq_c, count, gamma, beta):
    """Training-mode BN folded to per-channel (scale, shift), shape (2, C), f32."""
    mean = sum_c / count
    var = jnp.maximum(sumsq_c / count - mean * mean, 0.0)
    scale = gamma * jax.lax.rsqrt(var + EPS)
    shift = beta - mean * scale
    return jnp.stack([scale, shift], axis=0).astype(jnp.float32)


def unet_up_block(x_nchw, bridge_nchw, p, *, compute_dtype=None, row_tile=None):
    cdt = compute_dtype if compute_dtype is not None else _default_compute_dtype()
    vmem_limit = _vmem_limit_bytes()
    isz = jnp.dtype(cdt).itemsize

    x = jnp.transpose(x_nchw, (0, 2, 3, 1)).astype(cdt)                  # NHWC
    B, H, W, Cin = x.shape
    Cout = p["up_w"].shape[1]

    # --- self.up: ConvTranspose2d(2, s=2) as one matmul + pixel-shuffle write + stats
    #     (bias dropped: exact no-op under training-mode BatchNorm)
    wk = jnp.transpose(p["up_w"], (0, 2, 3, 1)).reshape(Cin, 4 * Cout).astype(cdt)
    tr_d = _adaptive_rows(B * H, W * (Cin + 4 * Cout) * isz + 64, vmem_limit,
                          override=row_tile)
    up4, st_up = deconv2x2_stats(x.reshape(B * H, W, Cin), wk, tr_d, vmem_limit)
    up = up4.reshape(B, 2 * H, 2 * W, Cout)                              # free reshape

    cnt = B * (2 * H) * (2 * W)
    s = st_up.sum(axis=0).reshape(2, 4, Cout).sum(axis=1)                # tiny XLA reduce
    ss_up = _fold_bn(s[0], s[1], cnt, p["bnup_g"], p["bnup_b"])

    # --- center_crop(bridge, 2H); the channel concat itself is fused into conv1.
    br = jnp.transpose(bridge_nchw, (0, 2, 3, 1)).astype(cdt)
    xy1 = (br.shape[1] - 2 * H) // 2
    crop = br[:, xy1:xy1 + 2 * H, xy1:xy1 + 2 * H, :]
    Cb = crop.shape[-1]

    # --- conv (3x3): fused BN(up)+ReLU + concat, 3 matmuls with K=3*(Cu+Cb), + stats.
    w1 = jnp.transpose(p["c1_w"], (2, 3, 1, 0)).reshape(3, 3 * (Cout + Cb),
                                                        Cout).astype(cdt)
    c1, st1 = conv3x3_cat_stats(up, crop, ss_up, w1, row_tile, vmem_limit)
    s1 = st1.sum(axis=(0, 1))
    ss1 = _fold_bn(s1[0], s1[1], cnt, p["bn1_g"], p["bn1_b"])

    # --- conv2 (3x3): fused BN(conv1)+ReLU, 3 matmuls with K=3*Cout, + stats.
    w2 = jnp.transpose(p["c2_w"], (2, 3, 1, 0)).reshape(3, 3 * Cout, Cout).astype(cdt)
    c2, st2 = conv3x3_stats(c1, ss1, w2, row_tile, vmem_limit)
    s2 = st2.sum(axis=(0, 1))
    ss2 = _fold_bn(s2[0], s2[1], cnt, p["bn2_g"], p["bn2_b"])

    # --- final BN2 + ReLU (tiled, mem-bound elementwise pass).
    tr_b = _adaptive_rows(B * 2 * H, 2 * W * Cout * (isz + 4), vmem_limit,
                          override=row_tile)
    out = bn_relu_final(c2.reshape(B * 2 * H, 2 * W, Cout), ss2, tr_b, vmem_limit)
    out = out.reshape(B, 2 * H, 2 * W, Cout)
    # TODO(synk): fold this NHWC->NCHW transpose into the final BN+ReLU kernel
    # (channel-blocked out_spec) to save one full HBM round trip.
    return jnp.transpose(out, (0, 3, 1, 2))                              # back to NCHW


# ---------------------------- params / pure-JAX reference ----------------------- #

def _xavier(key, shape, fan_in, fan_out, gain):
    bound = gain * np.sqrt(6.0 / (fan_in + fan_out))
    return jax.random.uniform(key, shape, jnp.float32, -bound, bound)


def init_params(key, in_size, out_size):
    g = np.sqrt(2.0)
    k = jax.random.split(key, 3)
    return {
        "up_w": _xavier(k[0], (in_size, out_size, 2, 2), out_size * 4, in_size * 4, g),
        "up_b": jnp.zeros((out_size,), jnp.float32),
        "bnup_g": jnp.ones((out_size,), jnp.float32),
        "bnup_b": jnp.zeros((out_size,), jnp.float32),
        "c1_w": _xavier(k[1], (out_size, in_size, 3, 3), in_size * 9, out_size * 9, g),
        "c1_b": jnp.zeros((out_size,), jnp.float32),
        "bn1_g": jnp.ones((out_size,), jnp.float32),
        "bn1_b": jnp.zeros((out_size,), jnp.float32),
        "c2_w": _xavier(k[2], (out_size, out_size, 3, 3), out_size * 9, out_size * 9, g),
        "c2_b": jnp.zeros((out_size,), jnp.float32),
        "bn2_g": jnp.ones((out_size,), jnp.float32),
        "bn2_b": jnp.zeros((out_size,), jnp.float32),
    }


def _bn_relu_ref(y, gamma, beta):
    m = y.mean(axis=(0, 1, 2), keepdims=True)
    v = ((y - m) ** 2).mean(axis=(0, 1, 2), keepdims=True)
    return jnp.maximum((y - m) / jnp.sqrt(v + EPS) * gamma.reshape(1, 1, 1, -1)
                       + beta.reshape(1, 1, 1, -1), 0.0)


def ref_forward(x_nchw, bridge_nchw, p):
    """Pure-JAX reference (no Pallas), training-mode BN."""
    hi = jax.lax.Precision.HIGHEST
    x = jnp.transpose(x_nchw, (0, 2, 3, 1)).astype(jnp.float32)
    B, H, W, Cin = x.shape
    Cout = p["up_w"].shape[1]
    up = jnp.einsum("bhwi,iocd->bhwcdo", x, p["up_w"], precision=hi)
    up = up.transpose(0, 1, 3, 2, 4, 5).reshape(B, 2 * H, 2 * W, Cout)
    up = up + p["up_b"].reshape(1, 1, 1, -1)
    up = _bn_relu_ref(up, p["bnup_g"], p["bnup_b"])
    br = jnp.transpose(bridge_nchw, (0, 2, 3, 1)).astype(jnp.float32)
    tgt = 2 * H
    xy1 = (br.shape[1] - tgt) // 2
    cat = jnp.concatenate([up, br[:, xy1:xy1 + tgt, xy1:xy1 + tgt, :]], axis=-1)

    def conv(inp, w_pt, b):
        w = jnp.transpose(w_pt, (2, 3, 1, 0))
        y = jax.lax.conv_general_dilated(inp, w, (1, 1), ((1, 1), (1, 1)),
                                         dimension_numbers=("NHWC", "HWIO", "NHWC"),
                                         precision=hi)
        return y + b.reshape(1, 1, 1, -1)

    out = _bn_relu_ref(conv(cat, p["c1_w"], p["c1_b"]), p["bn1_g"], p["bn1_b"])
    out = _bn_relu_ref(conv(out, p["c2_w"], p["c2_b"]), p["bn2_g"], p["bn2_b"])
    return jnp.transpose(out, (0, 3, 1, 2))


# ------------------------------------- main ------------------------------------- #

if __name__ == "__main__":
    key = jax.random.PRNGKey(0)

    def run_case(in_size, out_size, B, H, W, bridge_sp, k, check_bf16, check_tiled):
        kx, kb, kp = jax.random.split(k, 3)
        x = jax.random.normal(kx, (B, in_size, H, W), jnp.float32)
        bridge = jax.random.normal(kb, (B, in_size - out_size, bridge_sp, bridge_sp),
                                   jnp.float32)
        params = init_params(kp, in_size, out_size)
        ref = np.asarray(jax.block_until_ready(ref_forward(x, bridge, params)))

        f32_fn = jax.jit(lambda a, b, p: unet_up_block(a, b, p,
                                                       compute_dtype=jnp.float32))
        out = np.asarray(jax.block_until_ready(f32_fn(x, bridge, params)))
        assert out.shape == (B, out_size, 2 * H, 2 * W), out.shape
        assert np.allclose(out, ref, rtol=1e-2, atol=1e-2), "f32 mismatch"

        if check_tiled:   # force multi-tile grids: exercises row halos + cross-tile stats
            tiled_fn = jax.jit(lambda a, b, p: unet_up_block(
                a, b, p, compute_dtype=jnp.float32, row_tile=4))
            out_t = np.asarray(jax.block_until_ready(tiled_fn(x, bridge, params)))
            assert np.allclose(out_t, ref, rtol=1e-2, atol=1e-2), "tiled f32 mismatch"

        if check_bf16:    # bf16 matmul inputs, f32 accumulation / BN
            bf_fn = jax.jit(lambda a, b, p: unet_up_block(a, b, p,
                                                          compute_dtype=jnp.bfloat16))
            out_bf = np.asarray(jax.block_until_ready(bf_fn(x, bridge, params)))
            assert np.allclose(out_bf, ref, rtol=5e-2, atol=5e-2), "bf16 mismatch"
            # default (auto-selected) compute dtype path
            auto_fn = jax.jit(lambda a, b, p: unet_up_block(a, b, p))
            out_a = np.asarray(jax.block_until_ready(auto_fn(x, bridge, params)))
            assert np.allclose(out_a, ref, rtol=5e-2, atol=5e-2), "auto-dtype mismatch"

    k1, k2 = jax.random.split(key)
    # small channels, exercises center-crop, row-halo tiling, bf16 and auto paths
    run_case(8, 4, 2, 8, 8, 2 * 8 + 4, k1, check_bf16=True, check_tiled=True)
    # wider channels (lane-denser matmuls), B=1
    run_case(32, 16, 1, 4, 4, 2 * 4 + 4, k2, check_bf16=False, check_tiled=False)

    print("KERNEL_OK")
</pallas_src>

<mosaic_0001>
module attributes {stable_mosaic.version = 11 : i64} {
  func.func @_deconv_stats_kernel(%arg0: i32, %arg1: memref<16x8x8xf32, #tpu.memory_space<vmem>>, %arg2: memref<8x16xf32, #tpu.memory_space<vmem>>, %arg3: memref<16x2x8x8xf32, #tpu.memory_space<vmem>>, %arg4: memref<1x2x16xf32, #tpu.memory_space<vmem>>) attributes {dimension_semantics = [#tpu.dimension_semantics<parallel>], iteration_bounds = array<i64: 1>, scalar_prefetch = 0 : i64, scratch_operands = 0 : i64, tpu.core_type = #tpu.core_type<tc>, window_params = [{transform_indices = @transform_0, window_bounds = array<i64: 16, 8, 8>}, {pipeline_mode = #tpu.pipeline_mode<synchronous>, transform_indices = @transform_1, window_bounds = array<i64: 8, 16>}, {transform_indices = @transform_2, window_bounds = array<i64: 16, 2, 8, 8>}, {transform_indices = @transform_3, window_bounds = array<i64: 1, 2, 16>}]} {
    %c0 = arith.constant 0 : index
    %c0_0 = arith.constant 0 : index
    %c0_1 = arith.constant 0 : index
    %0 = vector.load %arg1[%c0, %c0_0, %c0_1] : memref<16x8x8xf32, #tpu.memory_space<vmem>>, vector<16x8x8xf32>
    %1 = vector.shape_cast %0 : vector<16x8x8xf32> to vector<128x8xf32>
    %c0_2 = arith.constant 0 : index
    %c0_3 = arith.constant 0 : index
    %2 = vector.load %arg2[%c0_2, %c0_3] : memref<8x16xf32, #tpu.memory_space<vmem>>, vector<8x16xf32>
    %cst = arith.constant dense<0.000000e+00> : vector<128x16xf32>
    %3 = tpu.matmul %1, %2, %cst {dimension_numbers = #tpu.dot_dimension_numbers<[1], [0], [0], [1], [0, 0, 1, 1], [], []>} : vector<128x8xf32>, vector<8x16xf32>, vector<128x16xf32> -> vector<128x16xf32>
    %4 = vector.extract_strided_slice %3 {offsets = [0, 0], sizes = [128, 8], strides = [1, 1]} : vector<128x16xf32> to vector<128x8xf32>
    %5 = vector.shape_cast %4 : vector<128x8xf32> to vector<16x1x8x8xf32>
    %c0_4 = arith.constant 0 : index
    %c0_5 = arith.constant 0 : index
    %c0_6 = arith.constant 0 : index
    %c0_7 = arith.constant 0 : index
    %6 = vector.load %arg3[%c0_4, %c0_5, %c0_6, %c0_7] : memref<16x2x8x8xf32, #tpu.memory_space<vmem>>, vector<16x1x8x8xf32>
    tpu.vector_store %arg3[%c0_4, %c0_5, %c0_6, %c0_7], %5 {strides = array<i32>} : memref<16x2x8x8xf32, #tpu.memory_space<vmem>>, vector<16x1x8x8xf32>,
    %7 = vector.extract_strided_slice %3 {offsets = [0, 8], sizes = [128, 8], strides = [1, 1]} : vector<128x16xf32> to vector<128x8xf32>
    %8 = vector.shape_cast %7 : vector<128x8xf32> to vector<16x1x8x8xf32>
    %c0_8 = arith.constant 0 : index
    %c1 = arith.constant 1 : index
    %c0_9 = arith.constant 0 : index
    %c0_10 = arith.constant 0 : index
    %9 = vector.load %arg3[%c0_8, %c1, %c0_9, %c0_10] : memref<16x2x8x8xf32, #tpu.memory_space<vmem>>, vector<16x1x8x8xf32>
    tpu.vector_store %arg3[%c0_8, %c1, %c0_9, %c0_10], %8 {strides = array<i32>} : memref<16x2x8x8xf32, #tpu.memory_space<vmem>>, vector<16x1x8x8xf32>,
    %cst_11 = arith.constant dense<0.000000e+00> : vector<16xf32>
    %10 = vector.multi_reduction <add>, %3, %cst_11 [0] : vector<128x16xf32> to vector<16xf32>
    %11 = vector.shape_cast %10 : vector<16xf32> to vector<1x16xf32>
    %12 = vector.shape_cast %11 : vector<1x16xf32> to vector<1x1x16xf32>
    %c0_12 = arith.constant 0 : index
    %c0_13 = arith.constant 0 : index
    %c0_14 = arith.constant 0 : index
    %13 = vector.load %arg4[%c0_12, %c0_13, %c0_14] : memref<1x2x16xf32, #tpu.memory_space<vmem>>, vector<1x1x16xf32>
    tpu.vector_store %arg4[%c0_12, %c0_13, %c0_14], %12 {strides = array<i32>} : memref<1x2x16xf32, #tpu.memory_space<vmem>>, vector<1x1x16xf32>,
    %14 = arith.mulf %3, %3 : vector<128x16xf32>
    %cst_15 = arith.constant dense<0.000000e+00> : vector<16xf32>
    %15 = vector.multi_reduction <add>, %14, %cst_15 [0] : vector<128x16xf32> to vector<16xf32>
    %16 = vector.shape_cast %15 : vector<16xf32> to vector<1x16xf32>
    %17 = vector.shape_cast %16 : vector<1x16xf32> to vector<1x1x16xf32>
    %c0_16 = arith.constant 0 : index
    %c1_17 = arith.constant 1 : index
    %c0_18 = arith.constant 0 : index
    %18 = vector.load %arg4[%c0_16, %c1_17, %c0_18] : memref<1x2x16xf32, #tpu.memory_space<vmem>>, vector<1x1x16xf32>
    tpu.vector_store %arg4[%c0_16, %c1_17, %c0_18], %17 {strides = array<i32>} : memref<1x2x16xf32, #tpu.memory_space<vmem>>, vector<1x1x16xf32>,
    return
  }
  func.func @transform_0(%arg0: i32) -> (i32, i32, i32) {
    %c0_i32 = arith.constant 0 : i32
    %c0_i32_0 = arith.constant 0 : i32
    %c0_i32_1 = arith.constant 0 : i32
    return %arg0, %c0_i32, %c0_i32_0 : i32, i32, i32
  }
  func.func @transform_1(%arg0: i32) -> (i32, i32) {
    %c0_i32 = arith.constant 0 : i32
    %c0_i32_0 = arith.constant 0 : i32
    %c0_i32_1 = arith.constant 0 : i32
    return %c0_i32, %c0_i32_0 : i32, i32
  }
  func.func @transform_2(%arg0: i32) -> (i32, i32, i32, i32) {
    %c0_i32 = arith.constant 0 : i32
    %c0_i32_0 = arith.constant 0 : i32
    %c0_i32_1 = arith.constant 0 : i32
    %c0_i32_2 = arith.constant 0 : i32
    return %arg0, %c0_i32, %c0_i32_0, %c0_i32_1 : i32, i32, i32, i32
  }
  func.func @transform_3(%arg0: i32) -> (i32, i32, i32) {
    %c0_i32 = arith.constant 0 : i32
    %c0_i32_0 = arith.constant 0 : i32
    %c0_i32_1 = arith.constant 0 : i32
    return %arg0, %c0_i32, %c0_i32_0 : i32, i32, i32
  }
}

module attributes {stable_mosaic.version = 11 : i64} {
  func.func @_conv1_kernel(%arg0: i32, %arg1: i32, %arg2: memref<1x16x16x4xf32, #tpu.memory_space<vmem>>, %arg3: memref<1x1x16x4xf32, #tpu.memory_space<vmem>>, %arg4: memref<1x1x16x4xf32, #tpu.memory_space<vmem>>, %arg5: memref<1x16x16x4xf32, #tpu.memory_space<vmem>>, %arg6: memref<1x1x16x4xf32, #tpu.memory_space<vmem>>, %arg7: memref<1x1x16x4xf32, #tpu.memory_space<vmem>>, %arg8: memref<2x4xf32, #tpu.memory_space<vmem>>, %arg9: memref<3x24x4xf32, #tpu.memory_space<vmem>>, %arg10: memref<1x16x16x4xf32, #tpu.memory_space<vmem>>, %arg11: memref<1x1x2x4xf32, #tpu.memory_space<vmem>>, %arg12: memref<18x16x24xf32, #tpu.memory_space<vmem>>) attributes {dimension_semantics = [#tpu.dimension_semantics<parallel>, #tpu.dimension_semantics<parallel>], iteration_bounds = array<i64: 2, 1>, scalar_prefetch = 0 : i64, scratch_operands = 1 : i64, tpu.core_type = #tpu.core_type<tc>, window_params = [{transform_indices = @transform_0, window_bounds = array<i64: 1, 16, 16, 4>}, {transform_indices = @transform_1, window_bounds = array<i64: 1, 1, 16, 4>}, {transform_indices = @transform_2, window_bounds = array<i64: 1, 1, 16, 4>}, {transform_indices = @transform_3, window_bounds = array<i64: 1, 16, 16, 4>}, {transform_indices = @transform_4, window_bounds = array<i64: 1, 1, 16, 4>}, {transform_indices = @transform_5, window_bounds = array<i64: 1, 1, 16, 4>}, {pipeline_mode = #tpu.pipeline_mode<synchronous>, transform_indices = @transform_6, window_bounds = array<i64: 2, 4>}, {pipeline_mode = #tpu.pipeline_mode<synchronous>, transform_indices = @transform_7, window_bounds = array<i64: 3, 24, 4>}, {transform_indices = @transform_8, window_bounds = array<i64: 1, 16, 16, 4>}, {transform_indices = @transform_9, window_bounds = array<i64: 1, 1, 2, 4>}]} {
    %c0 = arith.constant 0 : index
    %c0_0 = arith.constant 0 : index
    %c0_1 = arith.constant 0 : index
    %c0_2 = arith.constant 0 : index
    %0 = vector.load %arg3[%c0, %c0_0, %c0_1, %c0_2] : memref<1x1x16x4xf32, #tpu.memory_space<vmem>>, vector<1x1x16x4xf32>
    %c0_3 = arith.constant 0 : index
    %c0_4 = arith.constant 0 : index
    %c0_5 = arith.constant 0 : index
    %c0_6 = arith.constant 0 : index
    %1 = vector.load %arg2[%c0_3, %c0_4, %c0_5, %c0_6] : memref<1x16x16x4xf32, #tpu.memory_space<vmem>>, vector<1x16x16x4xf32>
    %c0_7 = arith.constant 0 : index
    %c0_8 = arith.constant 0 : index
    %c0_9 = arith.constant 0 : index
    %c0_10 = arith.constant 0 : index
    %2 = vector.load %arg4[%c0_7, %c0_8, %c0_9, %c0_10] : memref<1x1x16x4xf32, #tpu.memory_space<vmem>>, vector<1x1x16x4xf32>
    %3 = tpu.concatenate %0, %1, %2 in 1 : vector<1x1x16x4xf32>, vector<1x16x16x4xf32>, vector<1x1x16x4xf32> -> vector<1x18x16x4xf32>
    %c0_11 = arith.constant 0 : index
    %c0_12 = arith.constant 0 : index
    %c0_13 = arith.constant 0 : index
    %c0_14 = arith.constant 0 : index
    %4 = vector.load %arg6[%c0_11, %c0_12, %c0_13, %c0_14] : memref<1x1x16x4xf32, #tpu.memory_space<vmem>>, vector<1x1x16x4xf32>
    %c0_15 = arith.constant 0 : index
    %c0_16 = arith.constant 0 : index
    %c0_17 = arith.constant 0 : index
    %c0_18 = arith.constant 0 : index
    %5 = vector.load %arg5[%c0_15, %c0_16, %c0_17, %c0_18] : memref<1x16x16x4xf32, #tpu.memory_space<vmem>>, vector<1x16x16x4xf32>
    %c0_19 = arith.constant 0 : index
    %c0_20 = arith.constant 0 : index
    %c0_21 = arith.constant 0 : index
    %c0_22 = arith.constant 0 : index
    %6 = vector.load %arg7[%c0_19, %c0_20, %c0_21, %c0_22] : memref<1x1x16x4xf32, #tpu.memory_space<vmem>>, vector<1x1x16x4xf32>
    %7 = tpu.concatenate %4, %5, %6 in 1 : vector<1x1x16x4xf32>, vector<1x16x16x4xf32>, vector<1x1x16x4xf32> -> vector<1x18x16x4xf32>
    %8 = vector.shape_cast %3 : vector<1x18x16x4xf32> to vector<18x16x4xf32>
    %9 = vector.shape_cast %7 : vector<1x18x16x4xf32> to vector<18x16x4xf32>
    %c0_23 = arith.constant 0 : index
    %c0_24 = arith.constant 0 : index
    %10 = vector.load %arg8[%c0_23, %c0_24] : memref<2x4xf32, #tpu.memory_space<vmem>>, vector<1x4xf32>
    %11 = vector.shape_cast %10 : vector<1x4xf32> to vector<1x1x4xf32>
    %c1 = arith.constant 1 : index
    %c0_25 = arith.constant 0 : index
    %12 = vector.load %arg8[%c1, %c0_25] : memref<2x4xf32, #tpu.memory_space<vmem>>, vector<1x4xf32>
    %13 = vector.shape_cast %12 : vector<1x4xf32> to vector<1x1x4xf32>
    %14 = vector.broadcast %11 : vector<1x1x4xf32> to vector<18x16x4xf32>
    %15 = arith.mulf %8, %14 : vector<18x16x4xf32>
    %16 = vector.broadcast %13 : vector<1x1x4xf32> to vector<18x16x4xf32>
    %17 = arith.addf %15, %16 : vector<18x16x4xf32>
    %cst = arith.constant 0.000000e+00 : f32
    %18 = vector.broadcast %cst : f32 to vector<18x16x4xf32>
    %19 = arith.maximumf %17, %18 : vector<18x16x4xf32>
    %20 = tpu.concatenate %19, %9 in 2 : vector<18x16x4xf32>, vector<18x16x4xf32> -> vector<18x16x8xf32>
    %c16_i32 = arith.constant 16 : i32
    %21 = arith.muli %arg1, %c16_i32 : i32
    %c1_i32 = arith.constant 1 : i32
    %22 = arith.subi %21, %c1_i32 : i32
    %23 = tpu.iota {dimensions = array<i32: 0>} : vector<18x1x1xi32>
    %24 = vector.broadcast %22 : i32 to vector<18x1x1xi32>
    %25 = arith.addi %24, %23 : vector<18x1x1xi32>
    %c0_i32 = arith.constant 0 : i32
    %26 = vector.broadcast %c0_i32 : i32 to vector<18x1x1xi32>
    %27 = arith.cmpi sge, %25, %26 : vector<18x1x1xi32>
    %c16_i32_26 = arith.constant 16 : i32
    %28 = vector.broadcast %c16_i32_26 : i32 to vector<18x1x1xi32>
    %29 = arith.cmpi slt, %25, %28 : vector<18x1x1xi32>
    %30 = arith.andi %27, %29 : vector<18x1x1xi1>
    %cst_27 = arith.constant 0.000000e+00 : f32
    %31 = vector.shape_cast %30 : vector<18x1x1xi1> to vector<18x1x1xi1>
    %32 = vector.broadcast %31 : vector<18x1x1xi1> to vector<18x16x8xi1>
    %33 = vector.broadcast %cst_27 : f32 to vector<18x16x8xf32>
    %34 = arith.select %32, %20, %33 : vector<18x16x8xi1>, vector<18x16x8xf32>
    %cst_28 = arith.constant 0.000000e+00 : f32
    %35 = vector.broadcast %cst_28 : f32 to vector<18x1x8xf32>
    %36 = vector.extract_strided_slice %34 {offsets = [0, 0, 0], sizes = [18, 15, 8], strides = [1, 1, 1]} : vector<18x16x8xf32> to vector<18x15x8xf32>
    %37 = tpu.concatenate %35, %36 in 1 : vector<18x1x8xf32>, vector<18x15x8xf32> -> vector<18x16x8xf32>
    %38 = vector.extract_strided_slice %34 {offsets = [0, 1, 0], sizes = [18, 15, 8], strides = [1, 1, 1]} : vector<18x16x8xf32> to vector<18x15x8xf32>
    %39 = tpu.concatenate %38, %35 in 1 : vector<18x15x8xf32>, vector<18x1x8xf32> -> vector<18x16x8xf32>
    %40 = tpu.concatenate %37, %34, %39 in 2 : vector<18x16x8xf32>, vector<18x16x8xf32>, vector<18x16x8xf32> -> vector<18x16x24xf32>
    %c0_29 = arith.constant 0 : index
    %c0_30 = arith.constant 0 : index
    %c0_31 = arith.constant 0 : index
    %41 = vector.load %arg12[%c0_29, %c0_30, %c0_31] : memref<18x16x24xf32, #tpu.memory_space<vmem>>, vector<18x16x24xf32>
    tpu.vector_store %arg12[%c0_29, %c0_30, %c0_31], %40 {strides = array<i32>} : memref<18x16x24xf32, #tpu.memory_space<vmem>>, vector<18x16x24xf32>,
    %c0_32 = arith.constant 0 : index
    %c0_33 = arith.constant 0 : index
    %c0_34 = arith.constant 0 : index
    %42 = vector.load %arg12[%c0_32, %c0_33, %c0_34] : memref<18x16x24xf32, #tpu.memory_space<vmem>>, vector<16x16x24xf32>
    %43 = vector.shape_cast %42 : vector<16x16x24xf32> to vector<256x24xf32>
    %c0_35 = arith.constant 0 : index
    %c0_36 = arith.constant 0 : index
    %c0_37 = arith.constant 0 : index
    %44 = vector.load %arg9[%c0_35, %c0_36, %c0_37] : memref<3x24x4xf32, #tpu.memory_space<vmem>>, vector<1x24x4xf32>
    %45 = vector.shape_cast %44 : vector<1x24x4xf32> to vector<24x4xf32>
    %cst_38 = arith.constant dense<0.000000e+00> : vector<256x4xf32>
    %46 = tpu.matmul %43, %45, %cst_38 {dimension_numbers = #tpu.dot_dimension_numbers<[1], [0], [0], [1], [0, 0, 1, 1], [], []>} : vector<256x24xf32>, vector<24x4xf32>, vector<256x4xf32> -> vector<256x4xf32>
    %c1_39 = arith.constant 1 : index
    %c0_40 = arith.constant 0 : index
    %c0_41 = arith.constant 0 : index
    %47 = vector.load %arg12[%c1_39, %c0_40, %c0_41] : memref<18x16x24xf32, #tpu.memory_space<vmem>>, vector<16x16x24xf32>
    %48 = vector.shape_cast %47 : vector<16x16x24xf32> to vector<256x24xf32>
    %c1_42 = arith.constant 1 : index
    %c0_43 = arith.constant 0 : index
    %c0_44 = arith.constant 0 : index
    %49 = vector.load %arg9[%c1_42, %c0_43, %c0_44] : memref<3x24x4xf32, #tpu.memory_space<vmem>>, vector<1x24x4xf32>
    %50 = vector.shape_cast %49 : vector<1x24x4xf32> to vector<24x4xf32>
    %cst_45 = arith.constant dense<0.000000e+00> : vector<256x4xf32>
    %51 = tpu.matmul %48, %50, %cst_45 {dimension_numbers = #tpu.dot_dimension_numbers<[1], [0], [0], [1], [0, 0, 1, 1], [], []>} : vector<256x24xf32>, vector<24x4xf32>, vector<256x4xf32> -> vector<256x4xf32>
    %52 = arith.addf %46, %51 : vector<256x4xf32>
    %c2 = arith.constant 2 : index
    %c0_46 = arith.constant 0 : index
    %c0_47 = arith.constant 0 : index
    %53 = vector.load %arg12[%c2, %c0_46, %c0_47] : memref<18x16x24xf32, #tpu.memory_space<vmem>>, vector<16x16x24xf32>
    %54 = vector.shape_cast %53 : vector<16x16x24xf32> to vector<256x24xf32>
    %c2_48 = arith.constant 2 : index
    %c0_49 = arith.constant 0 : index
    %c0_50 = arith.constant 0 : index
    %55 = vector.load %arg9[%c2_48, %c0_49, %c0_50] : memref<3x24x4xf32, #tpu.memory_space<vmem>>, vector<1x24x4xf32>
    %56 = vector.shape_cast %55 : vector<1x24x4xf32> to vector<24x4xf32>
    %cst_51 = arith.constant dense<0.000000e+00> : vector<256x4xf32>
    %57 = tpu.matmul %54, %56, %cst_51 {dimension_numbers = #tpu.dot_dimension_numbers<[1], [0], [0], [1], [0, 0, 1, 1], [], []>} : vector<256x24xf32>, vector<24x4xf32>, vector<256x4xf32> -> vector<256x4xf32>
    %58 = arith.addf %52, %57 : vector<256x4xf32>
    %59 = vector.shape_cast %58 : vector<256x4xf32> to vector<1x16x16x4xf32>
    %c0_52 = arith.constant 0 : index
    %c0_53 = arith.constant 0 : index
    %c0_54 = arith.constant 0 : index
    %c0_55 = arith.constant 0 : index
    %60 = vector.load %arg10[%c0_52, %c0_53, %c0_54, %c0_55] : memref<1x16x16x4xf32, #tpu.memory_space<vmem>>, vector<1x16x16x4xf32>
    tpu.vector_store %arg10[%c0_52, %c0_53, %c0_54, %c0_55], %59 {strides = array<i32>} : memref<1x16x16x4xf32, #tpu.memory_space<vmem>>, vector<1x16x16x4xf32>,
    %cst_56 = arith.constant dense<0.000000e+00> : vector<4xf32>
    %61 = vector.multi_reduction <add>, %58, %cst_56 [0] : vector<256x4xf32> to vector<4xf32>
    %62 = vector.shape_cast %61 : vector<4xf32> to vector<1x1x1x4xf32>
    %c0_57 = arith.constant 0 : index
    %c0_58 = arith.constant 0 : index
    %c0_59 = arith.constant 0 : index
    %c0_60 = arith.constant 0 : index
    %63 = vector.load %arg11[%c0_57, %c0_58, %c0_59, %c0_60] : memref<1x1x2x4xf32, #tpu.memory_space<vmem>>, vector<1x1x1x4xf32>
    tpu.vector_store %arg11[%c0_57, %c0_58, %c0_59, %c0_60], %62 {strides = array<i32>} : memref<1x1x2x4xf32, #tpu.memory_space<vmem>>, vector<1x1x1x4xf32>,
    %64 = arith.mulf %58, %58 : vector<256x4xf32>
    %cst_61 = arith.constant dense<0.000000e+00> : vector<4xf32>
    %65 = vector.multi_reduction <add>, %64, %cst_61 [0] : vector<256x4xf32> to vector<4xf32>
    %66 = vector.shape_cast %65 : vector<4xf32> to vector<1x1x1x4xf32>
    %c0_62 = arith.constant 0 : index
    %c0_63 = arith.constant 0 : index
    %c1_64 = arith.constant 1 : index
    %c0_65 = arith.constant 0 : index
    %67 = vector.load %arg11[%c0_62, %c0_63, %c1_64, %c0_65] : memref<1x1x2x4xf32, #tpu.memory_space<vmem>>, vector<1x1x1x4xf32>
    tpu.vector_store %arg11[%c0_62, %c0_63, %c1_64, %c0_65], %66 {strides = array<i32>} : memref<1x1x2x4xf32, #tpu.memory_space<vmem>>, vector<1x1x1x4xf32>,
    return
  }
  func.func @transform_0(%arg0: i32, %arg1: i32) -> (i32, i32, i32, i32) {
    %c0_i32 = arith.constant 0 : i32
    %c0_i32_0 = arith.constant 0 : i32
    %c0_i32_1 = arith.constant 0 : i32
    return %arg0, %arg1, %c0_i32, %c0_i32_0 : i32, i32, i32, i32
  }
  func.func @transform_1(%arg0: i32, %arg1: i32) -> (i32, i32, i32, i32) {
    %c16_i32 = arith.constant 16 : i32
    %0 = arith.muli %arg1, %c16_i32 : i32
    %c1_i32 = arith.constant 1 : i32
    %1 = arith.subi %0, %c1_i32 : i32
    %c0_i32 = arith.constant 0 : i32
    %2 = arith.maxsi %1, %c0_i32 : i32
    %c0_i32_0 = arith.constant 0 : i32
    %c0_i32_1 = arith.constant 0 : i32
    %c0_i32_2 = arith.constant 0 : i32
    return %arg0, %2, %c0_i32_0, %c0_i32_1 : i32, i32, i32, i32
  }
  func.func @transform_2(%arg0: i32, %arg1: i32) -> (i32, i32, i32, i32) {
    %c16_i32 = arith.constant 16 : i32
    %0 = arith.muli %arg1, %c16_i32 : i32
    %c16_i32_0 = arith.constant 16 : i32
    %1 = arith.addi %0, %c16_i32_0 : i32
    %c15_i32 = arith.constant 15 : i32
    %2 = arith.minsi %1, %c15_i32 : i32
    %c0_i32 = arith.constant 0 : i32
    %c0_i32_1 = arith.constant 0 : i32
    %c0_i32_2 = arith.constant 0 : i32
    return %arg0, %2, %c0_i32, %c0_i32_1 : i32, i32, i32, i32
  }
  func.func @transform_3(%arg0: i32, %arg1: i32) -> (i32, i32, i32, i32) {
    %c0_i32 = arith.constant 0 : i32
    %c0_i32_0 = arith.constant 0 : i32
    %c0_i32_1 = arith.constant 0 : i32
    return %arg0, %arg1, %c0_i32, %c0_i32_0 : i32, i32, i32, i32
  }
  func.func @transform_4(%arg0: i32, %arg1: i32) -> (i32, i32, i32, i32) {
    %c16_i32 = arith.constant 16 : i32
    %0 = arith.muli %arg1, %c16_i32 : i32
    %c1_i32 = arith.constant 1 : i32
    %1 = arith.subi %0, %c1_i32 : i32
    %c0_i32 = arith.constant 0 : i32
    %2 = arith.maxsi %1, %c0_i32 : i32
    %c0_i32_0 = arith.constant 0 : i32
    %c0_i32_1 = arith.constant 0 : i32
    %c0_i32_2 = arith.constant 0 : i32
    return %arg0, %2, %c0_i32_0, %c0_i32_1 : i32, i32, i32, i32
  }
  func.func @transform_5(%arg0: i32, %arg1: i32) -> (i32, i32, i32, i32) {
    %c16_i32 = arith.constant 16 : i32
    %0 = arith.muli %arg1, %c16_i32 : i32
    %c16_i32_0 = arith.constant 16 : i32
    %1 = arith.addi %0, %c16_i32_0 : i32
    %c15_i32 = arith.constant 15 : i32
    %2 = arith.minsi %1, %c15_i32 : i32
    %c0_i32 = arith.constant 0 : i32
    %c0_i32_1 = arith.constant 0 : i32
    %c0_i32_2 = arith.constant 0 : i32
    return %arg0, %2, %c0_i32, %c0_i32_1 : i32, i32, i32, i32
  }
  func.func @transform_6(%arg0: i32, %arg1: i32) -> (i32, i32) {
    %c0_i32 = arith.constant 0 : i32
    %c0_i32_0 = arith.constant 0 : i32
    %c0_i32_1 = arith.constant 0 : i32
    return %c0_i32, %c0_i32_0 : i32, i32
  }
  func.func @transform_7(%arg0: i32, %arg1: i32) -> (i32, i32, i32) {
    %c0_i32 = arith.constant 0 : i32
    %c0_i32_0 = arith.constant 0 : i32
    %c0_i32_1 = arith.constant 0 : i32
    %c0_i32_2 = arith.constant 0 : i32
    return %c0_i32, %c0_i32_0, %c0_i32_1 : i32, i32, i32
  }
  func.func @transform_8(%arg0: i32, %arg1: i32) -> (i32, i32, i32, i32) {
    %c0_i32 = arith.constant 0 : i32
    %c0_i32_0 = arith.constant 0 : i32
    %c0_i32_1 = arith.constant 0 : i32
    return %arg0, %arg1, %c0_i32, %c0_i32_0 : i32, i32, i32, i32
  }
  func.func @transform_9(%arg0: i32, %arg1: i32) -> (i32, i32, i32, i32) {
    %c0_i32 = arith.constant 0 : i32
    %c0_i32_0 = arith.constant 0 : i32
    %c0_i32_1 = arith.constant 0 : i32
    return %arg0, %arg1, %c0_i32, %c0_i32_0 : i32, i32, i32, i32
  }
}

module attributes {stable_mosaic.version = 11 : i64} {
  func.func @_conv2_kernel(%arg0: i32, %arg1: i32, %arg2: memref<1x16x16x4xf32, #tpu.memory_space<vmem>>, %arg3: memref<1x1x16x4xf32, #tpu.memory_space<vmem>>, %arg4: memref<1x1x16x4xf32, #tpu.memory_space<vmem>>, %arg5: memref<2x4xf32, #tpu.memory_space<vmem>>, %arg6: memref<3x12x4xf32, #tpu.memory_space<vmem>>, %arg7: memref<1x16x16x4xf32, #tpu.memory_space<vmem>>, %arg8: memref<1x1x2x4xf32, #tpu.memory_space<vmem>>, %arg9: memref<18x16x12xf32, #tpu.memory_space<vmem>>) attributes {dimension_semantics = [#tpu.dimension_semantics<parallel>, #tpu.dimension_semantics<parallel>], iteration_bounds = array<i64: 2, 1>, scalar_prefetch = 0 : i64, scratch_operands = 1 : i64, tpu.core_type = #tpu.core_type<tc>, window_params = [{transform_indices = @transform_0, window_bounds = array<i64: 1, 16, 16, 4>}, {transform_indices = @transform_1, window_bounds = array<i64: 1, 1, 16, 4>}, {transform_indices = @transform_2, window_bounds = array<i64: 1, 1, 16, 4>}, {pipeline_mode = #tpu.pipeline_mode<synchronous>, transform_indices = @transform_3, window_bounds = array<i64: 2, 4>}, {pipeline_mode = #tpu.pipeline_mode<synchronous>, transform_indices = @transform_4, window_bounds = array<i64: 3, 12, 4>}, {transform_indices = @transform_5, window_bounds = array<i64: 1, 16, 16, 4>}, {transform_indices = @transform_6, window_bounds = array<i64: 1, 1, 2, 4>}]} {
    %c0 = arith.constant 0 : index
    %c0_0 = arith.constant 0 : index
    %c0_1 = arith.constant 0 : index
    %c0_2 = arith.constant 0 : index
    %0 = vector.load %arg3[%c0, %c0_0, %c0_1, %c0_2] : memref<1x1x16x4xf32, #tpu.memory_space<vmem>>, vector<1x1x16x4xf32>
    %c0_3 = arith.constant 0 : index
    %c0_4 = arith.constant 0 : index
    %c0_5 = arith.constant 0 : index
    %c0_6 = arith.constant 0 : index
    %1 = vector.load %arg2[%c0_3, %c0_4, %c0_5, %c0_6] : memref<1x16x16x4xf32, #tpu.memory_space<vmem>>, vector<1x16x16x4xf32>
    %c0_7 = arith.constant 0 : index
    %c0_8 = arith.constant 0 : index
    %c0_9 = arith.constant 0 : index
    %c0_10 = arith.constant 0 : index
    %2 = vector.load %arg4[%c0_7, %c0_8, %c0_9, %c0_10] : memref<1x1x16x4xf32, #tpu.memory_space<vmem>>, vector<1x1x16x4xf32>
    %3 = tpu.concatenate %0, %1, %2 in 1 : vector<1x1x16x4xf32>, vector<1x16x16x4xf32>, vector<1x1x16x4xf32> -> vector<1x18x16x4xf32>
    %4 = vector.shape_cast %3 : vector<1x18x16x4xf32> to vector<18x16x4xf32>
    %c0_11 = arith.constant 0 : index
    %c0_12 = arith.constant 0 : index
    %5 = vector.load %arg5[%c0_11, %c0_12] : memref<2x4xf32, #tpu.memory_space<vmem>>, vector<1x4xf32>
    %6 = vector.shape_cast %5 : vector<1x4xf32> to vector<1x1x4xf32>
    %c1 = arith.constant 1 : index
    %c0_13 = arith.constant 0 : index
    %7 = vector.load %arg5[%c1, %c0_13] : memref<2x4xf32, #tpu.memory_space<vmem>>, vector<1x4xf32>
    %8 = vector.shape_cast %7 : vector<1x4xf32> to vector<1x1x4xf32>
    %9 = vector.broadcast %6 : vector<1x1x4xf32> to vector<18x16x4xf32>
    %10 = arith.mulf %4, %9 : vector<18x16x4xf32>
    %11 = vector.broadcast %8 : vector<1x1x4xf32> to vector<18x16x4xf32>
    %12 = arith.addf %10, %11 : vector<18x16x4xf32>
    %cst = arith.constant 0.000000e+00 : f32
    %13 = vector.broadcast %cst : f32 to vector<18x16x4xf32>
    %14 = arith.maximumf %12, %13 : vector<18x16x4xf32>
    %c16_i32 = arith.constant 16 : i32
    %15 = arith.muli %arg1, %c16_i32 : i32
    %c1_i32 = arith.constant 1 : i32
    %16 = arith.subi %15, %c1_i32 : i32
    %17 = tpu.iota {dimensions = array<i32: 0>} : vector<18x1x1xi32>
    %18 = vector.broadcast %16 : i32 to vector<18x1x1xi32>
    %19 = arith.addi %18, %17 : vector<18x1x1xi32>
    %c0_i32 = arith.constant 0 : i32
    %20 = vector.broadcast %c0_i32 : i32 to vector<18x1x1xi32>
    %21 = arith.cmpi sge, %19, %20 : vector<18x1x1xi32>
    %c16_i32_14 = arith.constant 16 : i32
    %22 = vector.broadcast %c16_i32_14 : i32 to vector<18x1x1xi32>
    %23 = arith.cmpi slt, %19, %22 : vector<18x1x1xi32>
    %24 = arith.andi %21, %23 : vector<18x1x1xi1>
    %cst_15 = arith.constant 0.000000e+00 : f32
    %25 = vector.shape_cast %24 : vector<18x1x1xi1> to vector<18x1x1xi1>
    %26 = vector.broadcast %25 : vector<18x1x1xi1> to vector<18x16x4xi1>
    %27 = vector.broadcast %cst_15 : f32 to vector<18x16x4xf32>
    %28 = arith.select %26, %14, %27 : vector<18x16x4xi1>, vector<18x16x4xf32>
    %cst_16 = arith.constant 0.000000e+00 : f32
    %29 = vector.broadcast %cst_16 : f32 to vector<18x1x4xf32>
    %30 = vector.extract_strided_slice %28 {offsets = [0, 0, 0], sizes = [18, 15, 4], strides = [1, 1, 1]} : vector<18x16x4xf32> to vector<18x15x4xf32>
    %31 = tpu.concatenate %29, %30 in 1 : vector<18x1x4xf32>, vector<18x15x4xf32> -> vector<18x16x4xf32>
    %32 = vector.extract_strided_slice %28 {offsets = [0, 1, 0], sizes = [18, 15, 4], strides = [1, 1, 1]} : vector<18x16x4xf32> to vector<18x15x4xf32>
    %33 = tpu.concatenate %32, %29 in 1 : vector<18x15x4xf32>, vector<18x1x4xf32> -> vector<18x16x4xf32>
    %34 = tpu.concatenate %31, %28, %33 in 2 : vector<18x16x4xf32>, vector<18x16x4xf32>, vector<18x16x4xf32> -> vector<18x16x12xf32>
    %c0_17 = arith.constant 0 : index
    %c0_18 = arith.constant 0 : index
    %c0_19 = arith.constant 0 : index
    %35 = vector.load %arg9[%c0_17, %c0_18, %c0_19] : memref<18x16x12xf32, #tpu.memory_space<vmem>>, vector<18x16x12xf32>
    tpu.vector_store %arg9[%c0_17, %c0_18, %c0_19], %34 {strides = array<i32>} : memref<18x16x12xf32, #tpu.memory_space<vmem>>, vector<18x16x12xf32>,
    %c0_20 = arith.constant 0 : index
    %c0_21 = arith.constant 0 : index
    %c0_22 = arith.constant 0 : index
    %36 = vector.load %arg9[%c0_20, %c0_21, %c0_22] : memref<18x16x12xf32, #tpu.memory_space<vmem>>, vector<16x16x12xf32>
    %37 = vector.shape_cast %36 : vector<16x16x12xf32> to vector<256x12xf32>
    %c0_23 = arith.constant 0 : index
    %c0_24 = arith.constant 0 : index
    %c0_25 = arith.constant 0 : index
    %38 = vector.load %arg6[%c0_23, %c0_24, %c0_25] : memref<3x12x4xf32, #tpu.memory_space<vmem>>, vector<1x12x4xf32>
    %39 = vector.shape_cast %38 : vector<1x12x4xf32> to vector<12x4xf32>
    %cst_26 = arith.constant dense<0.000000e+00> : vector<256x4xf32>
    %40 = tpu.matmul %37, %39, %cst_26 {dimension_numbers = #tpu.dot_dimension_numbers<[1], [0], [0], [1], [0, 0, 1, 1], [], []>} : vector<256x12xf32>, vector<12x4xf32>, vector<256x4xf32> -> vector<256x4xf32>
    %c1_27 = arith.constant 1 : index
    %c0_28 = arith.constant 0 : index
    %c0_29 = arith.constant 0 : index
    %41 = vector.load %arg9[%c1_27, %c0_28, %c0_29] : memref<18x16x12xf32, #tpu.memory_space<vmem>>, vector<16x16x12xf32>
    %42 = vector.shape_cast %41 : vector<16x16x12xf32> to vector<256x12xf32>
    %c1_30 = arith.constant 1 : index
    %c0_31 = arith.constant 0 : index
    %c0_32 = arith.constant 0 : index
    %43 = vector.load %arg6[%c1_30, %c0_31, %c0_32] : memref<3x12x4xf32, #tpu.memory_space<vmem>>, vector<1x12x4xf32>
    %44 = vector.shape_cast %43 : vector<1x12x4xf32> to vector<12x4xf32>
    %cst_33 = arith.constant dense<0.000000e+00> : vector<256x4xf32>
    %45 = tpu.matmul %42, %44, %cst_33 {dimension_numbers = #tpu.dot_dimension_numbers<[1], [0], [0], [1], [0, 0, 1, 1], [], []>} : vector<256x12xf32>, vector<12x4xf32>, vector<256x4xf32> -> vector<256x4xf32>
    %46 = arith.addf %40, %45 : vector<256x4xf32>
    %c2 = arith.constant 2 : index
    %c0_34 = arith.constant 0 : index
    %c0_35 = arith.constant 0 : index
    %47 = vector.load %arg9[%c2, %c0_34, %c0_35] : memref<18x16x12xf32, #tpu.memory_space<vmem>>, vector<16x16x12xf32>
    %48 = vector.shape_cast %47 : vector<16x16x12xf32> to vector<256x12xf32>
    %c2_36 = arith.constant 2 : index
    %c0_37 = arith.constant 0 : index
    %c0_38 = arith.constant 0 : index
    %49 = vector.load %arg6[%c2_36, %c0_37, %c0_38] : memref<3x12x4xf32, #tpu.memory_space<vmem>>, vector<1x12x4xf32>
    %50 = vector.shape_cast %49 : vector<1x12x4xf32> to vector<12x4xf32>
    %cst_39 = arith.constant dense<0.000000e+00> : vector<256x4xf32>
    %51 = tpu.matmul %48, %50, %cst_39 {dimension_numbers = #tpu.dot_dimension_numbers<[1], [0], [0], [1], [0, 0, 1, 1], [], []>} : vector<256x12xf32>, vector<12x4xf32>, vector<256x4xf32> -> vector<256x4xf32>
    %52 = arith.addf %46, %51 : vector<256x4xf32>
    %53 = vector.shape_cast %52 : vector<256x4xf32> to vector<1x16x16x4xf32>
    %c0_40 = arith.constant 0 : index
    %c0_41 = arith.constant 0 : index
    %c0_42 = arith.constant 0 : index
    %c0_43 = arith.constant 0 : index
    %54 = vector.load %arg7[%c0_40, %c0_41, %c0_42, %c0_43] : memref<1x16x16x4xf32, #tpu.memory_space<vmem>>, vector<1x16x16x4xf32>
    tpu.vector_store %arg7[%c0_40, %c0_41, %c0_42, %c0_43], %53 {strides = array<i32>} : memref<1x16x16x4xf32, #tpu.memory_space<vmem>>, vector<1x16x16x4xf32>,
    %cst_44 = arith.constant dense<0.000000e+00> : vector<4xf32>
    %55 = vector.multi_reduction <add>, %52, %cst_44 [0] : vector<256x4xf32> to vector<4xf32>
    %56 = vector.shape_cast %55 : vector<4xf32> to vector<1x1x1x4xf32>
    %c0_45 = arith.constant 0 : index
    %c0_46 = arith.constant 0 : index
    %c0_47 = arith.constant 0 : index
    %c0_48 = arith.constant 0 : index
    %57 = vector.load %arg8[%c0_45, %c0_46, %c0_47, %c0_48] : memref<1x1x2x4xf32, #tpu.memory_space<vmem>>, vector<1x1x1x4xf32>
    tpu.vector_store %arg8[%c0_45, %c0_46, %c0_47, %c0_48], %56 {strides = array<i32>} : memref<1x1x2x4xf32, #tpu.memory_space<vmem>>, vector<1x1x1x4xf32>,
    %58 = arith.mulf %52, %52 : vector<256x4xf32>
    %cst_49 = arith.constant dense<0.000000e+00> : vector<4xf32>
    %59 = vector.multi_reduction <add>, %58, %cst_49 [0] : vector<256x4xf32> to vector<4xf32>
    %60 = vector.shape_cast %59 : vector<4xf32> to vector<1x1x1x4xf32>
    %c0_50 = arith.constant 0 : index
    %c0_51 = arith.constant 0 : index
    %c1_52 = arith.constant 1 : index
    %c0_53 = arith.constant 0 : index
    %61 = vector.load %arg8[%c0_50, %c0_51, %c1_52, %c0_53] : memref<1x1x2x4xf32, #tpu.memory_space<vmem>>, vector<1x1x1x4xf32>
    tpu.vector_store %arg8[%c0_50, %c0_51, %c1_52, %c0_53], %60 {strides = array<i32>} : memref<1x1x2x4xf32, #tpu.memory_space<vmem>>, vector<1x1x1x4xf32>,
    return
  }
  func.func @transform_0(%arg0: i32, %arg1: i32) -> (i32, i32, i32, i32) {
    %c0_i32 = arith.constant 0 : i32
    %c0_i32_0 = arith.constant 0 : i32
    %c0_i32_1 = arith.constant 0 : i32
    return %arg0, %arg1, %c0_i32, %c0_i32_0 : i32, i32, i32, i32
  }
  func.func @transform_1(%arg0: i32, %arg1: i32) -> (i32, i32, i32, i32) {
    %c16_i32 = arith.constant 16 : i32
    %0 = arith.muli %arg1, %c16_i32 : i32
    %c1_i32 = arith.constant 1 : i32
    %1 = arith.subi %0, %c1_i32 : i32
    %c0_i32 = arith.constant 0 : i32
    %2 = arith.maxsi %1, %c0_i32 : i32
    %c0_i32_0 = arith.constant 0 : i32
    %c0_i32_1 = arith.constant 0 : i32
    %c0_i32_2 = arith.constant 0 : i32
    return %arg0, %2, %c0_i32_0, %c0_i32_1 : i32, i32, i32, i32
  }
  func.func @transform_2(%arg0: i32, %arg1: i32) -> (i32, i32, i32, i32) {
    %c16_i32 = arith.constant 16 : i32
    %0 = arith.muli %arg1, %c16_i32 : i32
    %c16_i32_0 = arith.constant 16 : i32
    %1 = arith.addi %0, %c16_i32_0 : i32
    %c15_i32 = arith.constant 15 : i32
    %2 = arith.minsi %1, %c15_i32 : i32
    %c0_i32 = arith.constant 0 : i32
    %c0_i32_1 = arith.constant 0 : i32
    %c0_i32_2 = arith.constant 0 : i32
    return %arg0, %2, %c0_i32, %c0_i32_1 : i32, i32, i32, i32
  }
  func.func @transform_3(%arg0: i32, %arg1: i32) -> (i32, i32) {
    %c0_i32 = arith.constant 0 : i32
    %c0_i32_0 = arith.constant 0 : i32
    %c0_i32_1 = arith.constant 0 : i32
    return %c0_i32, %c0_i32_0 : i32, i32
  }
  func.func @transform_4(%arg0: i32, %arg1: i32) -> (i32, i32, i32) {
    %c0_i32 = arith.constant 0 : i32
    %c0_i32_0 = arith.constant 0 : i32
    %c0_i32_1 = arith.constant 0 : i32
    %c0_i32_2 = arith.constant 0 : i32
    return %c0_i32, %c0_i32_0, %c0_i32_1 : i32, i32, i32
  }
  func.func @transform_5(%arg0: i32, %arg1: i32) -> (i32, i32, i32, i32) {
    %c0_i32 = arith.constant 0 : i32
    %c0_i32_0 = arith.constant 0 : i32
    %c0_i32_1 = arith.constant 0 : i32
    return %arg0, %arg1, %c0_i32, %c0_i32_0 : i32, i32, i32, i32
  }
  func.func @transform_6(%arg0: i32, %arg1: i32) -> (i32, i32, i32, i32) {
    %c0_i32 = arith.constant 0 : i32
    %c0_i32_0 = arith.constant 0 : i32
    %c0_i32_1 = arith.constant 0 : i32
    return %arg0, %arg1, %c0_i32, %c0_i32_0 : i32, i32, i32, i32
  }
}

module attributes {stable_mosaic.version = 11 : i64} {
  func.func @_bn_relu_kernel(%arg0: i32, %arg1: memref<32x16x4xf32, #tpu.memory_space<vmem>>, %arg2: memref<2x4xf32, #tpu.memory_space<vmem>>, %arg3: memref<32x16x4xf32, #tpu.memory_space<vmem>>) attributes {dimension_semantics = [#tpu.dimension_semantics<parallel>], iteration_bounds = array<i64: 1>, scalar_prefetch = 0 : i64, scratch_operands = 0 : i64, tpu.core_type = #tpu.core_type<tc>, window_params = [{transform_indices = @transform_0, window_bounds = array<i64: 32, 16, 4>}, {pipeline_mode = #tpu.pipeline_mode<synchronous>, transform_indices = @transform_1, window_bounds = array<i64: 2, 4>}, {transform_indices = @transform_2, window_bounds = array<i64: 32, 16, 4>}]} {
    %c0 = arith.constant 0 : index
    %c0_0 = arith.constant 0 : index
    %0 = vector.load %arg2[%c0, %c0_0] : memref<2x4xf32, #tpu.memory_space<vmem>>, vector<1x4xf32>
    %1 = vector.shape_cast %0 : vector<1x4xf32> to vector<1x1x4xf32>
    %c1 = arith.constant 1 : index
    %c0_1 = arith.constant 0 : index
    %2 = vector.load %arg2[%c1, %c0_1] : memref<2x4xf32, #tpu.memory_space<vmem>>, vector<1x4xf32>
    %3 = vector.shape_cast %2 : vector<1x4xf32> to vector<1x1x4xf32>
    %c0_2 = arith.constant 0 : index
    %c0_3 = arith.constant 0 : index
    %c0_4 = arith.constant 0 : index
    %4 = vector.load %arg1[%c0_2, %c0_3, %c0_4] : memref<32x16x4xf32, #tpu.memory_space<vmem>>, vector<32x16x4xf32>
    %5 = vector.broadcast %1 : vector<1x1x4xf32> to vector<32x16x4xf32>
    %6 = arith.mulf %4, %5 : vector<32x16x4xf32>
    %7 = vector.broadcast %3 : vector<1x1x4xf32> to vector<32x16x4xf32>
    %8 = arith.addf %6, %7 : vector<32x16x4xf32>
    %cst = arith.constant 0.000000e+00 : f32
    %9 = vector.broadcast %cst : f32 to vector<32x16x4xf32>
    %10 = arith.maximumf %8, %9 : vector<32x16x4xf32>
    %c0_5 = arith.constant 0 : index
    %c0_6 = arith.constant 0 : index
    %c0_7 = arith.constant 0 : index
    %11 = vector.load %arg3[%c0_5, %c0_6, %c0_7] : memref<32x16x4xf32, #tpu.memory_space<vmem>>, vector<32x16x4xf32>
    tpu.vector_store %arg3[%c0_5, %c0_6, %c0_7], %10 {strides = array<i32>} : memref<32x16x4xf32, #tpu.memory_space<vmem>>, vector<32x16x4xf32>,
    return
  }
  func.func @transform_0(%arg0: i32) -> (i32, i32, i32) {
    %c0_i32 = arith.constant 0 : i32
    %c0_i32_0 = arith.constant 0 : i32
    %c0_i32_1 = arith.constant 0 : i32
    return %arg0, %c0_i32, %c0_i32_0 : i32, i32, i32
  }
  func.func @transform_1(%arg0: i32) -> (i32, i32) {
    %c0_i32 = arith.constant 0 : i32
    %c0_i32_0 = arith.constant 0 : i32
    %c0_i32_1 = arith.constant 0 : i32
    return %c0_i32, %c0_i32_0 : i32, i32
  }
  func.func @transform_2(%arg0: i32) -> (i32, i32, i32) {
    %c0_i32 = arith.constant 0 : i32
    %c0_i32_0 = arith.constant 0 : i32
    %c0_i32_1 = arith.constant 0 : i32
    return %arg0, %c0_i32, %c0_i32_0 : i32, i32, i32
  }
}

</mosaic_0001>

<llo_original>
// kernel: _lambda_.4
$region0: #{_lambda_.4}
  #allocation0 [shape = 'u32[]', space=smem, size = 0x4, offset = 0x4, fixed_abs, tag = 'smem constant byte address 0x4 - core index']
  #allocation1 [shape = 'u32[144,128]{1,0:T(1,128)}', space=vmem, size = 0x12000, scoped, tag = 'internal scratch']
  %s0 = inlined_call_operand.vmem [shape: f32[16,8,8], index: 0, kind: input, shape index: {}]
  %s1 = inlined_call_operand.vmem [shape: f32[8,16], index: 1, kind: input, shape index: {}]
  %s2 = inlined_call_operand.vmem [shape: f32[16,2,8,8], index: 2, kind: output, shape index: {0}]
  %s3 = inlined_call_operand.vmem [shape: f32[1,2,16], index: 3, kind: output, shape index: {1}]
  %4 = xla_tuple %s2, %s3
  %s5 = sld [smem:[#allocation0]]
  $region26: #{_lambda_.4} parent=0
    _
  %s7 = ssub.s32 1, %s5
  %s8 = scalar_select 0, %s7, %s5
  // Predicated region
  $region2: #{_lambda_.4} parent=0 // pred_check
    _
  $region3: #{_lambda_.4} parent=0 // pred_check_branch
    %10 = sbr.rel (0) target = $region5
  $region4: #{_lambda_.4} parent=0 // pred_region
    _
  $region5: #{_lambda_.4} parent=0 // pred_fallthru
    _
  // Predicated region
  $region6: #{_lambda_.4} parent=0 // pred_check
    _
  $region7: #{_lambda_.4} parent=0 // pred_check_branch
    %12 = sbr.rel (0) target = $region9
  $region8: #{_lambda_.4} parent=0 // pred_region
    _
  $region9: #{_lambda_.4} parent=0 // pred_fallthru
    _
  %v13 = vld [vmem:[%s0] sm:$0xff]
  %v14 = vld [vmem:[%s0 + $0x8] sm:$0xff]
  %v15 = vld [vmem:[%s0 + $0x10] sm:$0xff]
  %v16 = vld [vmem:[%s0 + $0x18] sm:$0xff]
  %v17 = vld [vmem:[%s0 + $0x20] sm:$0xff]
  %v18 = vld [vmem:[%s0 + $0x28] sm:$0xff]
  %v19 = vld [vmem:[%s0 + $0x30] sm:$0xff]
  %v20 = vld [vmem:[%s0 + $0x38] sm:$0xff]
  %v21 = vld [vmem:[%s0 + $0x40] sm:$0xff]
  %v22 = vld [vmem:[%s0 + $0x48] sm:$0xff]
  %v23 = vld [vmem:[%s0 + $0x50] sm:$0xff]
  %v24 = vld [vmem:[%s0 + $0x58] sm:$0xff]
  %v25 = vld [vmem:[%s0 + $0x60] sm:$0xff]
  %v26 = vld [vmem:[%s0 + $0x68] sm:$0xff]
  %v27 = vld [vmem:[%s0 + $0x70] sm:$0xff]
  %v28 = vld [vmem:[%s0 + $0x78] sm:$0xff]
  %v29 = vld [vmem:[%s1] sm:$0xff]
  %vm30 = vcmask 64512
  %v32 = vsel %vm30, %v13, 0
  %v35 = vsel %vm30, %v14, 0
  %v38 = vsel %vm30, %v15, 0
  %v41 = vsel %vm30, %v16, 0
  %v44 = vsel %vm30, %v17, 0
  %v47 = vsel %vm30, %v18, 0
  %v50 = vsel %vm30, %v19, 0
  %v53 = vsel %vm30, %v20, 0
  %v56 = vsel %vm30, %v21, 0
  %v59 = vsel %vm30, %v22, 0
  %v62 = vsel %vm30, %v23, 0
  %v65 = vsel %vm30, %v24, 0
  %v68 = vsel %vm30, %v25, 0
  %v71 = vsel %vm30, %v26, 0
  %v74 = vsel %vm30, %v27, 0
  %v77 = vsel %vm30, %v28, 0
  %79 = vmatprep.subr.mxu0 0.0
  %80 = vmatpush1.msra.mxu0 %v29
  %81 = vmatprep.subr.mxu0 0.0
  %82 = vmatpush1.msra.mxu0 0.0
  %83 = vmatprep.subr.mxu0 0.0
  %84 = vmatpush1.msra.mxu0 0.0
  %85 = vmatprep.subr.mxu0 0.0
  %86 = vmatpush1.msra.mxu0 0.0
  %87 = vmatprep.subr.mxu0 0.0
  %88 = vmatpush1.msra.mxu0 0.0
  %89 = vmatprep.subr.mxu0 0.0
  %90 = vmatpush1.msra.mxu0 0.0
  %91 = vmatprep.subr.mxu0 0.0
  %92 = vmatpush1.msra.mxu0 0.0
  %93 = vmatprep.subr.mxu0 0.0
  %94 = vmatpush1.msra.mxu0 0.0
  %95 = vmatprep.subr.mxu0 0.0
  %96 = vmatpush1.msra.mxu0 0.0
  %97 = vmatprep.subr.mxu0 0.0
  %98 = vmatpush1.msra.mxu0 0.0
  %99 = vmatprep.subr.mxu0 0.0
  %100 = vmatpush1.msra.mxu0 0.0
  %101 = vmatprep.subr.mxu0 0.0
  %102 = vmatpush1.msra.mxu0 0.0
  %103 = vmatprep.subr.mxu0 0.0
  %104 = vmatpush1.msra.mxu0 0.0
  %105 = vmatprep.subr.mxu0 0.0
  %106 = vmatpush1.msra.mxu0 0.0
  %107 = vmatprep.subr.mxu0 0.0
  %108 = vmatpush1.msra.mxu0 0.0
  %109 = vmatprep.subr.mxu0 0.0
  %110 = vmatpush1.msra.mxu0 0.0
  %111 = vmatprep.subr.mxu0 0.0
  %112 = vmatpush1.msra.mxu0 0.0
  %113 = vmatprep.subr.mxu0 0.0
  %114 = vmatpush1.msra.mxu0 0.0
  %115 = vmatprep.subr.mxu0 0.0
  %116 = vmatpush1.msra.mxu0 0.0
  %117 = vmatprep.subr.mxu0 0.0
  %118 = vmatpush1.msra.mxu0 0.0
  %119 = vmatprep.subr.mxu0 0.0
  %120 = vmatpush1.msra.mxu0 0.0
  %121 = vmatprep.subr.mxu0 0.0
  %122 = vmatpush1.msra.mxu0 0.0
  %123 = vmatprep.subr.mxu0 0.0
  %124 = vmatpush1.msra.mxu0 0.0
  %125 = vmatprep.subr.mxu0 0.0
  %126 = vmatpush1.msra.mxu0 0.0
  %127 = vmatprep.subr.mxu0 0.0
  %128 = vmatpush1.msra.mxu0 0.0
  %129 = vmatprep.subr.mxu0 0.0
  %130 = vmatpush1.msra.mxu0 0.0
  %131 = vmatprep.subr.mxu0 0.0
  %132 = vmatpush1.msra.mxu0 0.0
  %133 = vmatprep.subr.mxu0 0.0
  %134 = vmatpush1.msra.mxu0 0.0
  %135 = vmatprep.subr.mxu0 0.0
  %136 = vmatpush1.msra.mxu0 0.0
  %137 = vmatprep.subr.mxu0 0.0
  %138 = vmatpush1.msra.mxu0 0.0
  %139 = vmatprep.subr.mxu0 0.0
  %140 = vmatpush1.msra.mxu0 0.0
  %141 = vmatprep.subr.mxu0 0.0
  %142 = vmatpush1.msra.mxu0 0.0
  %143 = vmatprep.mubr.f32.mxu0 0.0
  %144 = vmatmul.mubr.f32.gmra.mrb[0].mxu0 %v32
  %v145 = vpop.f32.mrb[0].mxu0
  %v146 = vadd.f32 0.0, %v145
  %v147 = vpop.f32.mrb[0].mxu0
  %148 = vmatprep.mubr.f32.mxu0 0.0
  %149 = vmatmul.mubr.f32.gmra.mrb[0].mxu0 %v35
  %v150 = vpop.f32.mrb[0].mxu0
  %v151 = vadd.f32 0.0, %v150
  %v152 = vpop.f32.mrb[0].mxu0
  %153 = vmatprep.mubr.f32.mxu0 0.0
  %154 = vmatmul.mubr.f32.gmra.mrb[0].mxu0 %v38
  %v155 = vpop.f32.mrb[0].mxu0
  %v156 = vadd.f32 0.0, %v155
  %v157 = vpop.f32.mrb[0].mxu0
  %158 = vmatprep.mubr.f32.mxu0 0.0
  %159 = vmatmul.mubr.f32.gmra.mrb[0].mxu0 %v41
  %v160 = vpop.f32.mrb[0].mxu0
  %v161 = vadd.f32 0.0, %v160
  %v162 = vpop.f32.mrb[0].mxu0
  %163 = vmatprep.mubr.f32.mxu0 0.0
  %164 = vmatmul.mubr.f32.gmra.mrb[0].mxu0 %v44
  %v165 = vpop.f32.mrb[0].mxu0
  %v166 = vadd.f32 0.0, %v165
  %v167 = vpop.f32.mrb[0].mxu0
  %168 = vmatprep.mubr.f32.mxu0 0.0
  %169 = vmatmul.mubr.f32.gmra.mrb[0].mxu0 %v47
  %v170 = vpop.f32.mrb[0].mxu0
  %v171 = vadd.f32 0.0, %v170
  %v172 = vpop.f32.mrb[0].mxu0
  %173 = vmatprep.mubr.f32.mxu0 0.0
  %174 = vmatmul.mubr.f32.gmra.mrb[0].mxu0 %v50
  %v175 = vpop.f32.mrb[0].mxu0
  %v176 = vadd.f32 0.0, %v175
  %v177 = vpop.f32.mrb[0].mxu0
  %178 = vmatprep.mubr.f32.mxu0 0.0
  %179 = vmatmul.mubr.f32.gmra.mrb[0].mxu0 %v53
  %v180 = vpop.f32.mrb[0].mxu0
  %v181 = vadd.f32 0.0, %v180
  %v182 = vpop.f32.mrb[0].mxu0
  %183 = vmatprep.mubr.f32.mxu0 0.0
  %184 = vmatmul.mubr.f32.gmra.mrb[0].mxu0 %v56
  %v185 = vpop.f32.mrb[0].mxu0
  %v186 = vadd.f32 0.0, %v185
  %v187 = vpop.f32.mrb[0].mxu0
  %188 = vmatprep.mubr.f32.mxu0 0.0
  %189 = vmatmul.mubr.f32.gmra.mrb[0].mxu0 %v59
  %v190 = vpop.f32.mrb[0].mxu0
  %v191 = vadd.f32 0.0, %v190
  %v192 = vpop.f32.mrb[0].mxu0
  %193 = vmatprep.mubr.f32.mxu0 0.0
  %194 = vmatmul.mubr.f32.gmra.mrb[0].mxu0 %v62
  %v195 = vpop.f32.mrb[0].mxu0
  %v196 = vadd.f32 0.0, %v195
  %v197 = vpop.f32.mrb[0].mxu0
  %198 = vmatprep.mubr.f32.mxu0 0.0
  %199 = vmatmul.mubr.f32.gmra.mrb[0].mxu0 %v65
  %v200 = vpop.f32.mrb[0].mxu0
  %v201 = vadd.f32 0.0, %v200
  %v202 = vpop.f32.mrb[0].mxu0
  %203 = vmatprep.mubr.f32.mxu0 0.0
  %204 = vmatmul.mubr.f32.gmra.mrb[0].mxu0 %v68
  %v205 = vpop.f32.mrb[0].mxu0
  %v206 = vadd.f32 0.0, %v205
  %v207 = vpop.f32.mrb[0].mxu0
  %208 = vmatprep.mubr.f32.mxu0 0.0
  %209 = vmatmul.mubr.f32.gmra.mrb[0].mxu0 %v71
  %v210 = vpop.f32.mrb[0].mxu0
  %v211 = vadd.f32 0.0, %v210
  %v212 = vpop.f32.mrb[0].mxu0
  %213 = vmatprep.mubr.f32.mxu0 0.0
  %214 = vmatmul.mubr.f32.gmra.mrb[0].mxu0 %v74
  %v215 = vpop.f32.mrb[0].mxu0
  %v216 = vadd.f32 0.0, %v215
  %v217 = vpop.f32.mrb[0].mxu0
  %218 = vmatprep.mubr.f32.mxu0 0.0
  %219 = vmatmul.mubr.f32.gmra.mrb[0].mxu0 %v77
  %v220 = vpop.f32.mrb[0].mxu0
  %v221 = vadd.f32 0.0, %v220
  %v222 = vpop.f32.mrb[0].mxu0
  %223 = vdwg.mxu0
  %224 = vst.msk [vmem:[%s2] sm:$0xff] %vm30, %v146
  %225 = vst.msk [vmem:[%s2 + $0x10] sm:$0xff] %vm30, %v151
  %226 = vst.msk [vmem:[%s2 + $0x20] sm:$0xff] %vm30, %v156
  %227 = vst.msk [vmem:[%s2 + $0x30] sm:$0xff] %vm30, %v161
  %228 = vst.msk [vmem:[%s2 + $0x40] sm:$0xff] %vm30, %v166
  %229 = vst.msk [vmem:[%s2 + $0x50] sm:$0xff] %vm30, %v171
  %230 = vst.msk [vmem:[%s2 + $0x60] sm:$0xff] %vm30, %v176
  %231 = vst.msk [vmem:[%s2 + $0x70] sm:$0xff] %vm30, %v181
  %232 = vst.msk [vmem:[%s2 + $0x80] sm:$0xff] %vm30, %v186
  %233 = vst.msk [vmem:[%s2 + $0x90] sm:$0xff] %vm30, %v191
  %234 = vst.msk [vmem:[%s2 + $0xa0] sm:$0xff] %vm30, %v196
  %235 = vst.msk [vmem:[%s2 + $0xb0] sm:$0xff] %vm30, %v201
  %236 = vst.msk [vmem:[%s2 + $0xc0] sm:$0xff] %vm30, %v206
  %237 = vst.msk [vmem:[%s2 + $0xd0] sm:$0xff] %vm30, %v211
  %238 = vst.msk [vmem:[%s2 + $0xe0] sm:$0xff] %vm30, %v216
  %239 = vst.msk [vmem:[%s2 + $0xf0] sm:$0xff] %vm30, %v221
  %256 = vrot.lane.b32.xlu0 %v146, 120
  %v257 = vpop.permute.xlu0 %256
  %258 = vrot.lane.b32.xlu0 %v151, 120
  %v259 = vpop.permute.xlu0 %258
  %260 = vrot.lane.b32.xlu0 %v156, 120
  %v261 = vpop.permute.xlu0 %260
  %262 = vrot.lane.b32.xlu0 %v161, 120
  %v263 = vpop.permute.xlu0 %262
  %264 = vrot.lane.b32.xlu0 %v166, 120
  %v265 = vpop.permute.xlu0 %264
  %266 = vrot.lane.b32.xlu0 %v171, 120
  %v267 = vpop.permute.xlu0 %266
  %268 = vrot.lane.b32.xlu0 %v176, 120
  %v269 = vpop.permute.xlu0 %268
  %270 = vrot.lane.b32.xlu0 %v181, 120
  %v271 = vpop.permute.xlu0 %270
  %272 = vrot.lane.b32.xlu0 %v186, 120
  %v273 = vpop.permute.xlu0 %272
  %274 = vrot.lane.b32.xlu0 %v191, 120
  %v275 = vpop.permute.xlu0 %274
  %276 = vrot.lane.b32.xlu0 %v196, 120
  %v277 = vpop.permute.xlu0 %276
  %278 = vrot.lane.b32.xlu0 %v201, 120
  %v279 = vpop.permute.xlu0 %278
  %280 = vrot.lane.b32.xlu0 %v206, 120
  %v281 = vpop.permute.xlu0 %280
  %282 = vrot.lane.b32.xlu0 %v211, 120
  %v283 = vpop.permute.xlu0 %282
  %284 = vrot.lane.b32.xlu0 %v216, 120
  %v285 = vpop.permute.xlu0 %284
  %286 = vrot.lane.b32.xlu0 %v221, 120
  %v287 = vpop.permute.xlu0 %286
  %s304 = scalar_lea.vmem %s2, 8
  %305 = vst.msk [vmem:[%s304] sm:$0xff] %vm30, %v257
  %306 = vst.msk [vmem:[%s304 + $0x10] sm:$0xff] %vm30, %v259
  %307 = vst.msk [vmem:[%s304 + $0x20] sm:$0xff] %vm30, %v261
  %308 = vst.msk [vmem:[%s304 + $0x30] sm:$0xff] %vm30, %v263
  %309 = vst.msk [vmem:[%s304 + $0x40] sm:$0xff] %vm30, %v265
  %310 = vst.msk [vmem:[%s304 + $0x50] sm:$0xff] %vm30, %v267
  %311 = vst.msk [vmem:[%s304 + $0x60] sm:$0xff] %vm30, %v269
  %312 = vst.msk [vmem:[%s304 + $0x70] sm:$0xff] %vm30, %v271
  %313 = vst.msk [vmem:[%s304 + $0x80] sm:$0xff] %vm30, %v273
  %314 = vst.msk [vmem:[%s304 + $0x90] sm:$0xff] %vm30, %v275
  %315 = vst.msk [vmem:[%s304 + $0xa0] sm:$0xff] %vm30, %v277
  %316 = vst.msk [vmem:[%s304 + $0xb0] sm:$0xff] %vm30, %v279
  %317 = vst.msk [vmem:[%s304 + $0xc0] sm:$0xff] %vm30, %v281
  %318 = vst.msk [vmem:[%s304 + $0xd0] sm:$0xff] %vm30, %v283
  %319 = vst.msk [vmem:[%s304 + $0xe0] sm:$0xff] %vm30, %v285
  %320 = vst.msk [vmem:[%s304 + $0xf0] sm:$0xff] %vm30, %v287
  %vm321 = vcmask 130048
  %v322 = vsel %vm321, %v146, 0.0
  %v323 = vsel %vm321, %v151, 0.0
  %v324 = vadd.f32 %v322, %v323
  %v325 = vsel %vm321, %v156, 0.0
  %v326 = vadd.f32 %v324, %v325
  %v327 = vsel %vm321, %v161, 0.0
  %v328 = vadd.f32 %v326, %v327
  %v329 = vsel %vm321, %v166, 0.0
  %v330 = vadd.f32 %v328, %v329
  %v331 = vsel %vm321, %v171, 0.0
  %v332 = vadd.f32 %v330, %v331
  %v333 = vsel %vm321, %v176, 0.0
  %v334 = vadd.f32 %v332, %v333
  %v335 = vsel %vm321, %v181, 0.0
  %v336 = vadd.f32 %v334, %v335
  %v337 = vsel %vm321, %v186, 0.0
  %v338 = vadd.f32 %v336, %v337
  %v339 = vsel %vm321, %v191, 0.0
  %v340 = vadd.f32 %v338, %v339
  %v341 = vsel %vm321, %v196, 0.0
  %v342 = vadd.f32 %v340, %v341
  %v343 = vsel %vm321, %v201, 0.0
  %v344 = vadd.f32 %v342, %v343
  %v345 = vsel %vm321, %v206, 0.0
  %v346 = vadd.f32 %v344, %v345
  %v347 = vsel %vm321, %v211, 0.0
  %v348 = vadd.f32 %v346, %v347
  %v349 = vsel %vm321, %v216, 0.0
  %v350 = vadd.f32 %v348, %v349
  %v351 = vsel %vm321, %v221, 0.0
  %v352 = vadd.f32 %v350, %v351
  %v353 = vrot.slane %v352, 4
  %v354 = vadd.f32 %v352, %v353
  %v355 = vrot.slane %v354, 2
  %v356 = vadd.f32 %v354, %v355
  %v357 = vrot.slane %v356, 1
  %v358 = vadd.f32 %v356, %v357
  %vm359 = vcmask 122880
  %360 = vst.msk [vmem:[%s3] sm:$0x1] %vm359, %v358
  %v361 = vmul.f32 %v146, %v146
  %v362 = vmul.f32 %v151, %v151
  %v363 = vmul.f32 %v156, %v156
  %v364 = vmul.f32 %v161, %v161
  %v365 = vmul.f32 %v166, %v166
  %v366 = vmul.f32 %v171, %v171
  %v367 = vmul.f32 %v176, %v176
  %v368 = vmul.f32 %v181, %v181
  %v369 = vmul.f32 %v186, %v186
  %v370 = vmul.f32 %v191, %v191
  %v371 = vmul.f32 %v196, %v196
  %v372 = vmul.f32 %v201, %v201
  %v373 = vmul.f32 %v206, %v206
  %v374 = vmul.f32 %v211, %v211
  %v375 = vmul.f32 %v216, %v216
  %v376 = vmul.f32 %v221, %v221
  %v377 = vsel %vm321, %v361, 0.0
  %v378 = vsel %vm321, %v362, 0.0
  %v379 = vadd.f32 %v377, %v378
  %v380 = vsel %vm321, %v363, 0.0
  %v381 = vadd.f32 %v379, %v380
  %v382 = vsel %vm321, %v364, 0.0
  %v383 = vadd.f32 %v381, %v382
  %v384 = vsel %vm321, %v365, 0.0
  %v385 = vadd.f32 %v383, %v384
  %v386 = vsel %vm321, %v366, 0.0
  %v387 = vadd.f32 %v385, %v386
  %v388 = vsel %vm321, %v367, 0.0
  %v389 = vadd.f32 %v387, %v388
  %v390 = vsel %vm321, %v368, 0.0
  %v391 = vadd.f32 %v389, %v390
  %v392 = vsel %vm321, %v369, 0.0
  %v393 = vadd.f32 %v391, %v392
  %v394 = vsel %vm321, %v370, 0.0
  %v395 = vadd.f32 %v393, %v394
  %v396 = vsel %vm321, %v371, 0.0
  %v397 = vadd.f32 %v395, %v396
  %v398 = vsel %vm321, %v372, 0.0
  %v399 = vadd.f32 %v397, %v398
  %v400 = vsel %vm321, %v373, 0.0
  %v401 = vadd.f32 %v399, %v400
  %v402 = vsel %vm321, %v374, 0.0
  %v403 = vadd.f32 %v401, %v402
  %v404 = vsel %vm321, %v375, 0.0
  %v405 = vadd.f32 %v403, %v404
  %v406 = vsel %vm321, %v376, 0.0
  %v407 = vadd.f32 %v405, %v406
  %v408 = vrot.slane %v407, 4
  %v409 = vadd.f32 %v407, %v408
  %v410 = vrot.slane %v409, 2
  %v411 = vadd.f32 %v409, %v410
  %v412 = vrot.slane %v411, 1
  %v413 = vadd.f32 %v411, %v412
  %414 = vst.msk [vmem:[%s3 + $0x1] sm:$0x1] %vm359, %v413
  // Predicated region
  $region10: #{_lambda_.4} parent=0 // pred_check
    _
  $region11: #{_lambda_.4} parent=0 // pred_check_branch
    %416 = sbr.rel (0) target = $region13
  $region12: #{_lambda_.4} parent=0 // pred_region
    _
  $region13: #{_lambda_.4} parent=0 // pred_fallthru
    _
  // Predicated region
  $region14: #{_lambda_.4} parent=0 // pred_check
    _
  $region15: #{_lambda_.4} parent=0 // pred_check_branch
    %418 = sbr.rel (0) target = $region17
  $region16: #{_lambda_.4} parent=0 // pred_region
    _
  $region17: #{_lambda_.4} parent=0 // pred_fallthru
    _
  // Predicated region
  $region18: #{_lambda_.4} parent=0 // pred_check
    _
  $region19: #{_lambda_.4} parent=0 // pred_check_branch
    %420 = sbr.rel (0) target = $region21
  $region20: #{_lambda_.4} parent=0 // pred_region
    _
  $region21: #{_lambda_.4} parent=0 // pred_fallthru
    _
  // Predicated region
  $region22: #{_lambda_.4} parent=0 // pred_check
    _
  $region23: #{_lambda_.4} parent=0 // pred_check_branch
    %422 = sbr.rel (0) target = $region25
  $region24: #{_lambda_.4} parent=0 // pred_region
    _
  $region25: #{_lambda_.4} parent=0 // pred_fallthru
    _

// kernel: _lambda_.7
$region0: #{_lambda_.7}
  #allocation0 [shape = 'u32[]', space=smem, size = 0x4, offset = 0x4, fixed_abs, tag = 'smem constant byte address 0x4 - core index']
  #allocation1 [shape = 'u32[144,128]{1,0:T(1,128)}', space=vmem, size = 0x12000, scoped, tag = 'internal scratch']
  %s0 = inlined_call_operand.vmem [shape: f32[32,16,4], index: 0, kind: input, shape index: {}]
  %s1 = inlined_call_operand.vmem [shape: f32[2,4], index: 1, kind: input, shape index: {}]
  %s2 = inlined_call_operand.vmem [shape: f32[32,16,4], index: 2, kind: output, shape index: {}]
  %s3 = sld [smem:[#allocation0]]
  $region18: #{_lambda_.7} parent=0
    _
  %s5 = ssub.s32 1, %s3
  %s6 = scalar_select 0, %s5, %s3
  // Predicated region
  $region2: #{_lambda_.7} parent=0 // pred_check
    _
  $region3: #{_lambda_.7} parent=0 // pred_check_branch
    %8 = sbr.rel (0) target = $region5
  $region4: #{_lambda_.7} parent=0 // pred_region
    _
  $region5: #{_lambda_.7} parent=0 // pred_fallthru
    _
  // Predicated region
  $region6: #{_lambda_.7} parent=0 // pred_check
    _
  $region7: #{_lambda_.7} parent=0 // pred_check_branch
    %10 = sbr.rel (0) target = $region9
  $region8: #{_lambda_.7} parent=0 // pred_region
    _
  $region9: #{_lambda_.7} parent=0 // pred_fallthru
    _
  %v11 = vld [vmem:[%s1] sm:$0x1]
  %v12 = vld [vmem:[%s1 + $0x1] sm:$0x1]
  %v13 = vld [vmem:[%s0] sm:$0xff]
  %v14 = vld [vmem:[%s0 + $0x8] sm:$0xff]
  %v15 = vld [vmem:[%s0 + $0x10] sm:$0xff]
  %v16 = vld [vmem:[%s0 + $0x18] sm:$0xff]
  %v17 = vld [vmem:[%s0 + $0x20] sm:$0xff]
  %v18 = vld [vmem:[%s0 + $0x28] sm:$0xff]
  %v19 = vld [vmem:[%s0 + $0x30] sm:$0xff]
  %v20 = vld [vmem:[%s0 + $0x38] sm:$0xff]
  %v21 = vld [vmem:[%s0 + $0x40] sm:$0xff]
  %v22 = vld [vmem:[%s0 + $0x48] sm:$0xff]
  %v23 = vld [vmem:[%s0 + $0x50] sm:$0xff]
  %v24 = vld [vmem:[%s0 + $0x58] sm:$0xff]
  %v25 = vld [vmem:[%s0 + $0x60] sm:$0xff]
  %v26 = vld [vmem:[%s0 + $0x68] sm:$0xff]
  %v27 = vld [vmem:[%s0 + $0x70] sm:$0xff]
  %v28 = vld [vmem:[%s0 + $0x78] sm:$0xff]
  %v29 = vld [vmem:[%s0 + $0x80] sm:$0xff]
  %v30 = vld [vmem:[%s0 + $0x88] sm:$0xff]
  %v31 = vld [vmem:[%s0 + $0x90] sm:$0xff]
  %v32 = vld [vmem:[%s0 + $0x98] sm:$0xff]
  %v33 = vld [vmem:[%s0 + $0xa0] sm:$0xff]
  %v34 = vld [vmem:[%s0 + $0xa8] sm:$0xff]
  %v35 = vld [vmem:[%s0 + $0xb0] sm:$0xff]
  %v36 = vld [vmem:[%s0 + $0xb8] sm:$0xff]
  %v37 = vld [vmem:[%s0 + $0xc0] sm:$0xff]
  %v38 = vld [vmem:[%s0 + $0xc8] sm:$0xff]
  %v39 = vld [vmem:[%s0 + $0xd0] sm:$0xff]
  %v40 = vld [vmem:[%s0 + $0xd8] sm:$0xff]
  %v41 = vld [vmem:[%s0 + $0xe0] sm:$0xff]
  %v42 = vld [vmem:[%s0 + $0xe8] sm:$0xff]
  %v43 = vld [vmem:[%s0 + $0xf0] sm:$0xff]
  %v44 = vld [vmem:[%s0 + $0xf8] sm:$0xff]
  %v45 = vld [vmem:[%s0 + $0x100] sm:$0xff]
  %v46 = vld [vmem:[%s0 + $0x108] sm:$0xff]
  %v47 = vld [vmem:[%s0 + $0x110] sm:$0xff]
  %v48 = vld [vmem:[%s0 + $0x118] sm:$0xff]
  %v49 = vld [vmem:[%s0 + $0x120] sm:$0xff]
  %v50 = vld [vmem:[%s0 + $0x128] sm:$0xff]
  %v51 = vld [vmem:[%s0 + $0x130] sm:$0xff]
  %v52 = vld [vmem:[%s0 + $0x138] sm:$0xff]
  %v53 = vld [vmem:[%s0 + $0x140] sm:$0xff]
  %v54 = vld [vmem:[%s0 + $0x148] sm:$0xff]
  %v55 = vld [vmem:[%s0 + $0x150] sm:$0xff]
  %v56 = vld [vmem:[%s0 + $0x158] sm:$0xff]
  %v57 = vld [vmem:[%s0 + $0x160] sm:$0xff]
  %v58 = vld [vmem:[%s0 + $0x168] sm:$0xff]
  %v59 = vld [vmem:[%s0 + $0x170] sm:$0xff]
  %v60 = vld [vmem:[%s0 + $0x178] sm:$0xff]
  %v61 = vld [vmem:[%s0 + $0x180] sm:$0xff]
  %v62 = vld [vmem:[%s0 + $0x188] sm:$0xff]
  %v63 = vld [vmem:[%s0 + $0x190] sm:$0xff]
  %v64 = vld [vmem:[%s0 + $0x198] sm:$0xff]
  %v65 = vld [vmem:[%s0 + $0x1a0] sm:$0xff]
  %v66 = vld [vmem:[%s0 + $0x1a8] sm:$0xff]
  %v67 = vld [vmem:[%s0 + $0x1b0] sm:$0xff]
  %v68 = vld [vmem:[%s0 + $0x1b8] sm:$0xff]
  %v69 = vld [vmem:[%s0 + $0x1c0] sm:$0xff]
  %v70 = vld [vmem:[%s0 + $0x1c8] sm:$0xff]
  %v71 = vld [vmem:[%s0 + $0x1d0] sm:$0xff]
  %v72 = vld [vmem:[%s0 + $0x1d8] sm:$0xff]
  %v73 = vld [vmem:[%s0 + $0x1e0] sm:$0xff]
  %v74 = vld [vmem:[%s0 + $0x1e8] sm:$0xff]
  %v75 = vld [vmem:[%s0 + $0x1f0] sm:$0xff]
  %v76 = vld [vmem:[%s0 + $0x1f8] sm:$0xff]
  %v77 = vlaneseq
  %v78 = vshrl.u32 %v77, 7
  %v79 = vsub.s32 0, %v78
  %v80 = vrot.slane %v11, %v79
  %v81 = vmul.f32 %v13, %v80
  %v82 = vmul.f32 %v14, %v80
  %v83 = vmul.f32 %v15, %v80
  %v84 = vmul.f32 %v16, %v80
  %v85 = vmul.f32 %v17, %v80
  %v86 = vmul.f32 %v18, %v80
  %v87 = vmul.f32 %v19, %v80
  %v88 = vmul.f32 %v20, %v80
  %v89 = vmul.f32 %v21, %v80
  %v90 = vmul.f32 %v22, %v80
  %v91 = vmul.f32 %v23, %v80
  %v92 = vmul.f32 %v24, %v80
  %v93 = vmul.f32 %v25, %v80
  %v94 = vmul.f32 %v26, %v80
  %v95 = vmul.f32 %v27, %v80
  %v96 = vmul.f32 %v28, %v80
  %v97 = vmul.f32 %v29, %v80
  %v98 = vmul.f32 %v30, %v80
  %v99 = vmul.f32 %v31, %v80
  %v100 = vmul.f32 %v32, %v80
  %v101 = vmul.f32 %v33, %v80
  %v102 = vmul.f32 %v34, %v80
  %v103 = vmul.f32 %v35, %v80
  %v104 = vmul.f32 %v36, %v80
  %v105 = vmul.f32 %v37, %v80
  %v106 = vmul.f32 %v38, %v80
  %v107 = vmul.f32 %v39, %v80
  %v108 = vmul.f32 %v40, %v80
  %v109 = vmul.f32 %v41, %v80
  %v110 = vmul.f32 %v42, %v80
  %v111 = vmul.f32 %v43, %v80
  %v112 = vmul.f32 %v44, %v80
  %v113 = vmul.f32 %v45, %v80
  %v114 = vmul.f32 %v46, %v80
  %v115 = vmul.f32 %v47, %v80
  %v116 = vmul.f32 %v48, %v80
  %v117 = vmul.f32 %v49, %v80
  %v118 = vmul.f32 %v50, %v80
  %v119 = vmul.f32 %v51, %v80
  %v120 = vmul.f32 %v52, %v80
  %v121 = vmul.f32 %v53, %v80
  %v122 = vmul.f32 %v54, %v80
  %v123 = vmul.f32 %v55, %v80
  %v124 = vmul.f32 %v56, %v80
  %v125 = vmul.f32 %v57, %v80
  %v126 = vmul.f32 %v58, %v80
  %v127 = vmul.f32 %v59, %v80
  %v128 = vmul.f32 %v60, %v80
  %v129 = vmul.f32 %v61, %v80
  %v130 = vmul.f32 %v62, %v80
  %v131 = vmul.f32 %v63, %v80
  %v132 = vmul.f32 %v64, %v80
  %v133 = vmul.f32 %v65, %v80
  %v134 = vmul.f32 %v66, %v80
  %v135 = vmul.f32 %v67, %v80
  %v136 = vmul.f32 %v68, %v80
  %v137 = vmul.f32 %v69, %v80
  %v138 = vmul.f32 %v70, %v80
  %v139 = vmul.f32 %v71, %v80
  %v140 = vmul.f32 %v72, %v80
  %v141 = vmul.f32 %v73, %v80
  %v142 = vmul.f32 %v74, %v80
  %v143 = vmul.f32 %v75, %v80
  %v144 = vmul.f32 %v76, %v80
  %v145 = vlaneseq
  %v146 = vshrl.u32 %v145, 7
  %v147 = vsub.s32 0, %v146
  %v148 = vrot.slane %v12, %v147
  %v149 = vadd.f32 %v81, %v148
  %v150 = vadd.f32 %v82, %v148
  %v151 = vadd.f32 %v83, %v148
  %v152 = vadd.f32 %v84, %v148
  %v153 = vadd.f32 %v85, %v148
  %v154 = vadd.f32 %v86, %v148
  %v155 = vadd.f32 %v87, %v148
  %v156 = vadd.f32 %v88, %v148
  %v157 = vadd.f32 %v89, %v148
  %v158 = vadd.f32 %v90, %v148
  %v159 = vadd.f32 %v91, %v148
  %v160 = vadd.f32 %v92, %v148
  %v161 = vadd.f32 %v93, %v148
  %v162 = vadd.f32 %v94, %v148
  %v163 = vadd.f32 %v95, %v148
  %v164 = vadd.f32 %v96, %v148
  %v165 = vadd.f32 %v97, %v148
  %v166 = vadd.f32 %v98, %v148
  %v167 = vadd.f32 %v99, %v148
  %v168 = vadd.f32 %v100, %v148
  %v169 = vadd.f32 %v101, %v148
  %v170 = vadd.f32 %v102, %v148
  %v171 = vadd.f32 %v103, %v148
  %v172 = vadd.f32 %v104, %v148
  %v173 = vadd.f32 %v105, %v148
  %v174 = vadd.f32 %v106, %v148
  %v175 = vadd.f32 %v107, %v148
  %v176 = vadd.f32 %v108, %v148
  %v177 = vadd.f32 %v109, %v148
  %v178 = vadd.f32 %v110, %v148
  %v179 = vadd.f32 %v111, %v148
  %v180 = vadd.f32 %v112, %v148
  %v181 = vadd.f32 %v113, %v148
  %v182 = vadd.f32 %v114, %v148
  %v183 = vadd.f32 %v115, %v148
  %v184 = vadd.f32 %v116, %v148
  %v185 = vadd.f32 %v117, %v148
  %v186 = vadd.f32 %v118, %v148
  %v187 = vadd.f32 %v119, %v148
  %v188 = vadd.f32 %v120, %v148
  %v189 = vadd.f32 %v121, %v148
  %v190 = vadd.f32 %v122, %v148
  %v191 = vadd.f32 %v123, %v148
  %v192 = vadd.f32 %v124, %v148
  %v193 = vadd.f32 %v125, %v148
  %v194 = vadd.f32 %v126, %v148
  %v195 = vadd.f32 %v127, %v148
  %v196 = vadd.f32 %v128, %v148
  %v197 = vadd.f32 %v129, %v148
  %v198 = vadd.f32 %v130, %v148
  %v199 = vadd.f32 %v131, %v148
  %v200 = vadd.f32 %v132, %v148
  %v201 = vadd.f32 %v133, %v148
  %v202 = vadd.f32 %v134, %v148
  %v203 = vadd.f32 %v135, %v148
  %v204 = vadd.f32 %v136, %v148
  %v205 = vadd.f32 %v137, %v148
  %v206 = vadd.f32 %v138, %v148
  %v207 = vadd.f32 %v139, %v148
  %v208 = vadd.f32 %v140, %v148
  %v209 = vadd.f32 %v141, %v148
  %v210 = vadd.f32 %v142, %v148
  %v211 = vadd.f32 %v143, %v148
  %v212 = vadd.f32 %v144, %v148
  %v213 = vmax.f32 %v149, 0.0
  %v214 = vmax.f32 %v150, 0.0
  %v215 = vmax.f32 %v151, 0.0
  %v216 = vmax.f32 %v152, 0.0
  %v217 = vmax.f32 %v153, 0.0
  %v218 = vmax.f32 %v154, 0.0
  %v219 = vmax.f32 %v155, 0.0
  %v220 = vmax.f32 %v156, 0.0
  %v221 = vmax.f32 %v157, 0.0
  %v222 = vmax.f32 %v158, 0.0
  %v223 = vmax.f32 %v159, 0.0
  %v224 = vmax.f32 %v160, 0.0
  %v225 = vmax.f32 %v161, 0.0
  %v226 = vmax.f32 %v162, 0.0
  %v227 = vmax.f32 %v163, 0.0
  %v228 = vmax.f32 %v164, 0.0
  %v229 = vmax.f32 %v165, 0.0
  %v230 = vmax.f32 %v166, 0.0
  %v231 = vmax.f32 %v167, 0.0
  %v232 = vmax.f32 %v168, 0.0
  %v233 = vmax.f32 %v169, 0.0
  %v234 = vmax.f32 %v170, 0.0
  %v235 = vmax.f32 %v171, 0.0
  %v236 = vmax.f32 %v172, 0.0
  %v237 = vmax.f32 %v173, 0.0
  %v238 = vmax.f32 %v174, 0.0
  %v239 = vmax.f32 %v175, 0.0
  %v240 = vmax.f32 %v176, 0.0
  %v241 = vmax.f32 %v177, 0.0
  %v242 = vmax.f32 %v178, 0.0
  %v243 = vmax.f32 %v179, 0.0
  %v244 = vmax.f32 %v180, 0.0
  %v245 = vmax.f32 %v181, 0.0
  %v246 = vmax.f32 %v182, 0.0
  %v247 = vmax.f32 %v183, 0.0
  %v248 = vmax.f32 %v184, 0.0
  %v249 = vmax.f32 %v185, 0.0
  %v250 = vmax.f32 %v186, 0.0
  %v251 = vmax.f32 %v187, 0.0
  %v252 = vmax.f32 %v188, 0.0
  %v253 = vmax.f32 %v189, 0.0
  %v254 = vmax.f32 %v190, 0.0
  %v255 = vmax.f32 %v191, 0.0
  %v256 = vmax.f32 %v192, 0.0
  %v257 = vmax.f32 %v193, 0.0
  %v258 = vmax.f32 %v194, 0.0
  %v259 = vmax.f32 %v195, 0.0
  %v260 = vmax.f32 %v196, 0.0
  %v261 = vmax.f32 %v197, 0.0
  %v262 = vmax.f32 %v198, 0.0
  %v263 = vmax.f32 %v199, 0.0
  %v264 = vmax.f32 %v200, 0.0
  %v265 = vmax.f32 %v201, 0.0
  %v266 = vmax.f32 %v202, 0.0
  %v267 = vmax.f32 %v203, 0.0
  %v268 = vmax.f32 %v204, 0.0
  %v269 = vmax.f32 %v205, 0.0
  %v270 = vmax.f32 %v206, 0.0
  %v271 = vmax.f32 %v207, 0.0
  %v272 = vmax.f32 %v208, 0.0
  %v273 = vmax.f32 %v209, 0.0
  %v274 = vmax.f32 %v210, 0.0
  %v275 = vmax.f32 %v211, 0.0
  %v276 = vmax.f32 %v212, 0.0
  %vm277 = vcmask 31744
  %278 = vst.msk [vmem:[%s2] sm:$0xff] %vm277, %v213
  %279 = vst.msk [vmem:[%s2 + $0x8] sm:$0xff] %vm277, %v214
  %280 = vst.msk [vmem:[%s2 + $0x10] sm:$0xff] %vm277, %v215
  %281 = vst.msk [vmem:[%s2 + $0x18] sm:$0xff] %vm277, %v216
  %282 = vst.msk [vmem:[%s2 + $0x20] sm:$0xff] %vm277, %v217
  %283 = vst.msk [vmem:[%s2 + $0x28] sm:$0xff] %vm277, %v218
  %284 = vst.msk [vmem:[%s2 + $0x30] sm:$0xff] %vm277, %v219
  %285 = vst.msk [vmem:[%s2 + $0x38] sm:$0xff] %vm277, %v220
  %286 = vst.msk [vmem:[%s2 + $0x40] sm:$0xff] %vm277, %v221
  %287 = vst.msk [vmem:[%s2 + $0x48] sm:$0xff] %vm277, %v222
  %288 = vst.msk [vmem:[%s2 + $0x50] sm:$0xff] %vm277, %v223
  %289 = vst.msk [vmem:[%s2 + $0x58] sm:$0xff] %vm277, %v224
  %290 = vst.msk [vmem:[%s2 + $0x60] sm:$0xff] %vm277, %v225
  %291 = vst.msk [vmem:[%s2 + $0x68] sm:$0xff] %vm277, %v226
  %292 = vst.msk [vmem:[%s2 + $0x70] sm:$0xff] %vm277, %v227
  %293 = vst.msk [vmem:[%s2 + $0x78] sm:$0xff] %vm277, %v228
  %294 = vst.msk [vmem:[%s2 + $0x80] sm:$0xff] %vm277, %v229
  %295 = vst.msk [vmem:[%s2 + $0x88] sm:$0xff] %vm277, %v230
  %296 = vst.msk [vmem:[%s2 + $0x90] sm:$0xff] %vm277, %v231
  %297 = vst.msk [vmem:[%s2 + $0x98] sm:$0xff] %vm277, %v232
  %298 = vst.msk [vmem:[%s2 + $0xa0] sm:$0xff] %vm277, %v233
  %299 = vst.msk [vmem:[%s2 + $0xa8] sm:$0xff] %vm277, %v234
  %300 = vst.msk [vmem:[%s2 + $0xb0] sm:$0xff] %vm277, %v235
  %301 = vst.msk [vmem:[%s2 + $0xb8] sm:$0xff] %vm277, %v236
  %302 = vst.msk [vmem:[%s2 + $0xc0] sm:$0xff] %vm277, %v237
  %303 = vst.msk [vmem:[%s2 + $0xc8] sm:$0xff] %vm277, %v238
  %304 = vst.msk [vmem:[%s2 + $0xd0] sm:$0xff] %vm277, %v239
  %305 = vst.msk [vmem:[%s2 + $0xd8] sm:$0xff] %vm277, %v240
  %306 = vst.msk [vmem:[%s2 + $0xe0] sm:$0xff] %vm277, %v241
  %307 = vst.msk [vmem:[%s2 + $0xe8] sm:$0xff] %vm277, %v242
  %308 = vst.msk [vmem:[%s2 + $0xf0] sm:$0xff] %vm277, %v243
  %309 = vst.msk [vmem:[%s2 + $0xf8] sm:$0xff] %vm277, %v244
  %310 = vst.msk [vmem:[%s2 + $0x100] sm:$0xff] %vm277, %v245
  %311 = vst.msk [vmem:[%s2 + $0x108] sm:$0xff] %vm277, %v246
  %312 = vst.msk [vmem:[%s2 + $0x110] sm:$0xff] %vm277, %v247
  %313 = vst.msk [vmem:[%s2 + $0x118] sm:$0xff] %vm277, %v248
  %314 = vst.msk [vmem:[%s2 + $0x120] sm:$0xff] %vm277, %v249
  %315 = vst.msk [vmem:[%s2 + $0x128] sm:$0xff] %vm277, %v250
  %316 = vst.msk [vmem:[%s2 + $0x130] sm:$0xff] %vm277, %v251
  %317 = vst.msk [vmem:[%s2 + $0x138] sm:$0xff] %vm277, %v252
  %318 = vst.msk [vmem:[%s2 + $0x140] sm:$0xff] %vm277, %v253
  %319 = vst.msk [vmem:[%s2 + $0x148] sm:$0xff] %vm277, %v254
  %320 = vst.msk [vmem:[%s2 + $0x150] sm:$0xff] %vm277, %v255
  %321 = vst.msk [vmem:[%s2 + $0x158] sm:$0xff] %vm277, %v256
  %322 = vst.msk [vmem:[%s2 + $0x160] sm:$0xff] %vm277, %v257
  %323 = vst.msk [vmem:[%s2 + $0x168] sm:$0xff] %vm277, %v258
  %324 = vst.msk [vmem:[%s2 + $0x170] sm:$0xff] %vm277, %v259
  %325 = vst.msk [vmem:[%s2 + $0x178] sm:$0xff] %vm277, %v260
  %326 = vst.msk [vmem:[%s2 + $0x180] sm:$0xff] %vm277, %v261
  %327 = vst.msk [vmem:[%s2 + $0x188] sm:$0xff] %vm277, %v262
  %328 = vst.msk [vmem:[%s2 + $0x190] sm:$0xff] %vm277, %v263
  %329 = vst.msk [vmem:[%s2 + $0x198] sm:$0xff] %vm277, %v264
  %330 = vst.msk [vmem:[%s2 + $0x1a0] sm:$0xff] %vm277, %v265
  %331 = vst.msk [vmem:[%s2 + $0x1a8] sm:$0xff] %vm277, %v266
  %332 = vst.msk [vmem:[%s2 + $0x1b0] sm:$0xff] %vm277, %v267
  %333 = vst.msk [vmem:[%s2 + $0x1b8] sm:$0xff] %vm277, %v268
  %334 = vst.msk [vmem:[%s2 + $0x1c0] sm:$0xff] %vm277, %v269
  %335 = vst.msk [vmem:[%s2 + $0x1c8] sm:$0xff] %vm277, %v270
  %336 = vst.msk [vmem:[%s2 + $0x1d0] sm:$0xff] %vm277, %v271
  %337 = vst.msk [vmem:[%s2 + $0x1d8] sm:$0xff] %vm277, %v272
  %338 = vst.msk [vmem:[%s2 + $0x1e0] sm:$0xff] %vm277, %v273
  %339 = vst.msk [vmem:[%s2 + $0x1e8] sm:$0xff] %vm277, %v274
  %340 = vst.msk [vmem:[%s2 + $0x1f0] sm:$0xff] %vm277, %v275
  %341 = vst.msk [vmem:[%s2 + $0x1f8] sm:$0xff] %vm277, %v276
  // Predicated region
  $region10: #{_lambda_.7} parent=0 // pred_check
    _
  $region11: #{_lambda_.7} parent=0 // pred_check_branch
    %343 = sbr.rel (0) target = $region13
  $region12: #{_lambda_.7} parent=0 // pred_region
    _
  $region13: #{_lambda_.7} parent=0 // pred_fallthru
    _
  // Predicated region
  $region14: #{_lambda_.7} parent=0 // pred_check
    _
  $region15: #{_lambda_.7} parent=0 // pred_check_branch
    %345 = sbr.rel (0) target = $region17
  $region16: #{_lambda_.7} parent=0 // pred_region
    _
  $region17: #{_lambda_.7} parent=0 // pred_fallthru
    _

// kernel: _lambda_.5
$region0: #{_lambda_.5}
  #allocation0 [shape = 'u32[]', space=smem, size = 0x4, offset = 0x4, fixed_abs, tag = 'smem constant byte address 0x4 - core index']
  #allocation1 [shape = 'u32[144,128]{1,0:T(1,128)}', space=vmem, size = 0x12000, scoped, tag = 'internal scratch']
  #allocation2 [shape = 'f32[18,16,24]{2,1,0:T(8,128)}', space=vmem, size = 0x24000, scoped, tag = 'scratch operand']
  %s0 = inlined_call_operand.vmem [shape: f32[2,16,16,4], index: 0, kind: input, shape index: {}, may-alias: {0,1,2}]
  %s1 = inlined_call_operand.vmem [shape: f32[2,16,16,4], index: 1, kind: input, shape index: {}, may-alias: {0,1,2}]
  %s2 = inlined_call_operand.vmem [shape: f32[2,16,16,4], index: 2, kind: input, shape index: {}, may-alias: {0,1,2}]
  %s3 = inlined_call_operand.vmem [shape: f32[2,16,16,4], index: 3, kind: input, shape index: {}, may-alias: {3,4,5}]
  %s4 = inlined_call_operand.vmem [shape: f32[2,16,16,4], index: 4, kind: input, shape index: {}, may-alias: {3,4,5}]
  %s5 = inlined_call_operand.vmem [shape: f32[2,16,16,4], index: 5, kind: input, shape index: {}, may-alias: {3,4,5}]
  %s6 = inlined_call_operand.vmem [shape: f32[2,4], index: 6, kind: input, shape index: {}]
  %s7 = inlined_call_operand.vmem [shape: f32[3,24,4], index: 7, kind: input, shape index: {}]
  %s8 = inlined_call_operand.vmem [shape: f32[2,16,16,4], index: 8, kind: output, shape index: {0}]
  %s9 = inlined_call_operand.vmem [shape: f32[2,1,2,4], index: 9, kind: output, shape index: {1}]
  %10 = xla_tuple %s8, %s9
  %s11 = sld [smem:[#allocation0]]
  $region73: #{_lambda_.5} parent=0
    _
  %s13 = ssub.s32 1, %s11
  %s14 = scalar_select 0, %s13, %s11
  loop: start=0, step=1, limit=4
  $region2: #{_lambda_.5} parent=0 // loop_pre_header
    _
  $region3: #{_lambda_.5} parent=0 // loop_header
    %s16 = sphi 0, %s20
    %p17 = scmp.ge.s32.totalorder %s16, 4
    %s23 = sphi 0, %s35
    %s24 = sphi 0, %s31
    %s25 = sphi 0, %s23
    %s26 = sphi 0, %s24
    %s27 = sphi 0, %s25
    %s28 = sphi 0, %s26
    %s40 = sphi 0, %s42
    %s43 = sphi 0, %s40
    %s44 = sphi 0, %s43
    %s60 = sphi 0, %s44
    %s76 = sphi 0, %s78
    %s79 = sphi 0, %s76
    %s80 = sphi 0, %s79
    %s96 = sphi 0, %s80
    %s112 = sphi 0, %s114
    %s115 = sphi 0, %s112
    %s116 = sphi 0, %s115
    %s132 = sphi 0, %s116
    %s140 = sphi 0, %s142
    %s143 = sphi 0, %s140
    %s144 = sphi 0, %s143
    %s160 = sphi 0, %s144
    %s176 = sphi 0, %s178
    %s179 = sphi 0, %s176
    %s180 = sphi 0, %s179
    %s196 = sphi 0, %s180
    %s212 = sphi 0, %s214
    %s215 = sphi 0, %s212
    %s216 = sphi 0, %s215
    %s232 = sphi 0, %s216
    %s236 = sphi 0, %s236
    %s238 = sphi 0, %s236
    %s239 = sphi 0, %s238
    %s253 = sphi 0, %s239
    %s257 = sphi 0, %s257
    %s259 = sphi 0, %s257
    %s260 = sphi 0, %s259
    %s274 = sphi 0, %s260
    %s282 = sphi 0, %s284
    %s285 = sphi 0, %s282
    %s286 = sphi 0, %s285
    %s302 = sphi 0, %s286
    %s310 = sphi 0, %s312
    %s313 = sphi 0, %s310
    %s314 = sphi 0, %s313
    %s330 = sphi 0, %s314
  $region4: #{_lambda_.5} parent=0 // loop_header_branch
    %19 = sbr.rel (%p17) target = $region8
  $region5: #{_lambda_.5} parent=0 // loop_body
    %s21 = ssub.s32 %s16, 1
    %s22 = ssub.s32 %s16, 2
    %s29 = sadd.s32 1, %s24
    %p30 = scmp.ge.s32.totalorder %s29, 1
    %s31 = scalar_select %p30, 0, %s29
    %s32 = sadd.s32 1, %s23
    %s33 = scalar_select %p30, %s32, %s23
    %p34 = scmp.ge.s32.totalorder %s33, 2
    %s35 = scalar_select %p34, 0, %s33
    %s36 = ssub.s32 %s23, %s35
    %s37 = ssub.s32 %s24, %s31
    %s38 = sor.u32 %s36, %s37
    %p39 = scmp.eq.s32.totalorder %s38, 0
    %s41 = sadd.s32 %s40, 1
    %s42 = scalar_select %p39, %s40, %s41
    %p45 = pneg %p39
    %p46 = scmp.eq.s32.totalorder %s16, 1
    %p47 = por %p45, %p46
    %p48 = scmp.ne.s32.totalorder %s40, %s43
    %p49 = scmp.eq.s32.totalorder %s16, 0
    %p50 = por %p48, %p49
    %p51 = scmp.ne.s32.totalorder %s40, %s43
    %p52 = scmp.eq.s32.totalorder %s21, 1
    %p53 = por %p51, %p52
    %p54 = scmp.ne.s32.totalorder %s43, %s44
    %p55 = scmp.eq.s32.totalorder %s21, 0
    %p56 = por %p54, %p55
    %p57 = scmp.ne.s32.totalorder %s43, %s44
    %p58 = scmp.eq.s32.totalorder %s22, 1
    %p59 = por %p57, %p58
    %p61 = scmp.ne.s32.totalorder %s44, %s60
    %p62 = scmp.eq.s32.totalorder %s22, 0
    %p63 = por %p61, %p62
    %s64 = smul.u32 %s24, 16
    %s65 = ssub.s32 %s64, 1
    %p66 = scmp.gt.s32.totalorder %s65, 0
    %s67 = scalar_select %p66, %s65, 0
    %s68 = smul.u32 %s31, 16
    %s69 = ssub.s32 %s68, 1
    %p70 = scmp.gt.s32.totalorder %s69, 0
    %s71 = scalar_select %p70, %s69, 0
    %s72 = ssub.s32 %s23, %s35
    %s73 = ssub.s32 %s67, %s71
    %s74 = sor.u32 %s72, %s73
    %p75 = scmp.eq.s32.totalorder %s74, 0
    %s77 = sadd.s32 %s76, 1
    %s78 = scalar_select %p75, %s76, %s77
    %p81 = pneg %p75
    %p82 = scmp.eq.s32.totalorder %s16, 1
    %p83 = por %p81, %p82
    %p84 = scmp.ne.s32.totalorder %s76, %s79
    %p85 = scmp.eq.s32.totalorder %s16, 0
    %p86 = por %p84, %p85
    %p87 = scmp.ne.s32.totalorder %s76, %s79
    %p88 = scmp.eq.s32.totalorder %s21, 1
    %p89 = por %p87, %p88
    %p90 = scmp.ne.s32.totalorder %s79, %s80
    %p91 = scmp.eq.s32.totalorder %s21, 0
    %p92 = por %p90, %p91
    %p93 = scmp.ne.s32.totalorder %s79, %s80
    %p94 = scmp.eq.s32.totalorder %s22, 1
    %p95 = por %p93, %p94
    %p97 = scmp.ne.s32.totalorder %s80, %s96
    %p98 = scmp.eq.s32.totalorder %s22, 0
    %p99 = por %p97, %p98
    %s100 = smul.u32 %s24, 16
    %s101 = sadd.s32 %s100, 16
    %p102 = scmp.lt.s32.totalorder %s101, 15
    %s103 = scalar_select %p102, %s101, 15
    %s104 = smul.u32 %s31, 16
    %s105 = sadd.s32 %s104, 16
    %p106 = scmp.lt.s32.totalorder %s105, 15
    %s107 = scalar_select %p106, %s105, 15
    %s108 = ssub.s32 %s23, %s35
    %s109 = ssub.s32 %s103, %s107
    %s110 = sor.u32 %s108, %s109
    %p111 = scmp.eq.s32.totalorder %s110, 0
    %s113 = sadd.s32 %s112, 1
    %s114 = scalar_select %p111, %s112, %s113
    %p117 = pneg %p111
    %p118 = scmp.eq.s32.totalorder %s16, 1
    %p119 = por %p117, %p118
    %p120 = scmp.ne.s32.totalorder %s112, %s115
    %p121 = scmp.eq.s32.totalorder %s16, 0
    %p122 = por %p120, %p121
    %p123 = scmp.ne.s32.totalorder %s112, %s115
    %p124 = scmp.eq.s32.totalorder %s21, 1
    %p125 = por %p123, %p124
    %p126 = scmp.ne.s32.totalorder %s115, %s116
    %p127 = scmp.eq.s32.totalorder %s21, 0
    %p128 = por %p126, %p127
    %p129 = scmp.ne.s32.totalorder %s115, %s116
    %p130 = scmp.eq.s32.totalorder %s22, 1
    %p131 = por %p129, %p130
    %p133 = scmp.ne.s32.totalorder %s116, %s132
    %p134 = scmp.eq.s32.totalorder %s22, 0
    %p135 = por %p133, %p134
    %s136 = ssub.s32 %s23, %s35
    %s137 = ssub.s32 %s24, %s31
    %s138 = sor.u32 %s136, %s137
    %p139 = scmp.eq.s32.totalorder %s138, 0
    %s141 = sadd.s32 %s140, 1
    %s142 = scalar_select %p139, %s140, %s141
    %p145 = pneg %p139
    %p146 = scmp.eq.s32.totalorder %s16, 1
    %p147 = por %p145, %p146
    %p148 = scmp.ne.s32.totalorder %s140, %s143
    %p149 = scmp.eq.s32.totalorder %s16, 0
    %p150 = por %p148, %p149
    %p151 = scmp.ne.s32.totalorder %s140, %s143
    %p152 = scmp.eq.s32.totalorder %s21, 1
    %p153 = por %p151, %p152
    %p154 = scmp.ne.s32.totalorder %s143, %s144
    %p155 = scmp.eq.s32.totalorder %s21, 0
    %p156 = por %p154, %p155
    %p157 = scmp.ne.s32.totalorder %s143, %s144
    %p158 = scmp.eq.s32.totalorder %s22, 1
    %p159 = por %p157, %p158
    %p161 = scmp.ne.s32.totalorder %s144, %s160
    %p162 = scmp.eq.s32.totalorder %s22, 0
    %p163 = por %p161, %p162
    %s164 = smul.u32 %s24, 16
    %s165 = ssub.s32 %s164, 1
    %p166 = scmp.gt.s32.totalorder %s165, 0
    %s167 = scalar_select %p166, %s165, 0
    %s168 = smul.u32 %s31, 16
    %s169 = ssub.s32 %s168, 1
    %p170 = scmp.gt.s32.totalorder %s169, 0
    %s171 = scalar_select %p170, %s169, 0
    %s172 = ssub.s32 %s23, %s35
    %s173 = ssub.s32 %s167, %s171
    %s174 = sor.u32 %s172, %s173
    %p175 = scmp.eq.s32.totalorder %s174, 0
    %s177 = sadd.s32 %s176, 1
    %s178 = scalar_select %p175, %s176, %s177
    %p181 = pneg %p175
    %p182 = scmp.eq.s32.totalorder %s16, 1
    %p183 = por %p181, %p182
    %p184 = scmp.ne.s32.totalorder %s176, %s179
    %p185 = scmp.eq.s32.totalorder %s16, 0
    %p186 = por %p184, %p185
    %p187 = scmp.ne.s32.totalorder %s176, %s179
    %p188 = scmp.eq.s32.totalorder %s21, 1
    %p189 = por %p187, %p188
    %p190 = scmp.ne.s32.totalorder %s179, %s180
    %p191 = scmp.eq.s32.totalorder %s21, 0
    %p192 = por %p190, %p191
    %p193 = scmp.ne.s32.totalorder %s179, %s180
    %p194 = scmp.eq.s32.totalorder %s22, 1
    %p195 = por %p193, %p194
    %p197 = scmp.ne.s32.totalorder %s180, %s196
    %p198 = scmp.eq.s32.totalorder %s22, 0
    %p199 = por %p197, %p198
    %s200 = smul.u32 %s24, 16
    %s201 = sadd.s32 %s200, 16
    %p202 = scmp.lt.s32.totalorder %s201, 15
    %s203 = scalar_select %p202, %s201, 15
    %s204 = smul.u32 %s31, 16
    %s205 = sadd.s32 %s204, 16
    %p206 = scmp.lt.s32.totalorder %s205, 15
    %s207 = scalar_select %p206, %s205, 15
    %s208 = ssub.s32 %s23, %s35
    %s209 = ssub.s32 %s203, %s207
    %s210 = sor.u32 %s208, %s209
    %p211 = scmp.eq.s32.totalorder %s210, 0
    %s213 = sadd.s32 %s212, 1
    %s214 = scalar_select %p211, %s212, %s213
    %p217 = pneg %p211
    %p218 = scmp.eq.s32.totalorder %s16, 1
    %p219 = por %p217, %p218
    %p220 = scmp.ne.s32.totalorder %s212, %s215
    %p221 = scmp.eq.s32.totalorder %s16, 0
    %p222 = por %p220, %p221
    %p223 = scmp.ne.s32.totalorder %s212, %s215
    %p224 = scmp.eq.s32.totalorder %s21, 1
    %p225 = por %p223, %p224
    %p226 = scmp.ne.s32.totalorder %s215, %s216
    %p227 = scmp.eq.s32.totalorder %s21, 0
    %p228 = por %p226, %p227
    %p229 = scmp.ne.s32.totalorder %s215, %s216
    %p230 = scmp.eq.s32.totalorder %s22, 1
    %p231 = por %p229, %p230
    %p233 = scmp.ne.s32.totalorder %s216, %s232
    %p234 = scmp.eq.s32.totalorder %s22, 0
    %p235 = por %p233, %p234
    %s237 = sadd.s32 %s236, 1
    %p240 = scmp.eq.s32.totalorder %s16, 1
    %p241 = scmp.ne.s32.totalorder %s236, %s238
    %p242 = scmp.eq.s32.totalorder %s16, 0
    %p243 = por %p241, %p242
    %p244 = scmp.ne.s32.totalorder %s236, %s238
    %p245 = scmp.eq.s32.totalorder %s21, 1
    %p246 = por %p244, %p245
    %p247 = scmp.ne.s32.totalorder %s238, %s239
    %p248 = scmp.eq.s32.totalorder %s21, 0
    %p249 = por %p247, %p248
    %p250 = scmp.ne.s32.totalorder %s238, %s239
    %p251 = scmp.eq.s32.totalorder %s22, 1
    %p252 = por %p250, %p251
    %p254 = scmp.ne.s32.totalorder %s239, %s253
    %p255 = scmp.eq.s32.totalorder %s22, 0
    %p256 = por %p254, %p255
    %s258 = sadd.s32 %s257, 1
    %p261 = scmp.eq.s32.totalorder %s16, 1
    %p262 = scmp.ne.s32.totalorder %s257, %s259
    %p263 = scmp.eq.s32.totalorder %s16, 0
    %p264 = por %p262, %p263
    %p265 = scmp.ne.s32.totalorder %s257, %s259
    %p266 = scmp.eq.s32.totalorder %s21, 1
    %p267 = por %p265, %p266
    %p268 = scmp.ne.s32.totalorder %s259, %s260
    %p269 = scmp.eq.s32.totalorder %s21, 0
    %p270 = por %p268, %p269
    %p271 = scmp.ne.s32.totalorder %s259, %s260
    %p272 = scmp.eq.s32.totalorder %s22, 1
    %p273 = por %p271, %p272
    %p275 = scmp.ne.s32.totalorder %s260, %s274
    %p276 = scmp.eq.s32.totalorder %s22, 0
    %p277 = por %p275, %p276
    %s278 = ssub.s32 %s23, %s35
    %s279 = ssub.s32 %s24, %s31
    %s280 = sor.u32 %s278, %s279
    %p281 = scmp.eq.s32.totalorder %s280, 0
    %s283 = sadd.s32 %s282, 1
    %s284 = scalar_select %p281, %s282, %s283
    %p287 = pneg %p281
    %p288 = scmp.eq.s32.totalorder %s16, 1
    %p289 = por %p287, %p288
    %p290 = scmp.ne.s32.totalorder %s282, %s285
    %p291 = scmp.eq.s32.totalorder %s16, 0
    %p292 = por %p290, %p291
    %p293 = scmp.ne.s32.totalorder %s282, %s285
    %p294 = scmp.eq.s32.totalorder %s21, 1
    %p295 = por %p293, %p294
    %p296 = scmp.ne.s32.totalorder %s285, %s286
    %p297 = scmp.eq.s32.totalorder %s21, 0
    %p298 = por %p296, %p297
    %p299 = scmp.ne.s32.totalorder %s285, %s286
    %p300 = scmp.eq.s32.totalorder %s22, 1
    %p301 = por %p299, %p300
    %p303 = scmp.ne.s32.totalorder %s286, %s302
    %p304 = scmp.eq.s32.totalorder %s22, 0
    %p305 = por %p303, %p304
    %s306 = ssub.s32 %s23, %s35
    %s307 = ssub.s32 %s24, %s31
    %s308 = sor.u32 %s306, %s307
    %p309 = scmp.eq.s32.totalorder %s308, 0
    %s311 = sadd.s32 %s310, 1
    %s312 = scalar_select %p309, %s310, %s311
    %p315 = pneg %p309
    %p316 = scmp.eq.s32.totalorder %s16, 1
    %p317 = por %p315, %p316
    %p318 = scmp.ne.s32.totalorder %s310, %s313
    %p319 = scmp.eq.s32.totalorder %s16, 0
    %p320 = por %p318, %p319
    %p321 = scmp.ne.s32.totalorder %s310, %s313
    %p322 = scmp.eq.s32.totalorder %s21, 1
    %p323 = por %p321, %p322
    %p324 = scmp.ne.s32.totalorder %s313, %s314
    %p325 = scmp.eq.s32.totalorder %s21, 0
    %p326 = por %p324, %p325
    %p327 = scmp.ne.s32.totalorder %s313, %s314
    %p328 = scmp.eq.s32.totalorder %s22, 1
    %p329 = por %p327, %p328
    %p331 = scmp.ne.s32.totalorder %s314, %s330
    %p332 = scmp.eq.s32.totalorder %s22, 0
    %p333 = por %p331, %p332
    %p334 = scmp.le.s32.totalorder 1, %s16
    %p335 = scmp.lt.s32.totalorder %s16, 3
    %p336 = pnand %p334, %p335
    %p337 = pneg %p336
    // Predicated region
    $region9: #{_lambda_.5} parent=5 // pred_check
      _
    $region10: #{_lambda_.5} parent=5 // pred_check_branch
      %339 = sbr.rel (%p336) target = $region12
    $region11: #{_lambda_.5} parent=5 // pred_region
      %s340 = ssub.s32 %s16, 1
      // Predicated region
      $region13: #{_lambda_.5} parent=11 // pred_check
        %p341 = pneg %p249
      $region14: #{_lambda_.5} parent=11 // pred_check_branch
        %343 = sbr.rel (%p341) target = $region16
      $region15: #{_lambda_.5} parent=11 // pred_region
        _
      $region16: #{_lambda_.5} parent=11 // pred_fallthru
        _
      // Predicated region
      $region17: #{_lambda_.5} parent=11 // pred_check
        %p344 = pneg %p270
      $region18: #{_lambda_.5} parent=11 // pred_check_branch
        %346 = sbr.rel (%p344) target = $region20
      $region19: #{_lambda_.5} parent=11 // pred_region
        _
      $region20: #{_lambda_.5} parent=11 // pred_fallthru
        _
    $region12: #{_lambda_.5} parent=5 // pred_fallthru
      _
    %p347 = scmp.lt.s32.totalorder %s16, 2
    // Predicated region
    $region21: #{_lambda_.5} parent=5 // pred_check
      %p348 = pneg %p347
    $region22: #{_lambda_.5} parent=5 // pred_check_branch
      %350 = sbr.rel (%p348) target = $region24
    $region23: #{_lambda_.5} parent=5 // pred_region
      // Predicated region
      $region25: #{_lambda_.5} parent=23 // pred_check
        %p351 = pneg %p50
      $region26: #{_lambda_.5} parent=23 // pred_check_branch
        %353 = sbr.rel (%p351) target = $region28
      $region27: #{_lambda_.5} parent=23 // pred_region
        %s354 = smul.u32 16, %s24
        %p355 = scmp.lt.s32.totalorder %s23, 1
        %s356 = scalar_select %p355, %s23, 1
        %p357 = scmp.lt.s32.totalorder %s354, 15
        %s358 = scalar_select %p357, %s354, 15
        %s359 = smul.addr %s358, 2
        %s360 = smul.addr %s356, 32
        %s361 = sadd.s32 %s359, %s360
        %s362 = smul.addr %s361, 8
        %s363 = scalar_lea.vmem %s0, %s362
        %s364 = smul.u32 16, %s24
      $region28: #{_lambda_.5} parent=23 // pred_fallthru
        _
      // Predicated region
      $region29: #{_lambda_.5} parent=23 // pred_check
        %p365 = pneg %p86
      $region30: #{_lambda_.5} parent=23 // pred_check_branch
        %367 = sbr.rel (%p365) target = $region32
      $region31: #{_lambda_.5} parent=23 // pred_region
        %s368 = smul.u32 %s24, 16
        %s369 = ssub.s32 %s368, 1
        %p370 = scmp.gt.s32.totalorder %s369, 0
        %s371 = scalar_select %p370, %s369, 0
        %p372 = scmp.lt.s32.totalorder %s23, 1
        %s373 = scalar_select %p372, %s23, 1
        %p374 = scmp.lt.s32.totalorder %s371, 15
        %s375 = scalar_select %p374, %s371, 15
        %s376 = smul.addr %s375, 2
        %s377 = smul.addr %s373, 32
        %s378 = sadd.s32 %s376, %s377
        %s379 = smul.addr %s378, 8
        %s380 = scalar_lea.vmem %s1, %s379
        %s381 = smul.u32 %s24, 16
        %s382 = ssub.s32 %s381, 1
        %p383 = scmp.gt.s32.totalorder %s382, 0
        %s384 = scalar_select %p383, %s382, 0
      $region32: #{_lambda_.5} parent=23 // pred_fallthru
        _
      // Predicated region
      $region33: #{_lambda_.5} parent=23 // pred_check
        %p385 = pneg %p122
      $region34: #{_lambda_.5} parent=23 // pred_check_branch
        %387 = sbr.rel (%p385) target = $region36
      $region35: #{_lambda_.5} parent=23 // pred_region
        %s388 = smul.u32 %s24, 16
        %s389 = sadd.s32 %s388, 16
        %p390 = scmp.lt.s32.totalorder %s389, 15
        %s391 = scalar_select %p390, %s389, 15
        %p392 = scmp.lt.s32.totalorder %s23, 1
        %s393 = scalar_select %p392, %s23, 1
        %p394 = scmp.lt.s32.totalorder %s391, 15
        %s395 = scalar_select %p394, %s391, 15
        %s396 = smul.addr %s395, 2
        %s397 = smul.addr %s393, 32
        %s398 = sadd.s32 %s396, %s397
        %s399 = smul.addr %s398, 8
        %s400 = scalar_lea.vmem %s2, %s399
        %s401 = smul.u32 %s24, 16
        %s402 = sadd.s32 %s401, 16
        %p403 = scmp.lt.s32.totalorder %s402, 15
        %s404 = scalar_select %p403, %s402, 15
      $region36: #{_lambda_.5} parent=23 // pred_fallthru
        _
      // Predicated region
      $region37: #{_lambda_.5} parent=23 // pred_check
        %p405 = pneg %p150
      $region38: #{_lambda_.5} parent=23 // pred_check_branch
        %407 = sbr.rel (%p405) target = $region40
      $region39: #{_lambda_.5} parent=23 // pred_region
        %s408 = smul.u32 16, %s24
        %p409 = scmp.lt.s32.totalorder %s23, 1
        %s410 = scalar_select %p409, %s23, 1
        %p411 = scmp.lt.s32.totalorder %s408, 15
        %s412 = scalar_select %p411, %s408, 15
        %s413 = smul.addr %s412, 2
        %s414 = smul.addr %s410, 32
        %s415 = sadd.s32 %s413, %s414
        %s416 = smul.addr %s415, 8
        %s417 = scalar_lea.vmem %s3, %s416
        %s418 = smul.u32 16, %s24
      $region40: #{_lambda_.5} parent=23 // pred_fallthru
        _
      // Predicated region
      $region41: #{_lambda_.5} parent=23 // pred_check
        %p419 = pneg %p186
      $region42: #{_lambda_.5} parent=23 // pred_check_branch
        %421 = sbr.rel (%p419) target = $region44
      $region43: #{_lambda_.5} parent=23 // pred_region
        %s422 = smul.u32 %s24, 16
        %s423 = ssub.s32 %s422, 1
        %p424 = scmp.gt.s32.totalorder %s423, 0
        %s425 = scalar_select %p424, %s423, 0
        %p426 = scmp.lt.s32.totalorder %s23, 1
        %s427 = scalar_select %p426, %s23, 1
        %p428 = scmp.lt.s32.totalorder %s425, 15
        %s429 = scalar_select %p428, %s425, 15
        %s430 = smul.addr %s429, 2
        %s431 = smul.addr %s427, 32
        %s432 = sadd.s32 %s430, %s431
        %s433 = smul.addr %s432, 8
        %s434 = scalar_lea.vmem %s4, %s433
        %s435 = smul.u32 %s24, 16
        %s436 = ssub.s32 %s435, 1
        %p437 = scmp.gt.s32.totalorder %s436, 0
        %s438 = scalar_select %p437, %s436, 0
      $region44: #{_lambda_.5} parent=23 // pred_fallthru
        _
      // Predicated region
      $region45: #{_lambda_.5} parent=23 // pred_check
        %p439 = pneg %p222
      $region46: #{_lambda_.5} parent=23 // pred_check_branch
        %441 = sbr.rel (%p439) target = $region48
      $region47: #{_lambda_.5} parent=23 // pred_region
        %s442 = smul.u32 %s24, 16
        %s443 = sadd.s32 %s442, 16
        %p444 = scmp.lt.s32.totalorder %s443, 15
        %s445 = scalar_select %p444, %s443, 15
        %p446 = scmp.lt.s32.totalorder %s23, 1
        %s447 = scalar_select %p446, %s23, 1
        %p448 = scmp.lt.s32.totalorder %s445, 15
        %s449 = scalar_select %p448, %s445, 15
        %s450 = smul.addr %s449, 2
        %s451 = smul.addr %s447, 32
        %s452 = sadd.s32 %s450, %s451
        %s453 = smul.addr %s452, 8
        %s454 = scalar_lea.vmem %s5, %s453
        %s455 = smul.u32 %s24, 16
        %s456 = sadd.s32 %s455, 16
        %p457 = scmp.lt.s32.totalorder %s456, 15
        %s458 = scalar_select %p457, %s456, 15
      $region48: #{_lambda_.5} parent=23 // pred_fallthru
        _
    $region24: #{_lambda_.5} parent=5 // pred_fallthru
      _
    %p459 = scmp.le.s32.totalorder 1, %s16
    %p460 = scmp.lt.s32.totalorder %s16, 3
    %p461 = pnand %p459, %p460
    %p462 = pneg %p461
    // Predicated region
    $region49: #{_lambda_.5} parent=5 // pred_check
      _
    $region50: #{_lambda_.5} parent=5 // pred_check_branch
      %464 = sbr.rel (%p461) target = $region52
    $region51: #{_lambda_.5} parent=5 // pred_region
      %s465 = ssub.s32 %s16, 1
      %s466 = smul.u32 16, %s26
      %p467 = scmp.lt.s32.totalorder %s25, 1
      %s468 = scalar_select %p467, %s25, 1
      %p469 = scmp.lt.s32.totalorder %s466, 15
      %s470 = scalar_select %p469, %s466, 15
      %s471 = smul.addr %s470, 2
      %s472 = smul.addr %s468, 32
      %s473 = sadd.s32 %s471, %s472
      %s474 = smul.addr %s473, 8
      %s475 = scalar_lea.vmem %s0, %s474
      %p476 = pneg %p56
      %p477 = pneg %p53
      %s478 = smul.u32 %s26, 16
      %s479 = ssub.s32 %s478, 1
      %p480 = scmp.gt.s32.totalorder %s479, 0
      %s481 = scalar_select %p480, %s479, 0
      %p482 = scmp.lt.s32.totalorder %s25, 1
      %s483 = scalar_select %p482, %s25, 1
      %p484 = scmp.lt.s32.totalorder %s481, 15
      %s485 = scalar_select %p484, %s481, 15
      %s486 = smul.addr %s485, 2
      %s487 = smul.addr %s483, 32
      %s488 = sadd.s32 %s486, %s487
      %s489 = smul.addr %s488, 8
      %s490 = scalar_lea.vmem %s1, %s489
      %p491 = pneg %p92
      %p492 = pneg %p89
      %s493 = smul.u32 %s26, 16
      %s494 = sadd.s32 %s493, 16
      %p495 = scmp.lt.s32.totalorder %s494, 15
      %s496 = scalar_select %p495, %s494, 15
      %p497 = scmp.lt.s32.totalorder %s25, 1
      %s498 = scalar_select %p497, %s25, 1
      %p499 = scmp.lt.s32.totalorder %s496, 15
      %s500 = scalar_select %p499, %s496, 15
      %s501 = smul.addr %s500, 2
      %s502 = smul.addr %s498, 32
      %s503 = sadd.s32 %s501, %s502
      %s504 = smul.addr %s503, 8
      %s505 = scalar_lea.vmem %s2, %s504
      %p506 = pneg %p128
      %p507 = pneg %p125
      %s508 = smul.u32 16, %s26
      %p509 = scmp.lt.s32.totalorder %s25, 1
      %s510 = scalar_select %p509, %s25, 1
      %p511 = scmp.lt.s32.totalorder %s508, 15
      %s512 = scalar_select %p511, %s508, 15
      %s513 = smul.addr %s512, 2
      %s514 = smul.addr %s510, 32
      %s515 = sadd.s32 %s513, %s514
      %s516 = smul.addr %s515, 8
      %s517 = scalar_lea.vmem %s3, %s516
      %p518 = pneg %p156
      %p519 = pneg %p153
      %s520 = smul.u32 %s26, 16
      %s521 = ssub.s32 %s520, 1
      %p522 = scmp.gt.s32.totalorder %s521, 0
      %s523 = scalar_select %p522, %s521, 0
      %p524 = scmp.lt.s32.totalorder %s25, 1
      %s525 = scalar_select %p524, %s25, 1
      %p526 = scmp.lt.s32.totalorder %s523, 15
      %s527 = scalar_select %p526, %s523, 15
      %s528 = smul.addr %s527, 2
      %s529 = smul.addr %s525, 32
      %s530 = sadd.s32 %s528, %s529
      %s531 = smul.addr %s530, 8
      %s532 = scalar_lea.vmem %s4, %s531
      %p533 = pneg %p192
      %p534 = pneg %p189
      %s535 = smul.u32 %s26, 16
      %s536 = sadd.s32 %s535, 16
      %p537 = scmp.lt.s32.totalorder %s536, 15
      %s538 = scalar_select %p537, %s536, 15
      %p539 = scmp.lt.s32.totalorder %s25, 1
      %s540 = scalar_select %p539, %s25, 1
      %p541 = scmp.lt.s32.totalorder %s538, 15
      %s542 = scalar_select %p541, %s538, 15
      %s543 = smul.addr %s542, 2
      %s544 = smul.addr %s540, 32
      %s545 = sadd.s32 %s543, %s544
      %s546 = smul.addr %s545, 8
      %s547 = scalar_lea.vmem %s5, %s546
      %p548 = pneg %p228
      %p549 = pneg %p225
      %p550 = pneg %p249
      %p551 = pneg %p246
      %p552 = pneg %p270
      %p553 = pneg %p267
      %p554 = pneg %p298
      %p555 = pneg %p295
      %s556 = smul.u32 16, %s26
      %p557 = scmp.lt.s32.totalorder %s25, 1
      %s558 = scalar_select %p557, %s25, 1
      %p559 = scmp.lt.s32.totalorder %s556, 15
      %s560 = scalar_select %p559, %s556, 15
      %s561 = smul.addr %s560, 2
      %s562 = smul.addr %s558, 32
      %s563 = sadd.s32 %s561, %s562
      %s564 = smul.addr %s563, 8
      %s565 = scalar_lea.vmem %s8, %s564
      %p566 = pneg %p326
      %p567 = pneg %p323
      %p568 = scmp.lt.s32.totalorder %s25, 1
      %s569 = scalar_select %p568, %s25, 1
      %p570 = scmp.lt.s32.totalorder %s26, 0
      %s571 = scalar_select %p570, %s26, 0
      %s572 = sadd.s32 %s571, %s569
      %s573 = smul.addr %s572, 2
      %s574 = scalar_lea.vmem %s9, %s573
      %s575 = smul.u32 16, %s26
      %p576 = scmp.lt.s32.totalorder %s25, 1
      %s577 = scalar_select %p576, %s25, 1
      %p578 = scmp.lt.s32.totalorder %s575, 15
      %s579 = scalar_select %p578, %s575, 15
      %s580 = smul.addr %s579, 2
      %s581 = smul.addr %s577, 32
      %s582 = sadd.s32 %s580, %s581
      %s583 = smul.addr %s582, 8
      %s584 = scalar_lea.vmem %s0, %s583
      %s585 = smul.u32 16, %s26
      %s586 = smul.u32 %s26, 16
      %s587 = ssub.s32 %s586, 1
      %p588 = scmp.gt.s32.totalorder %s587, 0
      %s589 = scalar_select %p588, %s587, 0
      %p590 = scmp.lt.s32.totalorder %s25, 1
      %s591 = scalar_select %p590, %s25, 1
      %p592 = scmp.lt.s32.totalorder %s589, 15
      %s593 = scalar_select %p592, %s589, 15
      %s594 = smul.addr %s593, 2
      %s595 = smul.addr %s591, 32
      %s596 = sadd.s32 %s594, %s595
      %s597 = smul.addr %s596, 8
      %s598 = scalar_lea.vmem %s1, %s597
      %s599 = smul.u32 %s26, 16
      %s600 = ssub.s32 %s599, 1
      %p601 = scmp.gt.s32.totalorder %s600, 0
      %s602 = scalar_select %p601, %s600, 0
      %s603 = smul.u32 %s26, 16
      %s604 = sadd.s32 %s603, 16
      %p605 = scmp.lt.s32.totalorder %s604, 15
      %s606 = scalar_select %p605, %s604, 15
      %p607 = scmp.lt.s32.totalorder %s25, 1
      %s608 = scalar_select %p607, %s25, 1
      %p609 = scmp.lt.s32.totalorder %s606, 15
      %s610 = scalar_select %p609, %s606, 15
      %s611 = smul.addr %s610, 2
      %s612 = smul.addr %s608, 32
      %s613 = sadd.s32 %s611, %s612
      %s614 = smul.addr %s613, 8
      %s615 = scalar_lea.vmem %s2, %s614
      %s616 = smul.u32 %s26, 16
      %s617 = sadd.s32 %s616, 16
      %p618 = scmp.lt.s32.totalorder %s617, 15
      %s619 = scalar_select %p618, %s617, 15
      %s620 = smul.u32 16, %s26
      %p621 = scmp.lt.s32.totalorder %s25, 1
      %s622 = scalar_select %p621, %s25, 1
      %p623 = scmp.lt.s32.totalorder %s620, 15
      %s624 = scalar_select %p623, %s620, 15
      %s625 = smul.addr %s624, 2
      %s626 = smul.addr %s622, 32
      %s627 = sadd.s32 %s625, %s626
      %s628 = smul.addr %s627, 8
      %s629 = scalar_lea.vmem %s3, %s628
      %s630 = smul.u32 16, %s26
      %s631 = smul.u32 %s26, 16
      %s632 = ssub.s32 %s631, 1
      %p633 = scmp.gt.s32.totalorder %s632, 0
      %s634 = scalar_select %p633, %s632, 0
      %p635 = scmp.lt.s32.totalorder %s25, 1
      %s636 = scalar_select %p635, %s25, 1
      %p637 = scmp.lt.s32.totalorder %s634, 15
      %s638 = scalar_select %p637, %s634, 15
      %s639 = smul.addr %s638, 2
      %s640 = smul.addr %s636, 32
      %s641 = sadd.s32 %s639, %s640
      %s642 = smul.addr %s641, 8
      %s643 = scalar_lea.vmem %s4, %s642
      %s644 = smul.u32 %s26, 16
      %s645 = ssub.s32 %s644, 1
      %p646 = scmp.gt.s32.totalorder %s645, 0
      %s647 = scalar_select %p646, %s645, 0
      %s648 = smul.u32 %s26, 16
      %s649 = sadd.s32 %s648, 16
      %p650 = scmp.lt.s32.totalorder %s649, 15
      %s651 = scalar_select %p650, %s649, 15
      %p652 = scmp.lt.s32.totalorder %s25, 1
      %s653 = scalar_select %p652, %s25, 1
      %p654 = scmp.lt.s32.totalorder %s651, 15
      %s655 = scalar_select %p654, %s651, 15
      %s656 = smul.addr %s655, 2
      %s657 = smul.addr %s653, 32
      %s658 = sadd.s32 %s656, %s657
      %s659 = smul.addr %s658, 8
      %s660 = scalar_lea.vmem %s5, %s659
      %s661 = smul.u32 %s26, 16
      %s662 = sadd.s32 %s661, 16
      %p663 = scmp.lt.s32.totalorder %s662, 15
      %s664 = scalar_select %p663, %s662, 15
      %s665 = smul.u32 16, %s26
      %p666 = scmp.lt.s32.totalorder %s25, 1
      %s667 = scalar_select %p666, %s25, 1
      %p668 = scmp.lt.s32.totalorder %s665, 15
      %s669 = scalar_select %p668, %s665, 15
      %s670 = smul.addr %s669, 2
      %s671 = smul.addr %s667, 32
      %s672 = sadd.s32 %s670, %s671
      %s673 = smul.addr %s672, 8
      %s674 = scalar_lea.vmem %s8, %s673
      %s675 = smul.u32 16, %s26
      %p676 = scmp.lt.s32.totalorder %s25, 1
      %s677 = scalar_select %p676, %s25, 1
      %p678 = scmp.lt.s32.totalorder %s26, 0
      %s679 = scalar_select %p678, %s26, 0
      %s680 = sadd.s32 %s679, %s677
      %s681 = smul.addr %s680, 2
      %s682 = scalar_lea.vmem %s9, %s681
      %v683 = vld [vmem:[%s598] sm:$0xff]
      %v684 = vld [vmem:[%s598 + $0x8] sm:$0xff]
      %v685 = vld [vmem:[%s584] sm:$0xff]
      %v686 = vld [vmem:[%s584 + $0x8] sm:$0xff]
      %v687 = vld [vmem:[%s584 + $0x10] sm:$0xff]
      %v688 = vld [vmem:[%s584 + $0x18] sm:$0xff]
      %v689 = vld [vmem:[%s584 + $0x20] sm:$0xff]
      %v690 = vld [vmem:[%s584 + $0x28] sm:$0xff]
      %v691 = vld [vmem:[%s584 + $0x30] sm:$0xff]
      %v692 = vld [vmem:[%s584 + $0x38] sm:$0xff]
      %v693 = vld [vmem:[%s584 + $0x40] sm:$0xff]
      %v694 = vld [vmem:[%s584 + $0x48] sm:$0xff]
      %v695 = vld [vmem:[%s584 + $0x50] sm:$0xff]
      %v696 = vld [vmem:[%s584 + $0x58] sm:$0xff]
      %v697 = vld [vmem:[%s584 + $0x60] sm:$0xff]
      %v698 = vld [vmem:[%s584 + $0x68] sm:$0xff]
      %v699 = vld [vmem:[%s584 + $0x70] sm:$0xff]
      %v700 = vld [vmem:[%s584 + $0x78] sm:$0xff]
      %v701 = vld [vmem:[%s584 + $0x80] sm:$0xff]
      %v702 = vld [vmem:[%s584 + $0x88] sm:$0xff]
      %v703 = vld [vmem:[%s584 + $0x90] sm:$0xff]
      %v704 = vld [vmem:[%s584 + $0x98] sm:$0xff]
      %v705 = vld [vmem:[%s584 + $0xa0] sm:$0xff]
      %v706 = vld [vmem:[%s584 + $0xa8] sm:$0xff]
      %v707 = vld [vmem:[%s584 + $0xb0] sm:$0xff]
      %v708 = vld [vmem:[%s584 + $0xb8] sm:$0xff]
      %v709 = vld [vmem:[%s584 + $0xc0] sm:$0xff]
      %v710 = vld [vmem:[%s584 + $0xc8] sm:$0xff]
      %v711 = vld [vmem:[%s584 + $0xd0] sm:$0xff]
      %v712 = vld [vmem:[%s584 + $0xd8] sm:$0xff]
      %v713 = vld [vmem:[%s584 + $0xe0] sm:$0xff]
      %v714 = vld [vmem:[%s584 + $0xe8] sm:$0xff]
      %v715 = vld [vmem:[%s584 + $0xf0] sm:$0xff]
      %v716 = vld [vmem:[%s584 + $0xf8] sm:$0xff]
      %v717 = vld [vmem:[%s615] sm:$0xff]
      %v718 = vld [vmem:[%s615 + $0x8] sm:$0xff]
      %v719 = vld [vmem:[%s643] sm:$0xff]
      %v720 = vld [vmem:[%s643 + $0x8] sm:$0xff]
      %v721 = vld [vmem:[%s629] sm:$0xff]
      %v722 = vld [vmem:[%s629 + $0x8] sm:$0xff]
      %v723 = vld [vmem:[%s629 + $0x10] sm:$0xff]
      %v724 = vld [vmem:[%s629 + $0x18] sm:$0xff]
      %v725 = vld [vmem:[%s629 + $0x20] sm:$0xff]
      %v726 = vld [vmem:[%s629 + $0x28] sm:$0xff]
      %v727 = vld [vmem:[%s629 + $0x30] sm:$0xff]
      %v728 = vld [vmem:[%s629 + $0x38] sm:$0xff]
      %v729 = vld [vmem:[%s629 + $0x40] sm:$0xff]
      %v730 = vld [vmem:[%s629 + $0x48] sm:$0xff]
      %v731 = vld [vmem:[%s629 + $0x50] sm:$0xff]
      %v732 = vld [vmem:[%s629 + $0x58] sm:$0xff]
      %v733 = vld [vmem:[%s629 + $0x60] sm:$0xff]
      %v734 = vld [vmem:[%s629 + $0x68] sm:$0xff]
      %v735 = vld [vmem:[%s629 + $0x70] sm:$0xff]
      %v736 = vld [vmem:[%s629 + $0x78] sm:$0xff]
      %v737 = vld [vmem:[%s629 + $0x80] sm:$0xff]
      %v738 = vld [vmem:[%s629 + $0x88] sm:$0xff]
      %v739 = vld [vmem:[%s629 + $0x90] sm:$0xff]
      %v740 = vld [vmem:[%s629 + $0x98] sm:$0xff]
      %v741 = vld [vmem:[%s629 + $0xa0] sm:$0xff]
      %v742 = vld [vmem:[%s629 + $0xa8] sm:$0xff]
      %v743 = vld [vmem:[%s629 + $0xb0] sm:$0xff]
      %v744 = vld [vmem:[%s629 + $0xb8] sm:$0xff]
      %v745 = vld [vmem:[%s629 + $0xc0] sm:$0xff]
      %v746 = vld [vmem:[%s629 + $0xc8] sm:$0xff]
      %v747 = vld [vmem:[%s629 + $0xd0] sm:$0xff]
      %v748 = vld [vmem:[%s629 + $0xd8] sm:$0xff]
      %v749 = vld [vmem:[%s629 + $0xe0] sm:$0xff]
      %v750 = vld [vmem:[%s629 + $0xe8] sm:$0xff]
      %v751 = vld [vmem:[%s629 + $0xf0] sm:$0xff]
      %v752 = vld [vmem:[%s629 + $0xf8] sm:$0xff]
      %v753 = vld [vmem:[%s660] sm:$0xff]
      %v754 = vld [vmem:[%s660 + $0x8] sm:$0xff]
      %v755 = vld [vmem:[%s6] sm:$0x1]
      %v756 = vld [vmem:[%s6 + $0x1] sm:$0x1]
      %v757 = vlaneseq
      %v758 = vshrl.u32 %v757, 7
      %v759 = vsub.s32 0, %v758
      %v760 = vrot.slane %v755, %v759
      %v761 = vmul.f32 %v683, %v760
      %v762 = vmul.f32 %v684, %v760
      %v763 = vmul.f32 %v685, %v760
      %v764 = vmul.f32 %v686, %v760
      %v765 = vmul.f32 %v687, %v760
      %v766 = vmul.f32 %v688, %v760
      %v767 = vmul.f32 %v689, %v760
      %v768 = vmul.f32 %v690, %v760
      %v769 = vmul.f32 %v691, %v760
      %v770 = vmul.f32 %v692, %v760
      %v771 = vmul.f32 %v693, %v760
      %v772 = vmul.f32 %v694, %v760
      %v773 = vmul.f32 %v695, %v760
      %v774 = vmul.f32 %v696, %v760
      %v775 = vmul.f32 %v697, %v760
      %v776 = vmul.f32 %v698, %v760
      %v777 = vmul.f32 %v699, %v760
      %v778 = vmul.f32 %v700, %v760
      %v779 = vmul.f32 %v701, %v760
      %v780 = vmul.f32 %v702, %v760
      %v781 = vmul.f32 %v703, %v760
      %v782 = vmul.f32 %v704, %v760
      %v783 = vmul.f32 %v705, %v760
      %v784 = vmul.f32 %v706, %v760
      %v785 = vmul.f32 %v707, %v760
      %v786 = vmul.f32 %v708, %v760
      %v787 = vmul.f32 %v709, %v760
      %v788 = vmul.f32 %v710, %v760
      %v789 = vmul.f32 %v711, %v760
      %v790 = vmul.f32 %v712, %v760
      %v791 = vmul.f32 %v713, %v760
      %v792 = vmul.f32 %v714, %v760
      %v793 = vmul.f32 %v715, %v760
      %v794 = vmul.f32 %v716, %v760
      %v795 = vmul.f32 %v717, %v760
      %v796 = vmul.f32 %v718, %v760
      %v797 = vlaneseq
      %v798 = vshrl.u32 %v797, 7
      %v799 = vsub.s32 0, %v798
      %v800 = vrot.slane %v756, %v799
      %v801 = vadd.f32 %v761, %v800
      %v802 = vadd.f32 %v762, %v800
      %v803 = vadd.f32 %v763, %v800
      %v804 = vadd.f32 %v764, %v800
      %v805 = vadd.f32 %v765, %v800
      %v806 = vadd.f32 %v766, %v800
      %v807 = vadd.f32 %v767, %v800
      %v808 = vadd.f32 %v768, %v800
      %v809 = vadd.f32 %v769, %v800
      %v810 = vadd.f32 %v770, %v800
      %v811 = vadd.f32 %v771, %v800
      %v812 = vadd.f32 %v772, %v800
      %v813 = vadd.f32 %v773, %v800
      %v814 = vadd.f32 %v774, %v800
      %v815 = vadd.f32 %v775, %v800
      %v816 = vadd.f32 %v776, %v800
      %v817 = vadd.f32 %v777, %v800
      %v818 = vadd.f32 %v778, %v800
      %v819 = vadd.f32 %v779, %v800
      %v820 = vadd.f32 %v780, %v800
      %v821 = vadd.f32 %v781, %v800
      %v822 = vadd.f32 %v782, %v800
      %v823 = vadd.f32 %v783, %v800
      %v824 = vadd.f32 %v784, %v800
      %v825 = vadd.f32 %v785, %v800
      %v826 = vadd.f32 %v786, %v800
      %v827 = vadd.f32 %v787, %v800
      %v828 = vadd.f32 %v788, %v800
      %v829 = vadd.f32 %v789, %v800
      %v830 = vadd.f32 %v790, %v800
      %v831 = vadd.f32 %v791, %v800
      %v832 = vadd.f32 %v792, %v800
      %v833 = vadd.f32 %v793, %v800
      %v834 = vadd.f32 %v794, %v800
      %v835 = vadd.f32 %v795, %v800
      %v836 = vadd.f32 %v796, %v800
      %v837 = vmax.f32 %v801, 0.0
      %v838 = vmax.f32 %v802, 0.0
      %v839 = vmax.f32 %v803, 0.0
      %v840 = vmax.f32 %v804, 0.0
      %v841 = vmax.f32 %v805, 0.0
      %v842 = vmax.f32 %v806, 0.0
      %v843 = vmax.f32 %v807, 0.0
      %v844 = vmax.f32 %v808, 0.0
      %v845 = vmax.f32 %v809, 0.0
      %v846 = vmax.f32 %v810, 0.0
      %v847 = vmax.f32 %v811, 0.0
      %v848 = vmax.f32 %v812, 0.0
      %v849 = vmax.f32 %v813, 0.0
      %v850 = vmax.f32 %v814, 0.0
      %v851 = vmax.f32 %v815, 0.0
      %v852 = vmax.f32 %v816, 0.0
      %v853 = vmax.f32 %v817, 0.0
      %v854 = vmax.f32 %v818, 0.0
      %v855 = vmax.f32 %v819, 0.0
      %v856 = vmax.f32 %v820, 0.0
      %v857 = vmax.f32 %v821, 0.0
      %v858 = vmax.f32 %v822, 0.0
      %v859 = vmax.f32 %v823, 0.0
      %v860 = vmax.f32 %v824, 0.0
      %v861 = vmax.f32 %v825, 0.0
      %v862 = vmax.f32 %v826, 0.0
      %v863 = vmax.f32 %v827, 0.0
      %v864 = vmax.f32 %v828, 0.0
      %v865 = vmax.f32 %v829, 0.0
      %v866 = vmax.f32 %v830, 0.0
      %v867 = vmax.f32 %v831, 0.0
      %v868 = vmax.f32 %v832, 0.0
      %v869 = vmax.f32 %v833, 0.0
      %v870 = vmax.f32 %v834, 0.0
      %v871 = vmax.f32 %v835, 0.0
      %v872 = vmax.f32 %v836, 0.0
      %909 = vrot.lane.b32.xlu0 %v719, 4
      %v910 = vpop.permute.xlu0 %909
      %911 = vrot.lane.b32.xlu0 %v720, 4
      %v912 = vpop.permute.xlu0 %911
      %913 = vrot.lane.b32.xlu0 %v721, 4
      %v914 = vpop.permute.xlu0 %913
      %915 = vrot.lane.b32.xlu0 %v722, 4
      %v916 = vpop.permute.xlu0 %915
      %917 = vrot.lane.b32.xlu0 %v723, 4
      %v918 = vpop.permute.xlu0 %917
      %919 = vrot.lane.b32.xlu0 %v724, 4
      %v920 = vpop.permute.xlu0 %919
      %921 = vrot.lane.b32.xlu0 %v725, 4
      %v922 = vpop.permute.xlu0 %921
      %923 = vrot.lane.b32.xlu0 %v726, 4
      %v924 = vpop.permute.xlu0 %923
      %925 = vrot.lane.b32.xlu0 %v727, 4
      %v926 = vpop.permute.xlu0 %925
      %927 = vrot.lane.b32.xlu0 %v728, 4
      %v928 = vpop.permute.xlu0 %927
      %929 = vrot.lane.b32.xlu0 %v729, 4
      %v930 = vpop.permute.xlu0 %929
      %931 = vrot.lane.b32.xlu0 %v730, 4
      %v932 = vpop.permute.xlu0 %931
      %933 = vrot.lane.b32.xlu0 %v731, 4
      %v934 = vpop.permute.xlu0 %933
      %935 = vrot.lane.b32.xlu0 %v732, 4
      %v936 = vpop.permute.xlu0 %935
      %937 = vrot.lane.b32.xlu0 %v733, 4
      %v938 = vpop.permute.xlu0 %937
      %939 = vrot.lane.b32.xlu0 %v734, 4
      %v940 = vpop.permute.xlu0 %939
      %941 = vrot.lane.b32.xlu0 %v735, 4
      %v942 = vpop.permute.xlu0 %941
      %943 = vrot.lane.b32.xlu0 %v736, 4
      %v944 = vpop.permute.xlu0 %943
      %945 = vrot.lane.b32.xlu0 %v737, 4
      %v946 = vpop.permute.xlu0 %945
      %947 = vrot.lane.b32.xlu0 %v738, 4
      %v948 = vpop.permute.xlu0 %947
      %949 = vrot.lane.b32.xlu0 %v739, 4
      %v950 = vpop.permute.xlu0 %949
      %951 = vrot.lane.b32.xlu0 %v740, 4
      %v952 = vpop.permute.xlu0 %951
      %953 = vrot.lane.b32.xlu0 %v741, 4
      %v954 = vpop.permute.xlu0 %953
      %955 = vrot.lane.b32.xlu0 %v742, 4
      %v956 = vpop.permute.xlu0 %955
      %957 = vrot.lane.b32.xlu0 %v743, 4
      %v958 = vpop.permute.xlu0 %957
      %959 = vrot.lane.b32.xlu0 %v744, 4
      %v960 = vpop.permute.xlu0 %959
      %961 = vrot.lane.b32.xlu0 %v745, 4
      %v962 = vpop.permute.xlu0 %961
      %963 = vrot.lane.b32.xlu0 %v746, 4
      %v964 = vpop.permute.xlu0 %963
      %965 = vrot.lane.b32.xlu0 %v747, 4
      %v966 = vpop.permute.xlu0 %965
      %967 = vrot.lane.b32.xlu0 %v748, 4
      %v968 = vpop.permute.xlu0 %967
      %969 = vrot.lane.b32.xlu0 %v749, 4
      %v970 = vpop.permute.xlu0 %969
      %971 = vrot.lane.b32.xlu0 %v750, 4
      %v972 = vpop.permute.xlu0 %971
      %973 = vrot.lane.b32.xlu0 %v751, 4
      %v974 = vpop.permute.xlu0 %973
      %975 = vrot.lane.b32.xlu0 %v752, 4
      %v976 = vpop.permute.xlu0 %975
      %977 = vrot.lane.b32.xlu0 %v753, 4
      %v978 = vpop.permute.xlu0 %977
      %979 = vrot.lane.b32.xlu0 %v754, 4
      %v980 = vpop.permute.xlu0 %979
      %vm1017 = vcmask 31744
      %v1018 = vsel %vm1017, %v837, %v910
      %v1019 = vsel %vm1017, %v838, %v912
      %v1020 = vsel %vm1017, %v839, %v914
      %v1021 = vsel %vm1017, %v840, %v916
      %v1022 = vsel %vm1017, %v841, %v918
      %v1023 = vsel %vm1017, %v842, %v920
      %v1024 = vsel %vm1017, %v843, %v922
      %v1025 = vsel %vm1017, %v844, %v924
      %v1026 = vsel %vm1017, %v845, %v926
      %v1027 = vsel %vm1017, %v846, %v928
      %v1028 = vsel %vm1017, %v847, %v930
      %v1029 = vsel %vm1017, %v848, %v932
      %v1030 = vsel %vm1017, %v849, %v934
      %v1031 = vsel %vm1017, %v850, %v936
      %v1032 = vsel %vm1017, %v851, %v938
      %v1033 = vsel %vm1017, %v852, %v940
      %v1034 = vsel %vm1017, %v853, %v942
      %v1035 = vsel %vm1017, %v854, %v944
      %v1036 = vsel %vm1017, %v855, %v946
      %v1037 = vsel %vm1017, %v856, %v948
      %v1038 = vsel %vm1017, %v857, %v950
      %v1039 = vsel %vm1017, %v858, %v952
      %v1040 = vsel %vm1017, %v859, %v954
      %v1041 = vsel %vm1017, %v860, %v956
      %v1042 = vsel %vm1017, %v861, %v958
      %v1043 = vsel %vm1017, %v862, %v960
      %v1044 = vsel %vm1017, %v863, %v962
      %v1045 = vsel %vm1017, %v864, %v964
      %v1046 = vsel %vm1017, %v865, %v966
      %v1047 = vsel %vm1017, %v866, %v968
      %v1048 = vsel %vm1017, %v867, %v970
      %v1049 = vsel %vm1017, %v868, %v972
      %v1050 = vsel %vm1017, %v869, %v974
      %v1051 = vsel %vm1017, %v870, %v976
      %v1052 = vsel %vm1017, %v871, %v978
      %v1053 = vsel %vm1017, %v872, %v980
      %s1054 = smul.u32 %s26, 16
      %s1055 = ssub.s32 %s1054, 1
      %v1056 = vstv %s1055
      %v1057 = vadd.s32 %v1056, 1
      %v1058 = vadd.s32 %v1056, 2
      %v1059 = vadd.s32 %v1056, 3
      %v1060 = vadd.s32 %v1056, 4
      %v1061 = vadd.s32 %v1056, 5
      %v1062 = vadd.s32 %v1056, 6
      %v1063 = vadd.s32 %v1056, 7
      %v1064 = vadd.s32 %v1056, 8
      %v1065 = vadd.s32 %v1056, 9
      %v1066 = vadd.s32 %v1056, 10
      %v1067 = vadd.s32 %v1056, 11
      %v1068 = vadd.s32 %v1056, 12
      %v1069 = vadd.s32 %v1056, 13
      %v1070 = vadd.s32 %v1056, 14
      %v1071 = vadd.s32 %v1056, 15
      %v1072 = vadd.s32 %v1056, 16
      %v1073 = vadd.s32 %v1056, 17
      %vm1074 = vcmp.ge.s32.totalorder %v1056, 0
      %vm1075 = vcmp.ge.s32.totalorder %v1057, 0
      %vm1076 = vcmp.ge.s32.totalorder %v1058, 0
      %vm1077 = vcmp.ge.s32.totalorder %v1059, 0
      %vm1078 = vcmp.ge.s32.totalorder %v1060, 0
      %vm1079 = vcmp.ge.s32.totalorder %v1061, 0
      %vm1080 = vcmp.ge.s32.totalorder %v1062, 0
      %vm1081 = vcmp.ge.s32.totalorder %v1063, 0
      %vm1082 = vcmp.ge.s32.totalorder %v1064, 0
      %vm1083 = vcmp.ge.s32.totalorder %v1065, 0
      %vm1084 = vcmp.ge.s32.totalorder %v1066, 0
      %vm1085 = vcmp.ge.s32.totalorder %v1067, 0
      %vm1086 = vcmp.ge.s32.totalorder %v1068, 0
      %vm1087 = vcmp.ge.s32.totalorder %v1069, 0
      %vm1088 = vcmp.ge.s32.totalorder %v1070, 0
      %vm1089 = vcmp.ge.s32.totalorder %v1071, 0
      %vm1090 = vcmp.ge.s32.totalorder %v1072, 0
      %vm1091 = vcmp.ge.s32.totalorder %v1073, 0
      %vm1092 = vcmp.lt.s32.totalorder %v1056, 16
      %vm1093 = vcmp.lt.s32.totalorder %v1057, 16
      %vm1094 = vcmp.lt.s32.totalorder %v1058, 16
      %vm1095 = vcmp.lt.s32.totalorder %v1059, 16
      %vm1096 = vcmp.lt.s32.totalorder %v1060, 16
      %vm1097 = vcmp.lt.s32.totalorder %v1061, 16
      %vm1098 = vcmp.lt.s32.totalorder %v1062, 16
      %vm1099 = vcmp.lt.s32.totalorder %v1063, 16
      %vm1100 = vcmp.lt.s32.totalorder %v1064, 16
      %vm1101 = vcmp.lt.s32.totalorder %v1065, 16
      %vm1102 = vcmp.lt.s32.totalorder %v1066, 16
      %vm1103 = vcmp.lt.s32.totalorder %v1067, 16
      %vm1104 = vcmp.lt.s32.totalorder %v1068, 16
      %vm1105 = vcmp.lt.s32.totalorder %v1069, 16
      %vm1106 = vcmp.lt.s32.totalorder %v1070, 16
      %vm1107 = vcmp.lt.s32.totalorder %v1071, 16
      %vm1108 = vcmp.lt.s32.totalorder %v1072, 16
      %vm1109 = vcmp.lt.s32.totalorder %v1073, 16
      %vm1110 = vmand %vm1074, %vm1092
      %vm1111 = vmand %vm1075, %vm1093
      %vm1112 = vmand %vm1076, %vm1094
      %vm1113 = vmand %vm1077, %vm1095
      %vm1114 = vmand %vm1078, %vm1096
      %vm1115 = vmand %vm1079, %vm1097
      %vm1116 = vmand %vm1080, %vm1098
      %vm1117 = vmand %vm1081, %vm1099
      %vm1118 = vmand %vm1082, %vm1100
      %vm1119 = vmand %vm1083, %vm1101
      %vm1120 = vmand %vm1084, %vm1102
      %vm1121 = vmand %vm1085, %vm1103
      %vm1122 = vmand %vm1086, %vm1104
      %vm1123 = vmand %vm1087, %vm1105
      %vm1124 = vmand %vm1088, %vm1106
      %vm1125 = vmand %vm1089, %vm1107
      %vm1126 = vmand %vm1090, %vm1108
      %vm1127 = vmand %vm1091, %vm1109
      %v1128 = vsel %vm1110, 1, 0
      %v1129 = vsel %vm1111, 1, 0
      %v1130 = vsel %vm1112, 1, 0
      %v1131 = vsel %vm1113, 1, 0
      %v1132 = vsel %vm1114, 1, 0
      %v1133 = vsel %vm1115, 1, 0
      %v1134 = vsel %vm1116, 1, 0
      %v1135 = vsel %vm1117, 1, 0
      %v1136 = vsel %vm1118, 1, 0
      %v1137 = vsel %vm1119, 1, 0
      %v1138 = vsel %vm1120, 1, 0
      %v1139 = vsel %vm1121, 1, 0
      %v1140 = vsel %vm1122, 1, 0
      %v1141 = vsel %vm1123, 1, 0
      %v1142 = vsel %vm1124, 1, 0
      %v1143 = vsel %vm1125, 1, 0
      %v1144 = vsel %vm1126, 1, 0
      %v1145 = vsel %vm1127, 1, 0
      %vm1146 = vcmp.eq.s32.totalorder %v1128, 1
      %vm1147 = vcmp.eq.s32.totalorder %v1129, 1
      %vm1148 = vcmp.eq.s32.totalorder %v1130, 1
      %vm1149 = vcmp.eq.s32.totalorder %v1131, 1
      %vm1150 = vcmp.eq.s32.totalorder %v1132, 1
      %vm1151 = vcmp.eq.s32.totalorder %v1133, 1
      %vm1152 = vcmp.eq.s32.totalorder %v1134, 1
      %vm1153 = vcmp.eq.s32.totalorder %v1135, 1
      %vm1154 = vcmp.eq.s32.totalorder %v1136, 1
      %vm1155 = vcmp.eq.s32.totalorder %v1137, 1
      %vm1156 = vcmp.eq.s32.totalorder %v1138, 1
      %vm1157 = vcmp.eq.s32.totalorder %v1139, 1
      %vm1158 = vcmp.eq.s32.totalorder %v1140, 1
      %vm1159 = vcmp.eq.s32.totalorder %v1141, 1
      %vm1160 = vcmp.eq.s32.totalorder %v1142, 1
      %vm1161 = vcmp.eq.s32.totalorder %v1143, 1
      %vm1162 = vcmp.eq.s32.totalorder %v1144, 1
      %vm1163 = vcmp.eq.s32.totalorder %v1145, 1
      %v1164 = vsel %vm1146, %v1018, 0.0
      %v1165 = vsel %vm1146, %v1019, 0.0
      %v1166 = vsel %vm1147, %v1020, 0.0
      %v1167 = vsel %vm1147, %v1021, 0.0
      %v1168 = vsel %vm1148, %v1022, 0.0
      %v1169 = vsel %vm1148, %v1023, 0.0
      %v1170 = vsel %vm1149, %v1024, 0.0
      %v1171 = vsel %vm1149, %v1025, 0.0
      %v1172 = vsel %vm1150, %v1026, 0.0
      %v1173 = vsel %vm1150, %v1027, 0.0
      %v1174 = vsel %vm1151, %v1028, 0.0
      %v1175 = vsel %vm1151, %v1029, 0.0
      %v1176 = vsel %vm1152, %v1030, 0.0
      %v1177 = vsel %vm1152, %v1031, 0.0
      %v1178 = vsel %vm1153, %v1032, 0.0
      %v1179 = vsel %vm1153, %v1033, 0.0
      %v1180 = vsel %vm1154, %v1034, 0.0
      %v1181 = vsel %vm1154, %v1035, 0.0
      %v1182 = vsel %vm1155, %v1036, 0.0
      %v1183 = vsel %vm1155, %v1037, 0.0
      %v1184 = vsel %vm1156, %v1038, 0.0
      %v1185 = vsel %vm1156, %v1039, 0.0
      %v1186 = vsel %vm1157, %v1040, 0.0
      %v1187 = vsel %vm1157, %v1041, 0.0
      %v1188 = vsel %vm1158, %v1042, 0.0
      %v1189 = vsel %vm1158, %v1043, 0.0
      %v1190 = vsel %vm1159, %v1044, 0.0
      %v1191 = vsel %vm1159, %v1045, 0.0
      %v1192 = vsel %vm1160, %v1046, 0.0
      %v1193 = vsel %vm1160, %v1047, 0.0
      %v1194 = vsel %vm1161, %v1048, 0.0
      %v1195 = vsel %vm1161, %v1049, 0.0
      %v1196 = vsel %vm1162, %v1050, 0.0
      %v1197 = vsel %vm1162, %v1051, 0.0
      %v1198 = vsel %vm1163, %v1052, 0.0
      %v1199 = vsel %vm1163, %v1053, 0.0
      %vm1236 = vcmask 1040384
      %v1237 = vrot.slane %v1164, 7
      %v1238 = vrot.slane %v1165, 7
      %v1239 = vsel %vm1236, %v1237, %v1238
      %v1240 = vrot.slane %v1166, 7
      %v1241 = vrot.slane %v1167, 7
      %v1242 = vsel %vm1236, %v1240, %v1241
      %v1243 = vrot.slane %v1168, 7
      %v1244 = vrot.slane %v1169, 7
      %v1245 = vsel %vm1236, %v1243, %v1244
      %v1246 = vrot.slane %v1170, 7
      %v1247 = vrot.slane %v1171, 7
      %v1248 = vsel %vm1236, %v1246, %v1247
      %v1249 = vrot.slane %v1172, 7
      %v1250 = vrot.slane %v1173, 7
      %v1251 = vsel %vm1236, %v1249, %v1250
      %v1252 = vrot.slane %v1174, 7
      %v1253 = vrot.slane %v1175, 7
      %v1254 = vsel %vm1236, %v1252, %v1253
      %v1255 = vrot.slane %v1176, 7
      %v1256 = vrot.slane %v1177, 7
      %v1257 = vsel %vm1236, %v1255, %v1256
      %v1258 = vrot.slane %v1178, 7
      %v1259 = vrot.slane %v1179, 7
      %v1260 = vsel %vm1236, %v1258, %v1259
      %v1261 = vrot.slane %v1180, 7
      %v1262 = vrot.slane %v1181, 7
      %v1263 = vsel %vm1236, %v1261, %v1262
      %v1264 = vrot.slane %v1182, 7
      %v1265 = vrot.slane %v1183, 7
      %v1266 = vsel %vm1236, %v1264, %v1265
      %v1267 = vrot.slane %v1184, 7
      %v1268 = vrot.slane %v1185, 7
      %v1269 = vsel %vm1236, %v1267, %v1268
      %v1270 = vrot.slane %v1186, 7
      %v1271 = vrot.slane %v1187, 7
      %v1272 = vsel %vm1236, %v1270, %v1271
      %v1273 = vrot.slane %v1188, 7
      %v1274 = vrot.slane %v1189, 7
      %v1275 = vsel %vm1236, %v1273, %v1274
      %v1276 = vrot.slane %v1190, 7
      %v1277 = vrot.slane %v1191, 7
      %v1278 = vsel %vm1236, %v1276, %v1277
      %v1279 = vrot.slane %v1192, 7
      %v1280 = vrot.slane %v1193, 7
      %v1281 = vsel %vm1236, %v1279, %v1280
      %v1282 = vrot.slane %v1194, 7
      %v1283 = vrot.slane %v1195, 7
      %v1284 = vsel %vm1236, %v1282, %v1283
      %v1285 = vrot.slane %v1196, 7
      %v1286 = vrot.slane %v1197, 7
      %v1287 = vsel %vm1236, %v1285, %v1286
      %v1288 = vrot.slane %v1198, 7
      %v1289 = vrot.slane %v1199, 7
      %v1290 = vsel %vm1236, %v1288, %v1289
      %v1327 = vsel %vm1236, 0.0, %v1237
      %v1328 = vsel %vm1236, 0.0, %v1240
      %v1329 = vsel %vm1236, 0.0, %v1243
      %v1330 = vsel %vm1236, 0.0, %v1246
      %v1331 = vsel %vm1236, 0.0, %v1249
      %v1332 = vsel %vm1236, 0.0, %v1252
      %v1333 = vsel %vm1236, 0.0, %v1255
      %v1334 = vsel %vm1236, 0.0, %v1258
      %v1335 = vsel %vm1236, 0.0, %v1261
      %v1336 = vsel %vm1236, 0.0, %v1264
      %v1337 = vsel %vm1236, 0.0, %v1267
      %v1338 = vsel %vm1236, 0.0, %v1270
      %v1339 = vsel %vm1236, 0.0, %v1273
      %v1340 = vsel %vm1236, 0.0, %v1276
      %v1341 = vsel %vm1236, 0.0, %v1279
      %v1342 = vsel %vm1236, 0.0, %v1282
      %v1343 = vsel %vm1236, 0.0, %v1285
      %v1344 = vsel %vm1236, 0.0, %v1288
      %vm1345 = vcmask 1046528
      %v1346 = vrot.slane %v1164, 1
      %v1347 = vrot.slane %v1165, 1
      %v1348 = vsel %vm1345, %v1346, %v1347
      %v1349 = vrot.slane %v1166, 1
      %v1350 = vrot.slane %v1167, 1
      %v1351 = vsel %vm1345, %v1349, %v1350
      %v1352 = vrot.slane %v1168, 1
      %v1353 = vrot.slane %v1169, 1
      %v1354 = vsel %vm1345, %v1352, %v1353
      %v1355 = vrot.slane %v1170, 1
      %v1356 = vrot.slane %v1171, 1
      %v1357 = vsel %vm1345, %v1355, %v1356
      %v1358 = vrot.slane %v1172, 1
      %v1359 = vrot.slane %v1173, 1
      %v1360 = vsel %vm1345, %v1358, %v1359
      %v1361 = vrot.slane %v1174, 1
      %v1362 = vrot.slane %v1175, 1
      %v1363 = vsel %vm1345, %v1361, %v1362
      %v1364 = vrot.slane %v1176, 1
      %v1365 = vrot.slane %v1177, 1
      %v1366 = vsel %vm1345, %v1364, %v1365
      %v1367 = vrot.slane %v1178, 1
      %v1368 = vrot.slane %v1179, 1
      %v1369 = vsel %vm1345, %v1367, %v1368
      %v1370 = vrot.slane %v1180, 1
      %v1371 = vrot.slane %v1181, 1
      %v1372 = vsel %vm1345, %v1370, %v1371
      %v1373 = vrot.slane %v1182, 1
      %v1374 = vrot.slane %v1183, 1
      %v1375 = vsel %vm1345, %v1373, %v1374
      %v1376 = vrot.slane %v1184, 1
      %v1377 = vrot.slane %v1185, 1
      %v1378 = vsel %vm1345, %v1376, %v1377
      %v1379 = vrot.slane %v1186, 1
      %v1380 = vrot.slane %v1187, 1
      %v1381 = vsel %vm1345, %v1379, %v1380
      %v1382 = vrot.slane %v1188, 1
      %v1383 = vrot.slane %v1189, 1
      %v1384 = vsel %vm1345, %v1382, %v1383
      %v1385 = vrot.slane %v1190, 1
      %v1386 = vrot.slane %v1191, 1
      %v1387 = vsel %vm1345, %v1385, %v1386
      %v1388 = vrot.slane %v1192, 1
      %v1389 = vrot.slane %v1193, 1
      %v1390 = vsel %vm1345, %v1388, %v1389
      %v1391 = vrot.slane %v1194, 1
      %v1392 = vrot.slane %v1195, 1
      %v1393 = vsel %vm1345, %v1391, %v1392
      %v1394 = vrot.slane %v1196, 1
      %v1395 = vrot.slane %v1197, 1
      %v1396 = vsel %vm1345, %v1394, %v1395
      %v1397 = vrot.slane %v1198, 1
      %v1398 = vrot.slane %v1199, 1
      %v1399 = vsel %vm1345, %v1397, %v1398
      %v1418 = vsel %vm1345, %v1347, 0.0
      %v1419 = vsel %vm1345, %v1350, 0.0
      %v1420 = vsel %vm1345, %v1353, 0.0
      %v1421 = vsel %vm1345, %v1356, 0.0
      %v1422 = vsel %vm1345, %v1359, 0.0
      %v1423 = vsel %vm1345, %v1362, 0.0
      %v1424 = vsel %vm1345, %v1365, 0.0
      %v1425 = vsel %vm1345, %v1368, 0.0
      %v1426 = vsel %vm1345, %v1371, 0.0
      %v1427 = vsel %vm1345, %v1374, 0.0
      %v1428 = vsel %vm1345, %v1377, 0.0
      %v1429 = vsel %vm1345, %v1380, 0.0
      %v1430 = vsel %vm1345, %v1383, 0.0
      %v1431 = vsel %vm1345, %v1386, 0.0
      %v1432 = vsel %vm1345, %v1389, 0.0
      %v1433 = vsel %vm1345, %v1392, 0.0
      %v1434 = vsel %vm1345, %v1395, 0.0
      %v1435 = vsel %vm1345, %v1398, 0.0
      %1436 = vrot.lane.b32.xlu0 %v1164, 8
      %v1437 = vpop.permute.xlu0 %1436
      %1438 = vrot.lane.b32.xlu0 %v1165, 8
      %v1439 = vpop.permute.xlu0 %1438
      %1440 = vrot.lane.b32.xlu0 %v1166, 8
      %v1441 = vpop.permute.xlu0 %1440
      %1442 = vrot.lane.b32.xlu0 %v1167, 8
      %v1443 = vpop.permute.xlu0 %1442
      %1444 = vrot.lane.b32.xlu0 %v1168, 8
      %v1445 = vpop.permute.xlu0 %1444
      %1446 = vrot.lane.b32.xlu0 %v1169, 8
      %v1447 = vpop.permute.xlu0 %1446
      %1448 = vrot.lane.b32.xlu0 %v1170, 8
      %v1449 = vpop.permute.xlu0 %1448
      %1450 = vrot.lane.b32.xlu0 %v1171, 8
      %v1451 = vpop.permute.xlu0 %1450
      %1452 = vrot.lane.b32.xlu0 %v1172, 8
      %v1453 = vpop.permute.xlu0 %1452
      %1454 = vrot.lane.b32.xlu0 %v1173, 8
      %v1455 = vpop.permute.xlu0 %1454
      %1456 = vrot.lane.b32.xlu0 %v1174, 8
      %v1457 = vpop.permute.xlu0 %1456
      %1458 = vrot.lane.b32.xlu0 %v1175, 8
      %v1459 = vpop.permute.xlu0 %1458
      %1460 = vrot.lane.b32.xlu0 %v1176, 8
      %v1461 = vpop.permute.xlu0 %1460
      %1462 = vrot.lane.b32.xlu0 %v1177, 8
      %v1463 = vpop.permute.xlu0 %1462
      %1464 = vrot.lane.b32.xlu0 %v1178, 8
      %v1465 = vpop.permute.xlu0 %1464
      %1466 = vrot.lane.b32.xlu0 %v1179, 8
      %v1467 = vpop.permute.xlu0 %1466
      %1468 = vrot.lane.b32.xlu0 %v1180, 8
      %v1469 = vpop.permute.xlu0 %1468
      %1470 = vrot.lane.b32.xlu0 %v1181, 8
      %v1471 = vpop.permute.xlu0 %1470
      %1472 = vrot.lane.b32.xlu0 %v1182, 8
      %v1473 = vpop.permute.xlu0 %1472
      %1474 = vrot.lane.b32.xlu0 %v1183, 8
      %v1475 = vpop.permute.xlu0 %1474
      %1476 = vrot.lane.b32.xlu0 %v1184, 8
      %v1477 = vpop.permute.xlu0 %1476
      %1478 = vrot.lane.b32.xlu0 %v1185, 8
      %v1479 = vpop.permute.xlu0 %1478
      %1480 = vrot.lane.b32.xlu0 %v1186, 8
      %v1481 = vpop.permute.xlu0 %1480
      %1482 = vrot.lane.b32.xlu0 %v1187, 8
      %v1483 = vpop.permute.xlu0 %1482
      %1484 = vrot.lane.b32.xlu0 %v1188, 8
      %v1485 = vpop.permute.xlu0 %1484
      %1486 = vrot.lane.b32.xlu0 %v1189, 8
      %v1487 = vpop.permute.xlu0 %1486
      %1488 = vrot.lane.b32.xlu0 %v1190, 8
      %v1489 = vpop.permute.xlu0 %1488
      %1490 = vrot.lane.b32.xlu0 %v1191, 8
      %v1491 = vpop.permute.xlu0 %1490
      %1492 = vrot.lane.b32.xlu0 %v1192, 8
      %v1493 = vpop.permute.xlu0 %1492
      %1494 = vrot.lane.b32.xlu0 %v1193, 8
      %v1495 = vpop.permute.xlu0 %1494
      %1496 = vrot.lane.b32.xlu0 %v1194, 8
      %v1497 = vpop.permute.xlu0 %1496
      %1498 = vrot.lane.b32.xlu0 %v1195, 8
      %v1499 = vpop.permute.xlu0 %1498
      %1500 = vrot.lane.b32.xlu0 %v1196, 8
      %v1501 = vpop.permute.xlu0 %1500
      %1502 = vrot.lane.b32.xlu0 %v1197, 8
      %v1503 = vpop.permute.xlu0 %1502
      %1504 = vrot.lane.b32.xlu0 %v1198, 8
      %v1505 = vpop.permute.xlu0 %1504
      %1506 = vrot.lane.b32.xlu0 %v1199, 8
      %v1507 = vpop.permute.xlu0 %1506
      %1562 = vrot.lane.b32.xlu0 %v1348, 16
      %v1563 = vpop.permute.xlu0 %1562
      %1564 = vrot.lane.b32.xlu0 %v1418, 16
      %v1565 = vpop.permute.xlu0 %1564
      %1566 = vrot.lane.b32.xlu0 %v1351, 16
      %v1567 = vpop.permute.xlu0 %1566
      %1568 = vrot.lane.b32.xlu0 %v1419, 16
      %v1569 = vpop.permute.xlu0 %1568
      %1570 = vrot.lane.b32.xlu0 %v1354, 16
      %v1571 = vpop.permute.xlu0 %1570
      %1572 = vrot.lane.b32.xlu0 %v1420, 16
      %v1573 = vpop.permute.xlu0 %1572
      %1574 = vrot.lane.b32.xlu0 %v1357, 16
      %v1575 = vpop.permute.xlu0 %1574
      %1576 = vrot.lane.b32.xlu0 %v1421, 16
      %v1577 = vpop.permute.xlu0 %1576
      %1578 = vrot.lane.b32.xlu0 %v1360, 16
      %v1579 = vpop.permute.xlu0 %1578
      %1580 = vrot.lane.b32.xlu0 %v1422, 16
      %v1581 = vpop.permute.xlu0 %1580
      %1582 = vrot.lane.b32.xlu0 %v1363, 16
      %v1583 = vpop.permute.xlu0 %1582
      %1584 = vrot.lane.b32.xlu0 %v1423, 16
      %v1585 = vpop.permute.xlu0 %1584
      %1586 = vrot.lane.b32.xlu0 %v1366, 16
      %v1587 = vpop.permute.xlu0 %1586
      %1588 = vrot.lane.b32.xlu0 %v1424, 16
      %v1589 = vpop.permute.xlu0 %1588
      %1590 = vrot.lane.b32.xlu0 %v1369, 16
      %v1591 = vpop.permute.xlu0 %1590
      %1592 = vrot.lane.b32.xlu0 %v1425, 16
      %v1593 = vpop.permute.xlu0 %1592
      %1594 = vrot.lane.b32.xlu0 %v1372, 16
      %v1595 = vpop.permute.xlu0 %1594
      %1596 = vrot.lane.b32.xlu0 %v1426, 16
      %v1597 = vpop.permute.xlu0 %1596
      %1598 = vrot.lane.b32.xlu0 %v1375, 16
      %v1599 = vpop.permute.xlu0 %1598
      %1600 = vrot.lane.b32.xlu0 %v1427, 16
      %v1601 = vpop.permute.xlu0 %1600
      %1602 = vrot.lane.b32.xlu0 %v1378, 16
      %v1603 = vpop.permute.xlu0 %1602
      %1604 = vrot.lane.b32.xlu0 %v1428, 16
      %v1605 = vpop.permute.xlu0 %1604
      %1606 = vrot.lane.b32.xlu0 %v1381, 16
      %v1607 = vpop.permute.xlu0 %1606
      %1608 = vrot.lane.b32.xlu0 %v1429, 16
      %v1609 = vpop.permute.xlu0 %1608
      %1610 = vrot.lane.b32.xlu0 %v1384, 16
      %v1611 = vpop.permute.xlu0 %1610
      %1612 = vrot.lane.b32.xlu0 %v1430, 16
      %v1613 = vpop.permute.xlu0 %1612
      %1614 = vrot.lane.b32.xlu0 %v1387, 16
      %v1615 = vpop.permute.xlu0 %1614
      %1616 = vrot.lane.b32.xlu0 %v1431, 16
      %v1617 = vpop.permute.xlu0 %1616
      %1618 = vrot.lane.b32.xlu0 %v1390, 16
      %v1619 = vpop.permute.xlu0 %1618
      %1620 = vrot.lane.b32.xlu0 %v1432, 16
      %v1621 = vpop.permute.xlu0 %1620
      %1622 = vrot.lane.b32.xlu0 %v1393, 16
      %v1623 = vpop.permute.xlu0 %1622
      %1624 = vrot.lane.b32.xlu0 %v1433, 16
      %v1625 = vpop.permute.xlu0 %1624
      %1626 = vrot.lane.b32.xlu0 %v1396, 16
      %v1627 = vpop.permute.xlu0 %1626
      %1628 = vrot.lane.b32.xlu0 %v1434, 16
      %v1629 = vpop.permute.xlu0 %1628
      %1630 = vrot.lane.b32.xlu0 %v1399, 16
      %v1631 = vpop.permute.xlu0 %1630
      %1632 = vrot.lane.b32.xlu0 %v1435, 16
      %v1633 = vpop.permute.xlu0 %1632
      %vm1670 = vcmask 64512
      %v1671 = vsel %vm1670, %v1327, %v1437
      %v1672 = vsel %vm1670, %v1239, %v1439
      %v1673 = vsel %vm1670, %v1328, %v1441
      %v1674 = vsel %vm1670, %v1242, %v1443
      %v1675 = vsel %vm1670, %v1329, %v1445
      %v1676 = vsel %vm1670, %v1245, %v1447
      %v1677 = vsel %vm1670, %v1330, %v1449
      %v1678 = vsel %vm1670, %v1248, %v1451
      %v1679 = vsel %vm1670, %v1331, %v1453
      %v1680 = vsel %vm1670, %v1251, %v1455
      %v1681 = vsel %vm1670, %v1332, %v1457
      %v1682 = vsel %vm1670, %v1254, %v1459
      %v1683 = vsel %vm1670, %v1333, %v1461
      %v1684 = vsel %vm1670, %v1257, %v1463
      %v1685 = vsel %vm1670, %v1334, %v1465
      %v1686 = vsel %vm1670, %v1260, %v1467
      %v1687 = vsel %vm1670, %v1335, %v1469
      %v1688 = vsel %vm1670, %v1263, %v1471
      %v1689 = vsel %vm1670, %v1336, %v1473
      %v1690 = vsel %vm1670, %v1266, %v1475
      %v1691 = vsel %vm1670, %v1337, %v1477
      %v1692 = vsel %vm1670, %v1269, %v1479
      %v1693 = vsel %vm1670, %v1338, %v1481
      %v1694 = vsel %vm1670, %v1272, %v1483
      %v1695 = vsel %vm1670, %v1339, %v1485
      %v1696 = vsel %vm1670, %v1275, %v1487
      %v1697 = vsel %vm1670, %v1340, %v1489
      %v1698 = vsel %vm1670, %v1278, %v1491
      %v1699 = vsel %vm1670, %v1341, %v1493
      %v1700 = vsel %vm1670, %v1281, %v1495
      %v1701 = vsel %vm1670, %v1342, %v1497
      %v1702 = vsel %vm1670, %v1284, %v1499
      %v1703 = vsel %vm1670, %v1343, %v1501
      %v1704 = vsel %vm1670, %v1287, %v1503
      %v1705 = vsel %vm1670, %v1344, %v1505
      %v1706 = vsel %vm1670, %v1290, %v1507
      %vm1707 = vcmask 130048
      %v1708 = vsel %vm1707, %v1671, %v1563
      %v1709 = vsel %vm1707, %v1672, %v1565
      %v1710 = vsel %vm1707, %v1673, %v1567
      %v1711 = vsel %vm1707, %v1674, %v1569
      %v1712 = vsel %vm1707, %v1675, %v1571
      %v1713 = vsel %vm1707, %v1676, %v1573
      %v1714 = vsel %vm1707, %v1677, %v1575
      %v1715 = vsel %vm1707, %v1678, %v1577
      %v1716 = vsel %vm1707, %v1679, %v1579
      %v1717 = vsel %vm1707, %v1680, %v1581
      %v1718 = vsel %vm1707, %v1681, %v1583
      %v1719 = vsel %vm1707, %v1682, %v1585
      %v1720 = vsel %vm1707, %v1683, %v1587
      %v1721 = vsel %vm1707, %v1684, %v1589
      %v1722 = vsel %vm1707, %v1685, %v1591
      %v1723 = vsel %vm1707, %v1686, %v1593
      %v1724 = vsel %vm1707, %v1687, %v1595
      %v1725 = vsel %vm1707, %v1688, %v1597
      %v1726 = vsel %vm1707, %v1689, %v1599
      %v1727 = vsel %vm1707, %v1690, %v1601
      %v1728 = vsel %vm1707, %v1691, %v1603
      %v1729 = vsel %vm1707, %v1692, %v1605
      %v1730 = vsel %vm1707, %v1693, %v1607
      %v1731 = vsel %vm1707, %v1694, %v1609
      %v1732 = vsel %vm1707, %v1695, %v1611
      %v1733 = vsel %vm1707, %v1696, %v1613
      %v1734 = vsel %vm1707, %v1697, %v1615
      %v1735 = vsel %vm1707, %v1698, %v1617
      %v1736 = vsel %vm1707, %v1699, %v1619
      %v1737 = vsel %vm1707, %v1700, %v1621
      %v1738 = vsel %vm1707, %v1701, %v1623
      %v1739 = vsel %vm1707, %v1702, %v1625
      %v1740 = vsel %vm1707, %v1703, %v1627
      %v1741 = vsel %vm1707, %v1704, %v1629
      %v1742 = vsel %vm1707, %v1705, %v1631
      %v1743 = vsel %vm1707, %v1706, %v1633
      %vm1744 = vcmask 195584
      %1745 = vst.msk [vmem:[#allocation2] sm:$0xff] %vm1744, %v1708
      %1746 = vst.msk [vmem:[#allocation2 + $0x8] sm:$0xff] %vm1744, %v1709
      %1747 = vst.msk [vmem:[#allocation2 + $0x10] sm:$0xff] %vm1744, %v1710
      %1748 = vst.msk [vmem:[#allocation2 + $0x18] sm:$0xff] %vm1744, %v1711
      %1749 = vst.msk [vmem:[#allocation2 + $0x20] sm:$0xff] %vm1744, %v1712
      %1750 = vst.msk [vmem:[#allocation2 + $0x28] sm:$0xff] %vm1744, %v1713
      %1751 = vst.msk [vmem:[#allocation2 + $0x30] sm:$0xff] %vm1744, %v1714
      %1752 = vst.msk [vmem:[#allocation2 + $0x38] sm:$0xff] %vm1744, %v1715
      %1753 = vst.msk [vmem:[#allocation2 + $0x40] sm:$0xff] %vm1744, %v1716
      %1754 = vst.msk [vmem:[#allocation2 + $0x48] sm:$0xff] %vm1744, %v1717
      %1755 = vst.msk [vmem:[#allocation2 + $0x50] sm:$0xff] %vm1744, %v1718
      %1756 = vst.msk [vmem:[#allocation2 + $0x58] sm:$0xff] %vm1744, %v1719
      %1757 = vst.msk [vmem:[#allocation2 + $0x60] sm:$0xff] %vm1744, %v1720
      %1758 = vst.msk [vmem:[#allocation2 + $0x68] sm:$0xff] %vm1744, %v1721
      %1759 = vst.msk [vmem:[#allocation2 + $0x70] sm:$0xff] %vm1744, %v1722
      %1760 = vst.msk [vmem:[#allocation2 + $0x78] sm:$0xff] %vm1744, %v1723
      %1761 = vst.msk [vmem:[#allocation2 + $0x80] sm:$0xff] %vm1744, %v1724
      %1762 = vst.msk [vmem:[#allocation2 + $0x88] sm:$0xff] %vm1744, %v1725
      %1763 = vst.msk [vmem:[#allocation2 + $0x90] sm:$0xff] %vm1744, %v1726
      %1764 = vst.msk [vmem:[#allocation2 + $0x98] sm:$0xff] %vm1744, %v1727
      %1765 = vst.msk [vmem:[#allocation2 + $0xa0] sm:$0xff] %vm1744, %v1728
      %1766 = vst.msk [vmem:[#allocation2 + $0xa8] sm:$0xff] %vm1744, %v1729
      %1767 = vst.msk [vmem:[#allocation2 + $0xb0] sm:$0xff] %vm1744, %v1730
      %1768 = vst.msk [vmem:[#allocation2 + $0xb8] sm:$0xff] %vm1744, %v1731
      %1769 = vst.msk [vmem:[#allocation2 + $0xc0] sm:$0xff] %vm1744, %v1732
      %1770 = vst.msk [vmem:[#allocation2 + $0xc8] sm:$0xff] %vm1744, %v1733
      %1771 = vst.msk [vmem:[#allocation2 + $0xd0] sm:$0xff] %vm1744, %v1734
      %1772 = vst.msk [vmem:[#allocation2 + $0xd8] sm:$0xff] %vm1744, %v1735
      %1773 = vst.msk [vmem:[#allocation2 + $0xe0] sm:$0xff] %vm1744, %v1736
      %1774 = vst.msk [vmem:[#allocation2 + $0xe8] sm:$0xff] %vm1744, %v1737
      %1775 = vst.msk [vmem:[#allocation2 + $0xf0] sm:$0xff] %vm1744, %v1738
      %1776 = vst.msk [vmem:[#allocation2 + $0xf8] sm:$0xff] %vm1744, %v1739
      %1777 = vst.msk [vmem:[#allocation2 + $0x100] sm:$0xff] %vm1744, %v1740
      %1778 = vst.msk [vmem:[#allocation2 + $0x108] sm:$0xff] %vm1744, %v1741
      %1779 = vst.msk [vmem:[#allocation2 + $0x110] sm:$0xff] %vm1744, %v1742
      %1780 = vst.msk [vmem:[#allocation2 + $0x118] sm:$0xff] %vm1744, %v1743
      %v1781 = vld [vmem:[#allocation2] sm:$0xff]
      %v1782 = vld [vmem:[#allocation2 + $0x8] sm:$0xff]
      %v1783 = vld [vmem:[#allocation2 + $0x10] sm:$0xff]
      %v1784 = vld [vmem:[#allocation2 + $0x18] sm:$0xff]
      %v1785 = vld [vmem:[#allocation2 + $0x20] sm:$0xff]
      %v1786 = vld [vmem:[#allocation2 + $0x28] sm:$0xff]
      %v1787 = vld [vmem:[#allocation2 + $0x30] sm:$0xff]
      %v1788 = vld [vmem:[#allocation2 + $0x38] sm:$0xff]
      %v1789 = vld [vmem:[#allocation2 + $0x40] sm:$0xff]
      %v1790 = vld [vmem:[#allocation2 + $0x48] sm:$0xff]
      %v1791 = vld [vmem:[#allocation2 + $0x50] sm:$0xff]
      %v1792 = vld [vmem:[#allocation2 + $0x58] sm:$0xff]
      %v1793 = vld [vmem:[#allocation2 + $0x60] sm:$0xff]
      %v1794 = vld [vmem:[#allocation2 + $0x68] sm:$0xff]
      %v1795 = vld [vmem:[#allocation2 + $0x70] sm:$0xff]
      %v1796 = vld [vmem:[#allocation2 + $0x78] sm:$0xff]
      %v1797 = vld [vmem:[#allocation2 + $0x80] sm:$0xff]
      %v1798 = vld [vmem:[#allocation2 + $0x88] sm:$0xff]
      %v1799 = vld [vmem:[#allocation2 + $0x90] sm:$0xff]
      %v1800 = vld [vmem:[#allocation2 + $0x98] sm:$0xff]
      %v1801 = vld [vmem:[#allocation2 + $0xa0] sm:$0xff]
      %v1802 = vld [vmem:[#allocation2 + $0xa8] sm:$0xff]
      %v1803 = vld [vmem:[#allocation2 + $0xb0] sm:$0xff]
      %v1804 = vld [vmem:[#allocation2 + $0xb8] sm:$0xff]
      %v1805 = vld [vmem:[#allocation2 + $0xc0] sm:$0xff]
      %v1806 = vld [vmem:[#allocation2 + $0xc8] sm:$0xff]
      %v1807 = vld [vmem:[#allocation2 + $0xd0] sm:$0xff]
      %v1808 = vld [vmem:[#allocation2 + $0xd8] sm:$0xff]
      %v1809 = vld [vmem:[#allocation2 + $0xe0] sm:$0xff]
      %v1810 = vld [vmem:[#allocation2 + $0xe8] sm:$0xff]
      %v1811 = vld [vmem:[#allocation2 + $0xf0] sm:$0xff]
      %v1812 = vld [vmem:[#allocation2 + $0xf8] sm:$0xff]
      %v1813 = vld [vmem:[%s7] sm:$0xff]
      %v1814 = vld [vmem:[%s7 + $0x8] sm:$0xff]
      %v1815 = vld [vmem:[%s7 + $0x10] sm:$0xff]
      %s1816 = scalar_lea.vmem [#allocation2], 16
      %v1817 = vld [vmem:[%s1816] sm:$0xff]
      %v1818 = vld [vmem:[%s1816 + $0x8] sm:$0xff]
      %v1819 = vld [vmem:[%s1816 + $0x10] sm:$0xff]
      %v1820 = vld [vmem:[%s1816 + $0x18] sm:$0xff]
      %v1821 = vld [vmem:[%s1816 + $0x20] sm:$0xff]
      %v1822 = vld [vmem:[%s1816 + $0x28] sm:$0xff]
      %v1823 = vld [vmem:[%s1816 + $0x30] sm:$0xff]
      %v1824 = vld [vmem:[%s1816 + $0x38] sm:$0xff]
      %v1825 = vld [vmem:[%s1816 + $0x40] sm:$0xff]
      %v1826 = vld [vmem:[%s1816 + $0x48] sm:$0xff]
      %v1827 = vld [vmem:[%s1816 + $0x50] sm:$0xff]
      %v1828 = vld [vmem:[%s1816 + $0x58] sm:$0xff]
      %v1829 = vld [vmem:[%s1816 + $0x60] sm:$0xff]
      %v1830 = vld [vmem:[%s1816 + $0x68] sm:$0xff]
      %v1831 = vld [vmem:[%s1816 + $0x70] sm:$0xff]
      %v1832 = vld [vmem:[%s1816 + $0x78] sm:$0xff]
      %v1833 = vld [vmem:[%s1816 + $0x80] sm:$0xff]
      %v1834 = vld [vmem:[%s1816 + $0x88] sm:$0xff]
      %v1835 = vld [vmem:[%s1816 + $0x90] sm:$0xff]
      %v1836 = vld [vmem:[%s1816 + $0x98] sm:$0xff]
      %v1837 = vld [vmem:[%s1816 + $0xa0] sm:$0xff]
      %v1838 = vld [vmem:[%s1816 + $0xa8] sm:$0xff]
      %v1839 = vld [vmem:[%s1816 + $0xb0] sm:$0xff]
      %v1840 = vld [vmem:[%s1816 + $0xb8] sm:$0xff]
      %v1841 = vld [vmem:[%s1816 + $0xc0] sm:$0xff]
      %v1842 = vld [vmem:[%s1816 + $0xc8] sm:$0xff]
      %v1843 = vld [vmem:[%s1816 + $0xd0] sm:$0xff]
      %v1844 = vld [vmem:[%s1816 + $0xd8] sm:$0xff]
      %v1845 = vld [vmem:[%s1816 + $0xe0] sm:$0xff]
      %v1846 = vld [vmem:[%s1816 + $0xe8] sm:$0xff]
      %v1847 = vld [vmem:[%s1816 + $0xf0] sm:$0xff]
      %v1848 = vld [vmem:[%s1816 + $0xf8] sm:$0xff]
      %s1849 = scalar_lea.vmem %s7, 24
      %v1850 = vld [vmem:[%s1849] sm:$0xff]
      %v1851 = vld [vmem:[%s1849 + $0x8] sm:$0xff]
      %v1852 = vld [vmem:[%s1849 + $0x10] sm:$0xff]
      %v1854 = vsel %vm1744, %v1817, 0
      %v1857 = vsel %vm1744, %v1818, 0
      %v1860 = vsel %vm1744, %v1819, 0
      %v1863 = vsel %vm1744, %v1820, 0
      %v1866 = vsel %vm1744, %v1821, 0
      %v1869 = vsel %vm1744, %v1822, 0
      %v1872 = vsel %vm1744, %v1823, 0
      %v1875 = vsel %vm1744, %v1824, 0
      %v1878 = vsel %vm1744, %v1825, 0
      %v1881 = vsel %vm1744, %v1826, 0
      %v1884 = vsel %vm1744, %v1827, 0
      %v1887 = vsel %vm1744, %v1828, 0
      %v1890 = vsel %vm1744, %v1829, 0
      %v1893 = vsel %vm1744, %v1830, 0
      %v1896 = vsel %vm1744, %v1831, 0
      %v1899 = vsel %vm1744, %v1832, 0
      %v1902 = vsel %vm1744, %v1833, 0
      %v1905 = vsel %vm1744, %v1834, 0
      %v1908 = vsel %vm1744, %v1835, 0
      %v1911 = vsel %vm1744, %v1836, 0
      %v1914 = vsel %vm1744, %v1837, 0
      %v1917 = vsel %vm1744, %v1838, 0
      %v1920 = vsel %vm1744, %v1839, 0
      %v1923 = vsel %vm1744, %v1840, 0
      %v1926 = vsel %vm1744, %v1841, 0
      %v1929 = vsel %vm1744, %v1842, 0
      %v1932 = vsel %vm1744, %v1843, 0
      %v1935 = vsel %vm1744, %v1844, 0
      %v1938 = vsel %vm1744, %v1845, 0
      %v1941 = vsel %vm1744, %v1846, 0
      %v1944 = vsel %vm1744, %v1847, 0
      %v1947 = vsel %vm1744, %v1848, 0
      %1949 = vmatprep.subr.mxu0 0.0
      %1950 = vmatpush1.msra.mxu0 %v1850
      %1951 = vmatprep.subr.mxu0 0.0
      %1952 = vmatpush1.msra.mxu0 %v1851
      %1953 = vmatprep.subr.mxu0 0.0
      %1954 = vmatpush1.msra.mxu0 %v1852
      %1955 = vmatprep.subr.mxu0 0.0
      %1956 = vmatpush1.msra.mxu0 0.0
      %1957 = vmatprep.subr.mxu0 0.0
      %1958 = vmatpush1.msra.mxu0 0.0
      %1959 = vmatprep.subr.mxu0 0.0
      %1960 = vmatpush1.msra.mxu0 0.0
      %1961 = vmatprep.subr.mxu0 0.0
      %1962 = vmatpush1.msra.mxu0 0.0
      %1963 = vmatprep.subr.mxu0 0.0
      %1964 = vmatpush1.msra.mxu0 0.0
      %1965 = vmatprep.subr.mxu0 0.0
      %1966 = vmatpush1.msra.mxu0 0.0
      %1967 = vmatprep.subr.mxu0 0.0
      %1968 = vmatpush1.msra.mxu0 0.0
      %1969 = vmatprep.subr.mxu0 0.0
      %1970 = vmatpush1.msra.mxu0 0.0
      %1971 = vmatprep.subr.mxu0 0.0
      %1972 = vmatpush1.msra.mxu0 0.0
      %1973 = vmatprep.subr.mxu0 0.0
      %1974 = vmatpush1.msra.mxu0 0.0
      %1975 = vmatprep.subr.mxu0 0.0
      %1976 = vmatpush1.msra.mxu0 0.0
      %1977 = vmatprep.subr.mxu0 0.0
      %1978 = vmatpush1.msra.mxu0 0.0
      %1979 = vmatprep.subr.mxu0 0.0
      %1980 = vmatpush1.msra.mxu0 0.0
      %1981 = vmatprep.subr.mxu0 0.0
      %1982 = vmatpush1.msra.mxu0 0.0
      %1983 = vmatprep.subr.mxu0 0.0
      %1984 = vmatpush1.msra.mxu0 0.0
      %1985 = vmatprep.subr.mxu0 0.0
      %1986 = vmatpush1.msra.mxu0 0.0
      %1987 = vmatprep.subr.mxu0 0.0
      %1988 = vmatpush1.msra.mxu0 0.0
      %1989 = vmatprep.subr.mxu0 0.0
      %1990 = vmatpush1.msra.mxu0 0.0
      %1991 = vmatprep.subr.mxu0 0.0
      %1992 = vmatpush1.msra.mxu0 0.0
      %1993 = vmatprep.subr.mxu0 0.0
      %1994 = vmatpush1.msra.mxu0 0.0
      %1995 = vmatprep.subr.mxu0 0.0
      %1996 = vmatpush1.msra.mxu0 0.0
      %1997 = vmatprep.subr.mxu0 0.0
      %1998 = vmatpush1.msra.mxu0 0.0
      %1999 = vmatprep.subr.mxu0 0.0
      %2000 = vmatpush1.msra.mxu0 0.0
      %2001 = vmatprep.subr.mxu0 0.0
      %2002 = vmatpush1.msra.mxu0 0.0
      %2003 = vmatprep.subr.mxu0 0.0
      %2004 = vmatpush1.msra.mxu0 0.0
      %2005 = vmatprep.subr.mxu0 0.0
      %2006 = vmatpush1.msra.mxu0 0.0
      %2007 = vmatprep.subr.mxu0 0.0
      %2008 = vmatpush1.msra.mxu0 0.0
      %2009 = vmatprep.subr.mxu0 0.0
      %2010 = vmatpush1.msra.mxu0 0.0
      %2011 = vmatprep.subr.mxu0 0.0
      %2012 = vmatpush1.msra.mxu0 0.0
      %2013 = vmatprep.mubr.f32.mxu0 0.0
      %2014 = vmatmul.mubr.f32.gmra.mrb[0].mxu0 %v1854
      %v2015 = vpop.f32.mrb[0].mxu0
      %v2016 = vadd.f32 0.0, %v2015
      %v2017 = vpop.f32.mrb[0].mxu0
      %2018 = vmatprep.mubr.f32.mxu0 0.0
      %2019 = vmatmul.mubr.f32.gmra.mrb[0].mxu0 %v1857
      %v2020 = vpop.f32.mrb[0].mxu0
      %v2021 = vadd.f32 0.0, %v2020
      %v2022 = vpop.f32.mrb[0].mxu0
      %2023 = vmatprep.mubr.f32.mxu0 0.0
      %2024 = vmatmul.mubr.f32.gmra.mrb[0].mxu0 %v1860
      %v2025 = vpop.f32.mrb[0].mxu0
      %v2026 = vadd.f32 0.0, %v2025
      %v2027 = vpop.f32.mrb[0].mxu0
      %2028 = vmatprep.mubr.f32.mxu0 0.0
      %2029 = vmatmul.mubr.f32.gmra.mrb[0].mxu0 %v1863
      %v2030 = vpop.f32.mrb[0].mxu0
      %v2031 = vadd.f32 0.0, %v2030
      %v2032 = vpop.f32.mrb[0].mxu0
      %2033 = vmatprep.mubr.f32.mxu0 0.0
      %2034 = vmatmul.mubr.f32.gmra.mrb[0].mxu0 %v1866
      %v2035 = vpop.f32.mrb[0].mxu0
      %v2036 = vadd.f32 0.0, %v2035
      %v2037 = vpop.f32.mrb[0].mxu0
      %2038 = vmatprep.mubr.f32.mxu0 0.0
      %2039 = vmatmul.mubr.f32.gmra.mrb[0].mxu0 %v1869
      %v2040 = vpop.f32.mrb[0].mxu0
      %v2041 = vadd.f32 0.0, %v2040
      %v2042 = vpop.f32.mrb[0].mxu0
      %2043 = vmatprep.mubr.f32.mxu0 0.0
      %2044 = vmatmul.mubr.f32.gmra.mrb[0].mxu0 %v1872
      %v2045 = vpop.f32.mrb[0].mxu0
      %v2046 = vadd.f32 0.0, %v2045
      %v2047 = vpop.f32.mrb[0].mxu0
      %2048 = vmatprep.mubr.f32.mxu0 0.0
      %2049 = vmatmul.mubr.f32.gmra.mrb[0].mxu0 %v1875
      %v2050 = vpop.f32.mrb[0].mxu0
      %v2051 = vadd.f32 0.0, %v2050
      %v2052 = vpop.f32.mrb[0].mxu0
      %2053 = vmatprep.mubr.f32.mxu0 0.0
      %2054 = vmatmul.mubr.f32.gmra.mrb[0].mxu0 %v1878
      %v2055 = vpop.f32.mrb[0].mxu0
      %v2056 = vadd.f32 0.0, %v2055
      %v2057 = vpop.f32.mrb[0].mxu0
      %2058 = vmatprep.mubr.f32.mxu0 0.0
      %2059 = vmatmul.mubr.f32.gmra.mrb[0].mxu0 %v1881
      %v2060 = vpop.f32.mrb[0].mxu0
      %v2061 = vadd.f32 0.0, %v2060
      %v2062 = vpop.f32.mrb[0].mxu0
      %2063 = vmatprep.mubr.f32.mxu0 0.0
      %2064 = vmatmul.mubr.f32.gmra.mrb[0].mxu0 %v1884
      %v2065 = vpop.f32.mrb[0].mxu0
      %v2066 = vadd.f32 0.0, %v2065
      %v2067 = vpop.f32.mrb[0].mxu0
      %2068 = vmatprep.mubr.f32.mxu0 0.0
      %2069 = vmatmul.mubr.f32.gmra.mrb[0].mxu0 %v1887
      %v2070 = vpop.f32.mrb[0].mxu0
      %v2071 = vadd.f32 0.0, %v2070
      %v2072 = vpop.f32.mrb[0].mxu0
      %2073 = vmatprep.mubr.f32.mxu0 0.0
      %2074 = vmatmul.mubr.f32.gmra.mrb[0].mxu0 %v1890
      %v2075 = vpop.f32.mrb[0].mxu0
      %v2076 = vadd.f32 0.0, %v2075
      %v2077 = vpop.f32.mrb[0].mxu0
      %2078 = vmatprep.mubr.f32.mxu0 0.0
      %2079 = vmatmul.mubr.f32.gmra.mrb[0].mxu0 %v1893
      %v2080 = vpop.f32.mrb[0].mxu0
      %v2081 = vadd.f32 0.0, %v2080
      %v2082 = vpop.f32.mrb[0].mxu0
      %2083 = vmatprep.mubr.f32.mxu0 0.0
      %2084 = vmatmul.mubr.f32.gmra.mrb[0].mxu0 %v1896
      %v2085 = vpop.f32.mrb[0].mxu0
      %v2086 = vadd.f32 0.0, %v2085
      %v2087 = vpop.f32.mrb[0].mxu0
      %2088 = vmatprep.mubr.f32.mxu0 0.0
      %2089 = vmatmul.mubr.f32.gmra.mrb[0].mxu0 %v1899
      %v2090 = vpop.f32.mrb[0].mxu0
      %v2091 = vadd.f32 0.0, %v2090
      %v2092 = vpop.f32.mrb[0].mxu0
      %2093 = vmatprep.mubr.f32.mxu0 0.0
      %2094 = vmatmul.mubr.f32.gmra.mrb[0].mxu0 %v1902
      %v2095 = vpop.f32.mrb[0].mxu0
      %v2096 = vadd.f32 0.0, %v2095
      %v2097 = vpop.f32.mrb[0].mxu0
      %2098 = vmatprep.mubr.f32.mxu0 0.0
      %2099 = vmatmul.mubr.f32.gmra.mrb[0].mxu0 %v1905
      %v2100 = vpop.f32.mrb[0].mxu0
      %v2101 = vadd.f32 0.0, %v2100
      %v2102 = vpop.f32.mrb[0].mxu0
      %2103 = vmatprep.mubr.f32.mxu0 0.0
      %2104 = vmatmul.mubr.f32.gmra.mrb[0].mxu0 %v1908
      %v2105 = vpop.f32.mrb[0].mxu0
      %v2106 = vadd.f32 0.0, %v2105
      %v2107 = vpop.f32.mrb[0].mxu0
      %2108 = vmatprep.mubr.f32.mxu0 0.0
      %2109 = vmatmul.mubr.f32.gmra.mrb[0].mxu0 %v1911
      %v2110 = vpop.f32.mrb[0].mxu0
      %v2111 = vadd.f32 0.0, %v2110
      %v2112 = vpop.f32.mrb[0].mxu0
      %2113 = vmatprep.mubr.f32.mxu0 0.0
      %2114 = vmatmul.mubr.f32.gmra.mrb[0].mxu0 %v1914
      %v2115 = vpop.f32.mrb[0].mxu0
      %v2116 = vadd.f32 0.0, %v2115
      %v2117 = vpop.f32.mrb[0].mxu0
      %2118 = vmatprep.mubr.f32.mxu0 0.0
      %2119 = vmatmul.mubr.f32.gmra.mrb[0].mxu0 %v1917
      %v2120 = vpop.f32.mrb[0].mxu0
      %v2121 = vadd.f32 0.0, %v2120
      %v2122 = vpop.f32.mrb[0].mxu0
      %2123 = vmatprep.mubr.f32.mxu0 0.0
      %2124 = vmatmul.mubr.f32.gmra.mrb[0].mxu0 %v1920
      %v2125 = vpop.f32.mrb[0].mxu0
      %v2126 = vadd.f32 0.0, %v2125
      %v2127 = vpop.f32.mrb[0].mxu0
      %2128 = vmatprep.mubr.f32.mxu0 0.0
      %2129 = vmatmul.mubr.f32.gmra.mrb[0].mxu0 %v1923
      %v2130 = vpop.f32.mrb[0].mxu0
      %v2131 = vadd.f32 0.0, %v2130
      %v2132 = vpop.f32.mrb[0].mxu0
      %2133 = vmatprep.mubr.f32.mxu0 0.0
      %2134 = vmatmul.mubr.f32.gmra.mrb[0].mxu0 %v1926
      %v2135 = vpop.f32.mrb[0].mxu0
      %v2136 = vadd.f32 0.0, %v2135
      %v2137 = vpop.f32.mrb[0].mxu0
      %2138 = vmatprep.mubr.f32.mxu0 0.0
      %2139 = vmatmul.mubr.f32.gmra.mrb[0].mxu0 %v1929
      %v2140 = vpop.f32.mrb[0].mxu0
      %v2141 = vadd.f32 0.0, %v2140
      %v2142 = vpop.f32.mrb[0].mxu0
      %2143 = vmatprep.mubr.f32.mxu0 0.0
      %2144 = vmatmul.mubr.f32.gmra.mrb[0].mxu0 %v1932
      %v2145 = vpop.f32.mrb[0].mxu0
      %v2146 = vadd.f32 0.0, %v2145
      %v2147 = vpop.f32.mrb[0].mxu0
      %2148 = vmatprep.mubr.f32.mxu0 0.0
      %2149 = vmatmul.mubr.f32.gmra.mrb[0].mxu0 %v1935
      %v2150 = vpop.f32.mrb[0].mxu0
      %v2151 = vadd.f32 0.0, %v2150
      %v2152 = vpop.f32.mrb[0].mxu0
      %2153 = vmatprep.mubr.f32.mxu0 0.0
      %2154 = vmatmul.mubr.f32.gmra.mrb[0].mxu0 %v1938
      %v2155 = vpop.f32.mrb[0].mxu0
      %v2156 = vadd.f32 0.0, %v2155
      %v2157 = vpop.f32.mrb[0].mxu0
      %2158 = vmatprep.mubr.f32.mxu0 0.0
      %2159 = vmatmul.mubr.f32.gmra.mrb[0].mxu0 %v1941
      %v2160 = vpop.f32.mrb[0].mxu0
      %v2161 = vadd.f32 0.0, %v2160
      %v2162 = vpop.f32.mrb[0].mxu0
      %2163 = vmatprep.mubr.f32.mxu0 0.0
      %2164 = vmatmul.mubr.f32.gmra.mrb[0].mxu0 %v1944
      %v2165 = vpop.f32.mrb[0].mxu0
      %v2166 = vadd.f32 0.0, %v2165
      %v2167 = vpop.f32.mrb[0].mxu0
      %2168 = vmatprep.mubr.f32.mxu0 0.0
      %2169 = vmatmul.mubr.f32.gmra.mrb[0].mxu0 %v1947
      %v2170 = vpop.f32.mrb[0].mxu0
      %v2171 = vadd.f32 0.0, %v2170
      %v2172 = vpop.f32.mrb[0].mxu0
      %2173 = vdwg.mxu0
      %v2175 = vsel %vm1744, %v1781, 0
      %v2178 = vsel %vm1744, %v1782, 0
      %v2181 = vsel %vm1744, %v1783, 0
      %v2184 = vsel %vm1744, %v1784, 0
      %v2187 = vsel %vm1744, %v1785, 0
      %v2190 = vsel %vm1744, %v1786, 0
      %v2193 = vsel %vm1744, %v1787, 0
      %v2196 = vsel %vm1744, %v1788, 0
      %v2199 = vsel %vm1744, %v1789, 0
      %v2202 = vsel %vm1744, %v1790, 0
      %v2205 = vsel %vm1744, %v1791, 0
      %v2208 = vsel %vm1744, %v1792, 0
      %v2211 = vsel %vm1744, %v1793, 0
      %v2214 = vsel %vm1744, %v1794, 0
      %v2217 = vsel %vm1744, %v1795, 0
      %v2220 = vsel %vm1744, %v1796, 0
      %v2223 = vsel %vm1744, %v1797, 0
      %v2226 = vsel %vm1744, %v1798, 0
      %v2229 = vsel %vm1744, %v1799, 0
      %v2232 = vsel %vm1744, %v1800, 0
      %v2235 = vsel %vm1744, %v1801, 0
      %v2238 = vsel %vm1744, %v1802, 0
      %v2241 = vsel %vm1744, %v1803, 0
      %v2244 = vsel %vm1744, %v1804, 0
      %v2247 = vsel %vm1744, %v1805, 0
      %v2250 = vsel %vm1744, %v1806, 0
      %v2253 = vsel %vm1744, %v1807, 0
      %v2256 = vsel %vm1744, %v1808, 0
      %v2259 = vsel %vm1744, %v1809, 0
      %v2262 = vsel %vm1744, %v1810, 0
      %v2265 = vsel %vm1744, %v1811, 0
      %v2268 = vsel %vm1744, %v1812, 0
      %2270 = vmatprep.subr.mxu0 0.0
      %2271 = vmatpush1.msra.mxu0 %v1813
      %2272 = vmatprep.subr.mxu0 0.0
      %2273 = vmatpush1.msra.mxu0 %v1814
      %2274 = vmatprep.subr.mxu0 0.0
      %2275 = vmatpush1.msra.mxu0 %v1815
      %2276 = vmatprep.subr.mxu0 0.0
      %2277 = vmatpush1.msra.mxu0 0.0
      %2278 = vmatprep.subr.mxu0 0.0
      %2279 = vmatpush1.msra.mxu0 0.0
      %2280 = vmatprep.subr.mxu0 0.0
      %2281 = vmatpush1.msra.mxu0 0.0
      %2282 = vmatprep.subr.mxu0 0.0
      %2283 = vmatpush1.msra.mxu0 0.0
      %2284 = vmatprep.subr.mxu0 0.0
      %2285 = vmatpush1.msra.mxu0 0.0
      %2286 = vmatprep.subr.mxu0 0.0
      %2287 = vmatpush1.msra.mxu0 0.0
      %2288 = vmatprep.subr.mxu0 0.0
      %2289 = vmatpush1.msra.mxu0 0.0
      %2290 = vmatprep.subr.mxu0 0.0
      %2291 = vmatpush1.msra.mxu0 0.0
      %2292 = vmatprep.subr.mxu0 0.0
      %2293 = vmatpush1.msra.mxu0 0.0
      %2294 = vmatprep.subr.mxu0 0.0
      %2295 = vmatpush1.msra.mxu0 0.0
      %2296 = vmatprep.subr.mxu0 0.0
      %2297 = vmatpush1.msra.mxu0 0.0
      %2298 = vmatprep.subr.mxu0 0.0
      %2299 = vmatpush1.msra.mxu0 0.0
      %2300 = vmatprep.subr.mxu0 0.0
      %2301 = vmatpush1.msra.mxu0 0.0
      %2302 = vmatprep.subr.mxu0 0.0
      %2303 = vmatpush1.msra.mxu0 0.0
      %2304 = vmatprep.subr.mxu0 0.0
      %2305 = vmatpush1.msra.mxu0 0.0
      %2306 = vmatprep.subr.mxu0 0.0
      %2307 = vmatpush1.msra.mxu0 0.0
      %2308 = vmatprep.subr.mxu0 0.0
      %2309 = vmatpush1.msra.mxu0 0.0
      %2310 = vmatprep.subr.mxu0 0.0
      %2311 = vmatpush1.msra.mxu0 0.0
      %2312 = vmatprep.subr.mxu0 0.0
      %2313 = vmatpush1.msra.mxu0 0.0
      %2314 = vmatprep.subr.mxu0 0.0
      %2315 = vmatpush1.msra.mxu0 0.0
      %2316 = vmatprep.subr.mxu0 0.0
      %2317 = vmatpush1.msra.mxu0 0.0
      %2318 = vmatprep.subr.mxu0 0.0
      %2319 = vmatpush1.msra.mxu0 0.0
      %2320 = vmatprep.subr.mxu0 0.0
      %2321 = vmatpush1.msra.mxu0 0.0
      %2322 = vmatprep.subr.mxu0 0.0
      %2323 = vmatpush1.msra.mxu0 0.0
      %2324 = vmatprep.subr.mxu0 0.0
      %2325 = vmatpush1.msra.mxu0 0.0
      %2326 = vmatprep.subr.mxu0 0.0
      %2327 = vmatpush1.msra.mxu0 0.0
      %2328 = vmatprep.subr.mxu0 0.0
      %2329 = vmatpush1.msra.mxu0 0.0
      %2330 = vmatprep.subr.mxu0 0.0
      %2331 = vmatpush1.msra.mxu0 0.0
      %2332 = vmatprep.subr.mxu0 0.0
      %2333 = vmatpush1.msra.mxu0 0.0
      %2334 = vmatprep.mubr.f32.mxu0 0.0
      %2335 = vmatmul.mubr.f32.gmra.mrb[0].mxu0 %v2175
      %v2336 = vpop.f32.mrb[0].mxu0
      %v2337 = vadd.f32 %v2016, %v2336
      %v2338 = vpop.f32.mrb[0].mxu0
      %2339 = vmatprep.mubr.f32.mxu0 0.0
      %2340 = vmatmul.mubr.f32.gmra.mrb[0].mxu0 %v2178
      %v2341 = vpop.f32.mrb[0].mxu0
      %v2342 = vadd.f32 %v2021, %v2341
      %v2343 = vpop.f32.mrb[0].mxu0
      %2344 = vmatprep.mubr.f32.mxu0 0.0
      %2345 = vmatmul.mubr.f32.gmra.mrb[0].mxu0 %v2181
      %v2346 = vpop.f32.mrb[0].mxu0
      %v2347 = vadd.f32 %v2026, %v2346
      %v2348 = vpop.f32.mrb[0].mxu0
      %2349 = vmatprep.mubr.f32.mxu0 0.0
      %2350 = vmatmul.mubr.f32.gmra.mrb[0].mxu0 %v2184
      %v2351 = vpop.f32.mrb[0].mxu0
      %v2352 = vadd.f32 %v2031, %v2351
      %v2353 = vpop.f32.mrb[0].mxu0
      %2354 = vmatprep.mubr.f32.mxu0 0.0
      %2355 = vmatmul.mubr.f32.gmra.mrb[0].mxu0 %v2187
      %v2356 = vpop.f32.mrb[0].mxu0
      %v2357 = vadd.f32 %v2036, %v2356
      %v2358 = vpop.f32.mrb[0].mxu0
      %2359 = vmatprep.mubr.f32.mxu0 0.0
      %2360 = vmatmul.mubr.f32.gmra.mrb[0].mxu0 %v2190
      %v2361 = vpop.f32.mrb[0].mxu0
      %v2362 = vadd.f32 %v2041, %v2361
      %v2363 = vpop.f32.mrb[0].mxu0
      %2364 = vmatprep.mubr.f32.mxu0 0.0
      %2365 = vmatmul.mubr.f32.gmra.mrb[0].mxu0 %v2193
      %v2366 = vpop.f32.mrb[0].mxu0
      %v2367 = vadd.f32 %v2046, %v2366
      %v2368 = vpop.f32.mrb[0].mxu0
      %2369 = vmatprep.mubr.f32.mxu0 0.0
      %2370 = vmatmul.mubr.f32.gmra.mrb[0].mxu0 %v2196
      %v2371 = vpop.f32.mrb[0].mxu0
      %v2372 = vadd.f32 %v2051, %v2371
      %v2373 = vpop.f32.mrb[0].mxu0
      %2374 = vmatprep.mubr.f32.mxu0 0.0
      %2375 = vmatmul.mubr.f32.gmra.mrb[0].mxu0 %v2199
      %v2376 = vpop.f32.mrb[0].mxu0
      %v2377 = vadd.f32 %v2056, %v2376
      %v2378 = vpop.f32.mrb[0].mxu0
      %2379 = vmatprep.mubr.f32.mxu0 0.0
      %2380 = vmatmul.mubr.f32.gmra.mrb[0].mxu0 %v2202
      %v2381 = vpop.f32.mrb[0].mxu0
      %v2382 = vadd.f32 %v2061, %v2381
      %v2383 = vpop.f32.mrb[0].mxu0
      %2384 = vmatprep.mubr.f32.mxu0 0.0
      %2385 = vmatmul.mubr.f32.gmra.mrb[0].mxu0 %v2205
      %v2386 = vpop.f32.mrb[0].mxu0
      %v2387 = vadd.f32 %v2066, %v2386
      %v2388 = vpop.f32.mrb[0].mxu0
      %2389 = vmatprep.mubr.f32.mxu0 0.0
      %2390 = vmatmul.mubr.f32.gmra.mrb[0].mxu0 %v2208
      %v2391 = vpop.f32.mrb[0].mxu0
      %v2392 = vadd.f32 %v2071, %v2391
      %v2393 = vpop.f32.mrb[0].mxu0
      %2394 = vmatprep.mubr.f32.mxu0 0.0
      %2395 = vmatmul.mubr.f32.gmra.mrb[0].mxu0 %v2211
      %v2396 = vpop.f32.mrb[0].mxu0
      %v2397 = vadd.f32 %v2076, %v2396
      %v2398 = vpop.f32.mrb[0].mxu0
      %2399 = vmatprep.mubr.f32.mxu0 0.0
      %2400 = vmatmul.mubr.f32.gmra.mrb[0].mxu0 %v2214
      %v2401 = vpop.f32.mrb[0].mxu0
      %v2402 = vadd.f32 %v2081, %v2401
      %v2403 = vpop.f32.mrb[0].mxu0
      %2404 = vmatprep.mubr.f32.mxu0 0.0
      %2405 = vmatmul.mubr.f32.gmra.mrb[0].mxu0 %v2217
      %v2406 = vpop.f32.mrb[0].mxu0
      %v2407 = vadd.f32 %v2086, %v2406
      %v2408 = vpop.f32.mrb[0].mxu0
      %2409 = vmatprep.mubr.f32.mxu0 0.0
      %2410 = vmatmul.mubr.f32.gmra.mrb[0].mxu0 %v2220
      %v2411 = vpop.f32.mrb[0].mxu0
      %v2412 = vadd.f32 %v2091, %v2411
      %v2413 = vpop.f32.mrb[0].mxu0
      %2414 = vmatprep.mubr.f32.mxu0 0.0
      %2415 = vmatmul.mubr.f32.gmra.mrb[0].mxu0 %v2223
      %v2416 = vpop.f32.mrb[0].mxu0
      %v2417 = vadd.f32 %v2096, %v2416
      %v2418 = vpop.f32.mrb[0].mxu0
      %2419 = vmatprep.mubr.f32.mxu0 0.0
      %2420 = vmatmul.mubr.f32.gmra.mrb[0].mxu0 %v2226
      %v2421 = vpop.f32.mrb[0].mxu0
      %v2422 = vadd.f32 %v2101, %v2421
      %v2423 = vpop.f32.mrb[0].mxu0
      %2424 = vmatprep.mubr.f32.mxu0 0.0
      %2425 = vmatmul.mubr.f32.gmra.mrb[0].mxu0 %v2229
      %v2426 = vpop.f32.mrb[0].mxu0
      %v2427 = vadd.f32 %v2106, %v2426
      %v2428 = vpop.f32.mrb[0].mxu0
      %2429 = vmatprep.mubr.f32.mxu0 0.0
      %2430 = vmatmul.mubr.f32.gmra.mrb[0].mxu0 %v2232
      %v2431 = vpop.f32.mrb[0].mxu0
      %v2432 = vadd.f32 %v2111, %v2431
      %v2433 = vpop.f32.mrb[0].mxu0
      %2434 = vmatprep.mubr.f32.mxu0 0.0
      %2435 = vmatmul.mubr.f32.gmra.mrb[0].mxu0 %v2235
      %v2436 = vpop.f32.mrb[0].mxu0
      %v2437 = vadd.f32 %v2116, %v2436
      %v2438 = vpop.f32.mrb[0].mxu0
      %2439 = vmatprep.mubr.f32.mxu0 0.0
      %2440 = vmatmul.mubr.f32.gmra.mrb[0].mxu0 %v2238
      %v2441 = vpop.f32.mrb[0].mxu0
      %v2442 = vadd.f32 %v2121, %v2441
      %v2443 = vpop.f32.mrb[0].mxu0
      %2444 = vmatprep.mubr.f32.mxu0 0.0
      %2445 = vmatmul.mubr.f32.gmra.mrb[0].mxu0 %v2241
      %v2446 = vpop.f32.mrb[0].mxu0
      %v2447 = vadd.f32 %v2126, %v2446
      %v2448 = vpop.f32.mrb[0].mxu0
      %2449 = vmatprep.mubr.f32.mxu0 0.0
      %2450 = vmatmul.mubr.f32.gmra.mrb[0].mxu0 %v2244
      %v2451 = vpop.f32.mrb[0].mxu0
      %v2452 = vadd.f32 %v2131, %v2451
      %v2453 = vpop.f32.mrb[0].mxu0
      %2454 = vmatprep.mubr.f32.mxu0 0.0
      %2455 = vmatmul.mubr.f32.gmra.mrb[0].mxu0 %v2247
      %v2456 = vpop.f32.mrb[0].mxu0
      %v2457 = vadd.f32 %v2136, %v2456
      %v2458 = vpop.f32.mrb[0].mxu0
      %2459 = vmatprep.mubr.f32.mxu0 0.0
      %2460 = vmatmul.mubr.f32.gmra.mrb[0].mxu0 %v2250
      %v2461 = vpop.f32.mrb[0].mxu0
      %v2462 = vadd.f32 %v2141, %v2461
      %v2463 = vpop.f32.mrb[0].mxu0
      %2464 = vmatprep.mubr.f32.mxu0 0.0
      %2465 = vmatmul.mubr.f32.gmra.mrb[0].mxu0 %v2253
      %v2466 = vpop.f32.mrb[0].mxu0
      %v2467 = vadd.f32 %v2146, %v2466
      %v2468 = vpop.f32.mrb[0].mxu0
      %2469 = vmatprep.mubr.f32.mxu0 0.0
      %2470 = vmatmul.mubr.f32.gmra.mrb[0].mxu0 %v2256
      %v2471 = vpop.f32.mrb[0].mxu0
      %v2472 = vadd.f32 %v2151, %v2471
      %v2473 = vpop.f32.mrb[0].mxu0
      %2474 = vmatprep.mubr.f32.mxu0 0.0
      %2475 = vmatmul.mubr.f32.gmra.mrb[0].mxu0 %v2259
      %v2476 = vpop.f32.mrb[0].mxu0
      %v2477 = vadd.f32 %v2156, %v2476
      %v2478 = vpop.f32.mrb[0].mxu0
      %2479 = vmatprep.mubr.f32.mxu0 0.0
      %2480 = vmatmul.mubr.f32.gmra.mrb[0].mxu0 %v2262
      %v2481 = vpop.f32.mrb[0].mxu0
      %v2482 = vadd.f32 %v2161, %v2481
      %v2483 = vpop.f32.mrb[0].mxu0
      %2484 = vmatprep.mubr.f32.mxu0 0.0
      %2485 = vmatmul.mubr.f32.gmra.mrb[0].mxu0 %v2265
      %v2486 = vpop.f32.mrb[0].mxu0
      %v2487 = vadd.f32 %v2166, %v2486
      %v2488 = vpop.f32.mrb[0].mxu0
      %2489 = vmatprep.mubr.f32.mxu0 0.0
      %2490 = vmatmul.mubr.f32.gmra.mrb[0].mxu0 %v2268
      %v2491 = vpop.f32.mrb[0].mxu0
      %v2492 = vadd.f32 %v2171, %v2491
      %v2493 = vpop.f32.mrb[0].mxu0
      %2494 = vdwg.mxu0
      %s2495 = scalar_lea.vmem [#allocation2], 32
      %v2496 = vld [vmem:[%s2495] sm:$0xff]
      %v2497 = vld [vmem:[%s2495 + $0x8] sm:$0xff]
      %v2498 = vld [vmem:[%s2495 + $0x10] sm:$0xff]
      %v2499 = vld [vmem:[%s2495 + $0x18] sm:$0xff]
      %v2500 = vld [vmem:[%s2495 + $0x20] sm:$0xff]
      %v2501 = vld [vmem:[%s2495 + $0x28] sm:$0xff]
      %v2502 = vld [vmem:[%s2495 + $0x30] sm:$0xff]
      %v2503 = vld [vmem:[%s2495 + $0x38] sm:$0xff]
      %v2504 = vld [vmem:[%s2495 + $0x40] sm:$0xff]
      %v2505 = vld [vmem:[%s2495 + $0x48] sm:$0xff]
      %v2506 = vld [vmem:[%s2495 + $0x50] sm:$0xff]
      %v2507 = vld [vmem:[%s2495 + $0x58] sm:$0xff]
      %v2508 = vld [vmem:[%s2495 + $0x60] sm:$0xff]
      %v2509 = vld [vmem:[%s2495 + $0x68] sm:$0xff]
      %v2510 = vld [vmem:[%s2495 + $0x70] sm:$0xff]
      %v2511 = vld [vmem:[%s2495 + $0x78] sm:$0xff]
      %v2512 = vld [vmem:[%s2495 + $0x80] sm:$0xff]
      %v2513 = vld [vmem:[%s2495 + $0x88] sm:$0xff]
      %v2514 = vld [vmem:[%s2495 + $0x90] sm:$0xff]
      %v2515 = vld [vmem:[%s2495 + $0x98] sm:$0xff]
      %v2516 = vld [vmem:[%s2495 + $0xa0] sm:$0xff]
      %v2517 = vld [vmem:[%s2495 + $0xa8] sm:$0xff]
      %v2518 = vld [vmem:[%s2495 + $0xb0] sm:$0xff]
      %v2519 = vld [vmem:[%s2495 + $0xb8] sm:$0xff]
      %v2520 = vld [vmem:[%s2495 + $0xc0] sm:$0xff]
      %v2521 = vld [vmem:[%s2495 + $0xc8] sm:$0xff]
      %v2522 = vld [vmem:[%s2495 + $0xd0] sm:$0xff]
      %v2523 = vld [vmem:[%s2495 + $0xd8] sm:$0xff]
      %v2524 = vld [vmem:[%s2495 + $0xe0] sm:$0xff]
      %v2525 = vld [vmem:[%s2495 + $0xe8] sm:$0xff]
      %v2526 = vld [vmem:[%s2495 + $0xf0] sm:$0xff]
      %v2527 = vld [vmem:[%s2495 + $0xf8] sm:$0xff]
      %s2528 = scalar_lea.vmem %s7, 48
      %v2529 = vld [vmem:[%s2528] sm:$0xff]
      %v2530 = vld [vmem:[%s2528 + $0x8] sm:$0xff]
      %v2531 = vld [vmem:[%s2528 + $0x10] sm:$0xff]
      %v2533 = vsel %vm1744, %v2496, 0
      %v2536 = vsel %vm1744, %v2497, 0
      %v2539 = vsel %vm1744, %v2498, 0
      %v2542 = vsel %vm1744, %v2499, 0
      %v2545 = vsel %vm1744, %v2500, 0
      %v2548 = vsel %vm1744, %v2501, 0
      %v2551 = vsel %vm1744, %v2502, 0
      %v2554 = vsel %vm1744, %v2503, 0
      %v2557 = vsel %vm1744, %v2504, 0
      %v2560 = vsel %vm1744, %v2505, 0
      %v2563 = vsel %vm1744, %v2506, 0
      %v2566 = vsel %vm1744, %v2507, 0
      %v2569 = vsel %vm1744, %v2508, 0
      %v2572 = vsel %vm1744, %v2509, 0
      %v2575 = vsel %vm1744, %v2510, 0
      %v2578 = vsel %vm1744, %v2511, 0
      %v2581 = vsel %vm1744, %v2512, 0
      %v2584 = vsel %vm1744, %v2513, 0
      %v2587 = vsel %vm1744, %v2514, 0
      %v2590 = vsel %vm1744, %v2515, 0
      %v2593 = vsel %vm1744, %v2516, 0
      %v2596 = vsel %vm1744, %v2517, 0
      %v2599 = vsel %vm1744, %v2518, 0
      %v2602 = vsel %vm1744, %v2519, 0
      %v2605 = vsel %vm1744, %v2520, 0
      %v2608 = vsel %vm1744, %v2521, 0
      %v2611 = vsel %vm1744, %v2522, 0
      %v2614 = vsel %vm1744, %v2523, 0
      %v2617 = vsel %vm1744, %v2524, 0
      %v2620 = vsel %vm1744, %v2525, 0
      %v2623 = vsel %vm1744, %v2526, 0
      %v2626 = vsel %vm1744, %v2527, 0
      %2628 = vmatprep.subr.mxu0 0.0
      %2629 = vmatpush1.msra.mxu0 %v2529
      %2630 = vmatprep.subr.mxu0 0.0
      %2631 = vmatpush1.msra.mxu0 %v2530
      %2632 = vmatprep.subr.mxu0 0.0
      %2633 = vmatpush1.msra.mxu0 %v2531
      %2634 = vmatprep.subr.mxu0 0.0
      %2635 = vmatpush1.msra.mxu0 0.0
      %2636 = vmatprep.subr.mxu0 0.0
      %2637 = vmatpush1.msra.mxu0 0.0
      %2638 = vmatprep.subr.mxu0 0.0
      %2639 = vmatpush1.msra.mxu0 0.0
      %2640 = vmatprep.subr.mxu0 0.0
      %2641 = vmatpush1.msra.mxu0 0.0
      %2642 = vmatprep.subr.mxu0 0.0
      %2643 = vmatpush1.msra.mxu0 0.0
      %2644 = vmatprep.subr.mxu0 0.0
      %2645 = vmatpush1.msra.mxu0 0.0
      %2646 = vmatprep.subr.mxu0 0.0
      %2647 = vmatpush1.msra.mxu0 0.0
      %2648 = vmatprep.subr.mxu0 0.0
      %2649 = vmatpush1.msra.mxu0 0.0
      %2650 = vmatprep.subr.mxu0 0.0
      %2651 = vmatpush1.msra.mxu0 0.0
      %2652 = vmatprep.subr.mxu0 0.0
      %2653 = vmatpush1.msra.mxu0 0.0
      %2654 = vmatprep.subr.mxu0 0.0
      %2655 = vmatpush1.msra.mxu0 0.0
      %2656 = vmatprep.subr.mxu0 0.0
      %2657 = vmatpush1.msra.mxu0 0.0
      %2658 = vmatprep.subr.mxu0 0.0
      %2659 = vmatpush1.msra.mxu0 0.0
      %2660 = vmatprep.subr.mxu0 0.0
      %2661 = vmatpush1.msra.mxu0 0.0
      %2662 = vmatprep.subr.mxu0 0.0
      %2663 = vmatpush1.msra.mxu0 0.0
      %2664 = vmatprep.subr.mxu0 0.0
      %2665 = vmatpush1.msra.mxu0 0.0
      %2666 = vmatprep.subr.mxu0 0.0
      %2667 = vmatpush1.msra.mxu0 0.0
      %2668 = vmatprep.subr.mxu0 0.0
      %2669 = vmatpush1.msra.mxu0 0.0
      %2670 = vmatprep.subr.mxu0 0.0
      %2671 = vmatpush1.msra.mxu0 0.0
      %2672 = vmatprep.subr.mxu0 0.0
      %2673 = vmatpush1.msra.mxu0 0.0
      %2674 = vmatprep.subr.mxu0 0.0
      %2675 = vmatpush1.msra.mxu0 0.0
      %2676 = vmatprep.subr.mxu0 0.0
      %2677 = vmatpush1.msra.mxu0 0.0
      %2678 = vmatprep.subr.mxu0 0.0
      %2679 = vmatpush1.msra.mxu0 0.0
      %2680 = vmatprep.subr.mxu0 0.0
      %2681 = vmatpush1.msra.mxu0 0.0
      %2682 = vmatprep.subr.mxu0 0.0
      %2683 = vmatpush1.msra.mxu0 0.0
      %2684 = vmatprep.subr.mxu0 0.0
      %2685 = vmatpush1.msra.mxu0 0.0
      %2686 = vmatprep.subr.mxu0 0.0
      %2687 = vmatpush1.msra.mxu0 0.0
      %2688 = vmatprep.subr.mxu0 0.0
      %2689 = vmatpush1.msra.mxu0 0.0
      %2690 = vmatprep.subr.mxu0 0.0
      %2691 = vmatpush1.msra.mxu0 0.0
      %2692 = vmatprep.mubr.f32.mxu0 0.0
      %2693 = vmatmul.mubr.f32.gmra.mrb[0].mxu0 %v2533
      %v2694 = vpop.f32.mrb[0].mxu0
      %v2695 = vadd.f32 0.0, %v2694
      %v2696 = vpop.f32.mrb[0].mxu0
      %2697 = vmatprep.mubr.f32.mxu0 0.0
      %2698 = vmatmul.mubr.f32.gmra.mrb[0].mxu0 %v2536
      %v2699 = vpop.f32.mrb[0].mxu0
      %v2700 = vadd.f32 0.0, %v2699
      %v2701 = vpop.f32.mrb[0].mxu0
      %2702 = vmatprep.mubr.f32.mxu0 0.0
      %2703 = vmatmul.mubr.f32.gmra.mrb[0].mxu0 %v2539
      %v2704 = vpop.f32.mrb[0].mxu0
      %v2705 = vadd.f32 0.0, %v2704
      %v2706 = vpop.f32.mrb[0].mxu0
      %2707 = vmatprep.mubr.f32.mxu0 0.0
      %2708 = vmatmul.mubr.f32.gmra.mrb[0].mxu0 %v2542
      %v2709 = vpop.f32.mrb[0].mxu0
      %v2710 = vadd.f32 0.0, %v2709
      %v2711 = vpop.f32.mrb[0].mxu0
      %2712 = vmatprep.mubr.f32.mxu0 0.0
      %2713 = vmatmul.mubr.f32.gmra.mrb[0].mxu0 %v2545
      %v2714 = vpop.f32.mrb[0].mxu0
      %v2715 = vadd.f32 0.0, %v2714
      %v2716 = vpop.f32.mrb[0].mxu0
      %2717 = vmatprep.mubr.f32.mxu0 0.0
      %2718 = vmatmul.mubr.f32.gmra.mrb[0].mxu0 %v2548
      %v2719 = vpop.f32.mrb[0].mxu0
      %v2720 = vadd.f32 0.0, %v2719
      %v2721 = vpop.f32.mrb[0].mxu0
      %2722 = vmatprep.mubr.f32.mxu0 0.0
      %2723 = vmatmul.mubr.f32.gmra.mrb[0].mxu0 %v2551
      %v2724 = vpop.f32.mrb[0].mxu0
      %v2725 = vadd.f32 0.0, %v2724
      %v2726 = vpop.f32.mrb[0].mxu0
      %2727 = vmatprep.mubr.f32.mxu0 0.0
      %2728 = vmatmul.mubr.f32.gmra.mrb[0].mxu0 %v2554
      %v2729 = vpop.f32.mrb[0].mxu0
      %v2730 = vadd.f32 0.0, %v2729
      %v2731 = vpop.f32.mrb[0].mxu0
      %2732 = vmatprep.mubr.f32.mxu0 0.0
      %2733 = vmatmul.mubr.f32.gmra.mrb[0].mxu0 %v2557
      %v2734 = vpop.f32.mrb[0].mxu0
      %v2735 = vadd.f32 0.0, %v2734
      %v2736 = vpop.f32.mrb[0].mxu0
      %2737 = vmatprep.mubr.f32.mxu0 0.0
      %2738 = vmatmul.mubr.f32.gmra.mrb[0].mxu0 %v2560
      %v2739 = vpop.f32.mrb[0].mxu0
      %v2740 = vadd.f32 0.0, %v2739
      %v2741 = vpop.f32.mrb[0].mxu0
      %2742 = vmatprep.mubr.f32.mxu0 0.0
      %2743 = vmatmul.mubr.f32.gmra.mrb[0].mxu0 %v2563
      %v2744 = vpop.f32.mrb[0].mxu0
      %v2745 = vadd.f32 0.0, %v2744
      %v2746 = vpop.f32.mrb[0].mxu0
      %2747 = vmatprep.mubr.f32.mxu0 0.0
      %2748 = vmatmul.mubr.f32.gmra.mrb[0].mxu0 %v2566
      %v2749 = vpop.f32.mrb[0].mxu0
      %v2750 = vadd.f32 0.0, %v2749
      %v2751 = vpop.f32.mrb[0].mxu0
      %2752 = vmatprep.mubr.f32.mxu0 0.0
      %2753 = vmatmul.mubr.f32.gmra.mrb[0].mxu0 %v2569
      %v2754 = vpop.f32.mrb[0].mxu0
      %v2755 = vadd.f32 0.0, %v2754
      %v2756 = vpop.f32.mrb[0].mxu0
      %2757 = vmatprep.mubr.f32.mxu0 0.0
      %2758 = vmatmul.mubr.f32.gmra.mrb[0].mxu0 %v2572
      %v2759 = vpop.f32.mrb[0].mxu0
      %v2760 = vadd.f32 0.0, %v2759
      %v2761 = vpop.f32.mrb[0].mxu0
      %2762 = vmatprep.mubr.f32.mxu0 0.0
      %2763 = vmatmul.mubr.f32.gmra.mrb[0].mxu0 %v2575
      %v2764 = vpop.f32.mrb[0].mxu0
      %v2765 = vadd.f32 0.0, %v2764
      %v2766 = vpop.f32.mrb[0].mxu0
      %2767 = vmatprep.mubr.f32.mxu0 0.0
      %2768 = vmatmul.mubr.f32.gmra.mrb[0].mxu0 %v2578
      %v2769 = vpop.f32.mrb[0].mxu0
      %v2770 = vadd.f32 0.0, %v2769
      %v2771 = vpop.f32.mrb[0].mxu0
      %2772 = vmatprep.mubr.f32.mxu0 0.0
      %2773 = vmatmul.mubr.f32.gmra.mrb[0].mxu0 %v2581
      %v2774 = vpop.f32.mrb[0].mxu0
      %v2775 = vadd.f32 0.0, %v2774
      %v2776 = vpop.f32.mrb[0].mxu0
      %2777 = vmatprep.mubr.f32.mxu0 0.0
      %2778 = vmatmul.mubr.f32.gmra.mrb[0].mxu0 %v2584
      %v2779 = vpop.f32.mrb[0].mxu0
      %v2780 = vadd.f32 0.0, %v2779
      %v2781 = vpop.f32.mrb[0].mxu0
      %2782 = vmatprep.mubr.f32.mxu0 0.0
      %2783 = vmatmul.mubr.f32.gmra.mrb[0].mxu0 %v2587
      %v2784 = vpop.f32.mrb[0].mxu0
      %v2785 = vadd.f32 0.0, %v2784
      %v2786 = vpop.f32.mrb[0].mxu0
      %2787 = vmatprep.mubr.f32.mxu0 0.0
      %2788 = vmatmul.mubr.f32.gmra.mrb[0].mxu0 %v2590
      %v2789 = vpop.f32.mrb[0].mxu0
      %v2790 = vadd.f32 0.0, %v2789
      %v2791 = vpop.f32.mrb[0].mxu0
      %2792 = vmatprep.mubr.f32.mxu0 0.0
      %2793 = vmatmul.mubr.f32.gmra.mrb[0].mxu0 %v2593
      %v2794 = vpop.f32.mrb[0].mxu0
      %v2795 = vadd.f32 0.0, %v2794
      %v2796 = vpop.f32.mrb[0].mxu0
      %2797 = vmatprep.mubr.f32.mxu0 0.0
      %2798 = vmatmul.mubr.f32.gmra.mrb[0].mxu0 %v2596
      %v2799 = vpop.f32.mrb[0].mxu0
      %v2800 = vadd.f32 0.0, %v2799
      %v2801 = vpop.f32.mrb[0].mxu0
      %2802 = vmatprep.mubr.f32.mxu0 0.0
      %2803 = vmatmul.mubr.f32.gmra.mrb[0].mxu0 %v2599
      %v2804 = vpop.f32.mrb[0].mxu0
      %v2805 = vadd.f32 0.0, %v2804
      %v2806 = vpop.f32.mrb[0].mxu0
      %2807 = vmatprep.mubr.f32.mxu0 0.0
      %2808 = vmatmul.mubr.f32.gmra.mrb[0].mxu0 %v2602
      %v2809 = vpop.f32.mrb[0].mxu0
      %v2810 = vadd.f32 0.0, %v2809
      %v2811 = vpop.f32.mrb[0].mxu0
      %2812 = vmatprep.mubr.f32.mxu0 0.0
      %2813 = vmatmul.mubr.f32.gmra.mrb[0].mxu0 %v2605
      %v2814 = vpop.f32.mrb[0].mxu0
      %v2815 = vadd.f32 0.0, %v2814
      %v2816 = vpop.f32.mrb[0].mxu0
      %2817 = vmatprep.mubr.f32.mxu0 0.0
      %2818 = vmatmul.mubr.f32.gmra.mrb[0].mxu0 %v2608
      %v2819 = vpop.f32.mrb[0].mxu0
      %v2820 = vadd.f32 0.0, %v2819
      %v2821 = vpop.f32.mrb[0].mxu0
      %2822 = vmatprep.mubr.f32.mxu0 0.0
      %2823 = vmatmul.mubr.f32.gmra.mrb[0].mxu0 %v2611
      %v2824 = vpop.f32.mrb[0].mxu0
      %v2825 = vadd.f32 0.0, %v2824
      %v2826 = vpop.f32.mrb[0].mxu0
      %2827 = vmatprep.mubr.f32.mxu0 0.0
      %2828 = vmatmul.mubr.f32.gmra.mrb[0].mxu0 %v2614
      %v2829 = vpop.f32.mrb[0].mxu0
      %v2830 = vadd.f32 0.0, %v2829
      %v2831 = vpop.f32.mrb[0].mxu0
      %2832 = vmatprep.mubr.f32.mxu0 0.0
      %2833 = vmatmul.mubr.f32.gmra.mrb[0].mxu0 %v2617
      %v2834 = vpop.f32.mrb[0].mxu0
      %v2835 = vadd.f32 0.0, %v2834
      %v2836 = vpop.f32.mrb[0].mxu0
      %2837 = vmatprep.mubr.f32.mxu0 0.0
      %2838 = vmatmul.mubr.f32.gmra.mrb[0].mxu0 %v2620
      %v2839 = vpop.f32.mrb[0].mxu0
      %v2840 = vadd.f32 0.0, %v2839
      %v2841 = vpop.f32.mrb[0].mxu0
      %2842 = vmatprep.mubr.f32.mxu0 0.0
      %2843 = vmatmul.mubr.f32.gmra.mrb[0].mxu0 %v2623
      %v2844 = vpop.f32.mrb[0].mxu0
      %v2845 = vadd.f32 0.0, %v2844
      %v2846 = vpop.f32.mrb[0].mxu0
      %2847 = vmatprep.mubr.f32.mxu0 0.0
      %2848 = vmatmul.mubr.f32.gmra.mrb[0].mxu0 %v2626
      %v2849 = vpop.f32.mrb[0].mxu0
      %v2850 = vadd.f32 0.0, %v2849
      %v2851 = vpop.f32.mrb[0].mxu0
      %2852 = vdwg.mxu0
      %v2853 = vadd.f32 %v2337, %v2695
      %v2854 = vadd.f32 %v2342, %v2700
      %v2855 = vadd.f32 %v2347, %v2705
      %v2856 = vadd.f32 %v2352, %v2710
      %v2857 = vadd.f32 %v2357, %v2715
      %v2858 = vadd.f32 %v2362, %v2720
      %v2859 = vadd.f32 %v2367, %v2725
      %v2860 = vadd.f32 %v2372, %v2730
      %v2861 = vadd.f32 %v2377, %v2735
      %v2862 = vadd.f32 %v2382, %v2740
      %v2863 = vadd.f32 %v2387, %v2745
      %v2864 = vadd.f32 %v2392, %v2750
      %v2865 = vadd.f32 %v2397, %v2755
      %v2866 = vadd.f32 %v2402, %v2760
      %v2867 = vadd.f32 %v2407, %v2765
      %v2868 = vadd.f32 %v2412, %v2770
      %v2869 = vadd.f32 %v2417, %v2775
      %v2870 = vadd.f32 %v2422, %v2780
      %v2871 = vadd.f32 %v2427, %v2785
      %v2872 = vadd.f32 %v2432, %v2790
      %v2873 = vadd.f32 %v2437, %v2795
      %v2874 = vadd.f32 %v2442, %v2800
      %v2875 = vadd.f32 %v2447, %v2805
      %v2876 = vadd.f32 %v2452, %v2810
      %v2877 = vadd.f32 %v2457, %v2815
      %v2878 = vadd.f32 %v2462, %v2820
      %v2879 = vadd.f32 %v2467, %v2825
      %v2880 = vadd.f32 %v2472, %v2830
      %v2881 = vadd.f32 %v2477, %v2835
      %v2882 = vadd.f32 %v2482, %v2840
      %v2883 = vadd.f32 %v2487, %v2845
      %v2884 = vadd.f32 %v2492, %v2850
      %2885 = vst.msk [vmem:[%s674] sm:$0xff] %vm1017, %v2853
      %2886 = vst.msk [vmem:[%s674 + $0x8] sm:$0xff] %vm1017, %v2854
      %2887 = vst.msk [vmem:[%s674 + $0x10] sm:$0xff] %vm1017, %v2855
      %2888 = vst.msk [vmem:[%s674 + $0x18] sm:$0xff] %vm1017, %v2856
      %2889 = vst.msk [vmem:[%s674 + $0x20] sm:$0xff] %vm1017, %v2857
      %2890 = vst.msk [vmem:[%s674 + $0x28] sm:$0xff] %vm1017, %v2858
      %2891 = vst.msk [vmem:[%s674 + $0x30] sm:$0xff] %vm1017, %v2859
      %2892 = vst.msk [vmem:[%s674 + $0x38] sm:$0xff] %vm1017, %v2860
      %2893 = vst.msk [vmem:[%s674 + $0x40] sm:$0xff] %vm1017, %v2861
      %2894 = vst.msk [vmem:[%s674 + $0x48] sm:$0xff] %vm1017, %v2862
      %2895 = vst.msk [vmem:[%s674 + $0x50] sm:$0xff] %vm1017, %v2863
      %2896 = vst.msk [vmem:[%s674 + $0x58] sm:$0xff] %vm1017, %v2864
      %2897 = vst.msk [vmem:[%s674 + $0x60] sm:$0xff] %vm1017, %v2865
      %2898 = vst.msk [vmem:[%s674 + $0x68] sm:$0xff] %vm1017, %v2866
      %2899 = vst.msk [vmem:[%s674 + $0x70] sm:$0xff] %vm1017, %v2867
      %2900 = vst.msk [vmem:[%s674 + $0x78] sm:$0xff] %vm1017, %v2868
      %2901 = vst.msk [vmem:[%s674 + $0x80] sm:$0xff] %vm1017, %v2869
      %2902 = vst.msk [vmem:[%s674 + $0x88] sm:$0xff] %vm1017, %v2870
      %2903 = vst.msk [vmem:[%s674 + $0x90] sm:$0xff] %vm1017, %v2871
      %2904 = vst.msk [vmem:[%s674 + $0x98] sm:$0xff] %vm1017, %v2872
      %2905 = vst.msk [vmem:[%s674 + $0xa0] sm:$0xff] %vm1017, %v2873
      %2906 = vst.msk [vmem:[%s674 + $0xa8] sm:$0xff] %vm1017, %v2874
      %2907 = vst.msk [vmem:[%s674 + $0xb0] sm:$0xff] %vm1017, %v2875
      %2908 = vst.msk [vmem:[%s674 + $0xb8] sm:$0xff] %vm1017, %v2876
      %2909 = vst.msk [vmem:[%s674 + $0xc0] sm:$0xff] %vm1017, %v2877
      %2910 = vst.msk [vmem:[%s674 + $0xc8] sm:$0xff] %vm1017, %v2878
      %2911 = vst.msk [vmem:[%s674 + $0xd0] sm:$0xff] %vm1017, %v2879
      %2912 = vst.msk [vmem:[%s674 + $0xd8] sm:$0xff] %vm1017, %v2880
      %2913 = vst.msk [vmem:[%s674 + $0xe0] sm:$0xff] %vm1017, %v2881
      %2914 = vst.msk [vmem:[%s674 + $0xe8] sm:$0xff] %vm1017, %v2882
      %2915 = vst.msk [vmem:[%s674 + $0xf0] sm:$0xff] %vm1017, %v2883
      %2916 = vst.msk [vmem:[%s674 + $0xf8] sm:$0xff] %vm1017, %v2884
      %v2917 = vsel %vm1017, %v2853, 0.0
      %v2918 = vsel %vm1017, %v2854, 0.0
      %v2919 = vadd.f32 %v2917, %v2918
      %v2920 = vsel %vm1017, %v2855, 0.0
      %v2921 = vadd.f32 %v2919, %v2920
      %v2922 = vsel %vm1017, %v2856, 0.0
      %v2923 = vadd.f32 %v2921, %v2922
      %v2924 = vsel %vm1017, %v2857, 0.0
      %v2925 = vadd.f32 %v2923, %v2924
      %v2926 = vsel %vm1017, %v2858, 0.0
      %v2927 = vadd.f32 %v2925, %v2926
      %v2928 = vsel %vm1017, %v2859, 0.0
      %v2929 = vadd.f32 %v2927, %v2928
      %v2930 = vsel %vm1017, %v2860, 0.0
      %v2931 = vadd.f32 %v2929, %v2930
      %v2932 = vsel %vm1017, %v2861, 0.0
      %v2933 = vadd.f32 %v2931, %v2932
      %v2934 = vsel %vm1017, %v2862, 0.0
      %v2935 = vadd.f32 %v2933, %v2934
      %v2936 = vsel %vm1017, %v2863, 0.0
      %v2937 = vadd.f32 %v2935, %v2936
      %v2938 = vsel %vm1017, %v2864, 0.0
      %v2939 = vadd.f32 %v2937, %v2938
      %v2940 = vsel %vm1017, %v2865, 0.0
      %v2941 = vadd.f32 %v2939, %v2940
      %v2942 = vsel %vm1017, %v2866, 0.0
      %v2943 = vadd.f32 %v2941, %v2942
      %v2944 = vsel %vm1017, %v2867, 0.0
      %v2945 = vadd.f32 %v2943, %v2944
      %v2946 = vsel %vm1017, %v2868, 0.0
      %v2947 = vadd.f32 %v2945, %v2946
      %v2948 = vsel %vm1017, %v2869, 0.0
      %v2949 = vadd.f32 %v2947, %v2948
      %v2950 = vsel %vm1017, %v2870, 0.0
      %v2951 = vadd.f32 %v2949, %v2950
      %v2952 = vsel %vm1017, %v2871, 0.0
      %v2953 = vadd.f32 %v2951, %v2952
      %v2954 = vsel %vm1017, %v2872, 0.0
      %v2955 = vadd.f32 %v2953, %v2954
      %v2956 = vsel %vm1017, %v2873, 0.0
      %v2957 = vadd.f32 %v2955, %v2956
      %v2958 = vsel %vm1017, %v2874, 0.0
      %v2959 = vadd.f32 %v2957, %v2958
      %v2960 = vsel %vm1017, %v2875, 0.0
      %v2961 = vadd.f32 %v2959, %v2960
      %v2962 = vsel %vm1017, %v2876, 0.0
      %v2963 = vadd.f32 %v2961, %v2962
      %v2964 = vsel %vm1017, %v2877, 0.0
      %v2965 = vadd.f32 %v2963, %v2964
      %v2966 = vsel %vm1017, %v2878, 0.0
      %v2967 = vadd.f32 %v2965, %v2966
      %v2968 = vsel %vm1017, %v2879, 0.0
      %v2969 = vadd.f32 %v2967, %v2968
      %v2970 = vsel %vm1017, %v2880, 0.0
      %v2971 = vadd.f32 %v2969, %v2970
      %v2972 = vsel %vm1017, %v2881, 0.0
      %v2973 = vadd.f32 %v2971, %v2972
      %v2974 = vsel %vm1017, %v2882, 0.0
      %v2975 = vadd.f32 %v2973, %v2974
      %v2976 = vsel %vm1017, %v2883, 0.0
      %v2977 = vadd.f32 %v2975, %v2976
      %v2978 = vsel %vm1017, %v2884, 0.0
      %v2979 = vadd.f32 %v2977, %v2978
      %v2980 = vrot.slane %v2979, 4
      %v2981 = vadd.f32 %v2979, %v2980
      %v2982 = vrot.slane %v2981, 2
      %v2983 = vadd.f32 %v2981, %v2982
      %v2984 = vrot.slane %v2983, 1
      %v2985 = vadd.f32 %v2983, %v2984
      %vm2986 = vcmask 24576
      %2987 = vst.msk [vmem:[%s682] sm:$0x1] %vm2986, %v2985
      %v2988 = vmul.f32 %v2853, %v2853
      %v2989 = vmul.f32 %v2854, %v2854
      %v2990 = vmul.f32 %v2855, %v2855
      %v2991 = vmul.f32 %v2856, %v2856
      %v2992 = vmul.f32 %v2857, %v2857
      %v2993 = vmul.f32 %v2858, %v2858
      %v2994 = vmul.f32 %v2859, %v2859
      %v2995 = vmul.f32 %v2860, %v2860
      %v2996 = vmul.f32 %v2861, %v2861
      %v2997 = vmul.f32 %v2862, %v2862
      %v2998 = vmul.f32 %v2863, %v2863
      %v2999 = vmul.f32 %v2864, %v2864
      %v3000 = vmul.f32 %v2865, %v2865
      %v3001 = vmul.f32 %v2866, %v2866
      %v3002 = vmul.f32 %v2867, %v2867
      %v3003 = vmul.f32 %v2868, %v2868
      %v3004 = vmul.f32 %v2869, %v2869
      %v3005 = vmul.f32 %v2870, %v2870
      %v3006 = vmul.f32 %v2871, %v2871
      %v3007 = vmul.f32 %v2872, %v2872
      %v3008 = vmul.f32 %v2873, %v2873
      %v3009 = vmul.f32 %v2874, %v2874
      %v3010 = vmul.f32 %v2875, %v2875
      %v3011 = vmul.f32 %v2876, %v2876
      %v3012 = vmul.f32 %v2877, %v2877
      %v3013 = vmul.f32 %v2878, %v2878
      %v3014 = vmul.f32 %v2879, %v2879
      %v3015 = vmul.f32 %v2880, %v2880
      %v3016 = vmul.f32 %v2881, %v2881
      %v3017 = vmul.f32 %v2882, %v2882
      %v3018 = vmul.f32 %v2883, %v2883
      %v3019 = vmul.f32 %v2884, %v2884
      %v3020 = vsel %vm1017, %v2988, 0.0
      %v3021 = vsel %vm1017, %v2989, 0.0
      %v3022 = vadd.f32 %v3020, %v3021
      %v3023 = vsel %vm1017, %v2990, 0.0
      %v3024 = vadd.f32 %v3022, %v3023
      %v3025 = vsel %vm1017, %v2991, 0.0
      %v3026 = vadd.f32 %v3024, %v3025
      %v3027 = vsel %vm1017, %v2992, 0.0
      %v3028 = vadd.f32 %v3026, %v3027
      %v3029 = vsel %vm1017, %v2993, 0.0
      %v3030 = vadd.f32 %v3028, %v3029
      %v3031 = vsel %vm1017, %v2994, 0.0
      %v3032 = vadd.f32 %v3030, %v3031
      %v3033 = vsel %vm1017, %v2995, 0.0
      %v3034 = vadd.f32 %v3032, %v3033
      %v3035 = vsel %vm1017, %v2996, 0.0
      %v3036 = vadd.f32 %v3034, %v3035
      %v3037 = vsel %vm1017, %v2997, 0.0
      %v3038 = vadd.f32 %v3036, %v3037
      %v3039 = vsel %vm1017, %v2998, 0.0
      %v3040 = vadd.f32 %v3038, %v3039
      %v3041 = vsel %vm1017, %v2999, 0.0
      %v3042 = vadd.f32 %v3040, %v3041
      %v3043 = vsel %vm1017, %v3000, 0.0
      %v3044 = vadd.f32 %v3042, %v3043
      %v3045 = vsel %vm1017, %v3001, 0.0
      %v3046 = vadd.f32 %v3044, %v3045
      %v3047 = vsel %vm1017, %v3002, 0.0
      %v3048 = vadd.f32 %v3046, %v3047
      %v3049 = vsel %vm1017, %v3003, 0.0
      %v3050 = vadd.f32 %v3048, %v3049
      %v3051 = vsel %vm1017, %v3004, 0.0
      %v3052 = vadd.f32 %v3050, %v3051
      %v3053 = vsel %vm1017, %v3005, 0.0
      %v3054 = vadd.f32 %v3052, %v3053
      %v3055 = vsel %vm1017, %v3006, 0.0
      %v3056 = vadd.f32 %v3054, %v3055
      %v3057 = vsel %vm1017, %v3007, 0.0
      %v3058 = vadd.f32 %v3056, %v3057
      %v3059 = vsel %vm1017, %v3008, 0.0
      %v3060 = vadd.f32 %v3058, %v3059
      %v3061 = vsel %vm1017, %v3009, 0.0
      %v3062 = vadd.f32 %v3060, %v3061
      %v3063 = vsel %vm1017, %v3010, 0.0
      %v3064 = vadd.f32 %v3062, %v3063
      %v3065 = vsel %vm1017, %v3011, 0.0
      %v3066 = vadd.f32 %v3064, %v3065
      %v3067 = vsel %vm1017, %v3012, 0.0
      %v3068 = vadd.f32 %v3066, %v3067
      %v3069 = vsel %vm1017, %v3013, 0.0
      %v3070 = vadd.f32 %v3068, %v3069
      %v3071 = vsel %vm1017, %v3014, 0.0
      %v3072 = vadd.f32 %v3070, %v3071
      %v3073 = vsel %vm1017, %v3015, 0.0
      %v3074 = vadd.f32 %v3072, %v3073
      %v3075 = vsel %vm1017, %v3016, 0.0
      %v3076 = vadd.f32 %v3074, %v3075
      %v3077 = vsel %vm1017, %v3017, 0.0
      %v3078 = vadd.f32 %v3076, %v3077
      %v3079 = vsel %vm1017, %v3018, 0.0
      %v3080 = vadd.f32 %v3078, %v3079
      %v3081 = vsel %vm1017, %v3019, 0.0
      %v3082 = vadd.f32 %v3080, %v3081
      %v3083 = vrot.slane %v3082, 4
      %v3084 = vadd.f32 %v3082, %v3083
      %v3085 = vrot.slane %v3084, 2
      %v3086 = vadd.f32 %v3084, %v3085
      %v3087 = vrot.slane %v3086, 1
      %v3088 = vadd.f32 %v3086, %v3087
      %3089 = vst.msk [vmem:[%s682 + $0x1] sm:$0x1] %vm2986, %v3088
      %s3090 = smul.u32 16, %s26
      %p3091 = scmp.lt.s32.totalorder %s25, 1
      %s3092 = scalar_select %p3091, %s25, 1
      %p3093 = scmp.lt.s32.totalorder %s3090, 15
      %s3094 = scalar_select %p3093, %s3090, 15
      %s3095 = smul.addr %s3094, 2
      %s3096 = smul.addr %s3092, 32
      %s3097 = sadd.s32 %s3095, %s3096
      %s3098 = smul.addr %s3097, 8
      %s3099 = scalar_lea.vmem %s8, %s3098
      %p3100 = scmp.lt.s32.totalorder %s25, 1
      %s3101 = scalar_select %p3100, %s25, 1
      %p3102 = scmp.lt.s32.totalorder %s26, 0
      %s3103 = scalar_select %p3102, %s26, 0
      %s3104 = sadd.s32 %s3103, %s3101
      %s3105 = smul.addr %s3104, 2
      %s3106 = scalar_lea.vmem %s9, %s3105
      // Predicated region
      $region53: #{_lambda_.5} parent=51 // pred_check
        %p3107 = pneg %p295
      $region54: #{_lambda_.5} parent=51 // pred_check_branch
        %3109 = sbr.rel (%p3107) target = $region56
      $region55: #{_lambda_.5} parent=51 // pred_region
        %s3110 = smul.u32 16, %s26
      $region56: #{_lambda_.5} parent=51 // pred_fallthru
        _
      // Predicated region
      $region57: #{_lambda_.5} parent=51 // pred_check
        %p3111 = pneg %p323
      $region58: #{_lambda_.5} parent=51 // pred_check_branch
        %3113 = sbr.rel (%p3111) target = $region60
      $region59: #{_lambda_.5} parent=51 // pred_region
        _
      $region60: #{_lambda_.5} parent=51 // pred_fallthru
        _
    $region52: #{_lambda_.5} parent=5 // pred_fallthru
      _
    %p3114 = scmp.le.s32.totalorder 2, %s16
    // Predicated region
    $region61: #{_lambda_.5} parent=5 // pred_check
      %p3115 = pneg %p3114
    $region62: #{_lambda_.5} parent=5 // pred_check_branch
      %3117 = sbr.rel (%p3115) target = $region64
    $region63: #{_lambda_.5} parent=5 // pred_region
      %s3118 = ssub.s32 %s16, 2
      // Predicated region
      $region65: #{_lambda_.5} parent=63 // pred_check
        %p3119 = pneg %p301
      $region66: #{_lambda_.5} parent=63 // pred_check_branch
        %3121 = sbr.rel (%p3119) target = $region68
      $region67: #{_lambda_.5} parent=63 // pred_region
        %s3122 = smul.u32 16, %s28
        %p3123 = scmp.lt.s32.totalorder %s27, 1
        %s3124 = scalar_select %p3123, %s27, 1
        %p3125 = scmp.lt.s32.totalorder %s3122, 15
        %s3126 = scalar_select %p3125, %s3122, 15
        %s3127 = smul.addr %s3126, 2
        %s3128 = smul.addr %s3124, 32
        %s3129 = sadd.s32 %s3127, %s3128
        %s3130 = smul.addr %s3129, 8
        %s3131 = scalar_lea.vmem %s8, %s3130
      $region68: #{_lambda_.5} parent=63 // pred_fallthru
        _
      // Predicated region
      $region69: #{_lambda_.5} parent=63 // pred_check
        %p3132 = pneg %p329
      $region70: #{_lambda_.5} parent=63 // pred_check_branch
        %3134 = sbr.rel (%p3132) target = $region72
      $region71: #{_lambda_.5} parent=63 // pred_region
        %p3135 = scmp.lt.s32.totalorder %s27, 1
        %s3136 = scalar_select %p3135, %s27, 1
        %p3137 = scmp.lt.s32.totalorder %s28, 0
        %s3138 = scalar_select %p3137, %s28, 0
        %s3139 = sadd.s32 %s3138, %s3136
        %s3140 = smul.addr %s3139, 2
        %s3141 = scalar_lea.vmem %s9, %s3140
      $region72: #{_lambda_.5} parent=63 // pred_fallthru
        _
    $region64: #{_lambda_.5} parent=5 // pred_fallthru
      _
  $region6: #{_lambda_.5} parent=0 // loop_footer
    %s20 = sadd.s32 1, %s16
  $region7: #{_lambda_.5} parent=0 // loop_footer_branch
    %15 = sbr.rel target = $region3
  $region8: #{_lambda_.5} parent=0 // loop_exit
    _

// kernel: _lambda_.6
$region0: #{_lambda_.6}
  #allocation0 [shape = 'u32[]', space=smem, size = 0x4, offset = 0x4, fixed_abs, tag = 'smem constant byte address 0x4 - core index']
  #allocation1 [shape = 'u32[144,128]{1,0:T(1,128)}', space=vmem, size = 0x12000, scoped, tag = 'internal scratch']
  #allocation2 [shape = 'f32[18,16,12]{2,1,0:T(8,128)}', space=vmem, size = 0x24000, scoped, tag = 'scratch operand']
  %s0 = inlined_call_operand.vmem [shape: f32[2,16,16,4], index: 0, kind: input, shape index: {}, may-alias: {0,1,2}]
  %s1 = inlined_call_operand.vmem [shape: f32[2,16,16,4], index: 1, kind: input, shape index: {}, may-alias: {0,1,2}]
  %s2 = inlined_call_operand.vmem [shape: f32[2,16,16,4], index: 2, kind: input, shape index: {}, may-alias: {0,1,2}]
  %s3 = inlined_call_operand.vmem [shape: f32[2,4], index: 3, kind: input, shape index: {}]
  %s4 = inlined_call_operand.vmem [shape: f32[3,12,4], index: 4, kind: input, shape index: {}]
  %s5 = inlined_call_operand.vmem [shape: f32[2,16,16,4], index: 5, kind: output, shape index: {0}]
  %s6 = inlined_call_operand.vmem [shape: f32[2,1,2,4], index: 6, kind: output, shape index: {1}]
  %7 = xla_tuple %s5, %s6
  %s8 = sld [smem:[#allocation0]]
  $region61: #{_lambda_.6} parent=0
    _
  %s10 = ssub.s32 1, %s8
  %s11 = scalar_select 0, %s10, %s8
  loop: start=0, step=1, limit=4
  $region2: #{_lambda_.6} parent=0 // loop_pre_header
    _
  $region3: #{_lambda_.6} parent=0 // loop_header
    %s13 = sphi 0, %s17
    %p14 = scmp.ge.s32.totalorder %s13, 4
    %s20 = sphi 0, %s32
    %s21 = sphi 0, %s28
    %s22 = sphi 0, %s20
    %s23 = sphi 0, %s21
    %s24 = sphi 0, %s22
    %s25 = sphi 0, %s23
    %s37 = sphi 0, %s39
    %s40 = sphi 0, %s37
    %s41 = sphi 0, %s40
    %s57 = sphi 0, %s41
    %s73 = sphi 0, %s75
    %s76 = sphi 0, %s73
    %s77 = sphi 0, %s76
    %s93 = sphi 0, %s77
    %s109 = sphi 0, %s111
    %s112 = sphi 0, %s109
    %s113 = sphi 0, %s112
    %s129 = sphi 0, %s113
    %s133 = sphi 0, %s133
    %s135 = sphi 0, %s133
    %s136 = sphi 0, %s135
    %s150 = sphi 0, %s136
    %s154 = sphi 0, %s154
    %s156 = sphi 0, %s154
    %s157 = sphi 0, %s156
    %s171 = sphi 0, %s157
    %s179 = sphi 0, %s181
    %s182 = sphi 0, %s179
    %s183 = sphi 0, %s182
    %s199 = sphi 0, %s183
    %s207 = sphi 0, %s209
    %s210 = sphi 0, %s207
    %s211 = sphi 0, %s210
    %s227 = sphi 0, %s211
  $region4: #{_lambda_.6} parent=0 // loop_header_branch
    %16 = sbr.rel (%p14) target = $region8
  $region5: #{_lambda_.6} parent=0 // loop_body
    %s18 = ssub.s32 %s13, 1
    %s19 = ssub.s32 %s13, 2
    %s26 = sadd.s32 1, %s21
    %p27 = scmp.ge.s32.totalorder %s26, 1
    %s28 = scalar_select %p27, 0, %s26
    %s29 = sadd.s32 1, %s20
    %s30 = scalar_select %p27, %s29, %s20
    %p31 = scmp.ge.s32.totalorder %s30, 2
    %s32 = scalar_select %p31, 0, %s30
    %s33 = ssub.s32 %s20, %s32
    %s34 = ssub.s32 %s21, %s28
    %s35 = sor.u32 %s33, %s34
    %p36 = scmp.eq.s32.totalorder %s35, 0
    %s38 = sadd.s32 %s37, 1
    %s39 = scalar_select %p36, %s37, %s38
    %p42 = pneg %p36
    %p43 = scmp.eq.s32.totalorder %s13, 1
    %p44 = por %p42, %p43
    %p45 = scmp.ne.s32.totalorder %s37, %s40
    %p46 = scmp.eq.s32.totalorder %s13, 0
    %p47 = por %p45, %p46
    %p48 = scmp.ne.s32.totalorder %s37, %s40
    %p49 = scmp.eq.s32.totalorder %s18, 1
    %p50 = por %p48, %p49
    %p51 = scmp.ne.s32.totalorder %s40, %s41
    %p52 = scmp.eq.s32.totalorder %s18, 0
    %p53 = por %p51, %p52
    %p54 = scmp.ne.s32.totalorder %s40, %s41
    %p55 = scmp.eq.s32.totalorder %s19, 1
    %p56 = por %p54, %p55
    %p58 = scmp.ne.s32.totalorder %s41, %s57
    %p59 = scmp.eq.s32.totalorder %s19, 0
    %p60 = por %p58, %p59
    %s61 = smul.u32 %s21, 16
    %s62 = ssub.s32 %s61, 1
    %p63 = scmp.gt.s32.totalorder %s62, 0
    %s64 = scalar_select %p63, %s62, 0
    %s65 = smul.u32 %s28, 16
    %s66 = ssub.s32 %s65, 1
    %p67 = scmp.gt.s32.totalorder %s66, 0
    %s68 = scalar_select %p67, %s66, 0
    %s69 = ssub.s32 %s20, %s32
    %s70 = ssub.s32 %s64, %s68
    %s71 = sor.u32 %s69, %s70
    %p72 = scmp.eq.s32.totalorder %s71, 0
    %s74 = sadd.s32 %s73, 1
    %s75 = scalar_select %p72, %s73, %s74
    %p78 = pneg %p72
    %p79 = scmp.eq.s32.totalorder %s13, 1
    %p80 = por %p78, %p79
    %p81 = scmp.ne.s32.totalorder %s73, %s76
    %p82 = scmp.eq.s32.totalorder %s13, 0
    %p83 = por %p81, %p82
    %p84 = scmp.ne.s32.totalorder %s73, %s76
    %p85 = scmp.eq.s32.totalorder %s18, 1
    %p86 = por %p84, %p85
    %p87 = scmp.ne.s32.totalorder %s76, %s77
    %p88 = scmp.eq.s32.totalorder %s18, 0
    %p89 = por %p87, %p88
    %p90 = scmp.ne.s32.totalorder %s76, %s77
    %p91 = scmp.eq.s32.totalorder %s19, 1
    %p92 = por %p90, %p91
    %p94 = scmp.ne.s32.totalorder %s77, %s93
    %p95 = scmp.eq.s32.totalorder %s19, 0
    %p96 = por %p94, %p95
    %s97 = smul.u32 %s21, 16
    %s98 = sadd.s32 %s97, 16
    %p99 = scmp.lt.s32.totalorder %s98, 15
    %s100 = scalar_select %p99, %s98, 15
    %s101 = smul.u32 %s28, 16
    %s102 = sadd.s32 %s101, 16
    %p103 = scmp.lt.s32.totalorder %s102, 15
    %s104 = scalar_select %p103, %s102, 15
    %s105 = ssub.s32 %s20, %s32
    %s106 = ssub.s32 %s100, %s104
    %s107 = sor.u32 %s105, %s106
    %p108 = scmp.eq.s32.totalorder %s107, 0
    %s110 = sadd.s32 %s109, 1
    %s111 = scalar_select %p108, %s109, %s110
    %p114 = pneg %p108
    %p115 = scmp.eq.s32.totalorder %s13, 1
    %p116 = por %p114, %p115
    %p117 = scmp.ne.s32.totalorder %s109, %s112
    %p118 = scmp.eq.s32.totalorder %s13, 0
    %p119 = por %p117, %p118
    %p120 = scmp.ne.s32.totalorder %s109, %s112
    %p121 = scmp.eq.s32.totalorder %s18, 1
    %p122 = por %p120, %p121
    %p123 = scmp.ne.s32.totalorder %s112, %s113
    %p124 = scmp.eq.s32.totalorder %s18, 0
    %p125 = por %p123, %p124
    %p126 = scmp.ne.s32.totalorder %s112, %s113
    %p127 = scmp.eq.s32.totalorder %s19, 1
    %p128 = por %p126, %p127
    %p130 = scmp.ne.s32.totalorder %s113, %s129
    %p131 = scmp.eq.s32.totalorder %s19, 0
    %p132 = por %p130, %p131
    %s134 = sadd.s32 %s133, 1
    %p137 = scmp.eq.s32.totalorder %s13, 1
    %p138 = scmp.ne.s32.totalorder %s133, %s135
    %p139 = scmp.eq.s32.totalorder %s13, 0
    %p140 = por %p138, %p139
    %p141 = scmp.ne.s32.totalorder %s133, %s135
    %p142 = scmp.eq.s32.totalorder %s18, 1
    %p143 = por %p141, %p142
    %p144 = scmp.ne.s32.totalorder %s135, %s136
    %p145 = scmp.eq.s32.totalorder %s18, 0
    %p146 = por %p144, %p145
    %p147 = scmp.ne.s32.totalorder %s135, %s136
    %p148 = scmp.eq.s32.totalorder %s19, 1
    %p149 = por %p147, %p148
    %p151 = scmp.ne.s32.totalorder %s136, %s150
    %p152 = scmp.eq.s32.totalorder %s19, 0
    %p153 = por %p151, %p152
    %s155 = sadd.s32 %s154, 1
    %p158 = scmp.eq.s32.totalorder %s13, 1
    %p159 = scmp.ne.s32.totalorder %s154, %s156
    %p160 = scmp.eq.s32.totalorder %s13, 0
    %p161 = por %p159, %p160
    %p162 = scmp.ne.s32.totalorder %s154, %s156
    %p163 = scmp.eq.s32.totalorder %s18, 1
    %p164 = por %p162, %p163
    %p165 = scmp.ne.s32.totalorder %s156, %s157
    %p166 = scmp.eq.s32.totalorder %s18, 0
    %p167 = por %p165, %p166
    %p168 = scmp.ne.s32.totalorder %s156, %s157
    %p169 = scmp.eq.s32.totalorder %s19, 1
    %p170 = por %p168, %p169
    %p172 = scmp.ne.s32.totalorder %s157, %s171
    %p173 = scmp.eq.s32.totalorder %s19, 0
    %p174 = por %p172, %p173
    %s175 = ssub.s32 %s20, %s32
    %s176 = ssub.s32 %s21, %s28
    %s177 = sor.u32 %s175, %s176
    %p178 = scmp.eq.s32.totalorder %s177, 0
    %s180 = sadd.s32 %s179, 1
    %s181 = scalar_select %p178, %s179, %s180
    %p184 = pneg %p178
    %p185 = scmp.eq.s32.totalorder %s13, 1
    %p186 = por %p184, %p185
    %p187 = scmp.ne.s32.totalorder %s179, %s182
    %p188 = scmp.eq.s32.totalorder %s13, 0
    %p189 = por %p187, %p188
    %p190 = scmp.ne.s32.totalorder %s179, %s182
    %p191 = scmp.eq.s32.totalorder %s18, 1
    %p192 = por %p190, %p191
    %p193 = scmp.ne.s32.totalorder %s182, %s183
    %p194 = scmp.eq.s32.totalorder %s18, 0
    %p195 = por %p193, %p194
    %p196 = scmp.ne.s32.totalorder %s182, %s183
    %p197 = scmp.eq.s32.totalorder %s19, 1
    %p198 = por %p196, %p197
    %p200 = scmp.ne.s32.totalorder %s183, %s199
    %p201 = scmp.eq.s32.totalorder %s19, 0
    %p202 = por %p200, %p201
    %s203 = ssub.s32 %s20, %s32
    %s204 = ssub.s32 %s21, %s28
    %s205 = sor.u32 %s203, %s204
    %p206 = scmp.eq.s32.totalorder %s205, 0
    %s208 = sadd.s32 %s207, 1
    %s209 = scalar_select %p206, %s207, %s208
    %p212 = pneg %p206
    %p213 = scmp.eq.s32.totalorder %s13, 1
    %p214 = por %p212, %p213
    %p215 = scmp.ne.s32.totalorder %s207, %s210
    %p216 = scmp.eq.s32.totalorder %s13, 0
    %p217 = por %p215, %p216
    %p218 = scmp.ne.s32.totalorder %s207, %s210
    %p219 = scmp.eq.s32.totalorder %s18, 1
    %p220 = por %p218, %p219
    %p221 = scmp.ne.s32.totalorder %s210, %s211
    %p222 = scmp.eq.s32.totalorder %s18, 0
    %p223 = por %p221, %p222
    %p224 = scmp.ne.s32.totalorder %s210, %s211
    %p225 = scmp.eq.s32.totalorder %s19, 1
    %p226 = por %p224, %p225
    %p228 = scmp.ne.s32.totalorder %s211, %s227
    %p229 = scmp.eq.s32.totalorder %s19, 0
    %p230 = por %p228, %p229
    %p231 = scmp.le.s32.totalorder 1, %s13
    %p232 = scmp.lt.s32.totalorder %s13, 3
    %p233 = pnand %p231, %p232
    %p234 = pneg %p233
    // Predicated region
    $region9: #{_lambda_.6} parent=5 // pred_check
      _
    $region10: #{_lambda_.6} parent=5 // pred_check_branch
      %236 = sbr.rel (%p233) target = $region12
    $region11: #{_lambda_.6} parent=5 // pred_region
      %s237 = ssub.s32 %s13, 1
      // Predicated region
      $region13: #{_lambda_.6} parent=11 // pred_check
        %p238 = pneg %p146
      $region14: #{_lambda_.6} parent=11 // pred_check_branch
        %240 = sbr.rel (%p238) target = $region16
      $region15: #{_lambda_.6} parent=11 // pred_region
        _
      $region16: #{_lambda_.6} parent=11 // pred_fallthru
        _
      // Predicated region
      $region17: #{_lambda_.6} parent=11 // pred_check
        %p241 = pneg %p167
      $region18: #{_lambda_.6} parent=11 // pred_check_branch
        %243 = sbr.rel (%p241) target = $region20
      $region19: #{_lambda_.6} parent=11 // pred_region
        _
      $region20: #{_lambda_.6} parent=11 // pred_fallthru
        _
    $region12: #{_lambda_.6} parent=5 // pred_fallthru
      _
    %p244 = scmp.lt.s32.totalorder %s13, 2
    // Predicated region
    $region21: #{_lambda_.6} parent=5 // pred_check
      %p245 = pneg %p244
    $region22: #{_lambda_.6} parent=5 // pred_check_branch
      %247 = sbr.rel (%p245) target = $region24
    $region23: #{_lambda_.6} parent=5 // pred_region
      // Predicated region
      $region25: #{_lambda_.6} parent=23 // pred_check
        %p248 = pneg %p47
      $region26: #{_lambda_.6} parent=23 // pred_check_branch
        %250 = sbr.rel (%p248) target = $region28
      $region27: #{_lambda_.6} parent=23 // pred_region
        %s251 = smul.u32 16, %s21
        %p252 = scmp.lt.s32.totalorder %s20, 1
        %s253 = scalar_select %p252, %s20, 1
        %p254 = scmp.lt.s32.totalorder %s251, 15
        %s255 = scalar_select %p254, %s251, 15
        %s256 = smul.addr %s255, 2
        %s257 = smul.addr %s253, 32
        %s258 = sadd.s32 %s256, %s257
        %s259 = smul.addr %s258, 8
        %s260 = scalar_lea.vmem %s0, %s259
        %s261 = smul.u32 16, %s21
      $region28: #{_lambda_.6} parent=23 // pred_fallthru
        _
      // Predicated region
      $region29: #{_lambda_.6} parent=23 // pred_check
        %p262 = pneg %p83
      $region30: #{_lambda_.6} parent=23 // pred_check_branch
        %264 = sbr.rel (%p262) target = $region32
      $region31: #{_lambda_.6} parent=23 // pred_region
        %s265 = smul.u32 %s21, 16
        %s266 = ssub.s32 %s265, 1
        %p267 = scmp.gt.s32.totalorder %s266, 0
        %s268 = scalar_select %p267, %s266, 0
        %p269 = scmp.lt.s32.totalorder %s20, 1
        %s270 = scalar_select %p269, %s20, 1
        %p271 = scmp.lt.s32.totalorder %s268, 15
        %s272 = scalar_select %p271, %s268, 15
        %s273 = smul.addr %s272, 2
        %s274 = smul.addr %s270, 32
        %s275 = sadd.s32 %s273, %s274
        %s276 = smul.addr %s275, 8
        %s277 = scalar_lea.vmem %s1, %s276
        %s278 = smul.u32 %s21, 16
        %s279 = ssub.s32 %s278, 1
        %p280 = scmp.gt.s32.totalorder %s279, 0
        %s281 = scalar_select %p280, %s279, 0
      $region32: #{_lambda_.6} parent=23 // pred_fallthru
        _
      // Predicated region
      $region33: #{_lambda_.6} parent=23 // pred_check
        %p282 = pneg %p119
      $region34: #{_lambda_.6} parent=23 // pred_check_branch
        %284 = sbr.rel (%p282) target = $region36
      $region35: #{_lambda_.6} parent=23 // pred_region
        %s285 = smul.u32 %s21, 16
        %s286 = sadd.s32 %s285, 16
        %p287 = scmp.lt.s32.totalorder %s286, 15
        %s288 = scalar_select %p287, %s286, 15
        %p289 = scmp.lt.s32.totalorder %s20, 1
        %s290 = scalar_select %p289, %s20, 1
        %p291 = scmp.lt.s32.totalorder %s288, 15
        %s292 = scalar_select %p291, %s288, 15
        %s293 = smul.addr %s292, 2
        %s294 = smul.addr %s290, 32
        %s295 = sadd.s32 %s293, %s294
        %s296 = smul.addr %s295, 8
        %s297 = scalar_lea.vmem %s2, %s296
        %s298 = smul.u32 %s21, 16
        %s299 = sadd.s32 %s298, 16
        %p300 = scmp.lt.s32.totalorder %s299, 15
        %s301 = scalar_select %p300, %s299, 15
      $region36: #{_lambda_.6} parent=23 // pred_fallthru
        _
    $region24: #{_lambda_.6} parent=5 // pred_fallthru
      _
    %p302 = scmp.le.s32.totalorder 1, %s13
    %p303 = scmp.lt.s32.totalorder %s13, 3
    %p304 = pnand %p302, %p303
    %p305 = pneg %p304
    // Predicated region
    $region37: #{_lambda_.6} parent=5 // pred_check
      _
    $region38: #{_lambda_.6} parent=5 // pred_check_branch
      %307 = sbr.rel (%p304) target = $region40
    $region39: #{_lambda_.6} parent=5 // pred_region
      %s308 = ssub.s32 %s13, 1
      %s309 = smul.u32 16, %s23
      %p310 = scmp.lt.s32.totalorder %s22, 1
      %s311 = scalar_select %p310, %s22, 1
      %p312 = scmp.lt.s32.totalorder %s309, 15
      %s313 = scalar_select %p312, %s309, 15
      %s314 = smul.addr %s313, 2
      %s315 = smul.addr %s311, 32
      %s316 = sadd.s32 %s314, %s315
      %s317 = smul.addr %s316, 8
      %s318 = scalar_lea.vmem %s0, %s317
      %p319 = pneg %p53
      %p320 = pneg %p50
      %s321 = smul.u32 %s23, 16
      %s322 = ssub.s32 %s321, 1
      %p323 = scmp.gt.s32.totalorder %s322, 0
      %s324 = scalar_select %p323, %s322, 0
      %p325 = scmp.lt.s32.totalorder %s22, 1
      %s326 = scalar_select %p325, %s22, 1
      %p327 = scmp.lt.s32.totalorder %s324, 15
      %s328 = scalar_select %p327, %s324, 15
      %s329 = smul.addr %s328, 2
      %s330 = smul.addr %s326, 32
      %s331 = sadd.s32 %s329, %s330
      %s332 = smul.addr %s331, 8
      %s333 = scalar_lea.vmem %s1, %s332
      %p334 = pneg %p89
      %p335 = pneg %p86
      %s336 = smul.u32 %s23, 16
      %s337 = sadd.s32 %s336, 16
      %p338 = scmp.lt.s32.totalorder %s337, 15
      %s339 = scalar_select %p338, %s337, 15
      %p340 = scmp.lt.s32.totalorder %s22, 1
      %s341 = scalar_select %p340, %s22, 1
      %p342 = scmp.lt.s32.totalorder %s339, 15
      %s343 = scalar_select %p342, %s339, 15
      %s344 = smul.addr %s343, 2
      %s345 = smul.addr %s341, 32
      %s346 = sadd.s32 %s344, %s345
      %s347 = smul.addr %s346, 8
      %s348 = scalar_lea.vmem %s2, %s347
      %p349 = pneg %p125
      %p350 = pneg %p122
      %p351 = pneg %p146
      %p352 = pneg %p143
      %p353 = pneg %p167
      %p354 = pneg %p164
      %p355 = pneg %p195
      %p356 = pneg %p192
      %s357 = smul.u32 16, %s23
      %p358 = scmp.lt.s32.totalorder %s22, 1
      %s359 = scalar_select %p358, %s22, 1
      %p360 = scmp.lt.s32.totalorder %s357, 15
      %s361 = scalar_select %p360, %s357, 15
      %s362 = smul.addr %s361, 2
      %s363 = smul.addr %s359, 32
      %s364 = sadd.s32 %s362, %s363
      %s365 = smul.addr %s364, 8
      %s366 = scalar_lea.vmem %s5, %s365
      %p367 = pneg %p223
      %p368 = pneg %p220
      %p369 = scmp.lt.s32.totalorder %s22, 1
      %s370 = scalar_select %p369, %s22, 1
      %p371 = scmp.lt.s32.totalorder %s23, 0
      %s372 = scalar_select %p371, %s23, 0
      %s373 = sadd.s32 %s372, %s370
      %s374 = smul.addr %s373, 2
      %s375 = scalar_lea.vmem %s6, %s374
      %s376 = smul.u32 16, %s23
      %p377 = scmp.lt.s32.totalorder %s22, 1
      %s378 = scalar_select %p377, %s22, 1
      %p379 = scmp.lt.s32.totalorder %s376, 15
      %s380 = scalar_select %p379, %s376, 15
      %s381 = smul.addr %s380, 2
      %s382 = smul.addr %s378, 32
      %s383 = sadd.s32 %s381, %s382
      %s384 = smul.addr %s383, 8
      %s385 = scalar_lea.vmem %s0, %s384
      %s386 = smul.u32 16, %s23
      %s387 = smul.u32 %s23, 16
      %s388 = ssub.s32 %s387, 1
      %p389 = scmp.gt.s32.totalorder %s388, 0
      %s390 = scalar_select %p389, %s388, 0
      %p391 = scmp.lt.s32.totalorder %s22, 1
      %s392 = scalar_select %p391, %s22, 1
      %p393 = scmp.lt.s32.totalorder %s390, 15
      %s394 = scalar_select %p393, %s390, 15
      %s395 = smul.addr %s394, 2
      %s396 = smul.addr %s392, 32
      %s397 = sadd.s32 %s395, %s396
      %s398 = smul.addr %s397, 8
      %s399 = scalar_lea.vmem %s1, %s398
      %s400 = smul.u32 %s23, 16
      %s401 = ssub.s32 %s400, 1
      %p402 = scmp.gt.s32.totalorder %s401, 0
      %s403 = scalar_select %p402, %s401, 0
      %s404 = smul.u32 %s23, 16
      %s405 = sadd.s32 %s404, 16
      %p406 = scmp.lt.s32.totalorder %s405, 15
      %s407 = scalar_select %p406, %s405, 15
      %p408 = scmp.lt.s32.totalorder %s22, 1
      %s409 = scalar_select %p408, %s22, 1
      %p410 = scmp.lt.s32.totalorder %s407, 15
      %s411 = scalar_select %p410, %s407, 15
      %s412 = smul.addr %s411, 2
      %s413 = smul.addr %s409, 32
      %s414 = sadd.s32 %s412, %s413
      %s415 = smul.addr %s414, 8
      %s416 = scalar_lea.vmem %s2, %s415
      %s417 = smul.u32 %s23, 16
      %s418 = sadd.s32 %s417, 16
      %p419 = scmp.lt.s32.totalorder %s418, 15
      %s420 = scalar_select %p419, %s418, 15
      %s421 = smul.u32 16, %s23
      %p422 = scmp.lt.s32.totalorder %s22, 1
      %s423 = scalar_select %p422, %s22, 1
      %p424 = scmp.lt.s32.totalorder %s421, 15
      %s425 = scalar_select %p424, %s421, 15
      %s426 = smul.addr %s425, 2
      %s427 = smul.addr %s423, 32
      %s428 = sadd.s32 %s426, %s427
      %s429 = smul.addr %s428, 8
      %s430 = scalar_lea.vmem %s5, %s429
      %s431 = smul.u32 16, %s23
      %p432 = scmp.lt.s32.totalorder %s22, 1
      %s433 = scalar_select %p432, %s22, 1
      %p434 = scmp.lt.s32.totalorder %s23, 0
      %s435 = scalar_select %p434, %s23, 0
      %s436 = sadd.s32 %s435, %s433
      %s437 = smul.addr %s436, 2
      %s438 = scalar_lea.vmem %s6, %s437
      %v439 = vld [vmem:[%s399] sm:$0xff]
      %v440 = vld [vmem:[%s399 + $0x8] sm:$0xff]
      %v441 = vld [vmem:[%s385] sm:$0xff]
      %v442 = vld [vmem:[%s385 + $0x8] sm:$0xff]
      %v443 = vld [vmem:[%s385 + $0x10] sm:$0xff]
      %v444 = vld [vmem:[%s385 + $0x18] sm:$0xff]
      %v445 = vld [vmem:[%s385 + $0x20] sm:$0xff]
      %v446 = vld [vmem:[%s385 + $0x28] sm:$0xff]
      %v447 = vld [vmem:[%s385 + $0x30] sm:$0xff]
      %v448 = vld [vmem:[%s385 + $0x38] sm:$0xff]
      %v449 = vld [vmem:[%s385 + $0x40] sm:$0xff]
      %v450 = vld [vmem:[%s385 + $0x48] sm:$0xff]
      %v451 = vld [vmem:[%s385 + $0x50] sm:$0xff]
      %v452 = vld [vmem:[%s385 + $0x58] sm:$0xff]
      %v453 = vld [vmem:[%s385 + $0x60] sm:$0xff]
      %v454 = vld [vmem:[%s385 + $0x68] sm:$0xff]
      %v455 = vld [vmem:[%s385 + $0x70] sm:$0xff]
      %v456 = vld [vmem:[%s385 + $0x78] sm:$0xff]
      %v457 = vld [vmem:[%s385 + $0x80] sm:$0xff]
      %v458 = vld [vmem:[%s385 + $0x88] sm:$0xff]
      %v459 = vld [vmem:[%s385 + $0x90] sm:$0xff]
      %v460 = vld [vmem:[%s385 + $0x98] sm:$0xff]
      %v461 = vld [vmem:[%s385 + $0xa0] sm:$0xff]
      %v462 = vld [vmem:[%s385 + $0xa8] sm:$0xff]
      %v463 = vld [vmem:[%s385 + $0xb0] sm:$0xff]
      %v464 = vld [vmem:[%s385 + $0xb8] sm:$0xff]
      %v465 = vld [vmem:[%s385 + $0xc0] sm:$0xff]
      %v466 = vld [vmem:[%s385 + $0xc8] sm:$0xff]
      %v467 = vld [vmem:[%s385 + $0xd0] sm:$0xff]
      %v468 = vld [vmem:[%s385 + $0xd8] sm:$0xff]
      %v469 = vld [vmem:[%s385 + $0xe0] sm:$0xff]
      %v470 = vld [vmem:[%s385 + $0xe8] sm:$0xff]
      %v471 = vld [vmem:[%s385 + $0xf0] sm:$0xff]
      %v472 = vld [vmem:[%s385 + $0xf8] sm:$0xff]
      %v473 = vld [vmem:[%s416] sm:$0xff]
      %v474 = vld [vmem:[%s416 + $0x8] sm:$0xff]
      %v475 = vld [vmem:[%s3] sm:$0x1]
      %v476 = vld [vmem:[%s3 + $0x1] sm:$0x1]
      %v477 = vlaneseq
      %v478 = vshrl.u32 %v477, 7
      %v479 = vsub.s32 0, %v478
      %v480 = vrot.slane %v475, %v479
      %v481 = vmul.f32 %v439, %v480
      %v482 = vmul.f32 %v440, %v480
      %v483 = vmul.f32 %v441, %v480
      %v484 = vmul.f32 %v442, %v480
      %v485 = vmul.f32 %v443, %v480
      %v486 = vmul.f32 %v444, %v480
      %v487 = vmul.f32 %v445, %v480
      %v488 = vmul.f32 %v446, %v480
      %v489 = vmul.f32 %v447, %v480
      %v490 = vmul.f32 %v448, %v480
      %v491 = vmul.f32 %v449, %v480
      %v492 = vmul.f32 %v450, %v480
      %v493 = vmul.f32 %v451, %v480
      %v494 = vmul.f32 %v452, %v480
      %v495 = vmul.f32 %v453, %v480
      %v496 = vmul.f32 %v454, %v480
      %v497 = vmul.f32 %v455, %v480
      %v498 = vmul.f32 %v456, %v480
      %v499 = vmul.f32 %v457, %v480
      %v500 = vmul.f32 %v458, %v480
      %v501 = vmul.f32 %v459, %v480
      %v502 = vmul.f32 %v460, %v480
      %v503 = vmul.f32 %v461, %v480
      %v504 = vmul.f32 %v462, %v480
      %v505 = vmul.f32 %v463, %v480
      %v506 = vmul.f32 %v464, %v480
      %v507 = vmul.f32 %v465, %v480
      %v508 = vmul.f32 %v466, %v480
      %v509 = vmul.f32 %v467, %v480
      %v510 = vmul.f32 %v468, %v480
      %v511 = vmul.f32 %v469, %v480
      %v512 = vmul.f32 %v470, %v480
      %v513 = vmul.f32 %v471, %v480
      %v514 = vmul.f32 %v472, %v480
      %v515 = vmul.f32 %v473, %v480
      %v516 = vmul.f32 %v474, %v480
      %v517 = vlaneseq
      %v518 = vshrl.u32 %v517, 7
      %v519 = vsub.s32 0, %v518
      %v520 = vrot.slane %v476, %v519
      %v521 = vadd.f32 %v481, %v520
      %v522 = vadd.f32 %v482, %v520
      %v523 = vadd.f32 %v483, %v520
      %v524 = vadd.f32 %v484, %v520
      %v525 = vadd.f32 %v485, %v520
      %v526 = vadd.f32 %v486, %v520
      %v527 = vadd.f32 %v487, %v520
      %v528 = vadd.f32 %v488, %v520
      %v529 = vadd.f32 %v489, %v520
      %v530 = vadd.f32 %v490, %v520
      %v531 = vadd.f32 %v491, %v520
      %v532 = vadd.f32 %v492, %v520
      %v533 = vadd.f32 %v493, %v520
      %v534 = vadd.f32 %v494, %v520
      %v535 = vadd.f32 %v495, %v520
      %v536 = vadd.f32 %v496, %v520
      %v537 = vadd.f32 %v497, %v520
      %v538 = vadd.f32 %v498, %v520
      %v539 = vadd.f32 %v499, %v520
      %v540 = vadd.f32 %v500, %v520
      %v541 = vadd.f32 %v501, %v520
      %v542 = vadd.f32 %v502, %v520
      %v543 = vadd.f32 %v503, %v520
      %v544 = vadd.f32 %v504, %v520
      %v545 = vadd.f32 %v505, %v520
      %v546 = vadd.f32 %v506, %v520
      %v547 = vadd.f32 %v507, %v520
      %v548 = vadd.f32 %v508, %v520
      %v549 = vadd.f32 %v509, %v520
      %v550 = vadd.f32 %v510, %v520
      %v551 = vadd.f32 %v511, %v520
      %v552 = vadd.f32 %v512, %v520
      %v553 = vadd.f32 %v513, %v520
      %v554 = vadd.f32 %v514, %v520
      %v555 = vadd.f32 %v515, %v520
      %v556 = vadd.f32 %v516, %v520
      %v557 = vmax.f32 %v521, 0.0
      %v558 = vmax.f32 %v522, 0.0
      %v559 = vmax.f32 %v523, 0.0
      %v560 = vmax.f32 %v524, 0.0
      %v561 = vmax.f32 %v525, 0.0
      %v562 = vmax.f32 %v526, 0.0
      %v563 = vmax.f32 %v527, 0.0
      %v564 = vmax.f32 %v528, 0.0
      %v565 = vmax.f32 %v529, 0.0
      %v566 = vmax.f32 %v530, 0.0
      %v567 = vmax.f32 %v531, 0.0
      %v568 = vmax.f32 %v532, 0.0
      %v569 = vmax.f32 %v533, 0.0
      %v570 = vmax.f32 %v534, 0.0
      %v571 = vmax.f32 %v535, 0.0
      %v572 = vmax.f32 %v536, 0.0
      %v573 = vmax.f32 %v537, 0.0
      %v574 = vmax.f32 %v538, 0.0
      %v575 = vmax.f32 %v539, 0.0
      %v576 = vmax.f32 %v540, 0.0
      %v577 = vmax.f32 %v541, 0.0
      %v578 = vmax.f32 %v542, 0.0
      %v579 = vmax.f32 %v543, 0.0
      %v580 = vmax.f32 %v544, 0.0
      %v581 = vmax.f32 %v545, 0.0
      %v582 = vmax.f32 %v546, 0.0
      %v583 = vmax.f32 %v547, 0.0
      %v584 = vmax.f32 %v548, 0.0
      %v585 = vmax.f32 %v549, 0.0
      %v586 = vmax.f32 %v550, 0.0
      %v587 = vmax.f32 %v551, 0.0
      %v588 = vmax.f32 %v552, 0.0
      %v589 = vmax.f32 %v553, 0.0
      %v590 = vmax.f32 %v554, 0.0
      %v591 = vmax.f32 %v555, 0.0
      %v592 = vmax.f32 %v556, 0.0
      %s593 = smul.u32 %s23, 16
      %s594 = ssub.s32 %s593, 1
      %v595 = vstv %s594
      %v596 = vadd.s32 %v595, 1
      %v597 = vadd.s32 %v595, 2
      %v598 = vadd.s32 %v595, 3
      %v599 = vadd.s32 %v595, 4
      %v600 = vadd.s32 %v595, 5
      %v601 = vadd.s32 %v595, 6
      %v602 = vadd.s32 %v595, 7
      %v603 = vadd.s32 %v595, 8
      %v604 = vadd.s32 %v595, 9
      %v605 = vadd.s32 %v595, 10
      %v606 = vadd.s32 %v595, 11
      %v607 = vadd.s32 %v595, 12
      %v608 = vadd.s32 %v595, 13
      %v609 = vadd.s32 %v595, 14
      %v610 = vadd.s32 %v595, 15
      %v611 = vadd.s32 %v595, 16
      %v612 = vadd.s32 %v595, 17
      %vm613 = vcmp.ge.s32.totalorder %v595, 0
      %vm614 = vcmp.ge.s32.totalorder %v596, 0
      %vm615 = vcmp.ge.s32.totalorder %v597, 0
      %vm616 = vcmp.ge.s32.totalorder %v598, 0
      %vm617 = vcmp.ge.s32.totalorder %v599, 0
      %vm618 = vcmp.ge.s32.totalorder %v600, 0
      %vm619 = vcmp.ge.s32.totalorder %v601, 0
      %vm620 = vcmp.ge.s32.totalorder %v602, 0
      %vm621 = vcmp.ge.s32.totalorder %v603, 0
      %vm622 = vcmp.ge.s32.totalorder %v604, 0
      %vm623 = vcmp.ge.s32.totalorder %v605, 0
      %vm624 = vcmp.ge.s32.totalorder %v606, 0
      %vm625 = vcmp.ge.s32.totalorder %v607, 0
      %vm626 = vcmp.ge.s32.totalorder %v608, 0
      %vm627 = vcmp.ge.s32.totalorder %v609, 0
      %vm628 = vcmp.ge.s32.totalorder %v610, 0
      %vm629 = vcmp.ge.s32.totalorder %v611, 0
      %vm630 = vcmp.ge.s32.totalorder %v612, 0
      %vm631 = vcmp.lt.s32.totalorder %v595, 16
      %vm632 = vcmp.lt.s32.totalorder %v596, 16
      %vm633 = vcmp.lt.s32.totalorder %v597, 16
      %vm634 = vcmp.lt.s32.totalorder %v598, 16
      %vm635 = vcmp.lt.s32.totalorder %v599, 16
      %vm636 = vcmp.lt.s32.totalorder %v600, 16
      %vm637 = vcmp.lt.s32.totalorder %v601, 16
      %vm638 = vcmp.lt.s32.totalorder %v602, 16
      %vm639 = vcmp.lt.s32.totalorder %v603, 16
      %vm640 = vcmp.lt.s32.totalorder %v604, 16
      %vm641 = vcmp.lt.s32.totalorder %v605, 16
      %vm642 = vcmp.lt.s32.totalorder %v606, 16
      %vm643 = vcmp.lt.s32.totalorder %v607, 16
      %vm644 = vcmp.lt.s32.totalorder %v608, 16
      %vm645 = vcmp.lt.s32.totalorder %v609, 16
      %vm646 = vcmp.lt.s32.totalorder %v610, 16
      %vm647 = vcmp.lt.s32.totalorder %v611, 16
      %vm648 = vcmp.lt.s32.totalorder %v612, 16
      %vm649 = vmand %vm613, %vm631
      %vm650 = vmand %vm614, %vm632
      %vm651 = vmand %vm615, %vm633
      %vm652 = vmand %vm616, %vm634
      %vm653 = vmand %vm617, %vm635
      %vm654 = vmand %vm618, %vm636
      %vm655 = vmand %vm619, %vm637
      %vm656 = vmand %vm620, %vm638
      %vm657 = vmand %vm621, %vm639
      %vm658 = vmand %vm622, %vm640
      %vm659 = vmand %vm623, %vm641
      %vm660 = vmand %vm624, %vm642
      %vm661 = vmand %vm625, %vm643
      %vm662 = vmand %vm626, %vm644
      %vm663 = vmand %vm627, %vm645
      %vm664 = vmand %vm628, %vm646
      %vm665 = vmand %vm629, %vm647
      %vm666 = vmand %vm630, %vm648
      %v667 = vsel %vm649, 1, 0
      %v668 = vsel %vm650, 1, 0
      %v669 = vsel %vm651, 1, 0
      %v670 = vsel %vm652, 1, 0
      %v671 = vsel %vm653, 1, 0
      %v672 = vsel %vm654, 1, 0
      %v673 = vsel %vm655, 1, 0
      %v674 = vsel %vm656, 1, 0
      %v675 = vsel %vm657, 1, 0
      %v676 = vsel %vm658, 1, 0
      %v677 = vsel %vm659, 1, 0
      %v678 = vsel %vm660, 1, 0
      %v679 = vsel %vm661, 1, 0
      %v680 = vsel %vm662, 1, 0
      %v681 = vsel %vm663, 1, 0
      %v682 = vsel %vm664, 1, 0
      %v683 = vsel %vm665, 1, 0
      %v684 = vsel %vm666, 1, 0
      %vm685 = vcmp.eq.s32.totalorder %v667, 1
      %vm686 = vcmp.eq.s32.totalorder %v668, 1
      %vm687 = vcmp.eq.s32.totalorder %v669, 1
      %vm688 = vcmp.eq.s32.totalorder %v670, 1
      %vm689 = vcmp.eq.s32.totalorder %v671, 1
      %vm690 = vcmp.eq.s32.totalorder %v672, 1
      %vm691 = vcmp.eq.s32.totalorder %v673, 1
      %vm692 = vcmp.eq.s32.totalorder %v674, 1
      %vm693 = vcmp.eq.s32.totalorder %v675, 1
      %vm694 = vcmp.eq.s32.totalorder %v676, 1
      %vm695 = vcmp.eq.s32.totalorder %v677, 1
      %vm696 = vcmp.eq.s32.totalorder %v678, 1
      %vm697 = vcmp.eq.s32.totalorder %v679, 1
      %vm698 = vcmp.eq.s32.totalorder %v680, 1
      %vm699 = vcmp.eq.s32.totalorder %v681, 1
      %vm700 = vcmp.eq.s32.totalorder %v682, 1
      %vm701 = vcmp.eq.s32.totalorder %v683, 1
      %vm702 = vcmp.eq.s32.totalorder %v684, 1
      %v703 = vsel %vm685, %v557, 0.0
      %v704 = vsel %vm685, %v558, 0.0
      %v705 = vsel %vm686, %v559, 0.0
      %v706 = vsel %vm686, %v560, 0.0
      %v707 = vsel %vm687, %v561, 0.0
      %v708 = vsel %vm687, %v562, 0.0
      %v709 = vsel %vm688, %v563, 0.0
      %v710 = vsel %vm688, %v564, 0.0
      %v711 = vsel %vm689, %v565, 0.0
      %v712 = vsel %vm689, %v566, 0.0
      %v713 = vsel %vm690, %v567, 0.0
      %v714 = vsel %vm690, %v568, 0.0
      %v715 = vsel %vm691, %v569, 0.0
      %v716 = vsel %vm691, %v570, 0.0
      %v717 = vsel %vm692, %v571, 0.0
      %v718 = vsel %vm692, %v572, 0.0
      %v719 = vsel %vm693, %v573, 0.0
      %v720 = vsel %vm693, %v574, 0.0
      %v721 = vsel %vm694, %v575, 0.0
      %v722 = vsel %vm694, %v576, 0.0
      %v723 = vsel %vm695, %v577, 0.0
      %v724 = vsel %vm695, %v578, 0.0
      %v725 = vsel %vm696, %v579, 0.0
      %v726 = vsel %vm696, %v580, 0.0
      %v727 = vsel %vm697, %v581, 0.0
      %v728 = vsel %vm697, %v582, 0.0
      %v729 = vsel %vm698, %v583, 0.0
      %v730 = vsel %vm698, %v584, 0.0
      %v731 = vsel %vm699, %v585, 0.0
      %v732 = vsel %vm699, %v586, 0.0
      %v733 = vsel %vm700, %v587, 0.0
      %v734 = vsel %vm700, %v588, 0.0
      %v735 = vsel %vm701, %v589, 0.0
      %v736 = vsel %vm701, %v590, 0.0
      %v737 = vsel %vm702, %v591, 0.0
      %v738 = vsel %vm702, %v592, 0.0
      %vm775 = vcmask 1040384
      %v776 = vrot.slane %v703, 7
      %v777 = vrot.slane %v704, 7
      %v778 = vsel %vm775, %v776, %v777
      %v779 = vrot.slane %v705, 7
      %v780 = vrot.slane %v706, 7
      %v781 = vsel %vm775, %v779, %v780
      %v782 = vrot.slane %v707, 7
      %v783 = vrot.slane %v708, 7
      %v784 = vsel %vm775, %v782, %v783
      %v785 = vrot.slane %v709, 7
      %v786 = vrot.slane %v710, 7
      %v787 = vsel %vm775, %v785, %v786
      %v788 = vrot.slane %v711, 7
      %v789 = vrot.slane %v712, 7
      %v790 = vsel %vm775, %v788, %v789
      %v791 = vrot.slane %v713, 7
      %v792 = vrot.slane %v714, 7
      %v793 = vsel %vm775, %v791, %v792
      %v794 = vrot.slane %v715, 7
      %v795 = vrot.slane %v716, 7
      %v796 = vsel %vm775, %v794, %v795
      %v797 = vrot.slane %v717, 7
      %v798 = vrot.slane %v718, 7
      %v799 = vsel %vm775, %v797, %v798
      %v800 = vrot.slane %v719, 7
      %v801 = vrot.slane %v720, 7
      %v802 = vsel %vm775, %v800, %v801
      %v803 = vrot.slane %v721, 7
      %v804 = vrot.slane %v722, 7
      %v805 = vsel %vm775, %v803, %v804
      %v806 = vrot.slane %v723, 7
      %v807 = vrot.slane %v724, 7
      %v808 = vsel %vm775, %v806, %v807
      %v809 = vrot.slane %v725, 7
      %v810 = vrot.slane %v726, 7
      %v811 = vsel %vm775, %v809, %v810
      %v812 = vrot.slane %v727, 7
      %v813 = vrot.slane %v728, 7
      %v814 = vsel %vm775, %v812, %v813
      %v815 = vrot.slane %v729, 7
      %v816 = vrot.slane %v730, 7
      %v817 = vsel %vm775, %v815, %v816
      %v818 = vrot.slane %v731, 7
      %v819 = vrot.slane %v732, 7
      %v820 = vsel %vm775, %v818, %v819
      %v821 = vrot.slane %v733, 7
      %v822 = vrot.slane %v734, 7
      %v823 = vsel %vm775, %v821, %v822
      %v824 = vrot.slane %v735, 7
      %v825 = vrot.slane %v736, 7
      %v826 = vsel %vm775, %v824, %v825
      %v827 = vrot.slane %v737, 7
      %v828 = vrot.slane %v738, 7
      %v829 = vsel %vm775, %v827, %v828
      %v866 = vsel %vm775, 0.0, %v776
      %v867 = vsel %vm775, 0.0, %v779
      %v868 = vsel %vm775, 0.0, %v782
      %v869 = vsel %vm775, 0.0, %v785
      %v870 = vsel %vm775, 0.0, %v788
      %v871 = vsel %vm775, 0.0, %v791
      %v872 = vsel %vm775, 0.0, %v794
      %v873 = vsel %vm775, 0.0, %v797
      %v874 = vsel %vm775, 0.0, %v800
      %v875 = vsel %vm775, 0.0, %v803
      %v876 = vsel %vm775, 0.0, %v806
      %v877 = vsel %vm775, 0.0, %v809
      %v878 = vsel %vm775, 0.0, %v812
      %v879 = vsel %vm775, 0.0, %v815
      %v880 = vsel %vm775, 0.0, %v818
      %v881 = vsel %vm775, 0.0, %v821
      %v882 = vsel %vm775, 0.0, %v824
      %v883 = vsel %vm775, 0.0, %v827
      %vm884 = vcmask 1046528
      %v885 = vrot.slane %v703, 1
      %v886 = vrot.slane %v704, 1
      %v887 = vsel %vm884, %v885, %v886
      %v888 = vrot.slane %v705, 1
      %v889 = vrot.slane %v706, 1
      %v890 = vsel %vm884, %v888, %v889
      %v891 = vrot.slane %v707, 1
      %v892 = vrot.slane %v708, 1
      %v893 = vsel %vm884, %v891, %v892
      %v894 = vrot.slane %v709, 1
      %v895 = vrot.slane %v710, 1
      %v896 = vsel %vm884, %v894, %v895
      %v897 = vrot.slane %v711, 1
      %v898 = vrot.slane %v712, 1
      %v899 = vsel %vm884, %v897, %v898
      %v900 = vrot.slane %v713, 1
      %v901 = vrot.slane %v714, 1
      %v902 = vsel %vm884, %v900, %v901
      %v903 = vrot.slane %v715, 1
      %v904 = vrot.slane %v716, 1
      %v905 = vsel %vm884, %v903, %v904
      %v906 = vrot.slane %v717, 1
      %v907 = vrot.slane %v718, 1
      %v908 = vsel %vm884, %v906, %v907
      %v909 = vrot.slane %v719, 1
      %v910 = vrot.slane %v720, 1
      %v911 = vsel %vm884, %v909, %v910
      %v912 = vrot.slane %v721, 1
      %v913 = vrot.slane %v722, 1
      %v914 = vsel %vm884, %v912, %v913
      %v915 = vrot.slane %v723, 1
      %v916 = vrot.slane %v724, 1
      %v917 = vsel %vm884, %v915, %v916
      %v918 = vrot.slane %v725, 1
      %v919 = vrot.slane %v726, 1
      %v920 = vsel %vm884, %v918, %v919
      %v921 = vrot.slane %v727, 1
      %v922 = vrot.slane %v728, 1
      %v923 = vsel %vm884, %v921, %v922
      %v924 = vrot.slane %v729, 1
      %v925 = vrot.slane %v730, 1
      %v926 = vsel %vm884, %v924, %v925
      %v927 = vrot.slane %v731, 1
      %v928 = vrot.slane %v732, 1
      %v929 = vsel %vm884, %v927, %v928
      %v930 = vrot.slane %v733, 1
      %v931 = vrot.slane %v734, 1
      %v932 = vsel %vm884, %v930, %v931
      %v933 = vrot.slane %v735, 1
      %v934 = vrot.slane %v736, 1
      %v935 = vsel %vm884, %v933, %v934
      %v936 = vrot.slane %v737, 1
      %v937 = vrot.slane %v738, 1
      %v938 = vsel %vm884, %v936, %v937
      %v957 = vsel %vm884, %v886, 0.0
      %v958 = vsel %vm884, %v889, 0.0
      %v959 = vsel %vm884, %v892, 0.0
      %v960 = vsel %vm884, %v895, 0.0
      %v961 = vsel %vm884, %v898, 0.0
      %v962 = vsel %vm884, %v901, 0.0
      %v963 = vsel %vm884, %v904, 0.0
      %v964 = vsel %vm884, %v907, 0.0
      %v965 = vsel %vm884, %v910, 0.0
      %v966 = vsel %vm884, %v913, 0.0
      %v967 = vsel %vm884, %v916, 0.0
      %v968 = vsel %vm884, %v919, 0.0
      %v969 = vsel %vm884, %v922, 0.0
      %v970 = vsel %vm884, %v925, 0.0
      %v971 = vsel %vm884, %v928, 0.0
      %v972 = vsel %vm884, %v931, 0.0
      %v973 = vsel %vm884, %v934, 0.0
      %v974 = vsel %vm884, %v937, 0.0
      %975 = vrot.lane.b32.xlu0 %v703, 4
      %v976 = vpop.permute.xlu0 %975
      %977 = vrot.lane.b32.xlu0 %v704, 4
      %v978 = vpop.permute.xlu0 %977
      %979 = vrot.lane.b32.xlu0 %v705, 4
      %v980 = vpop.permute.xlu0 %979
      %981 = vrot.lane.b32.xlu0 %v706, 4
      %v982 = vpop.permute.xlu0 %981
      %983 = vrot.lane.b32.xlu0 %v707, 4
      %v984 = vpop.permute.xlu0 %983
      %985 = vrot.lane.b32.xlu0 %v708, 4
      %v986 = vpop.permute.xlu0 %985
      %987 = vrot.lane.b32.xlu0 %v709, 4
      %v988 = vpop.permute.xlu0 %987
      %989 = vrot.lane.b32.xlu0 %v710, 4
      %v990 = vpop.permute.xlu0 %989
      %991 = vrot.lane.b32.xlu0 %v711, 4
      %v992 = vpop.permute.xlu0 %991
      %993 = vrot.lane.b32.xlu0 %v712, 4
      %v994 = vpop.permute.xlu0 %993
      %995 = vrot.lane.b32.xlu0 %v713, 4
      %v996 = vpop.permute.xlu0 %995
      %997 = vrot.lane.b32.xlu0 %v714, 4
      %v998 = vpop.permute.xlu0 %997
      %999 = vrot.lane.b32.xlu0 %v715, 4
      %v1000 = vpop.permute.xlu0 %999
      %1001 = vrot.lane.b32.xlu0 %v716, 4
      %v1002 = vpop.permute.xlu0 %1001
      %1003 = vrot.lane.b32.xlu0 %v717, 4
      %v1004 = vpop.permute.xlu0 %1003
      %1005 = vrot.lane.b32.xlu0 %v718, 4
      %v1006 = vpop.permute.xlu0 %1005
      %1007 = vrot.lane.b32.xlu0 %v719, 4
      %v1008 = vpop.permute.xlu0 %1007
      %1009 = vrot.lane.b32.xlu0 %v720, 4
      %v1010 = vpop.permute.xlu0 %1009
      %1011 = vrot.lane.b32.xlu0 %v721, 4
      %v1012 = vpop.permute.xlu0 %1011
      %1013 = vrot.lane.b32.xlu0 %v722, 4
      %v1014 = vpop.permute.xlu0 %1013
      %1015 = vrot.lane.b32.xlu0 %v723, 4
      %v1016 = vpop.permute.xlu0 %1015
      %1017 = vrot.lane.b32.xlu0 %v724, 4
      %v1018 = vpop.permute.xlu0 %1017
      %1019 = vrot.lane.b32.xlu0 %v725, 4
      %v1020 = vpop.permute.xlu0 %1019
      %1021 = vrot.lane.b32.xlu0 %v726, 4
      %v1022 = vpop.permute.xlu0 %1021
      %1023 = vrot.lane.b32.xlu0 %v727, 4
      %v1024 = vpop.permute.xlu0 %1023
      %1025 = vrot.lane.b32.xlu0 %v728, 4
      %v1026 = vpop.permute.xlu0 %1025
      %1027 = vrot.lane.b32.xlu0 %v729, 4
      %v1028 = vpop.permute.xlu0 %1027
      %1029 = vrot.lane.b32.xlu0 %v730, 4
      %v1030 = vpop.permute.xlu0 %1029
      %1031 = vrot.lane.b32.xlu0 %v731, 4
      %v1032 = vpop.permute.xlu0 %1031
      %1033 = vrot.lane.b32.xlu0 %v732, 4
      %v1034 = vpop.permute.xlu0 %1033
      %1035 = vrot.lane.b32.xlu0 %v733, 4
      %v1036 = vpop.permute.xlu0 %1035
      %1037 = vrot.lane.b32.xlu0 %v734, 4
      %v1038 = vpop.permute.xlu0 %1037
      %1039 = vrot.lane.b32.xlu0 %v735, 4
      %v1040 = vpop.permute.xlu0 %1039
      %1041 = vrot.lane.b32.xlu0 %v736, 4
      %v1042 = vpop.permute.xlu0 %1041
      %1043 = vrot.lane.b32.xlu0 %v737, 4
      %v1044 = vpop.permute.xlu0 %1043
      %1045 = vrot.lane.b32.xlu0 %v738, 4
      %v1046 = vpop.permute.xlu0 %1045
      %1101 = vrot.lane.b32.xlu0 %v887, 8
      %v1102 = vpop.permute.xlu0 %1101
      %1103 = vrot.lane.b32.xlu0 %v957, 8
      %v1104 = vpop.permute.xlu0 %1103
      %1105 = vrot.lane.b32.xlu0 %v890, 8
      %v1106 = vpop.permute.xlu0 %1105
      %1107 = vrot.lane.b32.xlu0 %v958, 8
      %v1108 = vpop.permute.xlu0 %1107
      %1109 = vrot.lane.b32.xlu0 %v893, 8
      %v1110 = vpop.permute.xlu0 %1109
      %1111 = vrot.lane.b32.xlu0 %v959, 8
      %v1112 = vpop.permute.xlu0 %1111
      %1113 = vrot.lane.b32.xlu0 %v896, 8
      %v1114 = vpop.permute.xlu0 %1113
      %1115 = vrot.lane.b32.xlu0 %v960, 8
      %v1116 = vpop.permute.xlu0 %1115
      %1117 = vrot.lane.b32.xlu0 %v899, 8
      %v1118 = vpop.permute.xlu0 %1117
      %1119 = vrot.lane.b32.xlu0 %v961, 8
      %v1120 = vpop.permute.xlu0 %1119
      %1121 = vrot.lane.b32.xlu0 %v902, 8
      %v1122 = vpop.permute.xlu0 %1121
      %1123 = vrot.lane.b32.xlu0 %v962, 8
      %v1124 = vpop.permute.xlu0 %1123
      %1125 = vrot.lane.b32.xlu0 %v905, 8
      %v1126 = vpop.permute.xlu0 %1125
      %1127 = vrot.lane.b32.xlu0 %v963, 8
      %v1128 = vpop.permute.xlu0 %1127
      %1129 = vrot.lane.b32.xlu0 %v908, 8
      %v1130 = vpop.permute.xlu0 %1129
      %1131 = vrot.lane.b32.xlu0 %v964, 8
      %v1132 = vpop.permute.xlu0 %1131
      %1133 = vrot.lane.b32.xlu0 %v911, 8
      %v1134 = vpop.permute.xlu0 %1133
      %1135 = vrot.lane.b32.xlu0 %v965, 8
      %v1136 = vpop.permute.xlu0 %1135
      %1137 = vrot.lane.b32.xlu0 %v914, 8
      %v1138 = vpop.permute.xlu0 %1137
      %1139 = vrot.lane.b32.xlu0 %v966, 8
      %v1140 = vpop.permute.xlu0 %1139
      %1141 = vrot.lane.b32.xlu0 %v917, 8
      %v1142 = vpop.permute.xlu0 %1141
      %1143 = vrot.lane.b32.xlu0 %v967, 8
      %v1144 = vpop.permute.xlu0 %1143
      %1145 = vrot.lane.b32.xlu0 %v920, 8
      %v1146 = vpop.permute.xlu0 %1145
      %1147 = vrot.lane.b32.xlu0 %v968, 8
      %v1148 = vpop.permute.xlu0 %1147
      %1149 = vrot.lane.b32.xlu0 %v923, 8
      %v1150 = vpop.permute.xlu0 %1149
      %1151 = vrot.lane.b32.xlu0 %v969, 8
      %v1152 = vpop.permute.xlu0 %1151
      %1153 = vrot.lane.b32.xlu0 %v926, 8
      %v1154 = vpop.permute.xlu0 %1153
      %1155 = vrot.lane.b32.xlu0 %v970, 8
      %v1156 = vpop.permute.xlu0 %1155
      %1157 = vrot.lane.b32.xlu0 %v929, 8
      %v1158 = vpop.permute.xlu0 %1157
      %1159 = vrot.lane.b32.xlu0 %v971, 8
      %v1160 = vpop.permute.xlu0 %1159
      %1161 = vrot.lane.b32.xlu0 %v932, 8
      %v1162 = vpop.permute.xlu0 %1161
      %1163 = vrot.lane.b32.xlu0 %v972, 8
      %v1164 = vpop.permute.xlu0 %1163
      %1165 = vrot.lane.b32.xlu0 %v935, 8
      %v1166 = vpop.permute.xlu0 %1165
      %1167 = vrot.lane.b32.xlu0 %v973, 8
      %v1168 = vpop.permute.xlu0 %1167
      %1169 = vrot.lane.b32.xlu0 %v938, 8
      %v1170 = vpop.permute.xlu0 %1169
      %1171 = vrot.lane.b32.xlu0 %v974, 8
      %v1172 = vpop.permute.xlu0 %1171
      %vm1209 = vcmask 31744
      %v1210 = vsel %vm1209, %v866, %v976
      %v1211 = vsel %vm1209, %v778, %v978
      %v1212 = vsel %vm1209, %v867, %v980
      %v1213 = vsel %vm1209, %v781, %v982
      %v1214 = vsel %vm1209, %v868, %v984
      %v1215 = vsel %vm1209, %v784, %v986
      %v1216 = vsel %vm1209, %v869, %v988
      %v1217 = vsel %vm1209, %v787, %v990
      %v1218 = vsel %vm1209, %v870, %v992
      %v1219 = vsel %vm1209, %v790, %v994
      %v1220 = vsel %vm1209, %v871, %v996
      %v1221 = vsel %vm1209, %v793, %v998
      %v1222 = vsel %vm1209, %v872, %v1000
      %v1223 = vsel %vm1209, %v796, %v1002
      %v1224 = vsel %vm1209, %v873, %v1004
      %v1225 = vsel %vm1209, %v799, %v1006
      %v1226 = vsel %vm1209, %v874, %v1008
      %v1227 = vsel %vm1209, %v802, %v1010
      %v1228 = vsel %vm1209, %v875, %v1012
      %v1229 = vsel %vm1209, %v805, %v1014
      %v1230 = vsel %vm1209, %v876, %v1016
      %v1231 = vsel %vm1209, %v808, %v1018
      %v1232 = vsel %vm1209, %v877, %v1020
      %v1233 = vsel %vm1209, %v811, %v1022
      %v1234 = vsel %vm1209, %v878, %v1024
      %v1235 = vsel %vm1209, %v814, %v1026
      %v1236 = vsel %vm1209, %v879, %v1028
      %v1237 = vsel %vm1209, %v817, %v1030
      %v1238 = vsel %vm1209, %v880, %v1032
      %v1239 = vsel %vm1209, %v820, %v1034
      %v1240 = vsel %vm1209, %v881, %v1036
      %v1241 = vsel %vm1209, %v823, %v1038
      %v1242 = vsel %vm1209, %v882, %v1040
      %v1243 = vsel %vm1209, %v826, %v1042
      %v1244 = vsel %vm1209, %v883, %v1044
      %v1245 = vsel %vm1209, %v829, %v1046
      %vm1246 = vcmask 64512
      %v1247 = vsel %vm1246, %v1210, %v1102
      %v1248 = vsel %vm1246, %v1211, %v1104
      %v1249 = vsel %vm1246, %v1212, %v1106
      %v1250 = vsel %vm1246, %v1213, %v1108
      %v1251 = vsel %vm1246, %v1214, %v1110
      %v1252 = vsel %vm1246, %v1215, %v1112
      %v1253 = vsel %vm1246, %v1216, %v1114
      %v1254 = vsel %vm1246, %v1217, %v1116
      %v1255 = vsel %vm1246, %v1218, %v1118
      %v1256 = vsel %vm1246, %v1219, %v1120
      %v1257 = vsel %vm1246, %v1220, %v1122
      %v1258 = vsel %vm1246, %v1221, %v1124
      %v1259 = vsel %vm1246, %v1222, %v1126
      %v1260 = vsel %vm1246, %v1223, %v1128
      %v1261 = vsel %vm1246, %v1224, %v1130
      %v1262 = vsel %vm1246, %v1225, %v1132
      %v1263 = vsel %vm1246, %v1226, %v1134
      %v1264 = vsel %vm1246, %v1227, %v1136
      %v1265 = vsel %vm1246, %v1228, %v1138
      %v1266 = vsel %vm1246, %v1229, %v1140
      %v1267 = vsel %vm1246, %v1230, %v1142
      %v1268 = vsel %vm1246, %v1231, %v1144
      %v1269 = vsel %vm1246, %v1232, %v1146
      %v1270 = vsel %vm1246, %v1233, %v1148
      %v1271 = vsel %vm1246, %v1234, %v1150
      %v1272 = vsel %vm1246, %v1235, %v1152
      %v1273 = vsel %vm1246, %v1236, %v1154
      %v1274 = vsel %vm1246, %v1237, %v1156
      %v1275 = vsel %vm1246, %v1238, %v1158
      %v1276 = vsel %vm1246, %v1239, %v1160
      %v1277 = vsel %vm1246, %v1240, %v1162
      %v1278 = vsel %vm1246, %v1241, %v1164
      %v1279 = vsel %vm1246, %v1242, %v1166
      %v1280 = vsel %vm1246, %v1243, %v1168
      %v1281 = vsel %vm1246, %v1244, %v1170
      %v1282 = vsel %vm1246, %v1245, %v1172
      %vm1283 = vcmask 97280
      %1284 = vst.msk [vmem:[#allocation2] sm:$0xff] %vm1283, %v1247
      %1285 = vst.msk [vmem:[#allocation2 + $0x8] sm:$0xff] %vm1283, %v1248
      %1286 = vst.msk [vmem:[#allocation2 + $0x10] sm:$0xff] %vm1283, %v1249
      %1287 = vst.msk [vmem:[#allocation2 + $0x18] sm:$0xff] %vm1283, %v1250
      %1288 = vst.msk [vmem:[#allocation2 + $0x20] sm:$0xff] %vm1283, %v1251
      %1289 = vst.msk [vmem:[#allocation2 + $0x28] sm:$0xff] %vm1283, %v1252
      %1290 = vst.msk [vmem:[#allocation2 + $0x30] sm:$0xff] %vm1283, %v1253
      %1291 = vst.msk [vmem:[#allocation2 + $0x38] sm:$0xff] %vm1283, %v1254
      %1292 = vst.msk [vmem:[#allocation2 + $0x40] sm:$0xff] %vm1283, %v1255
      %1293 = vst.msk [vmem:[#allocation2 + $0x48] sm:$0xff] %vm1283, %v1256
      %1294 = vst.msk [vmem:[#allocation2 + $0x50] sm:$0xff] %vm1283, %v1257
      %1295 = vst.msk [vmem:[#allocation2 + $0x58] sm:$0xff] %vm1283, %v1258
      %1296 = vst.msk [vmem:[#allocation2 + $0x60] sm:$0xff] %vm1283, %v1259
      %1297 = vst.msk [vmem:[#allocation2 + $0x68] sm:$0xff] %vm1283, %v1260
      %1298 = vst.msk [vmem:[#allocation2 + $0x70] sm:$0xff] %vm1283, %v1261
      %1299 = vst.msk [vmem:[#allocation2 + $0x78] sm:$0xff] %vm1283, %v1262
      %1300 = vst.msk [vmem:[#allocation2 + $0x80] sm:$0xff] %vm1283, %v1263
      %1301 = vst.msk [vmem:[#allocation2 + $0x88] sm:$0xff] %vm1283, %v1264
      %1302 = vst.msk [vmem:[#allocation2 + $0x90] sm:$0xff] %vm1283, %v1265
      %1303 = vst.msk [vmem:[#allocation2 + $0x98] sm:$0xff] %vm1283, %v1266
      %1304 = vst.msk [vmem:[#allocation2 + $0xa0] sm:$0xff] %vm1283, %v1267
      %1305 = vst.msk [vmem:[#allocation2 + $0xa8] sm:$0xff] %vm1283, %v1268
      %1306 = vst.msk [vmem:[#allocation2 + $0xb0] sm:$0xff] %vm1283, %v1269
      %1307 = vst.msk [vmem:[#allocation2 + $0xb8] sm:$0xff] %vm1283, %v1270
      %1308 = vst.msk [vmem:[#allocation2 + $0xc0] sm:$0xff] %vm1283, %v1271
      %1309 = vst.msk [vmem:[#allocation2 + $0xc8] sm:$0xff] %vm1283, %v1272
      %1310 = vst.msk [vmem:[#allocation2 + $0xd0] sm:$0xff] %vm1283, %v1273
      %1311 = vst.msk [vmem:[#allocation2 + $0xd8] sm:$0xff] %vm1283, %v1274
      %1312 = vst.msk [vmem:[#allocation2 + $0xe0] sm:$0xff] %vm1283, %v1275
      %1313 = vst.msk [vmem:[#allocation2 + $0xe8] sm:$0xff] %vm1283, %v1276
      %1314 = vst.msk [vmem:[#allocation2 + $0xf0] sm:$0xff] %vm1283, %v1277
      %1315 = vst.msk [vmem:[#allocation2 + $0xf8] sm:$0xff] %vm1283, %v1278
      %1316 = vst.msk [vmem:[#allocation2 + $0x100] sm:$0xff] %vm1283, %v1279
      %1317 = vst.msk [vmem:[#allocation2 + $0x108] sm:$0xff] %vm1283, %v1280
      %1318 = vst.msk [vmem:[#allocation2 + $0x110] sm:$0xff] %vm1283, %v1281
      %1319 = vst.msk [vmem:[#allocation2 + $0x118] sm:$0xff] %vm1283, %v1282
      %v1320 = vld [vmem:[#allocation2] sm:$0xff]
      %v1321 = vld [vmem:[#allocation2 + $0x8] sm:$0xff]
      %v1322 = vld [vmem:[#allocation2 + $0x10] sm:$0xff]
      %v1323 = vld [vmem:[#allocation2 + $0x18] sm:$0xff]
      %v1324 = vld [vmem:[#allocation2 + $0x20] sm:$0xff]
      %v1325 = vld [vmem:[#allocation2 + $0x28] sm:$0xff]
      %v1326 = vld [vmem:[#allocation2 + $0x30] sm:$0xff]
      %v1327 = vld [vmem:[#allocation2 + $0x38] sm:$0xff]
      %v1328 = vld [vmem:[#allocation2 + $0x40] sm:$0xff]
      %v1329 = vld [vmem:[#allocation2 + $0x48] sm:$0xff]
      %v1330 = vld [vmem:[#allocation2 + $0x50] sm:$0xff]
      %v1331 = vld [vmem:[#allocation2 + $0x58] sm:$0xff]
      %v1332 = vld [vmem:[#allocation2 + $0x60] sm:$0xff]
      %v1333 = vld [vmem:[#allocation2 + $0x68] sm:$0xff]
      %v1334 = vld [vmem:[#allocation2 + $0x70] sm:$0xff]
      %v1335 = vld [vmem:[#allocation2 + $0x78] sm:$0xff]
      %v1336 = vld [vmem:[#allocation2 + $0x80] sm:$0xff]
      %v1337 = vld [vmem:[#allocation2 + $0x88] sm:$0xff]
      %v1338 = vld [vmem:[#allocation2 + $0x90] sm:$0xff]
      %v1339 = vld [vmem:[#allocation2 + $0x98] sm:$0xff]
      %v1340 = vld [vmem:[#allocation2 + $0xa0] sm:$0xff]
      %v1341 = vld [vmem:[#allocation2 + $0xa8] sm:$0xff]
      %v1342 = vld [vmem:[#allocation2 + $0xb0] sm:$0xff]
      %v1343 = vld [vmem:[#allocation2 + $0xb8] sm:$0xff]
      %v1344 = vld [vmem:[#allocation2 + $0xc0] sm:$0xff]
      %v1345 = vld [vmem:[#allocation2 + $0xc8] sm:$0xff]
      %v1346 = vld [vmem:[#allocation2 + $0xd0] sm:$0xff]
      %v1347 = vld [vmem:[#allocation2 + $0xd8] sm:$0xff]
      %v1348 = vld [vmem:[#allocation2 + $0xe0] sm:$0xff]
      %v1349 = vld [vmem:[#allocation2 + $0xe8] sm:$0xff]
      %v1350 = vld [vmem:[#allocation2 + $0xf0] sm:$0xff]
      %v1351 = vld [vmem:[#allocation2 + $0xf8] sm:$0xff]
      %v1352 = vld [vmem:[%s4] sm:$0xff]
      %v1353 = vld [vmem:[%s4 + $0x8] sm:$0xf]
      %s1354 = scalar_lea.vmem [#allocation2], 16
      %v1355 = vld [vmem:[%s1354] sm:$0xff]
      %v1356 = vld [vmem:[%s1354 + $0x8] sm:$0xff]
      %v1357 = vld [vmem:[%s1354 + $0x10] sm:$0xff]
      %v1358 = vld [vmem:[%s1354 + $0x18] sm:$0xff]
      %v1359 = vld [vmem:[%s1354 + $0x20] sm:$0xff]
      %v1360 = vld [vmem:[%s1354 + $0x28] sm:$0xff]
      %v1361 = vld [vmem:[%s1354 + $0x30] sm:$0xff]
      %v1362 = vld [vmem:[%s1354 + $0x38] sm:$0xff]
      %v1363 = vld [vmem:[%s1354 + $0x40] sm:$0xff]
      %v1364 = vld [vmem:[%s1354 + $0x48] sm:$0xff]
      %v1365 = vld [vmem:[%s1354 + $0x50] sm:$0xff]
      %v1366 = vld [vmem:[%s1354 + $0x58] sm:$0xff]
      %v1367 = vld [vmem:[%s1354 + $0x60] sm:$0xff]
      %v1368 = vld [vmem:[%s1354 + $0x68] sm:$0xff]
      %v1369 = vld [vmem:[%s1354 + $0x70] sm:$0xff]
      %v1370 = vld [vmem:[%s1354 + $0x78] sm:$0xff]
      %v1371 = vld [vmem:[%s1354 + $0x80] sm:$0xff]
      %v1372 = vld [vmem:[%s1354 + $0x88] sm:$0xff]
      %v1373 = vld [vmem:[%s1354 + $0x90] sm:$0xff]
      %v1374 = vld [vmem:[%s1354 + $0x98] sm:$0xff]
      %v1375 = vld [vmem:[%s1354 + $0xa0] sm:$0xff]
      %v1376 = vld [vmem:[%s1354 + $0xa8] sm:$0xff]
      %v1377 = vld [vmem:[%s1354 + $0xb0] sm:$0xff]
      %v1378 = vld [vmem:[%s1354 + $0xb8] sm:$0xff]
      %v1379 = vld [vmem:[%s1354 + $0xc0] sm:$0xff]
      %v1380 = vld [vmem:[%s1354 + $0xc8] sm:$0xff]
      %v1381 = vld [vmem:[%s1354 + $0xd0] sm:$0xff]
      %v1382 = vld [vmem:[%s1354 + $0xd8] sm:$0xff]
      %v1383 = vld [vmem:[%s1354 + $0xe0] sm:$0xff]
      %v1384 = vld [vmem:[%s1354 + $0xe8] sm:$0xff]
      %v1385 = vld [vmem:[%s1354 + $0xf0] sm:$0xff]
      %v1386 = vld [vmem:[%s1354 + $0xf8] sm:$0xff]
      %s1387 = scalar_lea.vmem %s4, 16
      %v1388 = vld [vmem:[%s1387] sm:$0xff]
      %v1389 = vld [vmem:[%s1387 + $0x8] sm:$0xf]
      %v1391 = vsel %vm1283, %v1355, 0
      %v1394 = vsel %vm1283, %v1356, 0
      %v1397 = vsel %vm1283, %v1357, 0
      %v1400 = vsel %vm1283, %v1358, 0
      %v1403 = vsel %vm1283, %v1359, 0
      %v1406 = vsel %vm1283, %v1360, 0
      %v1409 = vsel %vm1283, %v1361, 0
      %v1412 = vsel %vm1283, %v1362, 0
      %v1415 = vsel %vm1283, %v1363, 0
      %v1418 = vsel %vm1283, %v1364, 0
      %v1421 = vsel %vm1283, %v1365, 0
      %v1424 = vsel %vm1283, %v1366, 0
      %v1427 = vsel %vm1283, %v1367, 0
      %v1430 = vsel %vm1283, %v1368, 0
      %v1433 = vsel %vm1283, %v1369, 0
      %v1436 = vsel %vm1283, %v1370, 0
      %v1439 = vsel %vm1283, %v1371, 0
      %v1442 = vsel %vm1283, %v1372, 0
      %v1445 = vsel %vm1283, %v1373, 0
      %v1448 = vsel %vm1283, %v1374, 0
      %v1451 = vsel %vm1283, %v1375, 0
      %v1454 = vsel %vm1283, %v1376, 0
      %v1457 = vsel %vm1283, %v1377, 0
      %v1460 = vsel %vm1283, %v1378, 0
      %v1463 = vsel %vm1283, %v1379, 0
      %v1466 = vsel %vm1283, %v1380, 0
      %v1469 = vsel %vm1283, %v1381, 0
      %v1472 = vsel %vm1283, %v1382, 0
      %v1475 = vsel %vm1283, %v1383, 0
      %v1478 = vsel %vm1283, %v1384, 0
      %v1481 = vsel %vm1283, %v1385, 0
      %v1484 = vsel %vm1283, %v1386, 0
      %vm1486 = vcmask 1043456
      %v1488 = vsel %vm1486, %v1389, 0
      %1490 = vmatprep.subr.mxu0 0.0
      %1491 = vmatpush1.msra.mxu0 %v1388
      %1492 = vmatprep.subr.mxu0 0.0
      %1493 = vmatpush1.msra.mxu0 %v1488
      %1494 = vmatprep.subr.mxu0 0.0
      %1495 = vmatpush1.msra.mxu0 0.0
      %1496 = vmatprep.subr.mxu0 0.0
      %1497 = vmatpush1.msra.mxu0 0.0
      %1498 = vmatprep.subr.mxu0 0.0
      %1499 = vmatpush1.msra.mxu0 0.0
      %1500 = vmatprep.subr.mxu0 0.0
      %1501 = vmatpush1.msra.mxu0 0.0
      %1502 = vmatprep.subr.mxu0 0.0
      %1503 = vmatpush1.msra.mxu0 0.0
      %1504 = vmatprep.subr.mxu0 0.0
      %1505 = vmatpush1.msra.mxu0 0.0
      %1506 = vmatprep.subr.mxu0 0.0
      %1507 = vmatpush1.msra.mxu0 0.0
      %1508 = vmatprep.subr.mxu0 0.0
      %1509 = vmatpush1.msra.mxu0 0.0
      %1510 = vmatprep.subr.mxu0 0.0
      %1511 = vmatpush1.msra.mxu0 0.0
      %1512 = vmatprep.subr.mxu0 0.0
      %1513 = vmatpush1.msra.mxu0 0.0
      %1514 = vmatprep.subr.mxu0 0.0
      %1515 = vmatpush1.msra.mxu0 0.0
      %1516 = vmatprep.subr.mxu0 0.0
      %1517 = vmatpush1.msra.mxu0 0.0
      %1518 = vmatprep.subr.mxu0 0.0
      %1519 = vmatpush1.msra.mxu0 0.0
      %1520 = vmatprep.subr.mxu0 0.0
      %1521 = vmatpush1.msra.mxu0 0.0
      %1522 = vmatprep.subr.mxu0 0.0
      %1523 = vmatpush1.msra.mxu0 0.0
      %1524 = vmatprep.subr.mxu0 0.0
      %1525 = vmatpush1.msra.mxu0 0.0
      %1526 = vmatprep.subr.mxu0 0.0
      %1527 = vmatpush1.msra.mxu0 0.0
      %1528 = vmatprep.subr.mxu0 0.0
      %1529 = vmatpush1.msra.mxu0 0.0
      %1530 = vmatprep.subr.mxu0 0.0
      %1531 = vmatpush1.msra.mxu0 0.0
      %1532 = vmatprep.subr.mxu0 0.0
      %1533 = vmatpush1.msra.mxu0 0.0
      %1534 = vmatprep.subr.mxu0 0.0
      %1535 = vmatpush1.msra.mxu0 0.0
      %1536 = vmatprep.subr.mxu0 0.0
      %1537 = vmatpush1.msra.mxu0 0.0
      %1538 = vmatprep.subr.mxu0 0.0
      %1539 = vmatpush1.msra.mxu0 0.0
      %1540 = vmatprep.subr.mxu0 0.0
      %1541 = vmatpush1.msra.mxu0 0.0
      %1542 = vmatprep.subr.mxu0 0.0
      %1543 = vmatpush1.msra.mxu0 0.0
      %1544 = vmatprep.subr.mxu0 0.0
      %1545 = vmatpush1.msra.mxu0 0.0
      %1546 = vmatprep.subr.mxu0 0.0
      %1547 = vmatpush1.msra.mxu0 0.0
      %1548 = vmatprep.subr.mxu0 0.0
      %1549 = vmatpush1.msra.mxu0 0.0
      %1550 = vmatprep.subr.mxu0 0.0
      %1551 = vmatpush1.msra.mxu0 0.0
      %1552 = vmatprep.subr.mxu0 0.0
      %1553 = vmatpush1.msra.mxu0 0.0
      %1554 = vmatprep.mubr.f32.mxu0 0.0
      %1555 = vmatmul.mubr.f32.gmra.mrb[0].mxu0 %v1391
      %v1556 = vpop.f32.mrb[0].mxu0
      %v1557 = vadd.f32 0.0, %v1556
      %v1558 = vpop.f32.mrb[0].mxu0
      %1559 = vmatprep.mubr.f32.mxu0 0.0
      %1560 = vmatmul.mubr.f32.gmra.mrb[0].mxu0 %v1394
      %v1561 = vpop.f32.mrb[0].mxu0
      %v1562 = vadd.f32 0.0, %v1561
      %v1563 = vpop.f32.mrb[0].mxu0
      %1564 = vmatprep.mubr.f32.mxu0 0.0
      %1565 = vmatmul.mubr.f32.gmra.mrb[0].mxu0 %v1397
      %v1566 = vpop.f32.mrb[0].mxu0
      %v1567 = vadd.f32 0.0, %v1566
      %v1568 = vpop.f32.mrb[0].mxu0
      %1569 = vmatprep.mubr.f32.mxu0 0.0
      %1570 = vmatmul.mubr.f32.gmra.mrb[0].mxu0 %v1400
      %v1571 = vpop.f32.mrb[0].mxu0
      %v1572 = vadd.f32 0.0, %v1571
      %v1573 = vpop.f32.mrb[0].mxu0
      %1574 = vmatprep.mubr.f32.mxu0 0.0
      %1575 = vmatmul.mubr.f32.gmra.mrb[0].mxu0 %v1403
      %v1576 = vpop.f32.mrb[0].mxu0
      %v1577 = vadd.f32 0.0, %v1576
      %v1578 = vpop.f32.mrb[0].mxu0
      %1579 = vmatprep.mubr.f32.mxu0 0.0
      %1580 = vmatmul.mubr.f32.gmra.mrb[0].mxu0 %v1406
      %v1581 = vpop.f32.mrb[0].mxu0
      %v1582 = vadd.f32 0.0, %v1581
      %v1583 = vpop.f32.mrb[0].mxu0
      %1584 = vmatprep.mubr.f32.mxu0 0.0
      %1585 = vmatmul.mubr.f32.gmra.mrb[0].mxu0 %v1409
      %v1586 = vpop.f32.mrb[0].mxu0
      %v1587 = vadd.f32 0.0, %v1586
      %v1588 = vpop.f32.mrb[0].mxu0
      %1589 = vmatprep.mubr.f32.mxu0 0.0
      %1590 = vmatmul.mubr.f32.gmra.mrb[0].mxu0 %v1412
      %v1591 = vpop.f32.mrb[0].mxu0
      %v1592 = vadd.f32 0.0, %v1591
      %v1593 = vpop.f32.mrb[0].mxu0
      %1594 = vmatprep.mubr.f32.mxu0 0.0
      %1595 = vmatmul.mubr.f32.gmra.mrb[0].mxu0 %v1415
      %v1596 = vpop.f32.mrb[0].mxu0
      %v1597 = vadd.f32 0.0, %v1596
      %v1598 = vpop.f32.mrb[0].mxu0
      %1599 = vmatprep.mubr.f32.mxu0 0.0
      %1600 = vmatmul.mubr.f32.gmra.mrb[0].mxu0 %v1418
      %v1601 = vpop.f32.mrb[0].mxu0
      %v1602 = vadd.f32 0.0, %v1601
      %v1603 = vpop.f32.mrb[0].mxu0
      %1604 = vmatprep.mubr.f32.mxu0 0.0
      %1605 = vmatmul.mubr.f32.gmra.mrb[0].mxu0 %v1421
      %v1606 = vpop.f32.mrb[0].mxu0
      %v1607 = vadd.f32 0.0, %v1606
      %v1608 = vpop.f32.mrb[0].mxu0
      %1609 = vmatprep.mubr.f32.mxu0 0.0
      %1610 = vmatmul.mubr.f32.gmra.mrb[0].mxu0 %v1424
      %v1611 = vpop.f32.mrb[0].mxu0
      %v1612 = vadd.f32 0.0, %v1611
      %v1613 = vpop.f32.mrb[0].mxu0
      %1614 = vmatprep.mubr.f32.mxu0 0.0
      %1615 = vmatmul.mubr.f32.gmra.mrb[0].mxu0 %v1427
      %v1616 = vpop.f32.mrb[0].mxu0
      %v1617 = vadd.f32 0.0, %v1616
      %v1618 = vpop.f32.mrb[0].mxu0
      %1619 = vmatprep.mubr.f32.mxu0 0.0
      %1620 = vmatmul.mubr.f32.gmra.mrb[0].mxu0 %v1430
      %v1621 = vpop.f32.mrb[0].mxu0
      %v1622 = vadd.f32 0.0, %v1621
      %v1623 = vpop.f32.mrb[0].mxu0
      %1624 = vmatprep.mubr.f32.mxu0 0.0
      %1625 = vmatmul.mubr.f32.gmra.mrb[0].mxu0 %v1433
      %v1626 = vpop.f32.mrb[0].mxu0
      %v1627 = vadd.f32 0.0, %v1626
      %v1628 = vpop.f32.mrb[0].mxu0
      %1629 = vmatprep.mubr.f32.mxu0 0.0
      %1630 = vmatmul.mubr.f32.gmra.mrb[0].mxu0 %v1436
      %v1631 = vpop.f32.mrb[0].mxu0
      %v1632 = vadd.f32 0.0, %v1631
      %v1633 = vpop.f32.mrb[0].mxu0
      %1634 = vmatprep.mubr.f32.mxu0 0.0
      %1635 = vmatmul.mubr.f32.gmra.mrb[0].mxu0 %v1439
      %v1636 = vpop.f32.mrb[0].mxu0
      %v1637 = vadd.f32 0.0, %v1636
      %v1638 = vpop.f32.mrb[0].mxu0
      %1639 = vmatprep.mubr.f32.mxu0 0.0
      %1640 = vmatmul.mubr.f32.gmra.mrb[0].mxu0 %v1442
      %v1641 = vpop.f32.mrb[0].mxu0
      %v1642 = vadd.f32 0.0, %v1641
      %v1643 = vpop.f32.mrb[0].mxu0
      %1644 = vmatprep.mubr.f32.mxu0 0.0
      %1645 = vmatmul.mubr.f32.gmra.mrb[0].mxu0 %v1445
      %v1646 = vpop.f32.mrb[0].mxu0
      %v1647 = vadd.f32 0.0, %v1646
      %v1648 = vpop.f32.mrb[0].mxu0
      %1649 = vmatprep.mubr.f32.mxu0 0.0
      %1650 = vmatmul.mubr.f32.gmra.mrb[0].mxu0 %v1448
      %v1651 = vpop.f32.mrb[0].mxu0
      %v1652 = vadd.f32 0.0, %v1651
      %v1653 = vpop.f32.mrb[0].mxu0
      %1654 = vmatprep.mubr.f32.mxu0 0.0
      %1655 = vmatmul.mubr.f32.gmra.mrb[0].mxu0 %v1451
      %v1656 = vpop.f32.mrb[0].mxu0
      %v1657 = vadd.f32 0.0, %v1656
      %v1658 = vpop.f32.mrb[0].mxu0
      %1659 = vmatprep.mubr.f32.mxu0 0.0
      %1660 = vmatmul.mubr.f32.gmra.mrb[0].mxu0 %v1454
      %v1661 = vpop.f32.mrb[0].mxu0
      %v1662 = vadd.f32 0.0, %v1661
      %v1663 = vpop.f32.mrb[0].mxu0
      %1664 = vmatprep.mubr.f32.mxu0 0.0
      %1665 = vmatmul.mubr.f32.gmra.mrb[0].mxu0 %v1457
      %v1666 = vpop.f32.mrb[0].mxu0
      %v1667 = vadd.f32 0.0, %v1666
      %v1668 = vpop.f32.mrb[0].mxu0
      %1669 = vmatprep.mubr.f32.mxu0 0.0
      %1670 = vmatmul.mubr.f32.gmra.mrb[0].mxu0 %v1460
      %v1671 = vpop.f32.mrb[0].mxu0
      %v1672 = vadd.f32 0.0, %v1671
      %v1673 = vpop.f32.mrb[0].mxu0
      %1674 = vmatprep.mubr.f32.mxu0 0.0
      %1675 = vmatmul.mubr.f32.gmra.mrb[0].mxu0 %v1463
      %v1676 = vpop.f32.mrb[0].mxu0
      %v1677 = vadd.f32 0.0, %v1676
      %v1678 = vpop.f32.mrb[0].mxu0
      %1679 = vmatprep.mubr.f32.mxu0 0.0
      %1680 = vmatmul.mubr.f32.gmra.mrb[0].mxu0 %v1466
      %v1681 = vpop.f32.mrb[0].mxu0
      %v1682 = vadd.f32 0.0, %v1681
      %v1683 = vpop.f32.mrb[0].mxu0
      %1684 = vmatprep.mubr.f32.mxu0 0.0
      %1685 = vmatmul.mubr.f32.gmra.mrb[0].mxu0 %v1469
      %v1686 = vpop.f32.mrb[0].mxu0
      %v1687 = vadd.f32 0.0, %v1686
      %v1688 = vpop.f32.mrb[0].mxu0
      %1689 = vmatprep.mubr.f32.mxu0 0.0
      %1690 = vmatmul.mubr.f32.gmra.mrb[0].mxu0 %v1472
      %v1691 = vpop.f32.mrb[0].mxu0
      %v1692 = vadd.f32 0.0, %v1691
      %v1693 = vpop.f32.mrb[0].mxu0
      %1694 = vmatprep.mubr.f32.mxu0 0.0
      %1695 = vmatmul.mubr.f32.gmra.mrb[0].mxu0 %v1475
      %v1696 = vpop.f32.mrb[0].mxu0
      %v1697 = vadd.f32 0.0, %v1696
      %v1698 = vpop.f32.mrb[0].mxu0
      %1699 = vmatprep.mubr.f32.mxu0 0.0
      %1700 = vmatmul.mubr.f32.gmra.mrb[0].mxu0 %v1478
      %v1701 = vpop.f32.mrb[0].mxu0
      %v1702 = vadd.f32 0.0, %v1701
      %v1703 = vpop.f32.mrb[0].mxu0
      %1704 = vmatprep.mubr.f32.mxu0 0.0
      %1705 = vmatmul.mubr.f32.gmra.mrb[0].mxu0 %v1481
      %v1706 = vpop.f32.mrb[0].mxu0
      %v1707 = vadd.f32 0.0, %v1706
      %v1708 = vpop.f32.mrb[0].mxu0
      %1709 = vmatprep.mubr.f32.mxu0 0.0
      %1710 = vmatmul.mubr.f32.gmra.mrb[0].mxu0 %v1484
      %v1711 = vpop.f32.mrb[0].mxu0
      %v1712 = vadd.f32 0.0, %v1711
      %v1713 = vpop.f32.mrb[0].mxu0
      %1714 = vdwg.mxu0
      %v1716 = vsel %vm1283, %v1320, 0
      %v1719 = vsel %vm1283, %v1321, 0
      %v1722 = vsel %vm1283, %v1322, 0
      %v1725 = vsel %vm1283, %v1323, 0
      %v1728 = vsel %vm1283, %v1324, 0
      %v1731 = vsel %vm1283, %v1325, 0
      %v1734 = vsel %vm1283, %v1326, 0
      %v1737 = vsel %vm1283, %v1327, 0
      %v1740 = vsel %vm1283, %v1328, 0
      %v1743 = vsel %vm1283, %v1329, 0
      %v1746 = vsel %vm1283, %v1330, 0
      %v1749 = vsel %vm1283, %v1331, 0
      %v1752 = vsel %vm1283, %v1332, 0
      %v1755 = vsel %vm1283, %v1333, 0
      %v1758 = vsel %vm1283, %v1334, 0
      %v1761 = vsel %vm1283, %v1335, 0
      %v1764 = vsel %vm1283, %v1336, 0
      %v1767 = vsel %vm1283, %v1337, 0
      %v1770 = vsel %vm1283, %v1338, 0
      %v1773 = vsel %vm1283, %v1339, 0
      %v1776 = vsel %vm1283, %v1340, 0
      %v1779 = vsel %vm1283, %v1341, 0
      %v1782 = vsel %vm1283, %v1342, 0
      %v1785 = vsel %vm1283, %v1343, 0
      %v1788 = vsel %vm1283, %v1344, 0
      %v1791 = vsel %vm1283, %v1345, 0
      %v1794 = vsel %vm1283, %v1346, 0
      %v1797 = vsel %vm1283, %v1347, 0
      %v1800 = vsel %vm1283, %v1348, 0
      %v1803 = vsel %vm1283, %v1349, 0
      %v1806 = vsel %vm1283, %v1350, 0
      %v1809 = vsel %vm1283, %v1351, 0
      %v1812 = vsel %vm1486, %v1353, 0
      %1814 = vmatprep.subr.mxu0 0.0
      %1815 = vmatpush1.msra.mxu0 %v1352
      %1816 = vmatprep.subr.mxu0 0.0
      %1817 = vmatpush1.msra.mxu0 %v1812
      %1818 = vmatprep.subr.mxu0 0.0
      %1819 = vmatpush1.msra.mxu0 0.0
      %1820 = vmatprep.subr.mxu0 0.0
      %1821 = vmatpush1.msra.mxu0 0.0
      %1822 = vmatprep.subr.mxu0 0.0
      %1823 = vmatpush1.msra.mxu0 0.0
      %1824 = vmatprep.subr.mxu0 0.0
      %1825 = vmatpush1.msra.mxu0 0.0
      %1826 = vmatprep.subr.mxu0 0.0
      %1827 = vmatpush1.msra.mxu0 0.0
      %1828 = vmatprep.subr.mxu0 0.0
      %1829 = vmatpush1.msra.mxu0 0.0
      %1830 = vmatprep.subr.mxu0 0.0
      %1831 = vmatpush1.msra.mxu0 0.0
      %1832 = vmatprep.subr.mxu0 0.0
      %1833 = vmatpush1.msra.mxu0 0.0
      %1834 = vmatprep.subr.mxu0 0.0
      %1835 = vmatpush1.msra.mxu0 0.0
      %1836 = vmatprep.subr.mxu0 0.0
      %1837 = vmatpush1.msra.mxu0 0.0
      %1838 = vmatprep.subr.mxu0 0.0
      %1839 = vmatpush1.msra.mxu0 0.0
      %1840 = vmatprep.subr.mxu0 0.0
      %1841 = vmatpush1.msra.mxu0 0.0
      %1842 = vmatprep.subr.mxu0 0.0
      %1843 = vmatpush1.msra.mxu0 0.0
      %1844 = vmatprep.subr.mxu0 0.0
      %1845 = vmatpush1.msra.mxu0 0.0
      %1846 = vmatprep.subr.mxu0 0.0
      %1847 = vmatpush1.msra.mxu0 0.0
      %1848 = vmatprep.subr.mxu0 0.0
      %1849 = vmatpush1.msra.mxu0 0.0
      %1850 = vmatprep.subr.mxu0 0.0
      %1851 = vmatpush1.msra.mxu0 0.0
      %1852 = vmatprep.subr.mxu0 0.0
      %1853 = vmatpush1.msra.mxu0 0.0
      %1854 = vmatprep.subr.mxu0 0.0
      %1855 = vmatpush1.msra.mxu0 0.0
      %1856 = vmatprep.subr.mxu0 0.0
      %1857 = vmatpush1.msra.mxu0 0.0
      %1858 = vmatprep.subr.mxu0 0.0
      %1859 = vmatpush1.msra.mxu0 0.0
      %1860 = vmatprep.subr.mxu0 0.0
      %1861 = vmatpush1.msra.mxu0 0.0
      %1862 = vmatprep.subr.mxu0 0.0
      %1863 = vmatpush1.msra.mxu0 0.0
      %1864 = vmatprep.subr.mxu0 0.0
      %1865 = vmatpush1.msra.mxu0 0.0
      %1866 = vmatprep.subr.mxu0 0.0
      %1867 = vmatpush1.msra.mxu0 0.0
      %1868 = vmatprep.subr.mxu0 0.0
      %1869 = vmatpush1.msra.mxu0 0.0
      %1870 = vmatprep.subr.mxu0 0.0
      %1871 = vmatpush1.msra.mxu0 0.0
      %1872 = vmatprep.subr.mxu0 0.0
      %1873 = vmatpush1.msra.mxu0 0.0
      %1874 = vmatprep.subr.mxu0 0.0
      %1875 = vmatpush1.msra.mxu0 0.0
      %1876 = vmatprep.subr.mxu0 0.0
      %1877 = vmatpush1.msra.mxu0 0.0
      %1878 = vmatprep.mubr.f32.mxu0 0.0
      %1879 = vmatmul.mubr.f32.gmra.mrb[0].mxu0 %v1716
      %v1880 = vpop.f32.mrb[0].mxu0
      %v1881 = vadd.f32 %v1557, %v1880
      %v1882 = vpop.f32.mrb[0].mxu0
      %1883 = vmatprep.mubr.f32.mxu0 0.0
      %1884 = vmatmul.mubr.f32.gmra.mrb[0].mxu0 %v1719
      %v1885 = vpop.f32.mrb[0].mxu0
      %v1886 = vadd.f32 %v1562, %v1885
      %v1887 = vpop.f32.mrb[0].mxu0
      %1888 = vmatprep.mubr.f32.mxu0 0.0
      %1889 = vmatmul.mubr.f32.gmra.mrb[0].mxu0 %v1722
      %v1890 = vpop.f32.mrb[0].mxu0
      %v1891 = vadd.f32 %v1567, %v1890
      %v1892 = vpop.f32.mrb[0].mxu0
      %1893 = vmatprep.mubr.f32.mxu0 0.0
      %1894 = vmatmul.mubr.f32.gmra.mrb[0].mxu0 %v1725
      %v1895 = vpop.f32.mrb[0].mxu0
      %v1896 = vadd.f32 %v1572, %v1895
      %v1897 = vpop.f32.mrb[0].mxu0
      %1898 = vmatprep.mubr.f32.mxu0 0.0
      %1899 = vmatmul.mubr.f32.gmra.mrb[0].mxu0 %v1728
      %v1900 = vpop.f32.mrb[0].mxu0
      %v1901 = vadd.f32 %v1577, %v1900
      %v1902 = vpop.f32.mrb[0].mxu0
      %1903 = vmatprep.mubr.f32.mxu0 0.0
      %1904 = vmatmul.mubr.f32.gmra.mrb[0].mxu0 %v1731
      %v1905 = vpop.f32.mrb[0].mxu0
      %v1906 = vadd.f32 %v1582, %v1905
      %v1907 = vpop.f32.mrb[0].mxu0
      %1908 = vmatprep.mubr.f32.mxu0 0.0
      %1909 = vmatmul.mubr.f32.gmra.mrb[0].mxu0 %v1734
      %v1910 = vpop.f32.mrb[0].mxu0
      %v1911 = vadd.f32 %v1587, %v1910
      %v1912 = vpop.f32.mrb[0].mxu0
      %1913 = vmatprep.mubr.f32.mxu0 0.0
      %1914 = vmatmul.mubr.f32.gmra.mrb[0].mxu0 %v1737
      %v1915 = vpop.f32.mrb[0].mxu0
      %v1916 = vadd.f32 %v1592, %v1915
      %v1917 = vpop.f32.mrb[0].mxu0
      %1918 = vmatprep.mubr.f32.mxu0 0.0
      %1919 = vmatmul.mubr.f32.gmra.mrb[0].mxu0 %v1740
      %v1920 = vpop.f32.mrb[0].mxu0
      %v1921 = vadd.f32 %v1597, %v1920
      %v1922 = vpop.f32.mrb[0].mxu0
      %1923 = vmatprep.mubr.f32.mxu0 0.0
      %1924 = vmatmul.mubr.f32.gmra.mrb[0].mxu0 %v1743
      %v1925 = vpop.f32.mrb[0].mxu0
      %v1926 = vadd.f32 %v1602, %v1925
      %v1927 = vpop.f32.mrb[0].mxu0
      %1928 = vmatprep.mubr.f32.mxu0 0.0
      %1929 = vmatmul.mubr.f32.gmra.mrb[0].mxu0 %v1746
      %v1930 = vpop.f32.mrb[0].mxu0
      %v1931 = vadd.f32 %v1607, %v1930
      %v1932 = vpop.f32.mrb[0].mxu0
      %1933 = vmatprep.mubr.f32.mxu0 0.0
      %1934 = vmatmul.mubr.f32.gmra.mrb[0].mxu0 %v1749
      %v1935 = vpop.f32.mrb[0].mxu0
      %v1936 = vadd.f32 %v1612, %v1935
      %v1937 = vpop.f32.mrb[0].mxu0
      %1938 = vmatprep.mubr.f32.mxu0 0.0
      %1939 = vmatmul.mubr.f32.gmra.mrb[0].mxu0 %v1752
      %v1940 = vpop.f32.mrb[0].mxu0
      %v1941 = vadd.f32 %v1617, %v1940
      %v1942 = vpop.f32.mrb[0].mxu0
      %1943 = vmatprep.mubr.f32.mxu0 0.0
      %1944 = vmatmul.mubr.f32.gmra.mrb[0].mxu0 %v1755
      %v1945 = vpop.f32.mrb[0].mxu0
      %v1946 = vadd.f32 %v1622, %v1945
      %v1947 = vpop.f32.mrb[0].mxu0
      %1948 = vmatprep.mubr.f32.mxu0 0.0
      %1949 = vmatmul.mubr.f32.gmra.mrb[0].mxu0 %v1758
      %v1950 = vpop.f32.mrb[0].mxu0
      %v1951 = vadd.f32 %v1627, %v1950
      %v1952 = vpop.f32.mrb[0].mxu0
      %1953 = vmatprep.mubr.f32.mxu0 0.0
      %1954 = vmatmul.mubr.f32.gmra.mrb[0].mxu0 %v1761
      %v1955 = vpop.f32.mrb[0].mxu0
      %v1956 = vadd.f32 %v1632, %v1955
      %v1957 = vpop.f32.mrb[0].mxu0
      %1958 = vmatprep.mubr.f32.mxu0 0.0
      %1959 = vmatmul.mubr.f32.gmra.mrb[0].mxu0 %v1764
      %v1960 = vpop.f32.mrb[0].mxu0
      %v1961 = vadd.f32 %v1637, %v1960
      %v1962 = vpop.f32.mrb[0].mxu0
      %1963 = vmatprep.mubr.f32.mxu0 0.0
      %1964 = vmatmul.mubr.f32.gmra.mrb[0].mxu0 %v1767
      %v1965 = vpop.f32.mrb[0].mxu0
      %v1966 = vadd.f32 %v1642, %v1965
      %v1967 = vpop.f32.mrb[0].mxu0
      %1968 = vmatprep.mubr.f32.mxu0 0.0
      %1969 = vmatmul.mubr.f32.gmra.mrb[0].mxu0 %v1770
      %v1970 = vpop.f32.mrb[0].mxu0
      %v1971 = vadd.f32 %v1647, %v1970
      %v1972 = vpop.f32.mrb[0].mxu0
      %1973 = vmatprep.mubr.f32.mxu0 0.0
      %1974 = vmatmul.mubr.f32.gmra.mrb[0].mxu0 %v1773
      %v1975 = vpop.f32.mrb[0].mxu0
      %v1976 = vadd.f32 %v1652, %v1975
      %v1977 = vpop.f32.mrb[0].mxu0
      %1978 = vmatprep.mubr.f32.mxu0 0.0
      %1979 = vmatmul.mubr.f32.gmra.mrb[0].mxu0 %v1776
      %v1980 = vpop.f32.mrb[0].mxu0
      %v1981 = vadd.f32 %v1657, %v1980
      %v1982 = vpop.f32.mrb[0].mxu0
      %1983 = vmatprep.mubr.f32.mxu0 0.0
      %1984 = vmatmul.mubr.f32.gmra.mrb[0].mxu0 %v1779
      %v1985 = vpop.f32.mrb[0].mxu0
      %v1986 = vadd.f32 %v1662, %v1985
      %v1987 = vpop.f32.mrb[0].mxu0
      %1988 = vmatprep.mubr.f32.mxu0 0.0
      %1989 = vmatmul.mubr.f32.gmra.mrb[0].mxu0 %v1782
      %v1990 = vpop.f32.mrb[0].mxu0
      %v1991 = vadd.f32 %v1667, %v1990
      %v1992 = vpop.f32.mrb[0].mxu0
      %1993 = vmatprep.mubr.f32.mxu0 0.0
      %1994 = vmatmul.mubr.f32.gmra.mrb[0].mxu0 %v1785
      %v1995 = vpop.f32.mrb[0].mxu0
      %v1996 = vadd.f32 %v1672, %v1995
      %v1997 = vpop.f32.mrb[0].mxu0
      %1998 = vmatprep.mubr.f32.mxu0 0.0
      %1999 = vmatmul.mubr.f32.gmra.mrb[0].mxu0 %v1788
      %v2000 = vpop.f32.mrb[0].mxu0
      %v2001 = vadd.f32 %v1677, %v2000
      %v2002 = vpop.f32.mrb[0].mxu0
      %2003 = vmatprep.mubr.f32.mxu0 0.0
      %2004 = vmatmul.mubr.f32.gmra.mrb[0].mxu0 %v1791
      %v2005 = vpop.f32.mrb[0].mxu0
      %v2006 = vadd.f32 %v1682, %v2005
      %v2007 = vpop.f32.mrb[0].mxu0
      %2008 = vmatprep.mubr.f32.mxu0 0.0
      %2009 = vmatmul.mubr.f32.gmra.mrb[0].mxu0 %v1794
      %v2010 = vpop.f32.mrb[0].mxu0
      %v2011 = vadd.f32 %v1687, %v2010
      %v2012 = vpop.f32.mrb[0].mxu0
      %2013 = vmatprep.mubr.f32.mxu0 0.0
      %2014 = vmatmul.mubr.f32.gmra.mrb[0].mxu0 %v1797
      %v2015 = vpop.f32.mrb[0].mxu0
      %v2016 = vadd.f32 %v1692, %v2015
      %v2017 = vpop.f32.mrb[0].mxu0
      %2018 = vmatprep.mubr.f32.mxu0 0.0
      %2019 = vmatmul.mubr.f32.gmra.mrb[0].mxu0 %v1800
      %v2020 = vpop.f32.mrb[0].mxu0
      %v2021 = vadd.f32 %v1697, %v2020
      %v2022 = vpop.f32.mrb[0].mxu0
      %2023 = vmatprep.mubr.f32.mxu0 0.0
      %2024 = vmatmul.mubr.f32.gmra.mrb[0].mxu0 %v1803
      %v2025 = vpop.f32.mrb[0].mxu0
      %v2026 = vadd.f32 %v1702, %v2025
      %v2027 = vpop.f32.mrb[0].mxu0
      %2028 = vmatprep.mubr.f32.mxu0 0.0
      %2029 = vmatmul.mubr.f32.gmra.mrb[0].mxu0 %v1806
      %v2030 = vpop.f32.mrb[0].mxu0
      %v2031 = vadd.f32 %v1707, %v2030
      %v2032 = vpop.f32.mrb[0].mxu0
      %2033 = vmatprep.mubr.f32.mxu0 0.0
      %2034 = vmatmul.mubr.f32.gmra.mrb[0].mxu0 %v1809
      %v2035 = vpop.f32.mrb[0].mxu0
      %v2036 = vadd.f32 %v1712, %v2035
      %v2037 = vpop.f32.mrb[0].mxu0
      %2038 = vdwg.mxu0
      %s2039 = scalar_lea.vmem [#allocation2], 32
      %v2040 = vld [vmem:[%s2039] sm:$0xff]
      %v2041 = vld [vmem:[%s2039 + $0x8] sm:$0xff]
      %v2042 = vld [vmem:[%s2039 + $0x10] sm:$0xff]
      %v2043 = vld [vmem:[%s2039 + $0x18] sm:$0xff]
      %v2044 = vld [vmem:[%s2039 + $0x20] sm:$0xff]
      %v2045 = vld [vmem:[%s2039 + $0x28] sm:$0xff]
      %v2046 = vld [vmem:[%s2039 + $0x30] sm:$0xff]
      %v2047 = vld [vmem:[%s2039 + $0x38] sm:$0xff]
      %v2048 = vld [vmem:[%s2039 + $0x40] sm:$0xff]
      %v2049 = vld [vmem:[%s2039 + $0x48] sm:$0xff]
      %v2050 = vld [vmem:[%s2039 + $0x50] sm:$0xff]
      %v2051 = vld [vmem:[%s2039 + $0x58] sm:$0xff]
      %v2052 = vld [vmem:[%s2039 + $0x60] sm:$0xff]
      %v2053 = vld [vmem:[%s2039 + $0x68] sm:$0xff]
      %v2054 = vld [vmem:[%s2039 + $0x70] sm:$0xff]
      %v2055 = vld [vmem:[%s2039 + $0x78] sm:$0xff]
      %v2056 = vld [vmem:[%s2039 + $0x80] sm:$0xff]
      %v2057 = vld [vmem:[%s2039 + $0x88] sm:$0xff]
      %v2058 = vld [vmem:[%s2039 + $0x90] sm:$0xff]
      %v2059 = vld [vmem:[%s2039 + $0x98] sm:$0xff]
      %v2060 = vld [vmem:[%s2039 + $0xa0] sm:$0xff]
      %v2061 = vld [vmem:[%s2039 + $0xa8] sm:$0xff]
      %v2062 = vld [vmem:[%s2039 + $0xb0] sm:$0xff]
      %v2063 = vld [vmem:[%s2039 + $0xb8] sm:$0xff]
      %v2064 = vld [vmem:[%s2039 + $0xc0] sm:$0xff]
      %v2065 = vld [vmem:[%s2039 + $0xc8] sm:$0xff]
      %v2066 = vld [vmem:[%s2039 + $0xd0] sm:$0xff]
      %v2067 = vld [vmem:[%s2039 + $0xd8] sm:$0xff]
      %v2068 = vld [vmem:[%s2039 + $0xe0] sm:$0xff]
      %v2069 = vld [vmem:[%s2039 + $0xe8] sm:$0xff]
      %v2070 = vld [vmem:[%s2039 + $0xf0] sm:$0xff]
      %v2071 = vld [vmem:[%s2039 + $0xf8] sm:$0xff]
      %s2072 = scalar_lea.vmem %s4, 32
      %v2073 = vld [vmem:[%s2072] sm:$0xff]
      %v2074 = vld [vmem:[%s2072 + $0x8] sm:$0xf]
      %v2076 = vsel %vm1283, %v2040, 0
      %v2079 = vsel %vm1283, %v2041, 0
      %v2082 = vsel %vm1283, %v2042, 0
      %v2085 = vsel %vm1283, %v2043, 0
      %v2088 = vsel %vm1283, %v2044, 0
      %v2091 = vsel %vm1283, %v2045, 0
      %v2094 = vsel %vm1283, %v2046, 0
      %v2097 = vsel %vm1283, %v2047, 0
      %v2100 = vsel %vm1283, %v2048, 0
      %v2103 = vsel %vm1283, %v2049, 0
      %v2106 = vsel %vm1283, %v2050, 0
      %v2109 = vsel %vm1283, %v2051, 0
      %v2112 = vsel %vm1283, %v2052, 0
      %v2115 = vsel %vm1283, %v2053, 0
      %v2118 = vsel %vm1283, %v2054, 0
      %v2121 = vsel %vm1283, %v2055, 0
      %v2124 = vsel %vm1283, %v2056, 0
      %v2127 = vsel %vm1283, %v2057, 0
      %v2130 = vsel %vm1283, %v2058, 0
      %v2133 = vsel %vm1283, %v2059, 0
      %v2136 = vsel %vm1283, %v2060, 0
      %v2139 = vsel %vm1283, %v2061, 0
      %v2142 = vsel %vm1283, %v2062, 0
      %v2145 = vsel %vm1283, %v2063, 0
      %v2148 = vsel %vm1283, %v2064, 0
      %v2151 = vsel %vm1283, %v2065, 0
      %v2154 = vsel %vm1283, %v2066, 0
      %v2157 = vsel %vm1283, %v2067, 0
      %v2160 = vsel %vm1283, %v2068, 0
      %v2163 = vsel %vm1283, %v2069, 0
      %v2166 = vsel %vm1283, %v2070, 0
      %v2169 = vsel %vm1283, %v2071, 0
      %v2172 = vsel %vm1486, %v2074, 0
      %2174 = vmatprep.subr.mxu0 0.0
      %2175 = vmatpush1.msra.mxu0 %v2073
      %2176 = vmatprep.subr.mxu0 0.0
      %2177 = vmatpush1.msra.mxu0 %v2172
      %2178 = vmatprep.subr.mxu0 0.0
      %2179 = vmatpush1.msra.mxu0 0.0
      %2180 = vmatprep.subr.mxu0 0.0
      %2181 = vmatpush1.msra.mxu0 0.0
      %2182 = vmatprep.subr.mxu0 0.0
      %2183 = vmatpush1.msra.mxu0 0.0
      %2184 = vmatprep.subr.mxu0 0.0
      %2185 = vmatpush1.msra.mxu0 0.0
      %2186 = vmatprep.subr.mxu0 0.0
      %2187 = vmatpush1.msra.mxu0 0.0
      %2188 = vmatprep.subr.mxu0 0.0
      %2189 = vmatpush1.msra.mxu0 0.0
      %2190 = vmatprep.subr.mxu0 0.0
      %2191 = vmatpush1.msra.mxu0 0.0
      %2192 = vmatprep.subr.mxu0 0.0
      %2193 = vmatpush1.msra.mxu0 0.0
      %2194 = vmatprep.subr.mxu0 0.0
      %2195 = vmatpush1.msra.mxu0 0.0
      %2196 = vmatprep.subr.mxu0 0.0
      %2197 = vmatpush1.msra.mxu0 0.0
      %2198 = vmatprep.subr.mxu0 0.0
      %2199 = vmatpush1.msra.mxu0 0.0
      %2200 = vmatprep.subr.mxu0 0.0
      %2201 = vmatpush1.msra.mxu0 0.0
      %2202 = vmatprep.subr.mxu0 0.0
      %2203 = vmatpush1.msra.mxu0 0.0
      %2204 = vmatprep.subr.mxu0 0.0
      %2205 = vmatpush1.msra.mxu0 0.0
      %2206 = vmatprep.subr.mxu0 0.0
      %2207 = vmatpush1.msra.mxu0 0.0
      %2208 = vmatprep.subr.mxu0 0.0
      %2209 = vmatpush1.msra.mxu0 0.0
      %2210 = vmatprep.subr.mxu0 0.0
      %2211 = vmatpush1.msra.mxu0 0.0
      %2212 = vmatprep.subr.mxu0 0.0
      %2213 = vmatpush1.msra.mxu0 0.0
      %2214 = vmatprep.subr.mxu0 0.0
      %2215 = vmatpush1.msra.mxu0 0.0
      %2216 = vmatprep.subr.mxu0 0.0
      %2217 = vmatpush1.msra.mxu0 0.0
      %2218 = vmatprep.subr.mxu0 0.0
      %2219 = vmatpush1.msra.mxu0 0.0
      %2220 = vmatprep.subr.mxu0 0.0
      %2221 = vmatpush1.msra.mxu0 0.0
      %2222 = vmatprep.subr.mxu0 0.0
      %2223 = vmatpush1.msra.mxu0 0.0
      %2224 = vmatprep.subr.mxu0 0.0
      %2225 = vmatpush1.msra.mxu0 0.0
      %2226 = vmatprep.subr.mxu0 0.0
      %2227 = vmatpush1.msra.mxu0 0.0
      %2228 = vmatprep.subr.mxu0 0.0
      %2229 = vmatpush1.msra.mxu0 0.0
      %2230 = vmatprep.subr.mxu0 0.0
      %2231 = vmatpush1.msra.mxu0 0.0
      %2232 = vmatprep.subr.mxu0 0.0
      %2233 = vmatpush1.msra.mxu0 0.0
      %2234 = vmatprep.subr.mxu0 0.0
      %2235 = vmatpush1.msra.mxu0 0.0
      %2236 = vmatprep.subr.mxu0 0.0
      %2237 = vmatpush1.msra.mxu0 0.0
      %2238 = vmatprep.mubr.f32.mxu0 0.0
      %2239 = vmatmul.mubr.f32.gmra.mrb[0].mxu0 %v2076
      %v2240 = vpop.f32.mrb[0].mxu0
      %v2241 = vadd.f32 0.0, %v2240
      %v2242 = vpop.f32.mrb[0].mxu0
      %2243 = vmatprep.mubr.f32.mxu0 0.0
      %2244 = vmatmul.mubr.f32.gmra.mrb[0].mxu0 %v2079
      %v2245 = vpop.f32.mrb[0].mxu0
      %v2246 = vadd.f32 0.0, %v2245
      %v2247 = vpop.f32.mrb[0].mxu0
      %2248 = vmatprep.mubr.f32.mxu0 0.0
      %2249 = vmatmul.mubr.f32.gmra.mrb[0].mxu0 %v2082
      %v2250 = vpop.f32.mrb[0].mxu0
      %v2251 = vadd.f32 0.0, %v2250
      %v2252 = vpop.f32.mrb[0].mxu0
      %2253 = vmatprep.mubr.f32.mxu0 0.0
      %2254 = vmatmul.mubr.f32.gmra.mrb[0].mxu0 %v2085
      %v2255 = vpop.f32.mrb[0].mxu0
      %v2256 = vadd.f32 0.0, %v2255
      %v2257 = vpop.f32.mrb[0].mxu0
      %2258 = vmatprep.mubr.f32.mxu0 0.0
      %2259 = vmatmul.mubr.f32.gmra.mrb[0].mxu0 %v2088
      %v2260 = vpop.f32.mrb[0].mxu0
      %v2261 = vadd.f32 0.0, %v2260
      %v2262 = vpop.f32.mrb[0].mxu0
      %2263 = vmatprep.mubr.f32.mxu0 0.0
      %2264 = vmatmul.mubr.f32.gmra.mrb[0].mxu0 %v2091
      %v2265 = vpop.f32.mrb[0].mxu0
      %v2266 = vadd.f32 0.0, %v2265
      %v2267 = vpop.f32.mrb[0].mxu0
      %2268 = vmatprep.mubr.f32.mxu0 0.0
      %2269 = vmatmul.mubr.f32.gmra.mrb[0].mxu0 %v2094
      %v2270 = vpop.f32.mrb[0].mxu0
      %v2271 = vadd.f32 0.0, %v2270
      %v2272 = vpop.f32.mrb[0].mxu0
      %2273 = vmatprep.mubr.f32.mxu0 0.0
      %2274 = vmatmul.mubr.f32.gmra.mrb[0].mxu0 %v2097
      %v2275 = vpop.f32.mrb[0].mxu0
      %v2276 = vadd.f32 0.0, %v2275
      %v2277 = vpop.f32.mrb[0].mxu0
      %2278 = vmatprep.mubr.f32.mxu0 0.0
      %2279 = vmatmul.mubr.f32.gmra.mrb[0].mxu0 %v2100
      %v2280 = vpop.f32.mrb[0].mxu0
      %v2281 = vadd.f32 0.0, %v2280
      %v2282 = vpop.f32.mrb[0].mxu0
      %2283 = vmatprep.mubr.f32.mxu0 0.0
      %2284 = vmatmul.mubr.f32.gmra.mrb[0].mxu0 %v2103
      %v2285 = vpop.f32.mrb[0].mxu0
      %v2286 = vadd.f32 0.0, %v2285
      %v2287 = vpop.f32.mrb[0].mxu0
      %2288 = vmatprep.mubr.f32.mxu0 0.0
      %2289 = vmatmul.mubr.f32.gmra.mrb[0].mxu0 %v2106
      %v2290 = vpop.f32.mrb[0].mxu0
      %v2291 = vadd.f32 0.0, %v2290
      %v2292 = vpop.f32.mrb[0].mxu0
      %2293 = vmatprep.mubr.f32.mxu0 0.0
      %2294 = vmatmul.mubr.f32.gmra.mrb[0].mxu0 %v2109
      %v2295 = vpop.f32.mrb[0].mxu0
      %v2296 = vadd.f32 0.0, %v2295
      %v2297 = vpop.f32.mrb[0].mxu0
      %2298 = vmatprep.mubr.f32.mxu0 0.0
      %2299 = vmatmul.mubr.f32.gmra.mrb[0].mxu0 %v2112
      %v2300 = vpop.f32.mrb[0].mxu0
      %v2301 = vadd.f32 0.0, %v2300
      %v2302 = vpop.f32.mrb[0].mxu0
      %2303 = vmatprep.mubr.f32.mxu0 0.0
      %2304 = vmatmul.mubr.f32.gmra.mrb[0].mxu0 %v2115
      %v2305 = vpop.f32.mrb[0].mxu0
      %v2306 = vadd.f32 0.0, %v2305
      %v2307 = vpop.f32.mrb[0].mxu0
      %2308 = vmatprep.mubr.f32.mxu0 0.0
      %2309 = vmatmul.mubr.f32.gmra.mrb[0].mxu0 %v2118
      %v2310 = vpop.f32.mrb[0].mxu0
      %v2311 = vadd.f32 0.0, %v2310
      %v2312 = vpop.f32.mrb[0].mxu0
      %2313 = vmatprep.mubr.f32.mxu0 0.0
      %2314 = vmatmul.mubr.f32.gmra.mrb[0].mxu0 %v2121
      %v2315 = vpop.f32.mrb[0].mxu0
      %v2316 = vadd.f32 0.0, %v2315
      %v2317 = vpop.f32.mrb[0].mxu0
      %2318 = vmatprep.mubr.f32.mxu0 0.0
      %2319 = vmatmul.mubr.f32.gmra.mrb[0].mxu0 %v2124
      %v2320 = vpop.f32.mrb[0].mxu0
      %v2321 = vadd.f32 0.0, %v2320
      %v2322 = vpop.f32.mrb[0].mxu0
      %2323 = vmatprep.mubr.f32.mxu0 0.0
      %2324 = vmatmul.mubr.f32.gmra.mrb[0].mxu0 %v2127
      %v2325 = vpop.f32.mrb[0].mxu0
      %v2326 = vadd.f32 0.0, %v2325
      %v2327 = vpop.f32.mrb[0].mxu0
      %2328 = vmatprep.mubr.f32.mxu0 0.0
      %2329 = vmatmul.mubr.f32.gmra.mrb[0].mxu0 %v2130
      %v2330 = vpop.f32.mrb[0].mxu0
      %v2331 = vadd.f32 0.0, %v2330
      %v2332 = vpop.f32.mrb[0].mxu0
      %2333 = vmatprep.mubr.f32.mxu0 0.0
      %2334 = vmatmul.mubr.f32.gmra.mrb[0].mxu0 %v2133
      %v2335 = vpop.f32.mrb[0].mxu0
      %v2336 = vadd.f32 0.0, %v2335
      %v2337 = vpop.f32.mrb[0].mxu0
      %2338 = vmatprep.mubr.f32.mxu0 0.0
      %2339 = vmatmul.mubr.f32.gmra.mrb[0].mxu0 %v2136
      %v2340 = vpop.f32.mrb[0].mxu0
      %v2341 = vadd.f32 0.0, %v2340
      %v2342 = vpop.f32.mrb[0].mxu0
      %2343 = vmatprep.mubr.f32.mxu0 0.0
      %2344 = vmatmul.mubr.f32.gmra.mrb[0].mxu0 %v2139
      %v2345 = vpop.f32.mrb[0].mxu0
      %v2346 = vadd.f32 0.0, %v2345
      %v2347 = vpop.f32.mrb[0].mxu0
      %2348 = vmatprep.mubr.f32.mxu0 0.0
      %2349 = vmatmul.mubr.f32.gmra.mrb[0].mxu0 %v2142
      %v2350 = vpop.f32.mrb[0].mxu0
      %v2351 = vadd.f32 0.0, %v2350
      %v2352 = vpop.f32.mrb[0].mxu0
      %2353 = vmatprep.mubr.f32.mxu0 0.0
      %2354 = vmatmul.mubr.f32.gmra.mrb[0].mxu0 %v2145
      %v2355 = vpop.f32.mrb[0].mxu0
      %v2356 = vadd.f32 0.0, %v2355
      %v2357 = vpop.f32.mrb[0].mxu0
      %2358 = vmatprep.mubr.f32.mxu0 0.0
      %2359 = vmatmul.mubr.f32.gmra.mrb[0].mxu0 %v2148
      %v2360 = vpop.f32.mrb[0].mxu0
      %v2361 = vadd.f32 0.0, %v2360
      %v2362 = vpop.f32.mrb[0].mxu0
      %2363 = vmatprep.mubr.f32.mxu0 0.0
      %2364 = vmatmul.mubr.f32.gmra.mrb[0].mxu0 %v2151
      %v2365 = vpop.f32.mrb[0].mxu0
      %v2366 = vadd.f32 0.0, %v2365
      %v2367 = vpop.f32.mrb[0].mxu0
      %2368 = vmatprep.mubr.f32.mxu0 0.0
      %2369 = vmatmul.mubr.f32.gmra.mrb[0].mxu0 %v2154
      %v2370 = vpop.f32.mrb[0].mxu0
      %v2371 = vadd.f32 0.0, %v2370
      %v2372 = vpop.f32.mrb[0].mxu0
      %2373 = vmatprep.mubr.f32.mxu0 0.0
      %2374 = vmatmul.mubr.f32.gmra.mrb[0].mxu0 %v2157
      %v2375 = vpop.f32.mrb[0].mxu0
      %v2376 = vadd.f32 0.0, %v2375
      %v2377 = vpop.f32.mrb[0].mxu0
      %2378 = vmatprep.mubr.f32.mxu0 0.0
      %2379 = vmatmul.mubr.f32.gmra.mrb[0].mxu0 %v2160
      %v2380 = vpop.f32.mrb[0].mxu0
      %v2381 = vadd.f32 0.0, %v2380
      %v2382 = vpop.f32.mrb[0].mxu0
      %2383 = vmatprep.mubr.f32.mxu0 0.0
      %2384 = vmatmul.mubr.f32.gmra.mrb[0].mxu0 %v2163
      %v2385 = vpop.f32.mrb[0].mxu0
      %v2386 = vadd.f32 0.0, %v2385
      %v2387 = vpop.f32.mrb[0].mxu0
      %2388 = vmatprep.mubr.f32.mxu0 0.0
      %2389 = vmatmul.mubr.f32.gmra.mrb[0].mxu0 %v2166
      %v2390 = vpop.f32.mrb[0].mxu0
      %v2391 = vadd.f32 0.0, %v2390
      %v2392 = vpop.f32.mrb[0].mxu0
      %2393 = vmatprep.mubr.f32.mxu0 0.0
      %2394 = vmatmul.mubr.f32.gmra.mrb[0].mxu0 %v2169
      %v2395 = vpop.f32.mrb[0].mxu0
      %v2396 = vadd.f32 0.0, %v2395
      %v2397 = vpop.f32.mrb[0].mxu0
      %2398 = vdwg.mxu0
      %v2399 = vadd.f32 %v1881, %v2241
      %v2400 = vadd.f32 %v1886, %v2246
      %v2401 = vadd.f32 %v1891, %v2251
      %v2402 = vadd.f32 %v1896, %v2256
      %v2403 = vadd.f32 %v1901, %v2261
      %v2404 = vadd.f32 %v1906, %v2266
      %v2405 = vadd.f32 %v1911, %v2271
      %v2406 = vadd.f32 %v1916, %v2276
      %v2407 = vadd.f32 %v1921, %v2281
      %v2408 = vadd.f32 %v1926, %v2286
      %v2409 = vadd.f32 %v1931, %v2291
      %v2410 = vadd.f32 %v1936, %v2296
      %v2411 = vadd.f32 %v1941, %v2301
      %v2412 = vadd.f32 %v1946, %v2306
      %v2413 = vadd.f32 %v1951, %v2311
      %v2414 = vadd.f32 %v1956, %v2316
      %v2415 = vadd.f32 %v1961, %v2321
      %v2416 = vadd.f32 %v1966, %v2326
      %v2417 = vadd.f32 %v1971, %v2331
      %v2418 = vadd.f32 %v1976, %v2336
      %v2419 = vadd.f32 %v1981, %v2341
      %v2420 = vadd.f32 %v1986, %v2346
      %v2421 = vadd.f32 %v1991, %v2351
      %v2422 = vadd.f32 %v1996, %v2356
      %v2423 = vadd.f32 %v2001, %v2361
      %v2424 = vadd.f32 %v2006, %v2366
      %v2425 = vadd.f32 %v2011, %v2371
      %v2426 = vadd.f32 %v2016, %v2376
      %v2427 = vadd.f32 %v2021, %v2381
      %v2428 = vadd.f32 %v2026, %v2386
      %v2429 = vadd.f32 %v2031, %v2391
      %v2430 = vadd.f32 %v2036, %v2396
      %2431 = vst.msk [vmem:[%s430] sm:$0xff] %vm1209, %v2399
      %2432 = vst.msk [vmem:[%s430 + $0x8] sm:$0xff] %vm1209, %v2400
      %2433 = vst.msk [vmem:[%s430 + $0x10] sm:$0xff] %vm1209, %v2401
      %2434 = vst.msk [vmem:[%s430 + $0x18] sm:$0xff] %vm1209, %v2402
      %2435 = vst.msk [vmem:[%s430 + $0x20] sm:$0xff] %vm1209, %v2403
      %2436 = vst.msk [vmem:[%s430 + $0x28] sm:$0xff] %vm1209, %v2404
      %2437 = vst.msk [vmem:[%s430 + $0x30] sm:$0xff] %vm1209, %v2405
      %2438 = vst.msk [vmem:[%s430 + $0x38] sm:$0xff] %vm1209, %v2406
      %2439 = vst.msk [vmem:[%s430 + $0x40] sm:$0xff] %vm1209, %v2407
      %2440 = vst.msk [vmem:[%s430 + $0x48] sm:$0xff] %vm1209, %v2408
      %2441 = vst.msk [vmem:[%s430 + $0x50] sm:$0xff] %vm1209, %v2409
      %2442 = vst.msk [vmem:[%s430 + $0x58] sm:$0xff] %vm1209, %v2410
      %2443 = vst.msk [vmem:[%s430 + $0x60] sm:$0xff] %vm1209, %v2411
      %2444 = vst.msk [vmem:[%s430 + $0x68] sm:$0xff] %vm1209, %v2412
      %2445 = vst.msk [vmem:[%s430 + $0x70] sm:$0xff] %vm1209, %v2413
      %2446 = vst.msk [vmem:[%s430 + $0x78] sm:$0xff] %vm1209, %v2414
      %2447 = vst.msk [vmem:[%s430 + $0x80] sm:$0xff] %vm1209, %v2415
      %2448 = vst.msk [vmem:[%s430 + $0x88] sm:$0xff] %vm1209, %v2416
      %2449 = vst.msk [vmem:[%s430 + $0x90] sm:$0xff] %vm1209, %v2417
      %2450 = vst.msk [vmem:[%s430 + $0x98] sm:$0xff] %vm1209, %v2418
      %2451 = vst.msk [vmem:[%s430 + $0xa0] sm:$0xff] %vm1209, %v2419
      %2452 = vst.msk [vmem:[%s430 + $0xa8] sm:$0xff] %vm1209, %v2420
      %2453 = vst.msk [vmem:[%s430 + $0xb0] sm:$0xff] %vm1209, %v2421
      %2454 = vst.msk [vmem:[%s430 + $0xb8] sm:$0xff] %vm1209, %v2422
      %2455 = vst.msk [vmem:[%s430 + $0xc0] sm:$0xff] %vm1209, %v2423
      %2456 = vst.msk [vmem:[%s430 + $0xc8] sm:$0xff] %vm1209, %v2424
      %2457 = vst.msk [vmem:[%s430 + $0xd0] sm:$0xff] %vm1209, %v2425
      %2458 = vst.msk [vmem:[%s430 + $0xd8] sm:$0xff] %vm1209, %v2426
      %2459 = vst.msk [vmem:[%s430 + $0xe0] sm:$0xff] %vm1209, %v2427
      %2460 = vst.msk [vmem:[%s430 + $0xe8] sm:$0xff] %vm1209, %v2428
      %2461 = vst.msk [vmem:[%s430 + $0xf0] sm:$0xff] %vm1209, %v2429
      %2462 = vst.msk [vmem:[%s430 + $0xf8] sm:$0xff] %vm1209, %v2430
      %v2463 = vsel %vm1209, %v2399, 0.0
      %v2464 = vsel %vm1209, %v2400, 0.0
      %v2465 = vadd.f32 %v2463, %v2464
      %v2466 = vsel %vm1209, %v2401, 0.0
      %v2467 = vadd.f32 %v2465, %v2466
      %v2468 = vsel %vm1209, %v2402, 0.0
      %v2469 = vadd.f32 %v2467, %v2468
      %v2470 = vsel %vm1209, %v2403, 0.0
      %v2471 = vadd.f32 %v2469, %v2470
      %v2472 = vsel %vm1209, %v2404, 0.0
      %v2473 = vadd.f32 %v2471, %v2472
      %v2474 = vsel %vm1209, %v2405, 0.0
      %v2475 = vadd.f32 %v2473, %v2474
      %v2476 = vsel %vm1209, %v2406, 0.0
      %v2477 = vadd.f32 %v2475, %v2476
      %v2478 = vsel %vm1209, %v2407, 0.0
      %v2479 = vadd.f32 %v2477, %v2478
      %v2480 = vsel %vm1209, %v2408, 0.0
      %v2481 = vadd.f32 %v2479, %v2480
      %v2482 = vsel %vm1209, %v2409, 0.0
      %v2483 = vadd.f32 %v2481, %v2482
      %v2484 = vsel %vm1209, %v2410, 0.0
      %v2485 = vadd.f32 %v2483, %v2484
      %v2486 = vsel %vm1209, %v2411, 0.0
      %v2487 = vadd.f32 %v2485, %v2486
      %v2488 = vsel %vm1209, %v2412, 0.0
      %v2489 = vadd.f32 %v2487, %v2488
      %v2490 = vsel %vm1209, %v2413, 0.0
      %v2491 = vadd.f32 %v2489, %v2490
      %v2492 = vsel %vm1209, %v2414, 0.0
      %v2493 = vadd.f32 %v2491, %v2492
      %v2494 = vsel %vm1209, %v2415, 0.0
      %v2495 = vadd.f32 %v2493, %v2494
      %v2496 = vsel %vm1209, %v2416, 0.0
      %v2497 = vadd.f32 %v2495, %v2496
      %v2498 = vsel %vm1209, %v2417, 0.0
      %v2499 = vadd.f32 %v2497, %v2498
      %v2500 = vsel %vm1209, %v2418, 0.0
      %v2501 = vadd.f32 %v2499, %v2500
      %v2502 = vsel %vm1209, %v2419, 0.0
      %v2503 = vadd.f32 %v2501, %v2502
      %v2504 = vsel %vm1209, %v2420, 0.0
      %v2505 = vadd.f32 %v2503, %v2504
      %v2506 = vsel %vm1209, %v2421, 0.0
      %v2507 = vadd.f32 %v2505, %v2506
      %v2508 = vsel %vm1209, %v2422, 0.0
      %v2509 = vadd.f32 %v2507, %v2508
      %v2510 = vsel %vm1209, %v2423, 0.0
      %v2511 = vadd.f32 %v2509, %v2510
      %v2512 = vsel %vm1209, %v2424, 0.0
      %v2513 = vadd.f32 %v2511, %v2512
      %v2514 = vsel %vm1209, %v2425, 0.0
      %v2515 = vadd.f32 %v2513, %v2514
      %v2516 = vsel %vm1209, %v2426, 0.0
      %v2517 = vadd.f32 %v2515, %v2516
      %v2518 = vsel %vm1209, %v2427, 0.0
      %v2519 = vadd.f32 %v2517, %v2518
      %v2520 = vsel %vm1209, %v2428, 0.0
      %v2521 = vadd.f32 %v2519, %v2520
      %v2522 = vsel %vm1209, %v2429, 0.0
      %v2523 = vadd.f32 %v2521, %v2522
      %v2524 = vsel %vm1209, %v2430, 0.0
      %v2525 = vadd.f32 %v2523, %v2524
      %v2526 = vrot.slane %v2525, 4
      %v2527 = vadd.f32 %v2525, %v2526
      %v2528 = vrot.slane %v2527, 2
      %v2529 = vadd.f32 %v2527, %v2528
      %v2530 = vrot.slane %v2529, 1
      %v2531 = vadd.f32 %v2529, %v2530
      %vm2532 = vcmask 24576
      %2533 = vst.msk [vmem:[%s438] sm:$0x1] %vm2532, %v2531
      %v2534 = vmul.f32 %v2399, %v2399
      %v2535 = vmul.f32 %v2400, %v2400
      %v2536 = vmul.f32 %v2401, %v2401
      %v2537 = vmul.f32 %v2402, %v2402
      %v2538 = vmul.f32 %v2403, %v2403
      %v2539 = vmul.f32 %v2404, %v2404
      %v2540 = vmul.f32 %v2405, %v2405
      %v2541 = vmul.f32 %v2406, %v2406
      %v2542 = vmul.f32 %v2407, %v2407
      %v2543 = vmul.f32 %v2408, %v2408
      %v2544 = vmul.f32 %v2409, %v2409
      %v2545 = vmul.f32 %v2410, %v2410
      %v2546 = vmul.f32 %v2411, %v2411
      %v2547 = vmul.f32 %v2412, %v2412
      %v2548 = vmul.f32 %v2413, %v2413
      %v2549 = vmul.f32 %v2414, %v2414
      %v2550 = vmul.f32 %v2415, %v2415
      %v2551 = vmul.f32 %v2416, %v2416
      %v2552 = vmul.f32 %v2417, %v2417
      %v2553 = vmul.f32 %v2418, %v2418
      %v2554 = vmul.f32 %v2419, %v2419
      %v2555 = vmul.f32 %v2420, %v2420
      %v2556 = vmul.f32 %v2421, %v2421
      %v2557 = vmul.f32 %v2422, %v2422
      %v2558 = vmul.f32 %v2423, %v2423
      %v2559 = vmul.f32 %v2424, %v2424
      %v2560 = vmul.f32 %v2425, %v2425
      %v2561 = vmul.f32 %v2426, %v2426
      %v2562 = vmul.f32 %v2427, %v2427
      %v2563 = vmul.f32 %v2428, %v2428
      %v2564 = vmul.f32 %v2429, %v2429
      %v2565 = vmul.f32 %v2430, %v2430
      %v2566 = vsel %vm1209, %v2534, 0.0
      %v2567 = vsel %vm1209, %v2535, 0.0
      %v2568 = vadd.f32 %v2566, %v2567
      %v2569 = vsel %vm1209, %v2536, 0.0
      %v2570 = vadd.f32 %v2568, %v2569
      %v2571 = vsel %vm1209, %v2537, 0.0
      %v2572 = vadd.f32 %v2570, %v2571
      %v2573 = vsel %vm1209, %v2538, 0.0
      %v2574 = vadd.f32 %v2572, %v2573
      %v2575 = vsel %vm1209, %v2539, 0.0
      %v2576 = vadd.f32 %v2574, %v2575
      %v2577 = vsel %vm1209, %v2540, 0.0
      %v2578 = vadd.f32 %v2576, %v2577
      %v2579 = vsel %vm1209, %v2541, 0.0
      %v2580 = vadd.f32 %v2578, %v2579
      %v2581 = vsel %vm1209, %v2542, 0.0
      %v2582 = vadd.f32 %v2580, %v2581
      %v2583 = vsel %vm1209, %v2543, 0.0
      %v2584 = vadd.f32 %v2582, %v2583
      %v2585 = vsel %vm1209, %v2544, 0.0
      %v2586 = vadd.f32 %v2584, %v2585
      %v2587 = vsel %vm1209, %v2545, 0.0
      %v2588 = vadd.f32 %v2586, %v2587
      %v2589 = vsel %vm1209, %v2546, 0.0
      %v2590 = vadd.f32 %v2588, %v2589
      %v2591 = vsel %vm1209, %v2547, 0.0
      %v2592 = vadd.f32 %v2590, %v2591
      %v2593 = vsel %vm1209, %v2548, 0.0
      %v2594 = vadd.f32 %v2592, %v2593
      %v2595 = vsel %vm1209, %v2549, 0.0
      %v2596 = vadd.f32 %v2594, %v2595
      %v2597 = vsel %vm1209, %v2550, 0.0
      %v2598 = vadd.f32 %v2596, %v2597
      %v2599 = vsel %vm1209, %v2551, 0.0
      %v2600 = vadd.f32 %v2598, %v2599
      %v2601 = vsel %vm1209, %v2552, 0.0
      %v2602 = vadd.f32 %v2600, %v2601
      %v2603 = vsel %vm1209, %v2553, 0.0
      %v2604 = vadd.f32 %v2602, %v2603
      %v2605 = vsel %vm1209, %v2554, 0.0
      %v2606 = vadd.f32 %v2604, %v2605
      %v2607 = vsel %vm1209, %v2555, 0.0
      %v2608 = vadd.f32 %v2606, %v2607
      %v2609 = vsel %vm1209, %v2556, 0.0
      %v2610 = vadd.f32 %v2608, %v2609
      %v2611 = vsel %vm1209, %v2557, 0.0
      %v2612 = vadd.f32 %v2610, %v2611
      %v2613 = vsel %vm1209, %v2558, 0.0
      %v2614 = vadd.f32 %v2612, %v2613
      %v2615 = vsel %vm1209, %v2559, 0.0
      %v2616 = vadd.f32 %v2614, %v2615
      %v2617 = vsel %vm1209, %v2560, 0.0
      %v2618 = vadd.f32 %v2616, %v2617
      %v2619 = vsel %vm1209, %v2561, 0.0
      %v2620 = vadd.f32 %v2618, %v2619
      %v2621 = vsel %vm1209, %v2562, 0.0
      %v2622 = vadd.f32 %v2620, %v2621
      %v2623 = vsel %vm1209, %v2563, 0.0
      %v2624 = vadd.f32 %v2622, %v2623
      %v2625 = vsel %vm1209, %v2564, 0.0
      %v2626 = vadd.f32 %v2624, %v2625
      %v2627 = vsel %vm1209, %v2565, 0.0
      %v2628 = vadd.f32 %v2626, %v2627
      %v2629 = vrot.slane %v2628, 4
      %v2630 = vadd.f32 %v2628, %v2629
      %v2631 = vrot.slane %v2630, 2
      %v2632 = vadd.f32 %v2630, %v2631
      %v2633 = vrot.slane %v2632, 1
      %v2634 = vadd.f32 %v2632, %v2633
      %2635 = vst.msk [vmem:[%s438 + $0x1] sm:$0x1] %vm2532, %v2634
      %s2636 = smul.u32 16, %s23
      %p2637 = scmp.lt.s32.totalorder %s22, 1
      %s2638 = scalar_select %p2637, %s22, 1
      %p2639 = scmp.lt.s32.totalorder %s2636, 15
      %s2640 = scalar_select %p2639, %s2636, 15
      %s2641 = smul.addr %s2640, 2
      %s2642 = smul.addr %s2638, 32
      %s2643 = sadd.s32 %s2641, %s2642
      %s2644 = smul.addr %s2643, 8
      %s2645 = scalar_lea.vmem %s5, %s2644
      %p2646 = scmp.lt.s32.totalorder %s22, 1
      %s2647 = scalar_select %p2646, %s22, 1
      %p2648 = scmp.lt.s32.totalorder %s23, 0
      %s2649 = scalar_select %p2648, %s23, 0
      %s2650 = sadd.s32 %s2649, %s2647
      %s2651 = smul.addr %s2650, 2
      %s2652 = scalar_lea.vmem %s6, %s2651
      // Predicated region
      $region41: #{_lambda_.6} parent=39 // pred_check
        %p2653 = pneg %p192
      $region42: #{_lambda_.6} parent=39 // pred_check_branch
        %2655 = sbr.rel (%p2653) target = $region44
      $region43: #{_lambda_.6} parent=39 // pred_region
        %s2656 = smul.u32 16, %s23
      $region44: #{_lambda_.6} parent=39 // pred_fallthru
        _
      // Predicated region
      $region45: #{_lambda_.6} parent=39 // pred_check
        %p2657 = pneg %p220
      $region46: #{_lambda_.6} parent=39 // pred_check_branch
        %2659 = sbr.rel (%p2657) target = $region48
      $region47: #{_lambda_.6} parent=39 // pred_region
        _
      $region48: #{_lambda_.6} parent=39 // pred_fallthru
        _
    $region40: #{_lambda_.6} parent=5 // pred_fallthru
      _
    %p2660 = scmp.le.s32.totalorder 2, %s13
    // Predicated region
    $region49: #{_lambda_.6} parent=5 // pred_check
      %p2661 = pneg %p2660
    $region50: #{_lambda_.6} parent=5 // pred_check_branch
      %2663 = sbr.rel (%p2661) target = $region52
    $region51: #{_lambda_.6} parent=5 // pred_region
      %s2664 = ssub.s32 %s13, 2
      // Predicated region
      $region53: #{_lambda_.6} parent=51 // pred_check
        %p2665 = pneg %p198
      $region54: #{_lambda_.6} parent=51 // pred_check_branch
        %2667 = sbr.rel (%p2665) target = $region56
      $region55: #{_lambda_.6} parent=51 // pred_region
        %s2668 = smul.u32 16, %s25
        %p2669 = scmp.lt.s32.totalorder %s24, 1
        %s2670 = scalar_select %p2669, %s24, 1
        %p2671 = scmp.lt.s32.totalorder %s2668, 15
        %s2672 = scalar_select %p2671, %s2668, 15
        %s2673 = smul.addr %s2672, 2
        %s2674 = smul.addr %s2670, 32
        %s2675 = sadd.s32 %s2673, %s2674
        %s2676 = smul.addr %s2675, 8
        %s2677 = scalar_lea.vmem %s5, %s2676
      $region56: #{_lambda_.6} parent=51 // pred_fallthru
        _
      // Predicated region
      $region57: #{_lambda_.6} parent=51 // pred_check
        %p2678 = pneg %p226
      $region58: #{_lambda_.6} parent=51 // pred_check_branch
        %2680 = sbr.rel (%p2678) target = $region60
      $region59: #{_lambda_.6} parent=51 // pred_region
        %p2681 = scmp.lt.s32.totalorder %s24, 1
        %s2682 = scalar_select %p2681, %s24, 1
        %p2683 = scmp.lt.s32.totalorder %s25, 0
        %s2684 = scalar_select %p2683, %s25, 0
        %s2685 = sadd.s32 %s2684, %s2682
        %s2686 = smul.addr %s2685, 2
        %s2687 = scalar_lea.vmem %s6, %s2686
      $region60: #{_lambda_.6} parent=51 // pred_fallthru
        _
    $region52: #{_lambda_.6} parent=5 // pred_fallthru
      _
  $region6: #{_lambda_.6} parent=0 // loop_footer
    %s17 = sadd.s32 1, %s13
  $region7: #{_lambda_.6} parent=0 // loop_footer_branch
    %12 = sbr.rel target = $region3
  $region8: #{_lambda_.6} parent=0 // loop_exit
    _

</llo_original>
